<compile_context>
chip_gen: v6e
topology: v6e:2x2x1
jax: 0.10.0
libtpu: 0.0.40
codegen_flags: <defaults>
</compile_context>

<pallas_src>
import functools
import math

import jax
import jax.numpy as jnp
from jax.experimental import pallas as pl
from jax.experimental.pallas import tpu as pltpu

# ---------------- small synthetic "rbt3-like" config ----------------
VOCAB = 100
TYPE_VOCAB = 2
MAX_POS = 16
HIDDEN = 32
HEADS = 4
HEAD_DIM = HIDDEN // HEADS
INTERMEDIATE = 64
LAYERS = 3            # rbt3 has 3 encoder layers
LN_EPS = 1e-12        # BERT LayerNorm eps
SEQ = 8
BATCH = 2
NCHUNK = 2            # chunk 0 = text1 batch, chunk 1 = text2 batch

assert HEADS * HEAD_DIM == HIDDEN


# ---------------------------------------------------------------------------
# In-kernel helpers
# ---------------------------------------------------------------------------
def _erf(x):
    # Abramowitz & Stegun 7.1.26 polynomial (|err| < 1.5e-7), used for the exact
    # (erf-based) GELU that HF BERT ("gelu") applies.
    a1, a2, a3, a4, a5 = (0.254829592, -0.284496736, 1.421413741,
                          -1.453152027, 1.061405429)
    p = 0.3275911
    sign = jnp.where(x >= 0.0, 1.0, -1.0)
    ax = jnp.abs(x)
    t = 1.0 / (1.0 + p * ax)
    poly = ((((a5 * t + a4) * t + a3) * t + a2) * t + a1) * t
    return sign * (1.0 - poly * jnp.exp(-ax * ax))


def _layer_norm(v, g, b):
    mu = jnp.mean(v, axis=-1, keepdims=True)
    vc = v - mu
    var = jnp.mean(vc * vc, axis=-1, keepdims=True)
    return vc * jax.lax.rsqrt(var + LN_EPS) * g + b


# ---------------------------------------------------------------------------
# Single fused kernel: embeddings-LN -> 3 encoder layers -> pooler, per text.
# One grid step processes one text's whole batch ([rows*seq, H] activations),
# looping over layers with every weight resident in VMEM.
# ---------------------------------------------------------------------------
def _siamese_bert_kernel(
    x_ref, maskb_ref, emb_g_ref, emb_b_ref,
    wqkv_ref, bqkv_ref, wo_ref, bo_ref, ln1g_ref, ln1b_ref,
    w1_ref, b1_ref, w2_ref, b2_ref, ln2g_ref, ln2b_ref,
    poolw_ref, poolb_ref,
    out_ref, *, rows, seq,
):
    scale = 1.0 / math.sqrt(HEAD_DIM)

    x = x_ref[0]                                   # [rows*seq, H] summed embeddings
    maskb = maskb_ref[0]                           # [rows, seq] additive mask bias

    # Embedding LayerNorm (no residual -> no zero-tensor DMA).
    x = _layer_norm(x, emb_g_ref[...], emb_b_ref[...])

    for l in range(LAYERS):
        # ---- fused Q|K|V projection: one [rows*seq, H] @ [H, 3H] GEMM ----
        qkv = jnp.dot(x, wqkv_ref[l], preferred_element_type=jnp.float32)
        qkv = qkv + bqkv_ref[l]

        attn_rows = []
        for r in range(rows):
            rs = r * seq
            q2 = qkv[rs:rs + seq, 0 * HIDDEN:1 * HIDDEN]       # [seq, H]
            k2 = qkv[rs:rs + seq, 1 * HIDDEN:2 * HIDDEN]
            v2 = qkv[rs:rs + seq, 2 * HIDDEN:3 * HIDDEN]

            # Head-major stacks [HEADS, seq, HEAD_DIM]; heads batched in the
            # contractions below instead of a per-head matmul loop.
            qh = jnp.stack([q2[:, h * HEAD_DIM:(h + 1) * HEAD_DIM]
                            for h in range(HEADS)], axis=0)
            kh = jnp.stack([k2[:, h * HEAD_DIM:(h + 1) * HEAD_DIM]
                            for h in range(HEADS)], axis=0)
            vh = jnp.stack([v2[:, h * HEAD_DIM:(h + 1) * HEAD_DIM]
                            for h in range(HEADS)], axis=0)

            s = jnp.einsum("hqd,hkd->hqk", qh, kh,
                           preferred_element_type=jnp.float32)    # [HEADS, seq, seq]
            s = s * scale + maskb[r:r + 1, :].reshape(1, 1, seq)
            s = s - jnp.max(s, axis=-1, keepdims=True)
            p = jnp.exp(s)
            p = p * pl.reciprocal(jnp.sum(p, axis=-1, keepdims=True), approx=True)

            ctx = jnp.einsum("hqk,hkd->hqd", p, vh,
                             preferred_element_type=jnp.float32)  # [HEADS, seq, D]

            # Per-head output projection, summed: replaces concat + [H,H] GEMM
            # (mathematically identical to concat(ctx_h) @ Wo).
            acc = jnp.dot(ctx[0], wo_ref[l, 0], preferred_element_type=jnp.float32)
            for h in range(1, HEADS):
                acc = acc + jnp.dot(ctx[h], wo_ref[l, h],
                                    preferred_element_type=jnp.float32)
            attn_rows.append(acc)

        attn = jnp.concatenate(attn_rows, axis=0) + bo_ref[l]      # [rows*seq, H]

        # Fused residual-add + LayerNorm (stays in VMEM / vregs).
        x = _layer_norm(attn + x, ln1g_ref[l], ln1b_ref[l])

        # ---- FFN: dense + GELU + dense, fused residual + LayerNorm ----
        inter = jnp.dot(x, w1_ref[l], preferred_element_type=jnp.float32) + b1_ref[l]
        inter = 0.5 * inter * (1.0 + _erf(inter * (1.0 / math.sqrt(2.0))))
        ffn = jnp.dot(inter, w2_ref[l], preferred_element_type=jnp.float32) + b2_ref[l]
        x = _layer_norm(ffn + x, ln2g_ref[l], ln2b_ref[l])

    # ---- pooler: tanh(h_[CLS] @ W_pool + b_pool) per batch row ----
    cls = jnp.concatenate([x[r * seq:r * seq + 1, :] for r in range(rows)], axis=0)
    pooled = jnp.tanh(jnp.dot(cls, poolw_ref[...],
                              preferred_element_type=jnp.float32) + poolb_ref[...])
    out_ref[0] = pooled


# ---------------------------------------------------------------------------
# Parameters (deterministic synthetic init, BERT-style: N(0, 0.02), zero bias)
# Weights are stored already stacked over layers for the fused kernel.
# ---------------------------------------------------------------------------
def init_bert_params(key):
    def nrm(k, shape):
        return 0.02 * jax.random.normal(k, shape, dtype=jnp.float32)

    ks = iter(jax.random.split(key, 16))
    return {
        "word_emb": nrm(next(ks), (VOCAB, HIDDEN)),
        "pos_emb": nrm(next(ks), (MAX_POS, HIDDEN)),
        "type_emb": nrm(next(ks), (TYPE_VOCAB, HIDDEN)),
        "emb_ln_g": jnp.ones((1, HIDDEN), jnp.float32),
        "emb_ln_b": jnp.zeros((1, HIDDEN), jnp.float32),
        # Q|K|V fused along the output dim.
        "wqkv": nrm(next(ks), (LAYERS, HIDDEN, 3 * HIDDEN)),
        "bqkv": jnp.zeros((LAYERS, 1, 3 * HIDDEN), jnp.float32),
        "wo": nrm(next(ks), (LAYERS, HIDDEN, HIDDEN)),
        "bo": jnp.zeros((LAYERS, 1, HIDDEN), jnp.float32),
        "ln1_g": jnp.ones((LAYERS, 1, HIDDEN), jnp.float32),
        "ln1_b": jnp.zeros((LAYERS, 1, HIDDEN), jnp.float32),
        "w1": nrm(next(ks), (LAYERS, HIDDEN, INTERMEDIATE)),
        "b1": jnp.zeros((LAYERS, 1, INTERMEDIATE), jnp.float32),
        "w2": nrm(next(ks), (LAYERS, INTERMEDIATE, HIDDEN)),
        "b2": jnp.zeros((LAYERS, 1, HIDDEN), jnp.float32),
        "ln2_g": jnp.ones((LAYERS, 1, HIDDEN), jnp.float32),
        "ln2_b": jnp.zeros((LAYERS, 1, HIDDEN), jnp.float32),
        "pool_w": nrm(next(ks), (HIDDEN, HIDDEN)),
        "pool_b": jnp.zeros((1, HIDDEN), jnp.float32),
    }


# ---------------------------------------------------------------------------
# BertClassifier.forward: same BERT over both texts, return the two pooler outputs.
# Both texts are stacked and handled by a single pallas_call (grid step per text).
# ---------------------------------------------------------------------------
def bert_classifier_forward(params,
                            input_ids_text1, token_type_ids_text1, attention_mask_text1,
                            input_ids_text2, token_type_ids_text2, attention_mask_text2):
    b, s = input_ids_text1.shape
    assert s <= MAX_POS, "SEQ exceeds MAX_POS position table"

    input_ids = jnp.concatenate([input_ids_text1, input_ids_text2], axis=0)    # [2B, S]
    token_type = jnp.concatenate([token_type_ids_text1, token_type_ids_text2], axis=0)
    mask = jnp.concatenate([attention_mask_text1, attention_mask_text2],
                           axis=0).astype(jnp.float32)

    # Embedding lookups are gathers -> kept as plain-JAX glue.
    we = jnp.take(params["word_emb"], input_ids, axis=0)                       # [2B, S, H]
    pe = params["pos_emb"][:s][None, :, :]
    te = jnp.take(params["type_emb"], token_type, axis=0)
    x_emb = (we + pe + te).astype(jnp.float32).reshape(NCHUNK, b * s, HIDDEN)

    mask_bias = ((1.0 - mask) * (-10000.0)).reshape(NCHUNK, b, s)

    # Per-head view of the output projection (same tensor, reshaped once, free).
    wo_heads = params["wo"].reshape(LAYERS, HEADS, HEAD_DIM, HIDDEN)

    # TODO(synk): at real rbt3 sizes (H=768, S=512) these whole-array BlockSpecs
    # need row/K tiling sized against v7x's 64 MiB VMEM and bf16 MXU operands.
    pooled = pl.pallas_call(
        functools.partial(_siamese_bert_kernel, rows=b, seq=s),
        out_shape=jax.ShapeDtypeStruct((NCHUNK, b, HIDDEN), jnp.float32),
        grid=(NCHUNK,),
        in_specs=[
            pl.BlockSpec((1, b * s, HIDDEN), lambda i: (i, 0, 0)),              # x_emb
            pl.BlockSpec((1, b, s), lambda i: (i, 0, 0)),                       # mask bias
            pl.BlockSpec((1, HIDDEN), lambda i: (0, 0)),                        # emb_ln_g
            pl.BlockSpec((1, HIDDEN), lambda i: (0, 0)),                        # emb_ln_b
            pl.BlockSpec((LAYERS, HIDDEN, 3 * HIDDEN), lambda i: (0, 0, 0)),    # wqkv
            pl.BlockSpec((LAYERS, 1, 3 * HIDDEN), lambda i: (0, 0, 0)),         # bqkv
            pl.BlockSpec((LAYERS, HEADS, HEAD_DIM, HIDDEN),
                         lambda i: (0, 0, 0, 0)),                               # wo (per-head)
            pl.BlockSpec((LAYERS, 1, HIDDEN), lambda i: (0, 0, 0)),             # bo
            pl.BlockSpec((LAYERS, 1, HIDDEN), lambda i: (0, 0, 0)),             # ln1_g
            pl.BlockSpec((LAYERS, 1, HIDDEN), lambda i: (0, 0, 0)),             # ln1_b
            pl.BlockSpec((LAYERS, HIDDEN, INTERMEDIATE), lambda i: (0, 0, 0)),  # w1
            pl.BlockSpec((LAYERS, 1, INTERMEDIATE), lambda i: (0, 0, 0)),       # b1
            pl.BlockSpec((LAYERS, INTERMEDIATE, HIDDEN), lambda i: (0, 0, 0)),  # w2
            pl.BlockSpec((LAYERS, 1, HIDDEN), lambda i: (0, 0, 0)),             # b2
            pl.BlockSpec((LAYERS, 1, HIDDEN), lambda i: (0, 0, 0)),             # ln2_g
            pl.BlockSpec((LAYERS, 1, HIDDEN), lambda i: (0, 0, 0)),             # ln2_b
            pl.BlockSpec((HIDDEN, HIDDEN), lambda i: (0, 0)),                   # pool_w
            pl.BlockSpec((1, HIDDEN), lambda i: (0, 0)),                        # pool_b
        ],
        out_specs=pl.BlockSpec((1, b, HIDDEN), lambda i: (i, 0, 0)),
        compiler_params=pltpu.CompilerParams(
            dimension_semantics=("parallel",)),   # text1 / text2 on separate TCs (v7x)
    )(
        x_emb, mask_bias,
        params["emb_ln_g"], params["emb_ln_b"],
        params["wqkv"], params["bqkv"], wo_heads, params["bo"],
        params["ln1_g"], params["ln1_b"],
        params["w1"], params["b1"], params["w2"], params["b2"],
        params["ln2_g"], params["ln2_b"],
        params["pool_w"], params["pool_b"],
    )
    return pooled[0], pooled[1]                    # (cls_text1, cls_text2)


# ---------------------------------------------------------------------------
# Pure-JAX reference (for self-validation only)
# ---------------------------------------------------------------------------
def _reference_forward(params, ids1, tt1, am1, ids2, tt2, am2):
    def ln(v, g, b):
        mu = v.mean(-1, keepdims=True)
        vc = v - mu
        var = (vc * vc).mean(-1, keepdims=True)
        return vc * jax.lax.rsqrt(var + LN_EPS) * g + b

    def encode(ids, tt, am):
        b, s = ids.shape
        x = (jnp.take(params["word_emb"], ids, axis=0)
             + params["pos_emb"][:s][None, :, :]
             + jnp.take(params["type_emb"], tt, axis=0)).astype(jnp.float32)
        x = ln(x, params["emb_ln_g"], params["emb_ln_b"])
        bias = (1.0 - am.astype(jnp.float32))[:, None, None, :] * (-10000.0)
        for l in range(LAYERS):
            qkv = x @ params["wqkv"][l] + params["bqkv"][l]
            q, k, v = jnp.split(qkv, 3, axis=-1)

            def heads(t):
                return t.reshape(b, s, HEADS, HEAD_DIM).transpose(0, 2, 1, 3)

            qh, kh, vh = heads(q), heads(k), heads(v)
            sc = jnp.einsum("bhqd,bhkd->bhqk", qh, kh) / math.sqrt(HEAD_DIM) + bias
            p = jax.nn.softmax(sc, axis=-1)
            ctx = jnp.einsum("bhqk,bhkd->bhqd", p, vh)
            ctx = ctx.transpose(0, 2, 1, 3).reshape(b, s, HIDDEN)
            attn = ctx @ params["wo"][l] + params["bo"][l]
            x = ln(attn + x, params["ln1_g"][l], params["ln1_b"][l])
            inter = x @ params["w1"][l] + params["b1"][l]
            inter = 0.5 * inter * (1.0 + jax.scipy.special.erf(inter / math.sqrt(2.0)))
            ffn = inter @ params["w2"][l] + params["b2"][l]
            x = ln(ffn + x, params["ln2_g"][l], params["ln2_b"][l])
        cls = x[:, 0, :]
        return jnp.tanh(cls @ params["pool_w"] + params["pool_b"])

    return encode(ids1, tt1, am1), encode(ids2, tt2, am2)


# TODO(synk): HF BertModel pooler_output depends on pretrained rbt3 weights; here the
# weights are synthetic deterministic N(0, 0.02) since no checkpoint may be loaded.

if __name__ == "__main__":
    root = jax.random.PRNGKey(0)
    kp, k1, k2 = jax.random.split(root, 3)
    params = init_bert_params(kp)

    input_ids_text1 = jax.random.randint(k1, (BATCH, SEQ), 0, VOCAB, dtype=jnp.int32)
    input_ids_text2 = jax.random.randint(k2, (BATCH, SEQ), 0, VOCAB, dtype=jnp.int32)
    token_type_ids_text1 = jnp.zeros((BATCH, SEQ), jnp.int32)
    token_type_ids_text2 = jnp.zeros((BATCH, SEQ), jnp.int32)
    attention_mask_text1 = jnp.stack([jnp.ones((SEQ,), jnp.int32),
                                      jnp.array([1, 1, 1, 1, 1, 1, 0, 0], jnp.int32)])
    attention_mask_text2 = jnp.stack([jnp.array([1, 1, 1, 1, 1, 0, 0, 0], jnp.int32),
                                      jnp.ones((SEQ,), jnp.int32)])

    fwd = jax.jit(bert_classifier_forward)
    cls1, cls2 = fwd(params,
                     input_ids_text1, token_type_ids_text1, attention_mask_text1,
                     input_ids_text2, token_type_ids_text2, attention_mask_text2)
    jax.block_until_ready((cls1, cls2))

    assert cls1.shape == (BATCH, HIDDEN) and cls2.shape == (BATCH, HIDDEN)
    assert bool(jnp.all(jnp.isfinite(cls1))) and bool(jnp.all(jnp.isfinite(cls2)))

    ref1, ref2 = _reference_forward(params,
                                    input_ids_text1, token_type_ids_text1, attention_mask_text1,
                                    input_ids_text2, token_type_ids_text2, attention_mask_text2)
    assert bool(jnp.allclose(cls1, ref1, atol=2e-2, rtol=2e-2))
    assert bool(jnp.allclose(cls2, ref2, atol=2e-2, rtol=2e-2))

    print("KERNEL_OK")
</pallas_src>

<mosaic_0001>
module attributes {stable_mosaic.version = 11 : i64} {
  func.func @_siamese_bert_kernel(%arg0: i32, %arg1: memref<1x16x32xf32, #tpu.memory_space<vmem>>, %arg2: memref<1x2x8xf32, #tpu.memory_space<vmem>>, %arg3: memref<1x32xf32, #tpu.memory_space<vmem>>, %arg4: memref<1x32xf32, #tpu.memory_space<vmem>>, %arg5: memref<3x32x96xf32, #tpu.memory_space<vmem>>, %arg6: memref<3x1x96xf32, #tpu.memory_space<vmem>>, %arg7: memref<3x4x8x32xf32, #tpu.memory_space<vmem>>, %arg8: memref<3x1x32xf32, #tpu.memory_space<vmem>>, %arg9: memref<3x1x32xf32, #tpu.memory_space<vmem>>, %arg10: memref<3x1x32xf32, #tpu.memory_space<vmem>>, %arg11: memref<3x32x64xf32, #tpu.memory_space<vmem>>, %arg12: memref<3x1x64xf32, #tpu.memory_space<vmem>>, %arg13: memref<3x64x32xf32, #tpu.memory_space<vmem>>, %arg14: memref<3x1x32xf32, #tpu.memory_space<vmem>>, %arg15: memref<3x1x32xf32, #tpu.memory_space<vmem>>, %arg16: memref<3x1x32xf32, #tpu.memory_space<vmem>>, %arg17: memref<32x32xf32, #tpu.memory_space<vmem>>, %arg18: memref<1x32xf32, #tpu.memory_space<vmem>>, %arg19: memref<1x2x32xf32, #tpu.memory_space<vmem>>) attributes {dimension_semantics = [#tpu.dimension_semantics<parallel>], iteration_bounds = array<i64: 2>, scalar_prefetch = 0 : i64, scratch_operands = 0 : i64, tpu.core_type = #tpu.core_type<tc>, window_params = [{transform_indices = @transform_0, window_bounds = array<i64: 1, 16, 32>}, {transform_indices = @transform_1, window_bounds = array<i64: 1, 2, 8>}, {pipeline_mode = #tpu.pipeline_mode<synchronous>, transform_indices = @transform_2, window_bounds = array<i64: 1, 32>}, {pipeline_mode = #tpu.pipeline_mode<synchronous>, transform_indices = @transform_3, window_bounds = array<i64: 1, 32>}, {pipeline_mode = #tpu.pipeline_mode<synchronous>, transform_indices = @transform_4, window_bounds = array<i64: 3, 32, 96>}, {pipeline_mode = #tpu.pipeline_mode<synchronous>, transform_indices = @transform_5, window_bounds = array<i64: 3, 1, 96>}, {pipeline_mode = #tpu.pipeline_mode<synchronous>, transform_indices = @transform_6, window_bounds = array<i64: 3, 4, 8, 32>}, {pipeline_mode = #tpu.pipeline_mode<synchronous>, transform_indices = @transform_7, window_bounds = array<i64: 3, 1, 32>}, {pipeline_mode = #tpu.pipeline_mode<synchronous>, transform_indices = @transform_8, window_bounds = array<i64: 3, 1, 32>}, {pipeline_mode = #tpu.pipeline_mode<synchronous>, transform_indices = @transform_9, window_bounds = array<i64: 3, 1, 32>}, {pipeline_mode = #tpu.pipeline_mode<synchronous>, transform_indices = @transform_10, window_bounds = array<i64: 3, 32, 64>}, {pipeline_mode = #tpu.pipeline_mode<synchronous>, transform_indices = @transform_11, window_bounds = array<i64: 3, 1, 64>}, {pipeline_mode = #tpu.pipeline_mode<synchronous>, transform_indices = @transform_12, window_bounds = array<i64: 3, 64, 32>}, {pipeline_mode = #tpu.pipeline_mode<synchronous>, transform_indices = @transform_13, window_bounds = array<i64: 3, 1, 32>}, {pipeline_mode = #tpu.pipeline_mode<synchronous>, transform_indices = @transform_14, window_bounds = array<i64: 3, 1, 32>}, {pipeline_mode = #tpu.pipeline_mode<synchronous>, transform_indices = @transform_15, window_bounds = array<i64: 3, 1, 32>}, {pipeline_mode = #tpu.pipeline_mode<synchronous>, transform_indices = @transform_16, window_bounds = array<i64: 32, 32>}, {pipeline_mode = #tpu.pipeline_mode<synchronous>, transform_indices = @transform_17, window_bounds = array<i64: 1, 32>}, {transform_indices = @transform_18, window_bounds = array<i64: 1, 2, 32>}]} {
    %c0 = arith.constant 0 : index
    %c0_0 = arith.constant 0 : index
    %c0_1 = arith.constant 0 : index
    %0 = vector.load %arg1[%c0, %c0_0, %c0_1] : memref<1x16x32xf32, #tpu.memory_space<vmem>>, vector<1x16x32xf32>
    %1 = vector.shape_cast %0 : vector<1x16x32xf32> to vector<16x32xf32>
    %c0_2 = arith.constant 0 : index
    %c0_3 = arith.constant 0 : index
    %c0_4 = arith.constant 0 : index
    %2 = vector.load %arg2[%c0_2, %c0_3, %c0_4] : memref<1x2x8xf32, #tpu.memory_space<vmem>>, vector<1x2x8xf32>
    %3 = vector.shape_cast %2 : vector<1x2x8xf32> to vector<2x8xf32>
    %c0_5 = arith.constant 0 : index
    %c0_6 = arith.constant 0 : index
    %4 = vector.load %arg3[%c0_5, %c0_6] : memref<1x32xf32, #tpu.memory_space<vmem>>, vector<1x32xf32>
    %c0_7 = arith.constant 0 : index
    %c0_8 = arith.constant 0 : index
    %5 = vector.load %arg4[%c0_7, %c0_8] : memref<1x32xf32, #tpu.memory_space<vmem>>, vector<1x32xf32>
    %cst = arith.constant dense<0.000000e+00> : vector<16xf32>
    %6 = vector.multi_reduction <add>, %1, %cst [1] : vector<16x32xf32> to vector<16xf32>
    %7 = vector.shape_cast %6 : vector<16xf32> to vector<16x1xf32>
    %cst_9 = arith.constant 3.200000e+01 : f32
    %8 = vector.broadcast %cst_9 : f32 to vector<16x1xf32>
    %9 = arith.divf %7, %8 : vector<16x1xf32>
    %10 = vector.broadcast %9 : vector<16x1xf32> to vector<16x32xf32>
    %11 = arith.subf %1, %10 : vector<16x32xf32>
    %12 = arith.mulf %11, %11 : vector<16x32xf32>
    %cst_10 = arith.constant dense<0.000000e+00> : vector<16xf32>
    %13 = vector.multi_reduction <add>, %12, %cst_10 [1] : vector<16x32xf32> to vector<16xf32>
    %14 = vector.shape_cast %13 : vector<16xf32> to vector<16x1xf32>
    %cst_11 = arith.constant 3.200000e+01 : f32
    %15 = vector.broadcast %cst_11 : f32 to vector<16x1xf32>
    %16 = arith.divf %14, %15 : vector<16x1xf32>
    %cst_12 = arith.constant 9.99999996E-13 : f32
    %17 = vector.broadcast %cst_12 : f32 to vector<16x1xf32>
    %18 = arith.addf %16, %17 : vector<16x1xf32>
    %19 = math.rsqrt %18 : vector<16x1xf32>
    %20 = vector.broadcast %19 : vector<16x1xf32> to vector<16x32xf32>
    %21 = arith.mulf %11, %20 : vector<16x32xf32>
    %22 = vector.broadcast %4 : vector<1x32xf32> to vector<16x32xf32>
    %23 = arith.mulf %21, %22 : vector<16x32xf32>
    %24 = vector.broadcast %5 : vector<1x32xf32> to vector<16x32xf32>
    %25 = arith.addf %23, %24 : vector<16x32xf32>
    %c0_13 = arith.constant 0 : index
    %c0_14 = arith.constant 0 : index
    %c0_15 = arith.constant 0 : index
    %26 = vector.load %arg5[%c0_13, %c0_14, %c0_15] : memref<3x32x96xf32, #tpu.memory_space<vmem>>, vector<1x32x96xf32>
    %27 = vector.shape_cast %26 : vector<1x32x96xf32> to vector<32x96xf32>
    %cst_16 = arith.constant dense<0.000000e+00> : vector<16x96xf32>
    %28 = tpu.matmul %25, %27, %cst_16 {dimension_numbers = #tpu.dot_dimension_numbers<[1], [0], [0], [1], [0, 0, 1, 1], [], []>} : vector<16x32xf32>, vector<32x96xf32>, vector<16x96xf32> -> vector<16x96xf32>
    %c0_17 = arith.constant 0 : index
    %c0_18 = arith.constant 0 : index
    %c0_19 = arith.constant 0 : index
    %29 = vector.load %arg6[%c0_17, %c0_18, %c0_19] : memref<3x1x96xf32, #tpu.memory_space<vmem>>, vector<1x1x96xf32>
    %30 = vector.shape_cast %29 : vector<1x1x96xf32> to vector<1x96xf32>
    %31 = vector.broadcast %30 : vector<1x96xf32> to vector<16x96xf32>
    %32 = arith.addf %28, %31 : vector<16x96xf32>
    %33 = vector.extract_strided_slice %32 {offsets = [0, 0], sizes = [8, 32], strides = [1, 1]} : vector<16x96xf32> to vector<8x32xf32>
    %34 = vector.extract_strided_slice %32 {offsets = [0, 32], sizes = [8, 32], strides = [1, 1]} : vector<16x96xf32> to vector<8x32xf32>
    %35 = vector.extract_strided_slice %32 {offsets = [0, 64], sizes = [8, 32], strides = [1, 1]} : vector<16x96xf32> to vector<8x32xf32>
    %36 = vector.extract_strided_slice %33 {offsets = [0, 0], sizes = [8, 8], strides = [1, 1]} : vector<8x32xf32> to vector<8x8xf32>
    %37 = vector.extract_strided_slice %33 {offsets = [0, 8], sizes = [8, 8], strides = [1, 1]} : vector<8x32xf32> to vector<8x8xf32>
    %38 = vector.extract_strided_slice %33 {offsets = [0, 16], sizes = [8, 8], strides = [1, 1]} : vector<8x32xf32> to vector<8x8xf32>
    %39 = vector.extract_strided_slice %33 {offsets = [0, 24], sizes = [8, 8], strides = [1, 1]} : vector<8x32xf32> to vector<8x8xf32>
    %40 = vector.shape_cast %36 : vector<8x8xf32> to vector<1x8x8xf32>
    %41 = vector.shape_cast %37 : vector<8x8xf32> to vector<1x8x8xf32>
    %42 = vector.shape_cast %38 : vector<8x8xf32> to vector<1x8x8xf32>
    %43 = vector.shape_cast %39 : vector<8x8xf32> to vector<1x8x8xf32>
    %44 = tpu.concatenate %40, %41, %42, %43 in 0 : vector<1x8x8xf32>, vector<1x8x8xf32>, vector<1x8x8xf32>, vector<1x8x8xf32> -> vector<4x8x8xf32>
    %45 = vector.extract_strided_slice %34 {offsets = [0, 0], sizes = [8, 8], strides = [1, 1]} : vector<8x32xf32> to vector<8x8xf32>
    %46 = vector.extract_strided_slice %34 {offsets = [0, 8], sizes = [8, 8], strides = [1, 1]} : vector<8x32xf32> to vector<8x8xf32>
    %47 = vector.extract_strided_slice %34 {offsets = [0, 16], sizes = [8, 8], strides = [1, 1]} : vector<8x32xf32> to vector<8x8xf32>
    %48 = vector.extract_strided_slice %34 {offsets = [0, 24], sizes = [8, 8], strides = [1, 1]} : vector<8x32xf32> to vector<8x8xf32>
    %49 = vector.shape_cast %45 : vector<8x8xf32> to vector<1x8x8xf32>
    %50 = vector.shape_cast %46 : vector<8x8xf32> to vector<1x8x8xf32>
    %51 = vector.shape_cast %47 : vector<8x8xf32> to vector<1x8x8xf32>
    %52 = vector.shape_cast %48 : vector<8x8xf32> to vector<1x8x8xf32>
    %53 = tpu.concatenate %49, %50, %51, %52 in 0 : vector<1x8x8xf32>, vector<1x8x8xf32>, vector<1x8x8xf32>, vector<1x8x8xf32> -> vector<4x8x8xf32>
    %54 = vector.extract_strided_slice %35 {offsets = [0, 0], sizes = [8, 8], strides = [1, 1]} : vector<8x32xf32> to vector<8x8xf32>
    %55 = vector.extract_strided_slice %35 {offsets = [0, 8], sizes = [8, 8], strides = [1, 1]} : vector<8x32xf32> to vector<8x8xf32>
    %56 = vector.extract_strided_slice %35 {offsets = [0, 16], sizes = [8, 8], strides = [1, 1]} : vector<8x32xf32> to vector<8x8xf32>
    %57 = vector.extract_strided_slice %35 {offsets = [0, 24], sizes = [8, 8], strides = [1, 1]} : vector<8x32xf32> to vector<8x8xf32>
    %58 = vector.shape_cast %54 : vector<8x8xf32> to vector<1x8x8xf32>
    %59 = vector.shape_cast %55 : vector<8x8xf32> to vector<1x8x8xf32>
    %60 = vector.shape_cast %56 : vector<8x8xf32> to vector<1x8x8xf32>
    %61 = vector.shape_cast %57 : vector<8x8xf32> to vector<1x8x8xf32>
    %62 = tpu.concatenate %58, %59, %60, %61 in 0 : vector<1x8x8xf32>, vector<1x8x8xf32>, vector<1x8x8xf32>, vector<1x8x8xf32> -> vector<4x8x8xf32>
    "tpu.trace_start"() <{level = 10 : i32, message = "hqd,hkd->hqk"}> : () -> ()
    %cst_20 = arith.constant dense<0.000000e+00> : vector<4x8x8xf32>
    %63 = tpu.matmul %44, %53, %cst_20 {dimension_numbers = #tpu.dot_dimension_numbers<[2], [2], [1], [1], [0, 0, 0, 1, 1, 1], [0], [0]>} : vector<4x8x8xf32>, vector<4x8x8xf32>, vector<4x8x8xf32> -> vector<4x8x8xf32>
    "tpu.trace_stop"() : () -> ()
    %cst_21 = arith.constant 0.353553385 : f32
    %64 = vector.broadcast %cst_21 : f32 to vector<4x8x8xf32>
    %65 = arith.mulf %63, %64 : vector<4x8x8xf32>
    %66 = vector.extract_strided_slice %3 {offsets = [0, 0], sizes = [1, 8], strides = [1, 1]} : vector<2x8xf32> to vector<1x8xf32>
    %67 = vector.shape_cast %66 : vector<1x8xf32> to vector<1x1x8xf32>
    %68 = vector.broadcast %67 : vector<1x1x8xf32> to vector<4x8x8xf32>
    %69 = arith.addf %65, %68 : vector<4x8x8xf32>
    %cst_22 = arith.constant dense<0xFF800000> : vector<4x8xf32>
    %70 = vector.multi_reduction <maximumf>, %69, %cst_22 [2] : vector<4x8x8xf32> to vector<4x8xf32>
    %71 = vector.shape_cast %70 : vector<4x8xf32> to vector<4x8x1xf32>
    %72 = vector.broadcast %71 : vector<4x8x1xf32> to vector<4x8x8xf32>
    %73 = arith.subf %69, %72 : vector<4x8x8xf32>
    %74 = math.exp %73 : vector<4x8x8xf32>
    %cst_23 = arith.constant dense<0.000000e+00> : vector<4x8xf32>
    %75 = vector.multi_reduction <add>, %74, %cst_23 [2] : vector<4x8x8xf32> to vector<4x8xf32>
    %76 = vector.shape_cast %75 : vector<4x8xf32> to vector<4x8x1xf32>
    %77 = tpu.reciprocal %76 {approx = true} : vector<4x8x1xf32> -> vector<4x8x1xf32>
    %78 = vector.broadcast %77 : vector<4x8x1xf32> to vector<4x8x8xf32>
    %79 = arith.mulf %74, %78 : vector<4x8x8xf32>
    "tpu.trace_start"() <{level = 10 : i32, message = "hqk,hkd->hqd"}> : () -> ()
    %cst_24 = arith.constant dense<0.000000e+00> : vector<4x8x8xf32>
    %80 = tpu.matmul %79, %62, %cst_24 {dimension_numbers = #tpu.dot_dimension_numbers<[2], [1], [1], [2], [0, 0, 0, 1, 1, 2], [0], [0]>} : vector<4x8x8xf32>, vector<4x8x8xf32>, vector<4x8x8xf32> -> vector<4x8x8xf32>
    "tpu.trace_stop"() : () -> ()
    %81 = vector.extract_strided_slice %80 {offsets = [0, 0, 0], sizes = [1, 8, 8], strides = [1, 1, 1]} : vector<4x8x8xf32> to vector<1x8x8xf32>
    %82 = vector.shape_cast %81 : vector<1x8x8xf32> to vector<8x8xf32>
    %c0_25 = arith.constant 0 : index
    %c0_26 = arith.constant 0 : index
    %c0_27 = arith.constant 0 : index
    %c0_28 = arith.constant 0 : index
    %83 = vector.load %arg7[%c0_25, %c0_26, %c0_27, %c0_28] : memref<3x4x8x32xf32, #tpu.memory_space<vmem>>, vector<1x1x8x32xf32>
    %84 = vector.shape_cast %83 : vector<1x1x8x32xf32> to vector<8x32xf32>
    %cst_29 = arith.constant dense<0.000000e+00> : vector<8x32xf32>
    %85 = tpu.matmul %82, %84, %cst_29 {dimension_numbers = #tpu.dot_dimension_numbers<[1], [0], [0], [1], [0, 0, 1, 1], [], []>} : vector<8x8xf32>, vector<8x32xf32>, vector<8x32xf32> -> vector<8x32xf32>
    %86 = vector.extract_strided_slice %80 {offsets = [1, 0, 0], sizes = [1, 8, 8], strides = [1, 1, 1]} : vector<4x8x8xf32> to vector<1x8x8xf32>
    %87 = vector.shape_cast %86 : vector<1x8x8xf32> to vector<8x8xf32>
    %c0_30 = arith.constant 0 : index
    %c1 = arith.constant 1 : index
    %c0_31 = arith.constant 0 : index
    %c0_32 = arith.constant 0 : index
    %88 = vector.load %arg7[%c0_30, %c1, %c0_31, %c0_32] : memref<3x4x8x32xf32, #tpu.memory_space<vmem>>, vector<1x1x8x32xf32>
    %89 = vector.shape_cast %88 : vector<1x1x8x32xf32> to vector<8x32xf32>
    %cst_33 = arith.constant dense<0.000000e+00> : vector<8x32xf32>
    %90 = tpu.matmul %87, %89, %cst_33 {dimension_numbers = #tpu.dot_dimension_numbers<[1], [0], [0], [1], [0, 0, 1, 1], [], []>} : vector<8x8xf32>, vector<8x32xf32>, vector<8x32xf32> -> vector<8x32xf32>
    %91 = arith.addf %85, %90 : vector<8x32xf32>
    %92 = vector.extract_strided_slice %80 {offsets = [2, 0, 0], sizes = [1, 8, 8], strides = [1, 1, 1]} : vector<4x8x8xf32> to vector<1x8x8xf32>
    %93 = vector.shape_cast %92 : vector<1x8x8xf32> to vector<8x8xf32>
    %c0_34 = arith.constant 0 : index
    %c2 = arith.constant 2 : index
    %c0_35 = arith.constant 0 : index
    %c0_36 = arith.constant 0 : index
    %94 = vector.load %arg7[%c0_34, %c2, %c0_35, %c0_36] : memref<3x4x8x32xf32, #tpu.memory_space<vmem>>, vector<1x1x8x32xf32>
    %95 = vector.shape_cast %94 : vector<1x1x8x32xf32> to vector<8x32xf32>
    %cst_37 = arith.constant dense<0.000000e+00> : vector<8x32xf32>
    %96 = tpu.matmul %93, %95, %cst_37 {dimension_numbers = #tpu.dot_dimension_numbers<[1], [0], [0], [1], [0, 0, 1, 1], [], []>} : vector<8x8xf32>, vector<8x32xf32>, vector<8x32xf32> -> vector<8x32xf32>
    %97 = arith.addf %91, %96 : vector<8x32xf32>
    %98 = vector.extract_strided_slice %80 {offsets = [3, 0, 0], sizes = [1, 8, 8], strides = [1, 1, 1]} : vector<4x8x8xf32> to vector<1x8x8xf32>
    %99 = vector.shape_cast %98 : vector<1x8x8xf32> to vector<8x8xf32>
    %c0_38 = arith.constant 0 : index
    %c3 = arith.constant 3 : index
    %c0_39 = arith.constant 0 : index
    %c0_40 = arith.constant 0 : index
    %100 = vector.load %arg7[%c0_38, %c3, %c0_39, %c0_40] : memref<3x4x8x32xf32, #tpu.memory_space<vmem>>, vector<1x1x8x32xf32>
    %101 = vector.shape_cast %100 : vector<1x1x8x32xf32> to vector<8x32xf32>
    %cst_41 = arith.constant dense<0.000000e+00> : vector<8x32xf32>
    %102 = tpu.matmul %99, %101, %cst_41 {dimension_numbers = #tpu.dot_dimension_numbers<[1], [0], [0], [1], [0, 0, 1, 1], [], []>} : vector<8x8xf32>, vector<8x32xf32>, vector<8x32xf32> -> vector<8x32xf32>
    %103 = arith.addf %97, %102 : vector<8x32xf32>
    %104 = vector.extract_strided_slice %32 {offsets = [8, 0], sizes = [8, 32], strides = [1, 1]} : vector<16x96xf32> to vector<8x32xf32>
    %105 = vector.extract_strided_slice %32 {offsets = [8, 32], sizes = [8, 32], strides = [1, 1]} : vector<16x96xf32> to vector<8x32xf32>
    %106 = vector.extract_strided_slice %32 {offsets = [8, 64], sizes = [8, 32], strides = [1, 1]} : vector<16x96xf32> to vector<8x32xf32>
    %107 = vector.extract_strided_slice %104 {offsets = [0, 0], sizes = [8, 8], strides = [1, 1]} : vector<8x32xf32> to vector<8x8xf32>
    %108 = vector.extract_strided_slice %104 {offsets = [0, 8], sizes = [8, 8], strides = [1, 1]} : vector<8x32xf32> to vector<8x8xf32>
    %109 = vector.extract_strided_slice %104 {offsets = [0, 16], sizes = [8, 8], strides = [1, 1]} : vector<8x32xf32> to vector<8x8xf32>
    %110 = vector.extract_strided_slice %104 {offsets = [0, 24], sizes = [8, 8], strides = [1, 1]} : vector<8x32xf32> to vector<8x8xf32>
    %111 = vector.shape_cast %107 : vector<8x8xf32> to vector<1x8x8xf32>
    %112 = vector.shape_cast %108 : vector<8x8xf32> to vector<1x8x8xf32>
    %113 = vector.shape_cast %109 : vector<8x8xf32> to vector<1x8x8xf32>
    %114 = vector.shape_cast %110 : vector<8x8xf32> to vector<1x8x8xf32>
    %115 = tpu.concatenate %111, %112, %113, %114 in 0 : vector<1x8x8xf32>, vector<1x8x8xf32>, vector<1x8x8xf32>, vector<1x8x8xf32> -> vector<4x8x8xf32>
    %116 = vector.extract_strided_slice %105 {offsets = [0, 0], sizes = [8, 8], strides = [1, 1]} : vector<8x32xf32> to vector<8x8xf32>
    %117 = vector.extract_strided_slice %105 {offsets = [0, 8], sizes = [8, 8], strides = [1, 1]} : vector<8x32xf32> to vector<8x8xf32>
    %118 = vector.extract_strided_slice %105 {offsets = [0, 16], sizes = [8, 8], strides = [1, 1]} : vector<8x32xf32> to vector<8x8xf32>
    %119 = vector.extract_strided_slice %105 {offsets = [0, 24], sizes = [8, 8], strides = [1, 1]} : vector<8x32xf32> to vector<8x8xf32>
    %120 = vector.shape_cast %116 : vector<8x8xf32> to vector<1x8x8xf32>
    %121 = vector.shape_cast %117 : vector<8x8xf32> to vector<1x8x8xf32>
    %122 = vector.shape_cast %118 : vector<8x8xf32> to vector<1x8x8xf32>
    %123 = vector.shape_cast %119 : vector<8x8xf32> to vector<1x8x8xf32>
    %124 = tpu.concatenate %120, %121, %122, %123 in 0 : vector<1x8x8xf32>, vector<1x8x8xf32>, vector<1x8x8xf32>, vector<1x8x8xf32> -> vector<4x8x8xf32>
    %125 = vector.extract_strided_slice %106 {offsets = [0, 0], sizes = [8, 8], strides = [1, 1]} : vector<8x32xf32> to vector<8x8xf32>
    %126 = vector.extract_strided_slice %106 {offsets = [0, 8], sizes = [8, 8], strides = [1, 1]} : vector<8x32xf32> to vector<8x8xf32>
    %127 = vector.extract_strided_slice %106 {offsets = [0, 16], sizes = [8, 8], strides = [1, 1]} : vector<8x32xf32> to vector<8x8xf32>
    %128 = vector.extract_strided_slice %106 {offsets = [0, 24], sizes = [8, 8], strides = [1, 1]} : vector<8x32xf32> to vector<8x8xf32>
    %129 = vector.shape_cast %125 : vector<8x8xf32> to vector<1x8x8xf32>
    %130 = vector.shape_cast %126 : vector<8x8xf32> to vector<1x8x8xf32>
    %131 = vector.shape_cast %127 : vector<8x8xf32> to vector<1x8x8xf32>
    %132 = vector.shape_cast %128 : vector<8x8xf32> to vector<1x8x8xf32>
    %133 = tpu.concatenate %129, %130, %131, %132 in 0 : vector<1x8x8xf32>, vector<1x8x8xf32>, vector<1x8x8xf32>, vector<1x8x8xf32> -> vector<4x8x8xf32>
    "tpu.trace_start"() <{level = 10 : i32, message = "hqd,hkd->hqk"}> : () -> ()
    %cst_42 = arith.constant dense<0.000000e+00> : vector<4x8x8xf32>
    %134 = tpu.matmul %115, %124, %cst_42 {dimension_numbers = #tpu.dot_dimension_numbers<[2], [2], [1], [1], [0, 0, 0, 1, 1, 1], [0], [0]>} : vector<4x8x8xf32>, vector<4x8x8xf32>, vector<4x8x8xf32> -> vector<4x8x8xf32>
    "tpu.trace_stop"() : () -> ()
    %cst_43 = arith.constant 0.353553385 : f32
    %135 = vector.broadcast %cst_43 : f32 to vector<4x8x8xf32>
    %136 = arith.mulf %134, %135 : vector<4x8x8xf32>
    %137 = vector.extract_strided_slice %3 {offsets = [1, 0], sizes = [1, 8], strides = [1, 1]} : vector<2x8xf32> to vector<1x8xf32>
    %138 = vector.shape_cast %137 : vector<1x8xf32> to vector<1x1x8xf32>
    %139 = vector.broadcast %138 : vector<1x1x8xf32> to vector<4x8x8xf32>
    %140 = arith.addf %136, %139 : vector<4x8x8xf32>
    %cst_44 = arith.constant dense<0xFF800000> : vector<4x8xf32>
    %141 = vector.multi_reduction <maximumf>, %140, %cst_44 [2] : vector<4x8x8xf32> to vector<4x8xf32>
    %142 = vector.shape_cast %141 : vector<4x8xf32> to vector<4x8x1xf32>
    %143 = vector.broadcast %142 : vector<4x8x1xf32> to vector<4x8x8xf32>
    %144 = arith.subf %140, %143 : vector<4x8x8xf32>
    %145 = math.exp %144 : vector<4x8x8xf32>
    %cst_45 = arith.constant dense<0.000000e+00> : vector<4x8xf32>
    %146 = vector.multi_reduction <add>, %145, %cst_45 [2] : vector<4x8x8xf32> to vector<4x8xf32>
    %147 = vector.shape_cast %146 : vector<4x8xf32> to vector<4x8x1xf32>
    %148 = tpu.reciprocal %147 {approx = true} : vector<4x8x1xf32> -> vector<4x8x1xf32>
    %149 = vector.broadcast %148 : vector<4x8x1xf32> to vector<4x8x8xf32>
    %150 = arith.mulf %145, %149 : vector<4x8x8xf32>
    "tpu.trace_start"() <{level = 10 : i32, message = "hqk,hkd->hqd"}> : () -> ()
    %cst_46 = arith.constant dense<0.000000e+00> : vector<4x8x8xf32>
    %151 = tpu.matmul %150, %133, %cst_46 {dimension_numbers = #tpu.dot_dimension_numbers<[2], [1], [1], [2], [0, 0, 0, 1, 1, 2], [0], [0]>} : vector<4x8x8xf32>, vector<4x8x8xf32>, vector<4x8x8xf32> -> vector<4x8x8xf32>
    "tpu.trace_stop"() : () -> ()
    %152 = vector.extract_strided_slice %151 {offsets = [0, 0, 0], sizes = [1, 8, 8], strides = [1, 1, 1]} : vector<4x8x8xf32> to vector<1x8x8xf32>
    %153 = vector.shape_cast %152 : vector<1x8x8xf32> to vector<8x8xf32>
    %c0_47 = arith.constant 0 : index
    %c0_48 = arith.constant 0 : index
    %c0_49 = arith.constant 0 : index
    %c0_50 = arith.constant 0 : index
    %154 = vector.load %arg7[%c0_47, %c0_48, %c0_49, %c0_50] : memref<3x4x8x32xf32, #tpu.memory_space<vmem>>, vector<1x1x8x32xf32>
    %155 = vector.shape_cast %154 : vector<1x1x8x32xf32> to vector<8x32xf32>
    %cst_51 = arith.constant dense<0.000000e+00> : vector<8x32xf32>
    %156 = tpu.matmul %153, %155, %cst_51 {dimension_numbers = #tpu.dot_dimension_numbers<[1], [0], [0], [1], [0, 0, 1, 1], [], []>} : vector<8x8xf32>, vector<8x32xf32>, vector<8x32xf32> -> vector<8x32xf32>
    %157 = vector.extract_strided_slice %151 {offsets = [1, 0, 0], sizes = [1, 8, 8], strides = [1, 1, 1]} : vector<4x8x8xf32> to vector<1x8x8xf32>
    %158 = vector.shape_cast %157 : vector<1x8x8xf32> to vector<8x8xf32>
    %c0_52 = arith.constant 0 : index
    %c1_53 = arith.constant 1 : index
    %c0_54 = arith.constant 0 : index
    %c0_55 = arith.constant 0 : index
    %159 = vector.load %arg7[%c0_52, %c1_53, %c0_54, %c0_55] : memref<3x4x8x32xf32, #tpu.memory_space<vmem>>, vector<1x1x8x32xf32>
    %160 = vector.shape_cast %159 : vector<1x1x8x32xf32> to vector<8x32xf32>
    %cst_56 = arith.constant dense<0.000000e+00> : vector<8x32xf32>
    %161 = tpu.matmul %158, %160, %cst_56 {dimension_numbers = #tpu.dot_dimension_numbers<[1], [0], [0], [1], [0, 0, 1, 1], [], []>} : vector<8x8xf32>, vector<8x32xf32>, vector<8x32xf32> -> vector<8x32xf32>
    %162 = arith.addf %156, %161 : vector<8x32xf32>
    %163 = vector.extract_strided_slice %151 {offsets = [2, 0, 0], sizes = [1, 8, 8], strides = [1, 1, 1]} : vector<4x8x8xf32> to vector<1x8x8xf32>
    %164 = vector.shape_cast %163 : vector<1x8x8xf32> to vector<8x8xf32>
    %c0_57 = arith.constant 0 : index
    %c2_58 = arith.constant 2 : index
    %c0_59 = arith.constant 0 : index
    %c0_60 = arith.constant 0 : index
    %165 = vector.load %arg7[%c0_57, %c2_58, %c0_59, %c0_60] : memref<3x4x8x32xf32, #tpu.memory_space<vmem>>, vector<1x1x8x32xf32>
    %166 = vector.shape_cast %165 : vector<1x1x8x32xf32> to vector<8x32xf32>
    %cst_61 = arith.constant dense<0.000000e+00> : vector<8x32xf32>
    %167 = tpu.matmul %164, %166, %cst_61 {dimension_numbers = #tpu.dot_dimension_numbers<[1], [0], [0], [1], [0, 0, 1, 1], [], []>} : vector<8x8xf32>, vector<8x32xf32>, vector<8x32xf32> -> vector<8x32xf32>
    %168 = arith.addf %162, %167 : vector<8x32xf32>
    %169 = vector.extract_strided_slice %151 {offsets = [3, 0, 0], sizes = [1, 8, 8], strides = [1, 1, 1]} : vector<4x8x8xf32> to vector<1x8x8xf32>
    %170 = vector.shape_cast %169 : vector<1x8x8xf32> to vector<8x8xf32>
    %c0_62 = arith.constant 0 : index
    %c3_63 = arith.constant 3 : index
    %c0_64 = arith.constant 0 : index
    %c0_65 = arith.constant 0 : index
    %171 = vector.load %arg7[%c0_62, %c3_63, %c0_64, %c0_65] : memref<3x4x8x32xf32, #tpu.memory_space<vmem>>, vector<1x1x8x32xf32>
    %172 = vector.shape_cast %171 : vector<1x1x8x32xf32> to vector<8x32xf32>
    %cst_66 = arith.constant dense<0.000000e+00> : vector<8x32xf32>
    %173 = tpu.matmul %170, %172, %cst_66 {dimension_numbers = #tpu.dot_dimension_numbers<[1], [0], [0], [1], [0, 0, 1, 1], [], []>} : vector<8x8xf32>, vector<8x32xf32>, vector<8x32xf32> -> vector<8x32xf32>
    %174 = arith.addf %168, %173 : vector<8x32xf32>
    %175 = tpu.concatenate %103, %174 in 0 : vector<8x32xf32>, vector<8x32xf32> -> vector<16x32xf32>
    %c0_67 = arith.constant 0 : index
    %c0_68 = arith.constant 0 : index
    %c0_69 = arith.constant 0 : index
    %176 = vector.load %arg8[%c0_67, %c0_68, %c0_69] : memref<3x1x32xf32, #tpu.memory_space<vmem>>, vector<1x1x32xf32>
    %177 = vector.shape_cast %176 : vector<1x1x32xf32> to vector<1x32xf32>
    %178 = vector.broadcast %177 : vector<1x32xf32> to vector<16x32xf32>
    %179 = arith.addf %175, %178 : vector<16x32xf32>
    %180 = arith.addf %179, %25 : vector<16x32xf32>
    %c0_70 = arith.constant 0 : index
    %c0_71 = arith.constant 0 : index
    %c0_72 = arith.constant 0 : index
    %181 = vector.load %arg9[%c0_70, %c0_71, %c0_72] : memref<3x1x32xf32, #tpu.memory_space<vmem>>, vector<1x1x32xf32>
    %182 = vector.shape_cast %181 : vector<1x1x32xf32> to vector<1x32xf32>
    %c0_73 = arith.constant 0 : index
    %c0_74 = arith.constant 0 : index
    %c0_75 = arith.constant 0 : index
    %183 = vector.load %arg10[%c0_73, %c0_74, %c0_75] : memref<3x1x32xf32, #tpu.memory_space<vmem>>, vector<1x1x32xf32>
    %184 = vector.shape_cast %183 : vector<1x1x32xf32> to vector<1x32xf32>
    %cst_76 = arith.constant dense<0.000000e+00> : vector<16xf32>
    %185 = vector.multi_reduction <add>, %180, %cst_76 [1] : vector<16x32xf32> to vector<16xf32>
    %186 = vector.shape_cast %185 : vector<16xf32> to vector<16x1xf32>
    %cst_77 = arith.constant 3.200000e+01 : f32
    %187 = vector.broadcast %cst_77 : f32 to vector<16x1xf32>
    %188 = arith.divf %186, %187 : vector<16x1xf32>
    %189 = vector.broadcast %188 : vector<16x1xf32> to vector<16x32xf32>
    %190 = arith.subf %180, %189 : vector<16x32xf32>
    %191 = arith.mulf %190, %190 : vector<16x32xf32>
    %cst_78 = arith.constant dense<0.000000e+00> : vector<16xf32>
    %192 = vector.multi_reduction <add>, %191, %cst_78 [1] : vector<16x32xf32> to vector<16xf32>
    %193 = vector.shape_cast %192 : vector<16xf32> to vector<16x1xf32>
    %cst_79 = arith.constant 3.200000e+01 : f32
    %194 = vector.broadcast %cst_79 : f32 to vector<16x1xf32>
    %195 = arith.divf %193, %194 : vector<16x1xf32>
    %cst_80 = arith.constant 9.99999996E-13 : f32
    %196 = vector.broadcast %cst_80 : f32 to vector<16x1xf32>
    %197 = arith.addf %195, %196 : vector<16x1xf32>
    %198 = math.rsqrt %197 : vector<16x1xf32>
    %199 = vector.broadcast %198 : vector<16x1xf32> to vector<16x32xf32>
    %200 = arith.mulf %190, %199 : vector<16x32xf32>
    %201 = vector.broadcast %182 : vector<1x32xf32> to vector<16x32xf32>
    %202 = arith.mulf %200, %201 : vector<16x32xf32>
    %203 = vector.broadcast %184 : vector<1x32xf32> to vector<16x32xf32>
    %204 = arith.addf %202, %203 : vector<16x32xf32>
    %c0_81 = arith.constant 0 : index
    %c0_82 = arith.constant 0 : index
    %c0_83 = arith.constant 0 : index
    %205 = vector.load %arg11[%c0_81, %c0_82, %c0_83] : memref<3x32x64xf32, #tpu.memory_space<vmem>>, vector<1x32x64xf32>
    %206 = vector.shape_cast %205 : vector<1x32x64xf32> to vector<32x64xf32>
    %cst_84 = arith.constant dense<0.000000e+00> : vector<16x64xf32>
    %207 = tpu.matmul %204, %206, %cst_84 {dimension_numbers = #tpu.dot_dimension_numbers<[1], [0], [0], [1], [0, 0, 1, 1], [], []>} : vector<16x32xf32>, vector<32x64xf32>, vector<16x64xf32> -> vector<16x64xf32>
    %c0_85 = arith.constant 0 : index
    %c0_86 = arith.constant 0 : index
    %c0_87 = arith.constant 0 : index
    %208 = vector.load %arg12[%c0_85, %c0_86, %c0_87] : memref<3x1x64xf32, #tpu.memory_space<vmem>>, vector<1x1x64xf32>
    %209 = vector.shape_cast %208 : vector<1x1x64xf32> to vector<1x64xf32>
    %210 = vector.broadcast %209 : vector<1x64xf32> to vector<16x64xf32>
    %211 = arith.addf %207, %210 : vector<16x64xf32>
    %cst_88 = arith.constant 5.000000e-01 : f32
    %212 = vector.broadcast %cst_88 : f32 to vector<16x64xf32>
    %213 = arith.mulf %212, %211 : vector<16x64xf32>
    %cst_89 = arith.constant 0.707106769 : f32
    %214 = vector.broadcast %cst_89 : f32 to vector<16x64xf32>
    %215 = arith.mulf %211, %214 : vector<16x64xf32>
    %cst_90 = arith.constant 0.000000e+00 : f32
    %216 = vector.broadcast %cst_90 : f32 to vector<16x64xf32>
    %217 = arith.cmpf oge, %215, %216 : vector<16x64xf32>
    %cst_91 = arith.constant 1.000000e+00 : f32
    %cst_92 = arith.constant -1.000000e+00 : f32
    %218 = vector.broadcast %cst_91 : f32 to vector<16x64xf32>
    %219 = vector.broadcast %cst_92 : f32 to vector<16x64xf32>
    %220 = arith.select %217, %218, %219 : vector<16x64xi1>, vector<16x64xf32>
    %221 = math.absf %215 : vector<16x64xf32>
    %cst_93 = arith.constant 0.327591091 : f32
    %222 = vector.broadcast %cst_93 : f32 to vector<16x64xf32>
    %223 = arith.mulf %222, %221 : vector<16x64xf32>
    %cst_94 = arith.constant 1.000000e+00 : f32
    %224 = vector.broadcast %cst_94 : f32 to vector<16x64xf32>
    %225 = arith.addf %224, %223 : vector<16x64xf32>
    %cst_95 = arith.constant 1.000000e+00 : f32
    %226 = vector.broadcast %cst_95 : f32 to vector<16x64xf32>
    %227 = arith.divf %226, %225 : vector<16x64xf32>
    %cst_96 = arith.constant 1.06140542 : f32
    %228 = vector.broadcast %cst_96 : f32 to vector<16x64xf32>
    %229 = arith.mulf %228, %227 : vector<16x64xf32>
    %cst_97 = arith.constant -1.45315206 : f32
    %230 = vector.broadcast %cst_97 : f32 to vector<16x64xf32>
    %231 = arith.addf %229, %230 : vector<16x64xf32>
    %232 = arith.mulf %231, %227 : vector<16x64xf32>
    %cst_98 = arith.constant 1.42141378 : f32
    %233 = vector.broadcast %cst_98 : f32 to vector<16x64xf32>
    %234 = arith.addf %232, %233 : vector<16x64xf32>
    %235 = arith.mulf %234, %227 : vector<16x64xf32>
    %cst_99 = arith.constant -0.284496725 : f32
    %236 = vector.broadcast %cst_99 : f32 to vector<16x64xf32>
    %237 = arith.addf %235, %236 : vector<16x64xf32>
    %238 = arith.mulf %237, %227 : vector<16x64xf32>
    %cst_100 = arith.constant 0.254829586 : f32
    %239 = vector.broadcast %cst_100 : f32 to vector<16x64xf32>
    %240 = arith.addf %238, %239 : vector<16x64xf32>
    %241 = arith.mulf %240, %227 : vector<16x64xf32>
    %cst_101 = arith.constant 0.000000e+00 : f32
    %242 = vector.broadcast %cst_101 : f32 to vector<16x64xf32>
    %243 = arith.subf %242, %221 : vector<16x64xf32>
    %244 = arith.mulf %243, %221 : vector<16x64xf32>
    %245 = math.exp %244 : vector<16x64xf32>
    %246 = arith.mulf %241, %245 : vector<16x64xf32>
    %cst_102 = arith.constant 1.000000e+00 : f32
    %247 = vector.broadcast %cst_102 : f32 to vector<16x64xf32>
    %248 = arith.subf %247, %246 : vector<16x64xf32>
    %249 = arith.mulf %220, %248 : vector<16x64xf32>
    %cst_103 = arith.constant 1.000000e+00 : f32
    %250 = vector.broadcast %cst_103 : f32 to vector<16x64xf32>
    %251 = arith.addf %250, %249 : vector<16x64xf32>
    %252 = arith.mulf %213, %251 : vector<16x64xf32>
    %c0_104 = arith.constant 0 : index
    %c0_105 = arith.constant 0 : index
    %c0_106 = arith.constant 0 : index
    %253 = vector.load %arg13[%c0_104, %c0_105, %c0_106] : memref<3x64x32xf32, #tpu.memory_space<vmem>>, vector<1x64x32xf32>
    %254 = vector.shape_cast %253 : vector<1x64x32xf32> to vector<64x32xf32>
    %cst_107 = arith.constant dense<0.000000e+00> : vector<16x32xf32>
    %255 = tpu.matmul %252, %254, %cst_107 {dimension_numbers = #tpu.dot_dimension_numbers<[1], [0], [0], [1], [0, 0, 1, 1], [], []>} : vector<16x64xf32>, vector<64x32xf32>, vector<16x32xf32> -> vector<16x32xf32>
    %c0_108 = arith.constant 0 : index
    %c0_109 = arith.constant 0 : index
    %c0_110 = arith.constant 0 : index
    %256 = vector.load %arg14[%c0_108, %c0_109, %c0_110] : memref<3x1x32xf32, #tpu.memory_space<vmem>>, vector<1x1x32xf32>
    %257 = vector.shape_cast %256 : vector<1x1x32xf32> to vector<1x32xf32>
    %258 = vector.broadcast %257 : vector<1x32xf32> to vector<16x32xf32>
    %259 = arith.addf %255, %258 : vector<16x32xf32>
    %260 = arith.addf %259, %204 : vector<16x32xf32>
    %c0_111 = arith.constant 0 : index
    %c0_112 = arith.constant 0 : index
    %c0_113 = arith.constant 0 : index
    %261 = vector.load %arg15[%c0_111, %c0_112, %c0_113] : memref<3x1x32xf32, #tpu.memory_space<vmem>>, vector<1x1x32xf32>
    %262 = vector.shape_cast %261 : vector<1x1x32xf32> to vector<1x32xf32>
    %c0_114 = arith.constant 0 : index
    %c0_115 = arith.constant 0 : index
    %c0_116 = arith.constant 0 : index
    %263 = vector.load %arg16[%c0_114, %c0_115, %c0_116] : memref<3x1x32xf32, #tpu.memory_space<vmem>>, vector<1x1x32xf32>
    %264 = vector.shape_cast %263 : vector<1x1x32xf32> to vector<1x32xf32>
    %cst_117 = arith.constant dense<0.000000e+00> : vector<16xf32>
    %265 = vector.multi_reduction <add>, %260, %cst_117 [1] : vector<16x32xf32> to vector<16xf32>
    %266 = vector.shape_cast %265 : vector<16xf32> to vector<16x1xf32>
    %cst_118 = arith.constant 3.200000e+01 : f32
    %267 = vector.broadcast %cst_118 : f32 to vector<16x1xf32>
    %268 = arith.divf %266, %267 : vector<16x1xf32>
    %269 = vector.broadcast %268 : vector<16x1xf32> to vector<16x32xf32>
    %270 = arith.subf %260, %269 : vector<16x32xf32>
    %271 = arith.mulf %270, %270 : vector<16x32xf32>
    %cst_119 = arith.constant dense<0.000000e+00> : vector<16xf32>
    %272 = vector.multi_reduction <add>, %271, %cst_119 [1] : vector<16x32xf32> to vector<16xf32>
    %273 = vector.shape_cast %272 : vector<16xf32> to vector<16x1xf32>
    %cst_120 = arith.constant 3.200000e+01 : f32
    %274 = vector.broadcast %cst_120 : f32 to vector<16x1xf32>
    %275 = arith.divf %273, %274 : vector<16x1xf32>
    %cst_121 = arith.constant 9.99999996E-13 : f32
    %276 = vector.broadcast %cst_121 : f32 to vector<16x1xf32>
    %277 = arith.addf %275, %276 : vector<16x1xf32>
    %278 = math.rsqrt %277 : vector<16x1xf32>
    %279 = vector.broadcast %278 : vector<16x1xf32> to vector<16x32xf32>
    %280 = arith.mulf %270, %279 : vector<16x32xf32>
    %281 = vector.broadcast %262 : vector<1x32xf32> to vector<16x32xf32>
    %282 = arith.mulf %280, %281 : vector<16x32xf32>
    %283 = vector.broadcast %264 : vector<1x32xf32> to vector<16x32xf32>
    %284 = arith.addf %282, %283 : vector<16x32xf32>
    %c1_122 = arith.constant 1 : index
    %c0_123 = arith.constant 0 : index
    %c0_124 = arith.constant 0 : index
    %285 = vector.load %arg5[%c1_122, %c0_123, %c0_124] : memref<3x32x96xf32, #tpu.memory_space<vmem>>, vector<1x32x96xf32>
    %286 = vector.shape_cast %285 : vector<1x32x96xf32> to vector<32x96xf32>
    %cst_125 = arith.constant dense<0.000000e+00> : vector<16x96xf32>
    %287 = tpu.matmul %284, %286, %cst_125 {dimension_numbers = #tpu.dot_dimension_numbers<[1], [0], [0], [1], [0, 0, 1, 1], [], []>} : vector<16x32xf32>, vector<32x96xf32>, vector<16x96xf32> -> vector<16x96xf32>
    %c1_126 = arith.constant 1 : index
    %c0_127 = arith.constant 0 : index
    %c0_128 = arith.constant 0 : index
    %288 = vector.load %arg6[%c1_126, %c0_127, %c0_128] : memref<3x1x96xf32, #tpu.memory_space<vmem>>, vector<1x1x96xf32>
    %289 = vector.shape_cast %288 : vector<1x1x96xf32> to vector<1x96xf32>
    %290 = vector.broadcast %289 : vector<1x96xf32> to vector<16x96xf32>
    %291 = arith.addf %287, %290 : vector<16x96xf32>
    %292 = vector.extract_strided_slice %291 {offsets = [0, 0], sizes = [8, 32], strides = [1, 1]} : vector<16x96xf32> to vector<8x32xf32>
    %293 = vector.extract_strided_slice %291 {offsets = [0, 32], sizes = [8, 32], strides = [1, 1]} : vector<16x96xf32> to vector<8x32xf32>
    %294 = vector.extract_strided_slice %291 {offsets = [0, 64], sizes = [8, 32], strides = [1, 1]} : vector<16x96xf32> to vector<8x32xf32>
    %295 = vector.extract_strided_slice %292 {offsets = [0, 0], sizes = [8, 8], strides = [1, 1]} : vector<8x32xf32> to vector<8x8xf32>
    %296 = vector.extract_strided_slice %292 {offsets = [0, 8], sizes = [8, 8], strides = [1, 1]} : vector<8x32xf32> to vector<8x8xf32>
    %297 = vector.extract_strided_slice %292 {offsets = [0, 16], sizes = [8, 8], strides = [1, 1]} : vector<8x32xf32> to vector<8x8xf32>
    %298 = vector.extract_strided_slice %292 {offsets = [0, 24], sizes = [8, 8], strides = [1, 1]} : vector<8x32xf32> to vector<8x8xf32>
    %299 = vector.shape_cast %295 : vector<8x8xf32> to vector<1x8x8xf32>
    %300 = vector.shape_cast %296 : vector<8x8xf32> to vector<1x8x8xf32>
    %301 = vector.shape_cast %297 : vector<8x8xf32> to vector<1x8x8xf32>
    %302 = vector.shape_cast %298 : vector<8x8xf32> to vector<1x8x8xf32>
    %303 = tpu.concatenate %299, %300, %301, %302 in 0 : vector<1x8x8xf32>, vector<1x8x8xf32>, vector<1x8x8xf32>, vector<1x8x8xf32> -> vector<4x8x8xf32>
    %304 = vector.extract_strided_slice %293 {offsets = [0, 0], sizes = [8, 8], strides = [1, 1]} : vector<8x32xf32> to vector<8x8xf32>
    %305 = vector.extract_strided_slice %293 {offsets = [0, 8], sizes = [8, 8], strides = [1, 1]} : vector<8x32xf32> to vector<8x8xf32>
    %306 = vector.extract_strided_slice %293 {offsets = [0, 16], sizes = [8, 8], strides = [1, 1]} : vector<8x32xf32> to vector<8x8xf32>
    %307 = vector.extract_strided_slice %293 {offsets = [0, 24], sizes = [8, 8], strides = [1, 1]} : vector<8x32xf32> to vector<8x8xf32>
    %308 = vector.shape_cast %304 : vector<8x8xf32> to vector<1x8x8xf32>
    %309 = vector.shape_cast %305 : vector<8x8xf32> to vector<1x8x8xf32>
    %310 = vector.shape_cast %306 : vector<8x8xf32> to vector<1x8x8xf32>
    %311 = vector.shape_cast %307 : vector<8x8xf32> to vector<1x8x8xf32>
    %312 = tpu.concatenate %308, %309, %310, %311 in 0 : vector<1x8x8xf32>, vector<1x8x8xf32>, vector<1x8x8xf32>, vector<1x8x8xf32> -> vector<4x8x8xf32>
    %313 = vector.extract_strided_slice %294 {offsets = [0, 0], sizes = [8, 8], strides = [1, 1]} : vector<8x32xf32> to vector<8x8xf32>
    %314 = vector.extract_strided_slice %294 {offsets = [0, 8], sizes = [8, 8], strides = [1, 1]} : vector<8x32xf32> to vector<8x8xf32>
    %315 = vector.extract_strided_slice %294 {offsets = [0, 16], sizes = [8, 8], strides = [1, 1]} : vector<8x32xf32> to vector<8x8xf32>
    %316 = vector.extract_strided_slice %294 {offsets = [0, 24], sizes = [8, 8], strides = [1, 1]} : vector<8x32xf32> to vector<8x8xf32>
    %317 = vector.shape_cast %313 : vector<8x8xf32> to vector<1x8x8xf32>
    %318 = vector.shape_cast %314 : vector<8x8xf32> to vector<1x8x8xf32>
    %319 = vector.shape_cast %315 : vector<8x8xf32> to vector<1x8x8xf32>
    %320 = vector.shape_cast %316 : vector<8x8xf32> to vector<1x8x8xf32>
    %321 = tpu.concatenate %317, %318, %319, %320 in 0 : vector<1x8x8xf32>, vector<1x8x8xf32>, vector<1x8x8xf32>, vector<1x8x8xf32> -> vector<4x8x8xf32>
    "tpu.trace_start"() <{level = 10 : i32, message = "hqd,hkd->hqk"}> : () -> ()
    %cst_129 = arith.constant dense<0.000000e+00> : vector<4x8x8xf32>
    %322 = tpu.matmul %303, %312, %cst_129 {dimension_numbers = #tpu.dot_dimension_numbers<[2], [2], [1], [1], [0, 0, 0, 1, 1, 1], [0], [0]>} : vector<4x8x8xf32>, vector<4x8x8xf32>, vector<4x8x8xf32> -> vector<4x8x8xf32>
    "tpu.trace_stop"() : () -> ()
    %cst_130 = arith.constant 0.353553385 : f32
    %323 = vector.broadcast %cst_130 : f32 to vector<4x8x8xf32>
    %324 = arith.mulf %322, %323 : vector<4x8x8xf32>
    %325 = vector.extract_strided_slice %3 {offsets = [0, 0], sizes = [1, 8], strides = [1, 1]} : vector<2x8xf32> to vector<1x8xf32>
    %326 = vector.shape_cast %325 : vector<1x8xf32> to vector<1x1x8xf32>
    %327 = vector.broadcast %326 : vector<1x1x8xf32> to vector<4x8x8xf32>
    %328 = arith.addf %324, %327 : vector<4x8x8xf32>
    %cst_131 = arith.constant dense<0xFF800000> : vector<4x8xf32>
    %329 = vector.multi_reduction <maximumf>, %328, %cst_131 [2] : vector<4x8x8xf32> to vector<4x8xf32>
    %330 = vector.shape_cast %329 : vector<4x8xf32> to vector<4x8x1xf32>
    %331 = vector.broadcast %330 : vector<4x8x1xf32> to vector<4x8x8xf32>
    %332 = arith.subf %328, %331 : vector<4x8x8xf32>
    %333 = math.exp %332 : vector<4x8x8xf32>
    %cst_132 = arith.constant dense<0.000000e+00> : vector<4x8xf32>
    %334 = vector.multi_reduction <add>, %333, %cst_132 [2] : vector<4x8x8xf32> to vector<4x8xf32>
    %335 = vector.shape_cast %334 : vector<4x8xf32> to vector<4x8x1xf32>
    %336 = tpu.reciprocal %335 {approx = true} : vector<4x8x1xf32> -> vector<4x8x1xf32>
    %337 = vector.broadcast %336 : vector<4x8x1xf32> to vector<4x8x8xf32>
    %338 = arith.mulf %333, %337 : vector<4x8x8xf32>
    "tpu.trace_start"() <{level = 10 : i32, message = "hqk,hkd->hqd"}> : () -> ()
    %cst_133 = arith.constant dense<0.000000e+00> : vector<4x8x8xf32>
    %339 = tpu.matmul %338, %321, %cst_133 {dimension_numbers = #tpu.dot_dimension_numbers<[2], [1], [1], [2], [0, 0, 0, 1, 1, 2], [0], [0]>} : vector<4x8x8xf32>, vector<4x8x8xf32>, vector<4x8x8xf32> -> vector<4x8x8xf32>
    "tpu.trace_stop"() : () -> ()
    %340 = vector.extract_strided_slice %339 {offsets = [0, 0, 0], sizes = [1, 8, 8], strides = [1, 1, 1]} : vector<4x8x8xf32> to vector<1x8x8xf32>
    %341 = vector.shape_cast %340 : vector<1x8x8xf32> to vector<8x8xf32>
    %c1_134 = arith.constant 1 : index
    %c0_135 = arith.constant 0 : index
    %c0_136 = arith.constant 0 : index
    %c0_137 = arith.constant 0 : index
    %342 = vector.load %arg7[%c1_134, %c0_135, %c0_136, %c0_137] : memref<3x4x8x32xf32, #tpu.memory_space<vmem>>, vector<1x1x8x32xf32>
    %343 = vector.shape_cast %342 : vector<1x1x8x32xf32> to vector<8x32xf32>
    %cst_138 = arith.constant dense<0.000000e+00> : vector<8x32xf32>
    %344 = tpu.matmul %341, %343, %cst_138 {dimension_numbers = #tpu.dot_dimension_numbers<[1], [0], [0], [1], [0, 0, 1, 1], [], []>} : vector<8x8xf32>, vector<8x32xf32>, vector<8x32xf32> -> vector<8x32xf32>
    %345 = vector.extract_strided_slice %339 {offsets = [1, 0, 0], sizes = [1, 8, 8], strides = [1, 1, 1]} : vector<4x8x8xf32> to vector<1x8x8xf32>
    %346 = vector.shape_cast %345 : vector<1x8x8xf32> to vector<8x8xf32>
    %c1_139 = arith.constant 1 : index
    %c1_140 = arith.constant 1 : index
    %c0_141 = arith.constant 0 : index
    %c0_142 = arith.constant 0 : index
    %347 = vector.load %arg7[%c1_139, %c1_140, %c0_141, %c0_142] : memref<3x4x8x32xf32, #tpu.memory_space<vmem>>, vector<1x1x8x32xf32>
    %348 = vector.shape_cast %347 : vector<1x1x8x32xf32> to vector<8x32xf32>
    %cst_143 = arith.constant dense<0.000000e+00> : vector<8x32xf32>
    %349 = tpu.matmul %346, %348, %cst_143 {dimension_numbers = #tpu.dot_dimension_numbers<[1], [0], [0], [1], [0, 0, 1, 1], [], []>} : vector<8x8xf32>, vector<8x32xf32>, vector<8x32xf32> -> vector<8x32xf32>
    %350 = arith.addf %344, %349 : vector<8x32xf32>
    %351 = vector.extract_strided_slice %339 {offsets = [2, 0, 0], sizes = [1, 8, 8], strides = [1, 1, 1]} : vector<4x8x8xf32> to vector<1x8x8xf32>
    %352 = vector.shape_cast %351 : vector<1x8x8xf32> to vector<8x8xf32>
    %c1_144 = arith.constant 1 : index
    %c2_145 = arith.constant 2 : index
    %c0_146 = arith.constant 0 : index
    %c0_147 = arith.constant 0 : index
    %353 = vector.load %arg7[%c1_144, %c2_145, %c0_146, %c0_147] : memref<3x4x8x32xf32, #tpu.memory_space<vmem>>, vector<1x1x8x32xf32>
    %354 = vector.shape_cast %353 : vector<1x1x8x32xf32> to vector<8x32xf32>
    %cst_148 = arith.constant dense<0.000000e+00> : vector<8x32xf32>
    %355 = tpu.matmul %352, %354, %cst_148 {dimension_numbers = #tpu.dot_dimension_numbers<[1], [0], [0], [1], [0, 0, 1, 1], [], []>} : vector<8x8xf32>, vector<8x32xf32>, vector<8x32xf32> -> vector<8x32xf32>
    %356 = arith.addf %350, %355 : vector<8x32xf32>
    %357 = vector.extract_strided_slice %339 {offsets = [3, 0, 0], sizes = [1, 8, 8], strides = [1, 1, 1]} : vector<4x8x8xf32> to vector<1x8x8xf32>
    %358 = vector.shape_cast %357 : vector<1x8x8xf32> to vector<8x8xf32>
    %c1_149 = arith.constant 1 : index
    %c3_150 = arith.constant 3 : index
    %c0_151 = arith.constant 0 : index
    %c0_152 = arith.constant 0 : index
    %359 = vector.load %arg7[%c1_149, %c3_150, %c0_151, %c0_152] : memref<3x4x8x32xf32, #tpu.memory_space<vmem>>, vector<1x1x8x32xf32>
    %360 = vector.shape_cast %359 : vector<1x1x8x32xf32> to vector<8x32xf32>
    %cst_153 = arith.constant dense<0.000000e+00> : vector<8x32xf32>
    %361 = tpu.matmul %358, %360, %cst_153 {dimension_numbers = #tpu.dot_dimension_numbers<[1], [0], [0], [1], [0, 0, 1, 1], [], []>} : vector<8x8xf32>, vector<8x32xf32>, vector<8x32xf32> -> vector<8x32xf32>
    %362 = arith.addf %356, %361 : vector<8x32xf32>
    %363 = vector.extract_strided_slice %291 {offsets = [8, 0], sizes = [8, 32], strides = [1, 1]} : vector<16x96xf32> to vector<8x32xf32>
    %364 = vector.extract_strided_slice %291 {offsets = [8, 32], sizes = [8, 32], strides = [1, 1]} : vector<16x96xf32> to vector<8x32xf32>
    %365 = vector.extract_strided_slice %291 {offsets = [8, 64], sizes = [8, 32], strides = [1, 1]} : vector<16x96xf32> to vector<8x32xf32>
    %366 = vector.extract_strided_slice %363 {offsets = [0, 0], sizes = [8, 8], strides = [1, 1]} : vector<8x32xf32> to vector<8x8xf32>
    %367 = vector.extract_strided_slice %363 {offsets = [0, 8], sizes = [8, 8], strides = [1, 1]} : vector<8x32xf32> to vector<8x8xf32>
    %368 = vector.extract_strided_slice %363 {offsets = [0, 16], sizes = [8, 8], strides = [1, 1]} : vector<8x32xf32> to vector<8x8xf32>
    %369 = vector.extract_strided_slice %363 {offsets = [0, 24], sizes = [8, 8], strides = [1, 1]} : vector<8x32xf32> to vector<8x8xf32>
    %370 = vector.shape_cast %366 : vector<8x8xf32> to vector<1x8x8xf32>
    %371 = vector.shape_cast %367 : vector<8x8xf32> to vector<1x8x8xf32>
    %372 = vector.shape_cast %368 : vector<8x8xf32> to vector<1x8x8xf32>
    %373 = vector.shape_cast %369 : vector<8x8xf32> to vector<1x8x8xf32>
    %374 = tpu.concatenate %370, %371, %372, %373 in 0 : vector<1x8x8xf32>, vector<1x8x8xf32>, vector<1x8x8xf32>, vector<1x8x8xf32> -> vector<4x8x8xf32>
    %375 = vector.extract_strided_slice %364 {offsets = [0, 0], sizes = [8, 8], strides = [1, 1]} : vector<8x32xf32> to vector<8x8xf32>
    %376 = vector.extract_strided_slice %364 {offsets = [0, 8], sizes = [8, 8], strides = [1, 1]} : vector<8x32xf32> to vector<8x8xf32>
    %377 = vector.extract_strided_slice %364 {offsets = [0, 16], sizes = [8, 8], strides = [1, 1]} : vector<8x32xf32> to vector<8x8xf32>
    %378 = vector.extract_strided_slice %364 {offsets = [0, 24], sizes = [8, 8], strides = [1, 1]} : vector<8x32xf32> to vector<8x8xf32>
    %379 = vector.shape_cast %375 : vector<8x8xf32> to vector<1x8x8xf32>
    %380 = vector.shape_cast %376 : vector<8x8xf32> to vector<1x8x8xf32>
    %381 = vector.shape_cast %377 : vector<8x8xf32> to vector<1x8x8xf32>
    %382 = vector.shape_cast %378 : vector<8x8xf32> to vector<1x8x8xf32>
    %383 = tpu.concatenate %379, %380, %381, %382 in 0 : vector<1x8x8xf32>, vector<1x8x8xf32>, vector<1x8x8xf32>, vector<1x8x8xf32> -> vector<4x8x8xf32>
    %384 = vector.extract_strided_slice %365 {offsets = [0, 0], sizes = [8, 8], strides = [1, 1]} : vector<8x32xf32> to vector<8x8xf32>
    %385 = vector.extract_strided_slice %365 {offsets = [0, 8], sizes = [8, 8], strides = [1, 1]} : vector<8x32xf32> to vector<8x8xf32>
    %386 = vector.extract_strided_slice %365 {offsets = [0, 16], sizes = [8, 8], strides = [1, 1]} : vector<8x32xf32> to vector<8x8xf32>
    %387 = vector.extract_strided_slice %365 {offsets = [0, 24], sizes = [8, 8], strides = [1, 1]} : vector<8x32xf32> to vector<8x8xf32>
    %388 = vector.shape_cast %384 : vector<8x8xf32> to vector<1x8x8xf32>
    %389 = vector.shape_cast %385 : vector<8x8xf32> to vector<1x8x8xf32>
    %390 = vector.shape_cast %386 : vector<8x8xf32> to vector<1x8x8xf32>
    %391 = vector.shape_cast %387 : vector<8x8xf32> to vector<1x8x8xf32>
    %392 = tpu.concatenate %388, %389, %390, %391 in 0 : vector<1x8x8xf32>, vector<1x8x8xf32>, vector<1x8x8xf32>, vector<1x8x8xf32> -> vector<4x8x8xf32>
    "tpu.trace_start"() <{level = 10 : i32, message = "hqd,hkd->hqk"}> : () -> ()
    %cst_154 = arith.constant dense<0.000000e+00> : vector<4x8x8xf32>
    %393 = tpu.matmul %374, %383, %cst_154 {dimension_numbers = #tpu.dot_dimension_numbers<[2], [2], [1], [1], [0, 0, 0, 1, 1, 1], [0], [0]>} : vector<4x8x8xf32>, vector<4x8x8xf32>, vector<4x8x8xf32> -> vector<4x8x8xf32>
    "tpu.trace_stop"() : () -> ()
    %cst_155 = arith.constant 0.353553385 : f32
    %394 = vector.broadcast %cst_155 : f32 to vector<4x8x8xf32>
    %395 = arith.mulf %393, %394 : vector<4x8x8xf32>
    %396 = vector.extract_strided_slice %3 {offsets = [1, 0], sizes = [1, 8], strides = [1, 1]} : vector<2x8xf32> to vector<1x8xf32>
    %397 = vector.shape_cast %396 : vector<1x8xf32> to vector<1x1x8xf32>
    %398 = vector.broadcast %397 : vector<1x1x8xf32> to vector<4x8x8xf32>
    %399 = arith.addf %395, %398 : vector<4x8x8xf32>
    %cst_156 = arith.constant dense<0xFF800000> : vector<4x8xf32>
    %400 = vector.multi_reduction <maximumf>, %399, %cst_156 [2] : vector<4x8x8xf32> to vector<4x8xf32>
    %401 = vector.shape_cast %400 : vector<4x8xf32> to vector<4x8x1xf32>
    %402 = vector.broadcast %401 : vector<4x8x1xf32> to vector<4x8x8xf32>
    %403 = arith.subf %399, %402 : vector<4x8x8xf32>
    %404 = math.exp %403 : vector<4x8x8xf32>
    %cst_157 = arith.constant dense<0.000000e+00> : vector<4x8xf32>
    %405 = vector.multi_reduction <add>, %404, %cst_157 [2] : vector<4x8x8xf32> to vector<4x8xf32>
    %406 = vector.shape_cast %405 : vector<4x8xf32> to vector<4x8x1xf32>
    %407 = tpu.reciprocal %406 {approx = true} : vector<4x8x1xf32> -> vector<4x8x1xf32>
    %408 = vector.broadcast %407 : vector<4x8x1xf32> to vector<4x8x8xf32>
    %409 = arith.mulf %404, %408 : vector<4x8x8xf32>
    "tpu.trace_start"() <{level = 10 : i32, message = "hqk,hkd->hqd"}> : () -> ()
    %cst_158 = arith.constant dense<0.000000e+00> : vector<4x8x8xf32>
    %410 = tpu.matmul %409, %392, %cst_158 {dimension_numbers = #tpu.dot_dimension_numbers<[2], [1], [1], [2], [0, 0, 0, 1, 1, 2], [0], [0]>} : vector<4x8x8xf32>, vector<4x8x8xf32>, vector<4x8x8xf32> -> vector<4x8x8xf32>
    "tpu.trace_stop"() : () -> ()
    %411 = vector.extract_strided_slice %410 {offsets = [0, 0, 0], sizes = [1, 8, 8], strides = [1, 1, 1]} : vector<4x8x8xf32> to vector<1x8x8xf32>
    %412 = vector.shape_cast %411 : vector<1x8x8xf32> to vector<8x8xf32>
    %c1_159 = arith.constant 1 : index
    %c0_160 = arith.constant 0 : index
    %c0_161 = arith.constant 0 : index
    %c0_162 = arith.constant 0 : index
    %413 = vector.load %arg7[%c1_159, %c0_160, %c0_161, %c0_162] : memref<3x4x8x32xf32, #tpu.memory_space<vmem>>, vector<1x1x8x32xf32>
    %414 = vector.shape_cast %413 : vector<1x1x8x32xf32> to vector<8x32xf32>
    %cst_163 = arith.constant dense<0.000000e+00> : vector<8x32xf32>
    %415 = tpu.matmul %412, %414, %cst_163 {dimension_numbers = #tpu.dot_dimension_numbers<[1], [0], [0], [1], [0, 0, 1, 1], [], []>} : vector<8x8xf32>, vector<8x32xf32>, vector<8x32xf32> -> vector<8x32xf32>
    %416 = vector.extract_strided_slice %410 {offsets = [1, 0, 0], sizes = [1, 8, 8], strides = [1, 1, 1]} : vector<4x8x8xf32> to vector<1x8x8xf32>
    %417 = vector.shape_cast %416 : vector<1x8x8xf32> to vector<8x8xf32>
    %c1_164 = arith.constant 1 : index
    %c1_165 = arith.constant 1 : index
    %c0_166 = arith.constant 0 : index
    %c0_167 = arith.constant 0 : index
    %418 = vector.load %arg7[%c1_164, %c1_165, %c0_166, %c0_167] : memref<3x4x8x32xf32, #tpu.memory_space<vmem>>, vector<1x1x8x32xf32>
    %419 = vector.shape_cast %418 : vector<1x1x8x32xf32> to vector<8x32xf32>
    %cst_168 = arith.constant dense<0.000000e+00> : vector<8x32xf32>
    %420 = tpu.matmul %417, %419, %cst_168 {dimension_numbers = #tpu.dot_dimension_numbers<[1], [0], [0], [1], [0, 0, 1, 1], [], []>} : vector<8x8xf32>, vector<8x32xf32>, vector<8x32xf32> -> vector<8x32xf32>
    %421 = arith.addf %415, %420 : vector<8x32xf32>
    %422 = vector.extract_strided_slice %410 {offsets = [2, 0, 0], sizes = [1, 8, 8], strides = [1, 1, 1]} : vector<4x8x8xf32> to vector<1x8x8xf32>
    %423 = vector.shape_cast %422 : vector<1x8x8xf32> to vector<8x8xf32>
    %c1_169 = arith.constant 1 : index
    %c2_170 = arith.constant 2 : index
    %c0_171 = arith.constant 0 : index
    %c0_172 = arith.constant 0 : index
    %424 = vector.load %arg7[%c1_169, %c2_170, %c0_171, %c0_172] : memref<3x4x8x32xf32, #tpu.memory_space<vmem>>, vector<1x1x8x32xf32>
    %425 = vector.shape_cast %424 : vector<1x1x8x32xf32> to vector<8x32xf32>
    %cst_173 = arith.constant dense<0.000000e+00> : vector<8x32xf32>
    %426 = tpu.matmul %423, %425, %cst_173 {dimension_numbers = #tpu.dot_dimension_numbers<[1], [0], [0], [1], [0, 0, 1, 1], [], []>} : vector<8x8xf32>, vector<8x32xf32>, vector<8x32xf32> -> vector<8x32xf32>
    %427 = arith.addf %421, %426 : vector<8x32xf32>
    %428 = vector.extract_strided_slice %410 {offsets = [3, 0, 0], sizes = [1, 8, 8], strides = [1, 1, 1]} : vector<4x8x8xf32> to vector<1x8x8xf32>
    %429 = vector.shape_cast %428 : vector<1x8x8xf32> to vector<8x8xf32>
    %c1_174 = arith.constant 1 : index
    %c3_175 = arith.constant 3 : index
    %c0_176 = arith.constant 0 : index
    %c0_177 = arith.constant 0 : index
    %430 = vector.load %arg7[%c1_174, %c3_175, %c0_176, %c0_177] : memref<3x4x8x32xf32, #tpu.memory_space<vmem>>, vector<1x1x8x32xf32>
    %431 = vector.shape_cast %430 : vector<1x1x8x32xf32> to vector<8x32xf32>
    %cst_178 = arith.constant dense<0.000000e+00> : vector<8x32xf32>
    %432 = tpu.matmul %429, %431, %cst_178 {dimension_numbers = #tpu.dot_dimension_numbers<[1], [0], [0], [1], [0, 0, 1, 1], [], []>} : vector<8x8xf32>, vector<8x32xf32>, vector<8x32xf32> -> vector<8x32xf32>
    %433 = arith.addf %427, %432 : vector<8x32xf32>
    %434 = tpu.concatenate %362, %433 in 0 : vector<8x32xf32>, vector<8x32xf32> -> vector<16x32xf32>
    %c1_179 = arith.constant 1 : index
    %c0_180 = arith.constant 0 : index
    %c0_181 = arith.constant 0 : index
    %435 = vector.load %arg8[%c1_179, %c0_180, %c0_181] : memref<3x1x32xf32, #tpu.memory_space<vmem>>, vector<1x1x32xf32>
    %436 = vector.shape_cast %435 : vector<1x1x32xf32> to vector<1x32xf32>
    %437 = vector.broadcast %436 : vector<1x32xf32> to vector<16x32xf32>
    %438 = arith.addf %434, %437 : vector<16x32xf32>
    %439 = arith.addf %438, %284 : vector<16x32xf32>
    %c1_182 = arith.constant 1 : index
    %c0_183 = arith.constant 0 : index
    %c0_184 = arith.constant 0 : index
    %440 = vector.load %arg9[%c1_182, %c0_183, %c0_184] : memref<3x1x32xf32, #tpu.memory_space<vmem>>, vector<1x1x32xf32>
    %441 = vector.shape_cast %440 : vector<1x1x32xf32> to vector<1x32xf32>
    %c1_185 = arith.constant 1 : index
    %c0_186 = arith.constant 0 : index
    %c0_187 = arith.constant 0 : index
    %442 = vector.load %arg10[%c1_185, %c0_186, %c0_187] : memref<3x1x32xf32, #tpu.memory_space<vmem>>, vector<1x1x32xf32>
    %443 = vector.shape_cast %442 : vector<1x1x32xf32> to vector<1x32xf32>
    %cst_188 = arith.constant dense<0.000000e+00> : vector<16xf32>
    %444 = vector.multi_reduction <add>, %439, %cst_188 [1] : vector<16x32xf32> to vector<16xf32>
    %445 = vector.shape_cast %444 : vector<16xf32> to vector<16x1xf32>
    %cst_189 = arith.constant 3.200000e+01 : f32
    %446 = vector.broadcast %cst_189 : f32 to vector<16x1xf32>
    %447 = arith.divf %445, %446 : vector<16x1xf32>
    %448 = vector.broadcast %447 : vector<16x1xf32> to vector<16x32xf32>
    %449 = arith.subf %439, %448 : vector<16x32xf32>
    %450 = arith.mulf %449, %449 : vector<16x32xf32>
    %cst_190 = arith.constant dense<0.000000e+00> : vector<16xf32>
    %451 = vector.multi_reduction <add>, %450, %cst_190 [1] : vector<16x32xf32> to vector<16xf32>
    %452 = vector.shape_cast %451 : vector<16xf32> to vector<16x1xf32>
    %cst_191 = arith.constant 3.200000e+01 : f32
    %453 = vector.broadcast %cst_191 : f32 to vector<16x1xf32>
    %454 = arith.divf %452, %453 : vector<16x1xf32>
    %cst_192 = arith.constant 9.99999996E-13 : f32
    %455 = vector.broadcast %cst_192 : f32 to vector<16x1xf32>
    %456 = arith.addf %454, %455 : vector<16x1xf32>
    %457 = math.rsqrt %456 : vector<16x1xf32>
    %458 = vector.broadcast %457 : vector<16x1xf32> to vector<16x32xf32>
    %459 = arith.mulf %449, %458 : vector<16x32xf32>
    %460 = vector.broadcast %441 : vector<1x32xf32> to vector<16x32xf32>
    %461 = arith.mulf %459, %460 : vector<16x32xf32>
    %462 = vector.broadcast %443 : vector<1x32xf32> to vector<16x32xf32>
    %463 = arith.addf %461, %462 : vector<16x32xf32>
    %c1_193 = arith.constant 1 : index
    %c0_194 = arith.constant 0 : index
    %c0_195 = arith.constant 0 : index
    %464 = vector.load %arg11[%c1_193, %c0_194, %c0_195] : memref<3x32x64xf32, #tpu.memory_space<vmem>>, vector<1x32x64xf32>
    %465 = vector.shape_cast %464 : vector<1x32x64xf32> to vector<32x64xf32>
    %cst_196 = arith.constant dense<0.000000e+00> : vector<16x64xf32>
    %466 = tpu.matmul %463, %465, %cst_196 {dimension_numbers = #tpu.dot_dimension_numbers<[1], [0], [0], [1], [0, 0, 1, 1], [], []>} : vector<16x32xf32>, vector<32x64xf32>, vector<16x64xf32> -> vector<16x64xf32>
    %c1_197 = arith.constant 1 : index
    %c0_198 = arith.constant 0 : index
    %c0_199 = arith.constant 0 : index
    %467 = vector.load %arg12[%c1_197, %c0_198, %c0_199] : memref<3x1x64xf32, #tpu.memory_space<vmem>>, vector<1x1x64xf32>
    %468 = vector.shape_cast %467 : vector<1x1x64xf32> to vector<1x64xf32>
    %469 = vector.broadcast %468 : vector<1x64xf32> to vector<16x64xf32>
    %470 = arith.addf %466, %469 : vector<16x64xf32>
    %cst_200 = arith.constant 5.000000e-01 : f32
    %471 = vector.broadcast %cst_200 : f32 to vector<16x64xf32>
    %472 = arith.mulf %471, %470 : vector<16x64xf32>
    %cst_201 = arith.constant 0.707106769 : f32
    %473 = vector.broadcast %cst_201 : f32 to vector<16x64xf32>
    %474 = arith.mulf %470, %473 : vector<16x64xf32>
    %cst_202 = arith.constant 0.000000e+00 : f32
    %475 = vector.broadcast %cst_202 : f32 to vector<16x64xf32>
    %476 = arith.cmpf oge, %474, %475 : vector<16x64xf32>
    %cst_203 = arith.constant 1.000000e+00 : f32
    %cst_204 = arith.constant -1.000000e+00 : f32
    %477 = vector.broadcast %cst_203 : f32 to vector<16x64xf32>
    %478 = vector.broadcast %cst_204 : f32 to vector<16x64xf32>
    %479 = arith.select %476, %477, %478 : vector<16x64xi1>, vector<16x64xf32>
    %480 = math.absf %474 : vector<16x64xf32>
    %cst_205 = arith.constant 0.327591091 : f32
    %481 = vector.broadcast %cst_205 : f32 to vector<16x64xf32>
    %482 = arith.mulf %481, %480 : vector<16x64xf32>
    %cst_206 = arith.constant 1.000000e+00 : f32
    %483 = vector.broadcast %cst_206 : f32 to vector<16x64xf32>
    %484 = arith.addf %483, %482 : vector<16x64xf32>
    %cst_207 = arith.constant 1.000000e+00 : f32
    %485 = vector.broadcast %cst_207 : f32 to vector<16x64xf32>
    %486 = arith.divf %485, %484 : vector<16x64xf32>
    %cst_208 = arith.constant 1.06140542 : f32
    %487 = vector.broadcast %cst_208 : f32 to vector<16x64xf32>
    %488 = arith.mulf %487, %486 : vector<16x64xf32>
    %cst_209 = arith.constant -1.45315206 : f32
    %489 = vector.broadcast %cst_209 : f32 to vector<16x64xf32>
    %490 = arith.addf %488, %489 : vector<16x64xf32>
    %491 = arith.mulf %490, %486 : vector<16x64xf32>
    %cst_210 = arith.constant 1.42141378 : f32
    %492 = vector.broadcast %cst_210 : f32 to vector<16x64xf32>
    %493 = arith.addf %491, %492 : vector<16x64xf32>
    %494 = arith.mulf %493, %486 : vector<16x64xf32>
    %cst_211 = arith.constant -0.284496725 : f32
    %495 = vector.broadcast %cst_211 : f32 to vector<16x64xf32>
    %496 = arith.addf %494, %495 : vector<16x64xf32>
    %497 = arith.mulf %496, %486 : vector<16x64xf32>
    %cst_212 = arith.constant 0.254829586 : f32
    %498 = vector.broadcast %cst_212 : f32 to vector<16x64xf32>
    %499 = arith.addf %497, %498 : vector<16x64xf32>
    %500 = arith.mulf %499, %486 : vector<16x64xf32>
    %cst_213 = arith.constant 0.000000e+00 : f32
    %501 = vector.broadcast %cst_213 : f32 to vector<16x64xf32>
    %502 = arith.subf %501, %480 : vector<16x64xf32>
    %503 = arith.mulf %502, %480 : vector<16x64xf32>
    %504 = math.exp %503 : vector<16x64xf32>
    %505 = arith.mulf %500, %504 : vector<16x64xf32>
    %cst_214 = arith.constant 1.000000e+00 : f32
    %506 = vector.broadcast %cst_214 : f32 to vector<16x64xf32>
    %507 = arith.subf %506, %505 : vector<16x64xf32>
    %508 = arith.mulf %479, %507 : vector<16x64xf32>
    %cst_215 = arith.constant 1.000000e+00 : f32
    %509 = vector.broadcast %cst_215 : f32 to vector<16x64xf32>
    %510 = arith.addf %509, %508 : vector<16x64xf32>
    %511 = arith.mulf %472, %510 : vector<16x64xf32>
    %c1_216 = arith.constant 1 : index
    %c0_217 = arith.constant 0 : index
    %c0_218 = arith.constant 0 : index
    %512 = vector.load %arg13[%c1_216, %c0_217, %c0_218] : memref<3x64x32xf32, #tpu.memory_space<vmem>>, vector<1x64x32xf32>
    %513 = vector.shape_cast %512 : vector<1x64x32xf32> to vector<64x32xf32>
    %cst_219 = arith.constant dense<0.000000e+00> : vector<16x32xf32>
    %514 = tpu.matmul %511, %513, %cst_219 {dimension_numbers = #tpu.dot_dimension_numbers<[1], [0], [0], [1], [0, 0, 1, 1], [], []>} : vector<16x64xf32>, vector<64x32xf32>, vector<16x32xf32> -> vector<16x32xf32>
    %c1_220 = arith.constant 1 : index
    %c0_221 = arith.constant 0 : index
    %c0_222 = arith.constant 0 : index
    %515 = vector.load %arg14[%c1_220, %c0_221, %c0_222] : memref<3x1x32xf32, #tpu.memory_space<vmem>>, vector<1x1x32xf32>
    %516 = vector.shape_cast %515 : vector<1x1x32xf32> to vector<1x32xf32>
    %517 = vector.broadcast %516 : vector<1x32xf32> to vector<16x32xf32>
    %518 = arith.addf %514, %517 : vector<16x32xf32>
    %519 = arith.addf %518, %463 : vector<16x32xf32>
    %c1_223 = arith.constant 1 : index
    %c0_224 = arith.constant 0 : index
    %c0_225 = arith.constant 0 : index
    %520 = vector.load %arg15[%c1_223, %c0_224, %c0_225] : memref<3x1x32xf32, #tpu.memory_space<vmem>>, vector<1x1x32xf32>
    %521 = vector.shape_cast %520 : vector<1x1x32xf32> to vector<1x32xf32>
    %c1_226 = arith.constant 1 : index
    %c0_227 = arith.constant 0 : index
    %c0_228 = arith.constant 0 : index
    %522 = vector.load %arg16[%c1_226, %c0_227, %c0_228] : memref<3x1x32xf32, #tpu.memory_space<vmem>>, vector<1x1x32xf32>
    %523 = vector.shape_cast %522 : vector<1x1x32xf32> to vector<1x32xf32>
    %cst_229 = arith.constant dense<0.000000e+00> : vector<16xf32>
    %524 = vector.multi_reduction <add>, %519, %cst_229 [1] : vector<16x32xf32> to vector<16xf32>
    %525 = vector.shape_cast %524 : vector<16xf32> to vector<16x1xf32>
    %cst_230 = arith.constant 3.200000e+01 : f32
    %526 = vector.broadcast %cst_230 : f32 to vector<16x1xf32>
    %527 = arith.divf %525, %526 : vector<16x1xf32>
    %528 = vector.broadcast %527 : vector<16x1xf32> to vector<16x32xf32>
    %529 = arith.subf %519, %528 : vector<16x32xf32>
    %530 = arith.mulf %529, %529 : vector<16x32xf32>
    %cst_231 = arith.constant dense<0.000000e+00> : vector<16xf32>
    %531 = vector.multi_reduction <add>, %530, %cst_231 [1] : vector<16x32xf32> to vector<16xf32>
    %532 = vector.shape_cast %531 : vector<16xf32> to vector<16x1xf32>
    %cst_232 = arith.constant 3.200000e+01 : f32
    %533 = vector.broadcast %cst_232 : f32 to vector<16x1xf32>
    %534 = arith.divf %532, %533 : vector<16x1xf32>
    %cst_233 = arith.constant 9.99999996E-13 : f32
    %535 = vector.broadcast %cst_233 : f32 to vector<16x1xf32>
    %536 = arith.addf %534, %535 : vector<16x1xf32>
    %537 = math.rsqrt %536 : vector<16x1xf32>
    %538 = vector.broadcast %537 : vector<16x1xf32> to vector<16x32xf32>
    %539 = arith.mulf %529, %538 : vector<16x32xf32>
    %540 = vector.broadcast %521 : vector<1x32xf32> to vector<16x32xf32>
    %541 = arith.mulf %539, %540 : vector<16x32xf32>
    %542 = vector.broadcast %523 : vector<1x32xf32> to vector<16x32xf32>
    %543 = arith.addf %541, %542 : vector<16x32xf32>
    %c2_234 = arith.constant 2 : index
    %c0_235 = arith.constant 0 : index
    %c0_236 = arith.constant 0 : index
    %544 = vector.load %arg5[%c2_234, %c0_235, %c0_236] : memref<3x32x96xf32, #tpu.memory_space<vmem>>, vector<1x32x96xf32>
    %545 = vector.shape_cast %544 : vector<1x32x96xf32> to vector<32x96xf32>
    %cst_237 = arith.constant dense<0.000000e+00> : vector<16x96xf32>
    %546 = tpu.matmul %543, %545, %cst_237 {dimension_numbers = #tpu.dot_dimension_numbers<[1], [0], [0], [1], [0, 0, 1, 1], [], []>} : vector<16x32xf32>, vector<32x96xf32>, vector<16x96xf32> -> vector<16x96xf32>
    %c2_238 = arith.constant 2 : index
    %c0_239 = arith.constant 0 : index
    %c0_240 = arith.constant 0 : index
    %547 = vector.load %arg6[%c2_238, %c0_239, %c0_240] : memref<3x1x96xf32, #tpu.memory_space<vmem>>, vector<1x1x96xf32>
    %548 = vector.shape_cast %547 : vector<1x1x96xf32> to vector<1x96xf32>
    %549 = vector.broadcast %548 : vector<1x96xf32> to vector<16x96xf32>
    %550 = arith.addf %546, %549 : vector<16x96xf32>
    %551 = vector.extract_strided_slice %550 {offsets = [0, 0], sizes = [8, 32], strides = [1, 1]} : vector<16x96xf32> to vector<8x32xf32>
    %552 = vector.extract_strided_slice %550 {offsets = [0, 32], sizes = [8, 32], strides = [1, 1]} : vector<16x96xf32> to vector<8x32xf32>
    %553 = vector.extract_strided_slice %550 {offsets = [0, 64], sizes = [8, 32], strides = [1, 1]} : vector<16x96xf32> to vector<8x32xf32>
    %554 = vector.extract_strided_slice %551 {offsets = [0, 0], sizes = [8, 8], strides = [1, 1]} : vector<8x32xf32> to vector<8x8xf32>
    %555 = vector.extract_strided_slice %551 {offsets = [0, 8], sizes = [8, 8], strides = [1, 1]} : vector<8x32xf32> to vector<8x8xf32>
    %556 = vector.extract_strided_slice %551 {offsets = [0, 16], sizes = [8, 8], strides = [1, 1]} : vector<8x32xf32> to vector<8x8xf32>
    %557 = vector.extract_strided_slice %551 {offsets = [0, 24], sizes = [8, 8], strides = [1, 1]} : vector<8x32xf32> to vector<8x8xf32>
    %558 = vector.shape_cast %554 : vector<8x8xf32> to vector<1x8x8xf32>
    %559 = vector.shape_cast %555 : vector<8x8xf32> to vector<1x8x8xf32>
    %560 = vector.shape_cast %556 : vector<8x8xf32> to vector<1x8x8xf32>
    %561 = vector.shape_cast %557 : vector<8x8xf32> to vector<1x8x8xf32>
    %562 = tpu.concatenate %558, %559, %560, %561 in 0 : vector<1x8x8xf32>, vector<1x8x8xf32>, vector<1x8x8xf32>, vector<1x8x8xf32> -> vector<4x8x8xf32>
    %563 = vector.extract_strided_slice %552 {offsets = [0, 0], sizes = [8, 8], strides = [1, 1]} : vector<8x32xf32> to vector<8x8xf32>
    %564 = vector.extract_strided_slice %552 {offsets = [0, 8], sizes = [8, 8], strides = [1, 1]} : vector<8x32xf32> to vector<8x8xf32>
    %565 = vector.extract_strided_slice %552 {offsets = [0, 16], sizes = [8, 8], strides = [1, 1]} : vector<8x32xf32> to vector<8x8xf32>
    %566 = vector.extract_strided_slice %552 {offsets = [0, 24], sizes = [8, 8], strides = [1, 1]} : vector<8x32xf32> to vector<8x8xf32>
    %567 = vector.shape_cast %563 : vector<8x8xf32> to vector<1x8x8xf32>
    %568 = vector.shape_cast %564 : vector<8x8xf32> to vector<1x8x8xf32>
    %569 = vector.shape_cast %565 : vector<8x8xf32> to vector<1x8x8xf32>
    %570 = vector.shape_cast %566 : vector<8x8xf32> to vector<1x8x8xf32>
    %571 = tpu.concatenate %567, %568, %569, %570 in 0 : vector<1x8x8xf32>, vector<1x8x8xf32>, vector<1x8x8xf32>, vector<1x8x8xf32> -> vector<4x8x8xf32>
    %572 = vector.extract_strided_slice %553 {offsets = [0, 0], sizes = [8, 8], strides = [1, 1]} : vector<8x32xf32> to vector<8x8xf32>
    %573 = vector.extract_strided_slice %553 {offsets = [0, 8], sizes = [8, 8], strides = [1, 1]} : vector<8x32xf32> to vector<8x8xf32>
    %574 = vector.extract_strided_slice %553 {offsets = [0, 16], sizes = [8, 8], strides = [1, 1]} : vector<8x32xf32> to vector<8x8xf32>
    %575 = vector.extract_strided_slice %553 {offsets = [0, 24], sizes = [8, 8], strides = [1, 1]} : vector<8x32xf32> to vector<8x8xf32>
    %576 = vector.shape_cast %572 : vector<8x8xf32> to vector<1x8x8xf32>
    %577 = vector.shape_cast %573 : vector<8x8xf32> to vector<1x8x8xf32>
    %578 = vector.shape_cast %574 : vector<8x8xf32> to vector<1x8x8xf32>
    %579 = vector.shape_cast %575 : vector<8x8xf32> to vector<1x8x8xf32>
    %580 = tpu.concatenate %576, %577, %578, %579 in 0 : vector<1x8x8xf32>, vector<1x8x8xf32>, vector<1x8x8xf32>, vector<1x8x8xf32> -> vector<4x8x8xf32>
    "tpu.trace_start"() <{level = 10 : i32, message = "hqd,hkd->hqk"}> : () -> ()
    %cst_241 = arith.constant dense<0.000000e+00> : vector<4x8x8xf32>
    %581 = tpu.matmul %562, %571, %cst_241 {dimension_numbers = #tpu.dot_dimension_numbers<[2], [2], [1], [1], [0, 0, 0, 1, 1, 1], [0], [0]>} : vector<4x8x8xf32>, vector<4x8x8xf32>, vector<4x8x8xf32> -> vector<4x8x8xf32>
    "tpu.trace_stop"() : () -> ()
    %cst_242 = arith.constant 0.353553385 : f32
    %582 = vector.broadcast %cst_242 : f32 to vector<4x8x8xf32>
    %583 = arith.mulf %581, %582 : vector<4x8x8xf32>
    %584 = vector.extract_strided_slice %3 {offsets = [0, 0], sizes = [1, 8], strides = [1, 1]} : vector<2x8xf32> to vector<1x8xf32>
    %585 = vector.shape_cast %584 : vector<1x8xf32> to vector<1x1x8xf32>
    %586 = vector.broadcast %585 : vector<1x1x8xf32> to vector<4x8x8xf32>
    %587 = arith.addf %583, %586 : vector<4x8x8xf32>
    %cst_243 = arith.constant dense<0xFF800000> : vector<4x8xf32>
    %588 = vector.multi_reduction <maximumf>, %587, %cst_243 [2] : vector<4x8x8xf32> to vector<4x8xf32>
    %589 = vector.shape_cast %588 : vector<4x8xf32> to vector<4x8x1xf32>
    %590 = vector.broadcast %589 : vector<4x8x1xf32> to vector<4x8x8xf32>
    %591 = arith.subf %587, %590 : vector<4x8x8xf32>
    %592 = math.exp %591 : vector<4x8x8xf32>
    %cst_244 = arith.constant dense<0.000000e+00> : vector<4x8xf32>
    %593 = vector.multi_reduction <add>, %592, %cst_244 [2] : vector<4x8x8xf32> to vector<4x8xf32>
    %594 = vector.shape_cast %593 : vector<4x8xf32> to vector<4x8x1xf32>
    %595 = tpu.reciprocal %594 {approx = true} : vector<4x8x1xf32> -> vector<4x8x1xf32>
    %596 = vector.broadcast %595 : vector<4x8x1xf32> to vector<4x8x8xf32>
    %597 = arith.mulf %592, %596 : vector<4x8x8xf32>
    "tpu.trace_start"() <{level = 10 : i32, message = "hqk,hkd->hqd"}> : () -> ()
    %cst_245 = arith.constant dense<0.000000e+00> : vector<4x8x8xf32>
    %598 = tpu.matmul %597, %580, %cst_245 {dimension_numbers = #tpu.dot_dimension_numbers<[2], [1], [1], [2], [0, 0, 0, 1, 1, 2], [0], [0]>} : vector<4x8x8xf32>, vector<4x8x8xf32>, vector<4x8x8xf32> -> vector<4x8x8xf32>
    "tpu.trace_stop"() : () -> ()
    %599 = vector.extract_strided_slice %598 {offsets = [0, 0, 0], sizes = [1, 8, 8], strides = [1, 1, 1]} : vector<4x8x8xf32> to vector<1x8x8xf32>
    %600 = vector.shape_cast %599 : vector<1x8x8xf32> to vector<8x8xf32>
    %c2_246 = arith.constant 2 : index
    %c0_247 = arith.constant 0 : index
    %c0_248 = arith.constant 0 : index
    %c0_249 = arith.constant 0 : index
    %601 = vector.load %arg7[%c2_246, %c0_247, %c0_248, %c0_249] : memref<3x4x8x32xf32, #tpu.memory_space<vmem>>, vector<1x1x8x32xf32>
    %602 = vector.shape_cast %601 : vector<1x1x8x32xf32> to vector<8x32xf32>
    %cst_250 = arith.constant dense<0.000000e+00> : vector<8x32xf32>
    %603 = tpu.matmul %600, %602, %cst_250 {dimension_numbers = #tpu.dot_dimension_numbers<[1], [0], [0], [1], [0, 0, 1, 1], [], []>} : vector<8x8xf32>, vector<8x32xf32>, vector<8x32xf32> -> vector<8x32xf32>
    %604 = vector.extract_strided_slice %598 {offsets = [1, 0, 0], sizes = [1, 8, 8], strides = [1, 1, 1]} : vector<4x8x8xf32> to vector<1x8x8xf32>
    %605 = vector.shape_cast %604 : vector<1x8x8xf32> to vector<8x8xf32>
    %c2_251 = arith.constant 2 : index
    %c1_252 = arith.constant 1 : index
    %c0_253 = arith.constant 0 : index
    %c0_254 = arith.constant 0 : index
    %606 = vector.load %arg7[%c2_251, %c1_252, %c0_253, %c0_254] : memref<3x4x8x32xf32, #tpu.memory_space<vmem>>, vector<1x1x8x32xf32>
    %607 = vector.shape_cast %606 : vector<1x1x8x32xf32> to vector<8x32xf32>
    %cst_255 = arith.constant dense<0.000000e+00> : vector<8x32xf32>
    %608 = tpu.matmul %605, %607, %cst_255 {dimension_numbers = #tpu.dot_dimension_numbers<[1], [0], [0], [1], [0, 0, 1, 1], [], []>} : vector<8x8xf32>, vector<8x32xf32>, vector<8x32xf32> -> vector<8x32xf32>
    %609 = arith.addf %603, %608 : vector<8x32xf32>
    %610 = vector.extract_strided_slice %598 {offsets = [2, 0, 0], sizes = [1, 8, 8], strides = [1, 1, 1]} : vector<4x8x8xf32> to vector<1x8x8xf32>
    %611 = vector.shape_cast %610 : vector<1x8x8xf32> to vector<8x8xf32>
    %c2_256 = arith.constant 2 : index
    %c2_257 = arith.constant 2 : index
    %c0_258 = arith.constant 0 : index
    %c0_259 = arith.constant 0 : index
    %612 = vector.load %arg7[%c2_256, %c2_257, %c0_258, %c0_259] : memref<3x4x8x32xf32, #tpu.memory_space<vmem>>, vector<1x1x8x32xf32>
    %613 = vector.shape_cast %612 : vector<1x1x8x32xf32> to vector<8x32xf32>
    %cst_260 = arith.constant dense<0.000000e+00> : vector<8x32xf32>
    %614 = tpu.matmul %611, %613, %cst_260 {dimension_numbers = #tpu.dot_dimension_numbers<[1], [0], [0], [1], [0, 0, 1, 1], [], []>} : vector<8x8xf32>, vector<8x32xf32>, vector<8x32xf32> -> vector<8x32xf32>
    %615 = arith.addf %609, %614 : vector<8x32xf32>
    %616 = vector.extract_strided_slice %598 {offsets = [3, 0, 0], sizes = [1, 8, 8], strides = [1, 1, 1]} : vector<4x8x8xf32> to vector<1x8x8xf32>
    %617 = vector.shape_cast %616 : vector<1x8x8xf32> to vector<8x8xf32>
    %c2_261 = arith.constant 2 : index
    %c3_262 = arith.constant 3 : index
    %c0_263 = arith.constant 0 : index
    %c0_264 = arith.constant 0 : index
    %618 = vector.load %arg7[%c2_261, %c3_262, %c0_263, %c0_264] : memref<3x4x8x32xf32, #tpu.memory_space<vmem>>, vector<1x1x8x32xf32>
    %619 = vector.shape_cast %618 : vector<1x1x8x32xf32> to vector<8x32xf32>
    %cst_265 = arith.constant dense<0.000000e+00> : vector<8x32xf32>
    %620 = tpu.matmul %617, %619, %cst_265 {dimension_numbers = #tpu.dot_dimension_numbers<[1], [0], [0], [1], [0, 0, 1, 1], [], []>} : vector<8x8xf32>, vector<8x32xf32>, vector<8x32xf32> -> vector<8x32xf32>
    %621 = arith.addf %615, %620 : vector<8x32xf32>
    %622 = vector.extract_strided_slice %550 {offsets = [8, 0], sizes = [8, 32], strides = [1, 1]} : vector<16x96xf32> to vector<8x32xf32>
    %623 = vector.extract_strided_slice %550 {offsets = [8, 32], sizes = [8, 32], strides = [1, 1]} : vector<16x96xf32> to vector<8x32xf32>
    %624 = vector.extract_strided_slice %550 {offsets = [8, 64], sizes = [8, 32], strides = [1, 1]} : vector<16x96xf32> to vector<8x32xf32>
    %625 = vector.extract_strided_slice %622 {offsets = [0, 0], sizes = [8, 8], strides = [1, 1]} : vector<8x32xf32> to vector<8x8xf32>
    %626 = vector.extract_strided_slice %622 {offsets = [0, 8], sizes = [8, 8], strides = [1, 1]} : vector<8x32xf32> to vector<8x8xf32>
    %627 = vector.extract_strided_slice %622 {offsets = [0, 16], sizes = [8, 8], strides = [1, 1]} : vector<8x32xf32> to vector<8x8xf32>
    %628 = vector.extract_strided_slice %622 {offsets = [0, 24], sizes = [8, 8], strides = [1, 1]} : vector<8x32xf32> to vector<8x8xf32>
    %629 = vector.shape_cast %625 : vector<8x8xf32> to vector<1x8x8xf32>
    %630 = vector.shape_cast %626 : vector<8x8xf32> to vector<1x8x8xf32>
    %631 = vector.shape_cast %627 : vector<8x8xf32> to vector<1x8x8xf32>
    %632 = vector.shape_cast %628 : vector<8x8xf32> to vector<1x8x8xf32>
    %633 = tpu.concatenate %629, %630, %631, %632 in 0 : vector<1x8x8xf32>, vector<1x8x8xf32>, vector<1x8x8xf32>, vector<1x8x8xf32> -> vector<4x8x8xf32>
    %634 = vector.extract_strided_slice %623 {offsets = [0, 0], sizes = [8, 8], strides = [1, 1]} : vector<8x32xf32> to vector<8x8xf32>
    %635 = vector.extract_strided_slice %623 {offsets = [0, 8], sizes = [8, 8], strides = [1, 1]} : vector<8x32xf32> to vector<8x8xf32>
    %636 = vector.extract_strided_slice %623 {offsets = [0, 16], sizes = [8, 8], strides = [1, 1]} : vector<8x32xf32> to vector<8x8xf32>
    %637 = vector.extract_strided_slice %623 {offsets = [0, 24], sizes = [8, 8], strides = [1, 1]} : vector<8x32xf32> to vector<8x8xf32>
    %638 = vector.shape_cast %634 : vector<8x8xf32> to vector<1x8x8xf32>
    %639 = vector.shape_cast %635 : vector<8x8xf32> to vector<1x8x8xf32>
    %640 = vector.shape_cast %636 : vector<8x8xf32> to vector<1x8x8xf32>
    %641 = vector.shape_cast %637 : vector<8x8xf32> to vector<1x8x8xf32>
    %642 = tpu.concatenate %638, %639, %640, %641 in 0 : vector<1x8x8xf32>, vector<1x8x8xf32>, vector<1x8x8xf32>, vector<1x8x8xf32> -> vector<4x8x8xf32>
    %643 = vector.extract_strided_slice %624 {offsets = [0, 0], sizes = [8, 8], strides = [1, 1]} : vector<8x32xf32> to vector<8x8xf32>
    %644 = vector.extract_strided_slice %624 {offsets = [0, 8], sizes = [8, 8], strides = [1, 1]} : vector<8x32xf32> to vector<8x8xf32>
    %645 = vector.extract_strided_slice %624 {offsets = [0, 16], sizes = [8, 8], strides = [1, 1]} : vector<8x32xf32> to vector<8x8xf32>
    %646 = vector.extract_strided_slice %624 {offsets = [0, 24], sizes = [8, 8], strides = [1, 1]} : vector<8x32xf32> to vector<8x8xf32>
    %647 = vector.shape_cast %643 : vector<8x8xf32> to vector<1x8x8xf32>
    %648 = vector.shape_cast %644 : vector<8x8xf32> to vector<1x8x8xf32>
    %649 = vector.shape_cast %645 : vector<8x8xf32> to vector<1x8x8xf32>
    %650 = vector.shape_cast %646 : vector<8x8xf32> to vector<1x8x8xf32>
    %651 = tpu.concatenate %647, %648, %649, %650 in 0 : vector<1x8x8xf32>, vector<1x8x8xf32>, vector<1x8x8xf32>, vector<1x8x8xf32> -> vector<4x8x8xf32>
    "tpu.trace_start"() <{level = 10 : i32, message = "hqd,hkd->hqk"}> : () -> ()
    %cst_266 = arith.constant dense<0.000000e+00> : vector<4x8x8xf32>
    %652 = tpu.matmul %633, %642, %cst_266 {dimension_numbers = #tpu.dot_dimension_numbers<[2], [2], [1], [1], [0, 0, 0, 1, 1, 1], [0], [0]>} : vector<4x8x8xf32>, vector<4x8x8xf32>, vector<4x8x8xf32> -> vector<4x8x8xf32>
    "tpu.trace_stop"() : () -> ()
    %cst_267 = arith.constant 0.353553385 : f32
    %653 = vector.broadcast %cst_267 : f32 to vector<4x8x8xf32>
    %654 = arith.mulf %652, %653 : vector<4x8x8xf32>
    %655 = vector.extract_strided_slice %3 {offsets = [1, 0], sizes = [1, 8], strides = [1, 1]} : vector<2x8xf32> to vector<1x8xf32>
    %656 = vector.shape_cast %655 : vector<1x8xf32> to vector<1x1x8xf32>
    %657 = vector.broadcast %656 : vector<1x1x8xf32> to vector<4x8x8xf32>
    %658 = arith.addf %654, %657 : vector<4x8x8xf32>
    %cst_268 = arith.constant dense<0xFF800000> : vector<4x8xf32>
    %659 = vector.multi_reduction <maximumf>, %658, %cst_268 [2] : vector<4x8x8xf32> to vector<4x8xf32>
    %660 = vector.shape_cast %659 : vector<4x8xf32> to vector<4x8x1xf32>
    %661 = vector.broadcast %660 : vector<4x8x1xf32> to vector<4x8x8xf32>
    %662 = arith.subf %658, %661 : vector<4x8x8xf32>
    %663 = math.exp %662 : vector<4x8x8xf32>
    %cst_269 = arith.constant dense<0.000000e+00> : vector<4x8xf32>
    %664 = vector.multi_reduction <add>, %663, %cst_269 [2] : vector<4x8x8xf32> to vector<4x8xf32>
    %665 = vector.shape_cast %664 : vector<4x8xf32> to vector<4x8x1xf32>
    %666 = tpu.reciprocal %665 {approx = true} : vector<4x8x1xf32> -> vector<4x8x1xf32>
    %667 = vector.broadcast %666 : vector<4x8x1xf32> to vector<4x8x8xf32>
    %668 = arith.mulf %663, %667 : vector<4x8x8xf32>
    "tpu.trace_start"() <{level = 10 : i32, message = "hqk,hkd->hqd"}> : () -> ()
    %cst_270 = arith.constant dense<0.000000e+00> : vector<4x8x8xf32>
    %669 = tpu.matmul %668, %651, %cst_270 {dimension_numbers = #tpu.dot_dimension_numbers<[2], [1], [1], [2], [0, 0, 0, 1, 1, 2], [0], [0]>} : vector<4x8x8xf32>, vector<4x8x8xf32>, vector<4x8x8xf32> -> vector<4x8x8xf32>
    "tpu.trace_stop"() : () -> ()
    %670 = vector.extract_strided_slice %669 {offsets = [0, 0, 0], sizes = [1, 8, 8], strides = [1, 1, 1]} : vector<4x8x8xf32> to vector<1x8x8xf32>
    %671 = vector.shape_cast %670 : vector<1x8x8xf32> to vector<8x8xf32>
    %c2_271 = arith.constant 2 : index
    %c0_272 = arith.constant 0 : index
    %c0_273 = arith.constant 0 : index
    %c0_274 = arith.constant 0 : index
    %672 = vector.load %arg7[%c2_271, %c0_272, %c0_273, %c0_274] : memref<3x4x8x32xf32, #tpu.memory_space<vmem>>, vector<1x1x8x32xf32>
    %673 = vector.shape_cast %672 : vector<1x1x8x32xf32> to vector<8x32xf32>
    %cst_275 = arith.constant dense<0.000000e+00> : vector<8x32xf32>
    %674 = tpu.matmul %671, %673, %cst_275 {dimension_numbers = #tpu.dot_dimension_numbers<[1], [0], [0], [1], [0, 0, 1, 1], [], []>} : vector<8x8xf32>, vector<8x32xf32>, vector<8x32xf32> -> vector<8x32xf32>
    %675 = vector.extract_strided_slice %669 {offsets = [1, 0, 0], sizes = [1, 8, 8], strides = [1, 1, 1]} : vector<4x8x8xf32> to vector<1x8x8xf32>
    %676 = vector.shape_cast %675 : vector<1x8x8xf32> to vector<8x8xf32>
    %c2_276 = arith.constant 2 : index
    %c1_277 = arith.constant 1 : index
    %c0_278 = arith.constant 0 : index
    %c0_279 = arith.constant 0 : index
    %677 = vector.load %arg7[%c2_276, %c1_277, %c0_278, %c0_279] : memref<3x4x8x32xf32, #tpu.memory_space<vmem>>, vector<1x1x8x32xf32>
    %678 = vector.shape_cast %677 : vector<1x1x8x32xf32> to vector<8x32xf32>
    %cst_280 = arith.constant dense<0.000000e+00> : vector<8x32xf32>
    %679 = tpu.matmul %676, %678, %cst_280 {dimension_numbers = #tpu.dot_dimension_numbers<[1], [0], [0], [1], [0, 0, 1, 1], [], []>} : vector<8x8xf32>, vector<8x32xf32>, vector<8x32xf32> -> vector<8x32xf32>
    %680 = arith.addf %674, %679 : vector<8x32xf32>
    %681 = vector.extract_strided_slice %669 {offsets = [2, 0, 0], sizes = [1, 8, 8], strides = [1, 1, 1]} : vector<4x8x8xf32> to vector<1x8x8xf32>
    %682 = vector.shape_cast %681 : vector<1x8x8xf32> to vector<8x8xf32>
    %c2_281 = arith.constant 2 : index
    %c2_282 = arith.constant 2 : index
    %c0_283 = arith.constant 0 : index
    %c0_284 = arith.constant 0 : index
    %683 = vector.load %arg7[%c2_281, %c2_282, %c0_283, %c0_284] : memref<3x4x8x32xf32, #tpu.memory_space<vmem>>, vector<1x1x8x32xf32>
    %684 = vector.shape_cast %683 : vector<1x1x8x32xf32> to vector<8x32xf32>
    %cst_285 = arith.constant dense<0.000000e+00> : vector<8x32xf32>
    %685 = tpu.matmul %682, %684, %cst_285 {dimension_numbers = #tpu.dot_dimension_numbers<[1], [0], [0], [1], [0, 0, 1, 1], [], []>} : vector<8x8xf32>, vector<8x32xf32>, vector<8x32xf32> -> vector<8x32xf32>
    %686 = arith.addf %680, %685 : vector<8x32xf32>
    %687 = vector.extract_strided_slice %669 {offsets = [3, 0, 0], sizes = [1, 8, 8], strides = [1, 1, 1]} : vector<4x8x8xf32> to vector<1x8x8xf32>
    %688 = vector.shape_cast %687 : vector<1x8x8xf32> to vector<8x8xf32>
    %c2_286 = arith.constant 2 : index
    %c3_287 = arith.constant 3 : index
    %c0_288 = arith.constant 0 : index
    %c0_289 = arith.constant 0 : index
    %689 = vector.load %arg7[%c2_286, %c3_287, %c0_288, %c0_289] : memref<3x4x8x32xf32, #tpu.memory_space<vmem>>, vector<1x1x8x32xf32>
    %690 = vector.shape_cast %689 : vector<1x1x8x32xf32> to vector<8x32xf32>
    %cst_290 = arith.constant dense<0.000000e+00> : vector<8x32xf32>
    %691 = tpu.matmul %688, %690, %cst_290 {dimension_numbers = #tpu.dot_dimension_numbers<[1], [0], [0], [1], [0, 0, 1, 1], [], []>} : vector<8x8xf32>, vector<8x32xf32>, vector<8x32xf32> -> vector<8x32xf32>
    %692 = arith.addf %686, %691 : vector<8x32xf32>
    %693 = tpu.concatenate %621, %692 in 0 : vector<8x32xf32>, vector<8x32xf32> -> vector<16x32xf32>
    %c2_291 = arith.constant 2 : index
    %c0_292 = arith.constant 0 : index
    %c0_293 = arith.constant 0 : index
    %694 = vector.load %arg8[%c2_291, %c0_292, %c0_293] : memref<3x1x32xf32, #tpu.memory_space<vmem>>, vector<1x1x32xf32>
    %695 = vector.shape_cast %694 : vector<1x1x32xf32> to vector<1x32xf32>
    %696 = vector.broadcast %695 : vector<1x32xf32> to vector<16x32xf32>
    %697 = arith.addf %693, %696 : vector<16x32xf32>
    %698 = arith.addf %697, %543 : vector<16x32xf32>
    %c2_294 = arith.constant 2 : index
    %c0_295 = arith.constant 0 : index
    %c0_296 = arith.constant 0 : index
    %699 = vector.load %arg9[%c2_294, %c0_295, %c0_296] : memref<3x1x32xf32, #tpu.memory_space<vmem>>, vector<1x1x32xf32>
    %700 = vector.shape_cast %699 : vector<1x1x32xf32> to vector<1x32xf32>
    %c2_297 = arith.constant 2 : index
    %c0_298 = arith.constant 0 : index
    %c0_299 = arith.constant 0 : index
    %701 = vector.load %arg10[%c2_297, %c0_298, %c0_299] : memref<3x1x32xf32, #tpu.memory_space<vmem>>, vector<1x1x32xf32>
    %702 = vector.shape_cast %701 : vector<1x1x32xf32> to vector<1x32xf32>
    %cst_300 = arith.constant dense<0.000000e+00> : vector<16xf32>
    %703 = vector.multi_reduction <add>, %698, %cst_300 [1] : vector<16x32xf32> to vector<16xf32>
    %704 = vector.shape_cast %703 : vector<16xf32> to vector<16x1xf32>
    %cst_301 = arith.constant 3.200000e+01 : f32
    %705 = vector.broadcast %cst_301 : f32 to vector<16x1xf32>
    %706 = arith.divf %704, %705 : vector<16x1xf32>
    %707 = vector.broadcast %706 : vector<16x1xf32> to vector<16x32xf32>
    %708 = arith.subf %698, %707 : vector<16x32xf32>
    %709 = arith.mulf %708, %708 : vector<16x32xf32>
    %cst_302 = arith.constant dense<0.000000e+00> : vector<16xf32>
    %710 = vector.multi_reduction <add>, %709, %cst_302 [1] : vector<16x32xf32> to vector<16xf32>
    %711 = vector.shape_cast %710 : vector<16xf32> to vector<16x1xf32>
    %cst_303 = arith.constant 3.200000e+01 : f32
    %712 = vector.broadcast %cst_303 : f32 to vector<16x1xf32>
    %713 = arith.divf %711, %712 : vector<16x1xf32>
    %cst_304 = arith.constant 9.99999996E-13 : f32
    %714 = vector.broadcast %cst_304 : f32 to vector<16x1xf32>
    %715 = arith.addf %713, %714 : vector<16x1xf32>
    %716 = math.rsqrt %715 : vector<16x1xf32>
    %717 = vector.broadcast %716 : vector<16x1xf32> to vector<16x32xf32>
    %718 = arith.mulf %708, %717 : vector<16x32xf32>
    %719 = vector.broadcast %700 : vector<1x32xf32> to vector<16x32xf32>
    %720 = arith.mulf %718, %719 : vector<16x32xf32>
    %721 = vector.broadcast %702 : vector<1x32xf32> to vector<16x32xf32>
    %722 = arith.addf %720, %721 : vector<16x32xf32>
    %c2_305 = arith.constant 2 : index
    %c0_306 = arith.constant 0 : index
    %c0_307 = arith.constant 0 : index
    %723 = vector.load %arg11[%c2_305, %c0_306, %c0_307] : memref<3x32x64xf32, #tpu.memory_space<vmem>>, vector<1x32x64xf32>
    %724 = vector.shape_cast %723 : vector<1x32x64xf32> to vector<32x64xf32>
    %cst_308 = arith.constant dense<0.000000e+00> : vector<16x64xf32>
    %725 = tpu.matmul %722, %724, %cst_308 {dimension_numbers = #tpu.dot_dimension_numbers<[1], [0], [0], [1], [0, 0, 1, 1], [], []>} : vector<16x32xf32>, vector<32x64xf32>, vector<16x64xf32> -> vector<16x64xf32>
    %c2_309 = arith.constant 2 : index
    %c0_310 = arith.constant 0 : index
    %c0_311 = arith.constant 0 : index
    %726 = vector.load %arg12[%c2_309, %c0_310, %c0_311] : memref<3x1x64xf32, #tpu.memory_space<vmem>>, vector<1x1x64xf32>
    %727 = vector.shape_cast %726 : vector<1x1x64xf32> to vector<1x64xf32>
    %728 = vector.broadcast %727 : vector<1x64xf32> to vector<16x64xf32>
    %729 = arith.addf %725, %728 : vector<16x64xf32>
    %cst_312 = arith.constant 5.000000e-01 : f32
    %730 = vector.broadcast %cst_312 : f32 to vector<16x64xf32>
    %731 = arith.mulf %730, %729 : vector<16x64xf32>
    %cst_313 = arith.constant 0.707106769 : f32
    %732 = vector.broadcast %cst_313 : f32 to vector<16x64xf32>
    %733 = arith.mulf %729, %732 : vector<16x64xf32>
    %cst_314 = arith.constant 0.000000e+00 : f32
    %734 = vector.broadcast %cst_314 : f32 to vector<16x64xf32>
    %735 = arith.cmpf oge, %733, %734 : vector<16x64xf32>
    %cst_315 = arith.constant 1.000000e+00 : f32
    %cst_316 = arith.constant -1.000000e+00 : f32
    %736 = vector.broadcast %cst_315 : f32 to vector<16x64xf32>
    %737 = vector.broadcast %cst_316 : f32 to vector<16x64xf32>
    %738 = arith.select %735, %736, %737 : vector<16x64xi1>, vector<16x64xf32>
    %739 = math.absf %733 : vector<16x64xf32>
    %cst_317 = arith.constant 0.327591091 : f32
    %740 = vector.broadcast %cst_317 : f32 to vector<16x64xf32>
    %741 = arith.mulf %740, %739 : vector<16x64xf32>
    %cst_318 = arith.constant 1.000000e+00 : f32
    %742 = vector.broadcast %cst_318 : f32 to vector<16x64xf32>
    %743 = arith.addf %742, %741 : vector<16x64xf32>
    %cst_319 = arith.constant 1.000000e+00 : f32
    %744 = vector.broadcast %cst_319 : f32 to vector<16x64xf32>
    %745 = arith.divf %744, %743 : vector<16x64xf32>
    %cst_320 = arith.constant 1.06140542 : f32
    %746 = vector.broadcast %cst_320 : f32 to vector<16x64xf32>
    %747 = arith.mulf %746, %745 : vector<16x64xf32>
    %cst_321 = arith.constant -1.45315206 : f32
    %748 = vector.broadcast %cst_321 : f32 to vector<16x64xf32>
    %749 = arith.addf %747, %748 : vector<16x64xf32>
    %750 = arith.mulf %749, %745 : vector<16x64xf32>
    %cst_322 = arith.constant 1.42141378 : f32
    %751 = vector.broadcast %cst_322 : f32 to vector<16x64xf32>
    %752 = arith.addf %750, %751 : vector<16x64xf32>
    %753 = arith.mulf %752, %745 : vector<16x64xf32>
    %cst_323 = arith.constant -0.284496725 : f32
    %754 = vector.broadcast %cst_323 : f32 to vector<16x64xf32>
    %755 = arith.addf %753, %754 : vector<16x64xf32>
    %756 = arith.mulf %755, %745 : vector<16x64xf32>
    %cst_324 = arith.constant 0.254829586 : f32
    %757 = vector.broadcast %cst_324 : f32 to vector<16x64xf32>
    %758 = arith.addf %756, %757 : vector<16x64xf32>
    %759 = arith.mulf %758, %745 : vector<16x64xf32>
    %cst_325 = arith.constant 0.000000e+00 : f32
    %760 = vector.broadcast %cst_325 : f32 to vector<16x64xf32>
    %761 = arith.subf %760, %739 : vector<16x64xf32>
    %762 = arith.mulf %761, %739 : vector<16x64xf32>
    %763 = math.exp %762 : vector<16x64xf32>
    %764 = arith.mulf %759, %763 : vector<16x64xf32>
    %cst_326 = arith.constant 1.000000e+00 : f32
    %765 = vector.broadcast %cst_326 : f32 to vector<16x64xf32>
    %766 = arith.subf %765, %764 : vector<16x64xf32>
    %767 = arith.mulf %738, %766 : vector<16x64xf32>
    %cst_327 = arith.constant 1.000000e+00 : f32
    %768 = vector.broadcast %cst_327 : f32 to vector<16x64xf32>
    %769 = arith.addf %768, %767 : vector<16x64xf32>
    %770 = arith.mulf %731, %769 : vector<16x64xf32>
    %c2_328 = arith.constant 2 : index
    %c0_329 = arith.constant 0 : index
    %c0_330 = arith.constant 0 : index
    %771 = vector.load %arg13[%c2_328, %c0_329, %c0_330] : memref<3x64x32xf32, #tpu.memory_space<vmem>>, vector<1x64x32xf32>
    %772 = vector.shape_cast %771 : vector<1x64x32xf32> to vector<64x32xf32>
    %cst_331 = arith.constant dense<0.000000e+00> : vector<16x32xf32>
    %773 = tpu.matmul %770, %772, %cst_331 {dimension_numbers = #tpu.dot_dimension_numbers<[1], [0], [0], [1], [0, 0, 1, 1], [], []>} : vector<16x64xf32>, vector<64x32xf32>, vector<16x32xf32> -> vector<16x32xf32>
    %c2_332 = arith.constant 2 : index
    %c0_333 = arith.constant 0 : index
    %c0_334 = arith.constant 0 : index
    %774 = vector.load %arg14[%c2_332, %c0_333, %c0_334] : memref<3x1x32xf32, #tpu.memory_space<vmem>>, vector<1x1x32xf32>
    %775 = vector.shape_cast %774 : vector<1x1x32xf32> to vector<1x32xf32>
    %776 = vector.broadcast %775 : vector<1x32xf32> to vector<16x32xf32>
    %777 = arith.addf %773, %776 : vector<16x32xf32>
    %778 = arith.addf %777, %722 : vector<16x32xf32>
    %c2_335 = arith.constant 2 : index
    %c0_336 = arith.constant 0 : index
    %c0_337 = arith.constant 0 : index
    %779 = vector.load %arg15[%c2_335, %c0_336, %c0_337] : memref<3x1x32xf32, #tpu.memory_space<vmem>>, vector<1x1x32xf32>
    %780 = vector.shape_cast %779 : vector<1x1x32xf32> to vector<1x32xf32>
    %c2_338 = arith.constant 2 : index
    %c0_339 = arith.constant 0 : index
    %c0_340 = arith.constant 0 : index
    %781 = vector.load %arg16[%c2_338, %c0_339, %c0_340] : memref<3x1x32xf32, #tpu.memory_space<vmem>>, vector<1x1x32xf32>
    %782 = vector.shape_cast %781 : vector<1x1x32xf32> to vector<1x32xf32>
    %cst_341 = arith.constant dense<0.000000e+00> : vector<16xf32>
    %783 = vector.multi_reduction <add>, %778, %cst_341 [1] : vector<16x32xf32> to vector<16xf32>
    %784 = vector.shape_cast %783 : vector<16xf32> to vector<16x1xf32>
    %cst_342 = arith.constant 3.200000e+01 : f32
    %785 = vector.broadcast %cst_342 : f32 to vector<16x1xf32>
    %786 = arith.divf %784, %785 : vector<16x1xf32>
    %787 = vector.broadcast %786 : vector<16x1xf32> to vector<16x32xf32>
    %788 = arith.subf %778, %787 : vector<16x32xf32>
    %789 = arith.mulf %788, %788 : vector<16x32xf32>
    %cst_343 = arith.constant dense<0.000000e+00> : vector<16xf32>
    %790 = vector.multi_reduction <add>, %789, %cst_343 [1] : vector<16x32xf32> to vector<16xf32>
    %791 = vector.shape_cast %790 : vector<16xf32> to vector<16x1xf32>
    %cst_344 = arith.constant 3.200000e+01 : f32
    %792 = vector.broadcast %cst_344 : f32 to vector<16x1xf32>
    %793 = arith.divf %791, %792 : vector<16x1xf32>
    %cst_345 = arith.constant 9.99999996E-13 : f32
    %794 = vector.broadcast %cst_345 : f32 to vector<16x1xf32>
    %795 = arith.addf %793, %794 : vector<16x1xf32>
    %796 = math.rsqrt %795 : vector<16x1xf32>
    %797 = vector.broadcast %796 : vector<16x1xf32> to vector<16x32xf32>
    %798 = arith.mulf %788, %797 : vector<16x32xf32>
    %799 = vector.broadcast %780 : vector<1x32xf32> to vector<16x32xf32>
    %800 = arith.mulf %798, %799 : vector<16x32xf32>
    %801 = vector.broadcast %782 : vector<1x32xf32> to vector<16x32xf32>
    %802 = arith.addf %800, %801 : vector<16x32xf32>
    %803 = vector.extract_strided_slice %802 {offsets = [0, 0], sizes = [1, 32], strides = [1, 1]} : vector<16x32xf32> to vector<1x32xf32>
    %804 = vector.extract_strided_slice %802 {offsets = [8, 0], sizes = [1, 32], strides = [1, 1]} : vector<16x32xf32> to vector<1x32xf32>
    %805 = tpu.concatenate %803, %804 in 0 : vector<1x32xf32>, vector<1x32xf32> -> vector<2x32xf32>
    %c0_346 = arith.constant 0 : index
    %c0_347 = arith.constant 0 : index
    %806 = vector.load %arg17[%c0_346, %c0_347] : memref<32x32xf32, #tpu.memory_space<vmem>>, vector<32x32xf32>
    %cst_348 = arith.constant dense<0.000000e+00> : vector<2x32xf32>
    %807 = tpu.matmul %805, %806, %cst_348 {dimension_numbers = #tpu.dot_dimension_numbers<[1], [0], [0], [1], [0, 0, 1, 1], [], []>} : vector<2x32xf32>, vector<32x32xf32>, vector<2x32xf32> -> vector<2x32xf32>
    %c0_349 = arith.constant 0 : index
    %c0_350 = arith.constant 0 : index
    %808 = vector.load %arg18[%c0_349, %c0_350] : memref<1x32xf32, #tpu.memory_space<vmem>>, vector<1x32xf32>
    %809 = vector.broadcast %808 : vector<1x32xf32> to vector<2x32xf32>
    %810 = arith.addf %807, %809 : vector<2x32xf32>
    %811 = math.tanh %810 : vector<2x32xf32>
    %c0_351 = arith.constant 0 : index
    %c0_352 = arith.constant 0 : index
    %c0_353 = arith.constant 0 : index
    %812 = vector.load %arg19[%c0_351, %c0_352, %c0_353] : memref<1x2x32xf32, #tpu.memory_space<vmem>>, vector<1x2x32xf32>
    %813 = vector.shape_cast %812 : vector<1x2x32xf32> to vector<2x32xf32>
    %814 = vector.shape_cast %811 : vector<2x32xf32> to vector<1x2x32xf32>
    tpu.vector_store %arg19[%c0_351, %c0_352, %c0_353], %814 {strides = array<i32>} : memref<1x2x32xf32, #tpu.memory_space<vmem>>, vector<1x2x32xf32>,
    return
  }
  func.func @transform_0(%arg0: i32) -> (i32, i32, i32) {
    %c0_i32 = arith.constant 0 : i32
    %c0_i32_0 = arith.constant 0 : i32
    %c0_i32_1 = arith.constant 0 : i32
    return %arg0, %c0_i32, %c0_i32_0 : i32, i32, i32
  }
  func.func @transform_1(%arg0: i32) -> (i32, i32, i32) {
    %c0_i32 = arith.constant 0 : i32
    %c0_i32_0 = arith.constant 0 : i32
    %c0_i32_1 = arith.constant 0 : i32
    return %arg0, %c0_i32, %c0_i32_0 : i32, i32, i32
  }
  func.func @transform_2(%arg0: i32) -> (i32, i32) {
    %c0_i32 = arith.constant 0 : i32
    %c0_i32_0 = arith.constant 0 : i32
    %c0_i32_1 = arith.constant 0 : i32
    return %c0_i32, %c0_i32_0 : i32, i32
  }
  func.func @transform_3(%arg0: i32) -> (i32, i32) {
    %c0_i32 = arith.constant 0 : i32
    %c0_i32_0 = arith.constant 0 : i32
    %c0_i32_1 = arith.constant 0 : i32
    return %c0_i32, %c0_i32_0 : i32, i32
  }
  func.func @transform_4(%arg0: i32) -> (i32, i32, i32) {
    %c0_i32 = arith.constant 0 : i32
    %c0_i32_0 = arith.constant 0 : i32
    %c0_i32_1 = arith.constant 0 : i32
    %c0_i32_2 = arith.constant 0 : i32
    return %c0_i32, %c0_i32_0, %c0_i32_1 : i32, i32, i32
  }
  func.func @transform_5(%arg0: i32) -> (i32, i32, i32) {
    %c0_i32 = arith.constant 0 : i32
    %c0_i32_0 = arith.constant 0 : i32
    %c0_i32_1 = arith.constant 0 : i32
    %c0_i32_2 = arith.constant 0 : i32
    return %c0_i32, %c0_i32_0, %c0_i32_1 : i32, i32, i32
  }
  func.func @transform_6(%arg0: i32) -> (i32, i32, i32, i32) {
    %c0_i32 = arith.constant 0 : i32
    %c0_i32_0 = arith.constant 0 : i32
    %c0_i32_1 = arith.constant 0 : i32
    %c0_i32_2 = arith.constant 0 : i32
    %c0_i32_3 = arith.constant 0 : i32
    return %c0_i32, %c0_i32_0, %c0_i32_1, %c0_i32_2 : i32, i32, i32, i32
  }
  func.func @transform_7(%arg0: i32) -> (i32, i32, i32) {
    %c0_i32 = arith.constant 0 : i32
    %c0_i32_0 = arith.constant 0 : i32
    %c0_i32_1 = arith.constant 0 : i32
    %c0_i32_2 = arith.constant 0 : i32
    return %c0_i32, %c0_i32_0, %c0_i32_1 : i32, i32, i32
  }
  func.func @transform_8(%arg0: i32) -> (i32, i32, i32) {
    %c0_i32 = arith.constant 0 : i32
    %c0_i32_0 = arith.constant 0 : i32
    %c0_i32_1 = arith.constant 0 : i32
    %c0_i32_2 = arith.constant 0 : i32
    return %c0_i32, %c0_i32_0, %c0_i32_1 : i32, i32, i32
  }
  func.func @transform_9(%arg0: i32) -> (i32, i32, i32) {
    %c0_i32 = arith.constant 0 : i32
    %c0_i32_0 = arith.constant 0 : i32
    %c0_i32_1 = arith.constant 0 : i32
    %c0_i32_2 = arith.constant 0 : i32
    return %c0_i32, %c0_i32_0, %c0_i32_1 : i32, i32, i32
  }
  func.func @transform_10(%arg0: i32) -> (i32, i32, i32) {
    %c0_i32 = arith.constant 0 : i32
    %c0_i32_0 = arith.constant 0 : i32
    %c0_i32_1 = arith.constant 0 : i32
    %c0_i32_2 = arith.constant 0 : i32
    return %c0_i32, %c0_i32_0, %c0_i32_1 : i32, i32, i32
  }
  func.func @transform_11(%arg0: i32) -> (i32, i32, i32) {
    %c0_i32 = arith.constant 0 : i32
    %c0_i32_0 = arith.constant 0 : i32
    %c0_i32_1 = arith.constant 0 : i32
    %c0_i32_2 = arith.constant 0 : i32
    return %c0_i32, %c0_i32_0, %c0_i32_1 : i32, i32, i32
  }
  func.func @transform_12(%arg0: i32) -> (i32, i32, i32) {
    %c0_i32 = arith.constant 0 : i32
    %c0_i32_0 = arith.constant 0 : i32
    %c0_i32_1 = arith.constant 0 : i32
    %c0_i32_2 = arith.constant 0 : i32
    return %c0_i32, %c0_i32_0, %c0_i32_1 : i32, i32, i32
  }
  func.func @transform_13(%arg0: i32) -> (i32, i32, i32) {
    %c0_i32 = arith.constant 0 : i32
    %c0_i32_0 = arith.constant 0 : i32
    %c0_i32_1 = arith.constant 0 : i32
    %c0_i32_2 = arith.constant 0 : i32
    return %c0_i32, %c0_i32_0, %c0_i32_1 : i32, i32, i32
  }
  func.func @transform_14(%arg0: i32) -> (i32, i32, i32) {
    %c0_i32 = arith.constant 0 : i32
    %c0_i32_0 = arith.constant 0 : i32
    %c0_i32_1 = arith.constant 0 : i32
    %c0_i32_2 = arith.constant 0 : i32
    return %c0_i32, %c0_i32_0, %c0_i32_1 : i32, i32, i32
  }
  func.func @transform_15(%arg0: i32) -> (i32, i32, i32) {
    %c0_i32 = arith.constant 0 : i32
    %c0_i32_0 = arith.constant 0 : i32
    %c0_i32_1 = arith.constant 0 : i32
    %c0_i32_2 = arith.constant 0 : i32
    return %c0_i32, %c0_i32_0, %c0_i32_1 : i32, i32, i32
  }
  func.func @transform_16(%arg0: i32) -> (i32, i32) {
    %c0_i32 = arith.constant 0 : i32
    %c0_i32_0 = arith.constant 0 : i32
    %c0_i32_1 = arith.constant 0 : i32
    return %c0_i32, %c0_i32_0 : i32, i32
  }
  func.func @transform_17(%arg0: i32) -> (i32, i32) {
    %c0_i32 = arith.constant 0 : i32
    %c0_i32_0 = arith.constant 0 : i32
    %c0_i32_1 = arith.constant 0 : i32
    return %c0_i32, %c0_i32_0 : i32, i32
  }
  func.func @transform_18(%arg0: i32) -> (i32, i32, i32) {
    %c0_i32 = arith.constant 0 : i32
    %c0_i32_0 = arith.constant 0 : i32
    %c0_i32_1 = arith.constant 0 : i32
    return %arg0, %c0_i32, %c0_i32_0 : i32, i32, i32
  }
}

</mosaic_0001>

<llo_original>
// kernel: bert_classifier_forward.1
$region0: #{bert_classifier_forward.1}
  #allocation0 [shape = 'u32[]', space=smem, size = 0x4, offset = 0x4, fixed_abs, tag = 'smem constant byte address 0x4 - core index']
  #allocation1 [shape = 'u32[144,128]{1,0:T(1,128)}', space=vmem, size = 0x12000, scoped, tag = 'internal scratch']
  %s0 = inlined_call_operand.vmem [shape: f32[2,16,32], index: 0, kind: input, shape index: {}]
  %s1 = inlined_call_operand.vmem [shape: f32[2,2,8], index: 1, kind: input, shape index: {}]
  %s2 = inlined_call_operand.vmem [shape: f32[1,32], index: 2, kind: input, shape index: {}]
  %s3 = inlined_call_operand.vmem [shape: f32[1,32], index: 3, kind: input, shape index: {}]
  %s4 = inlined_call_operand.vmem [shape: f32[3,32,96], index: 4, kind: input, shape index: {}]
  %s5 = inlined_call_operand.vmem [shape: f32[3,1,96], index: 5, kind: input, shape index: {}]
  %s6 = inlined_call_operand.vmem [shape: f32[3,4,8,32], index: 6, kind: input, shape index: {}]
  %s7 = inlined_call_operand.vmem [shape: f32[3,1,32], index: 7, kind: input, shape index: {}]
  %s8 = inlined_call_operand.vmem [shape: f32[3,1,32], index: 8, kind: input, shape index: {}]
  %s9 = inlined_call_operand.vmem [shape: f32[3,1,32], index: 9, kind: input, shape index: {}]
  %s10 = inlined_call_operand.vmem [shape: f32[3,32,64], index: 10, kind: input, shape index: {}]
  %s11 = inlined_call_operand.vmem [shape: f32[3,1,64], index: 11, kind: input, shape index: {}]
  %s12 = inlined_call_operand.vmem [shape: f32[3,64,32], index: 12, kind: input, shape index: {}]
  %s13 = inlined_call_operand.vmem [shape: f32[3,1,32], index: 13, kind: input, shape index: {}]
  %s14 = inlined_call_operand.vmem [shape: f32[3,1,32], index: 14, kind: input, shape index: {}]
  %s15 = inlined_call_operand.vmem [shape: f32[3,1,32], index: 15, kind: input, shape index: {}]
  %s16 = inlined_call_operand.vmem [shape: f32[32,32], index: 16, kind: input, shape index: {}]
  %s17 = inlined_call_operand.vmem [shape: f32[1,32], index: 17, kind: input, shape index: {}]
  %s18 = inlined_call_operand.vmem [shape: f32[2,2,32], index: 18, kind: output, shape index: {}]
  %s19 = sld [smem:[#allocation0]]
  $region105: #{bert_classifier_forward.1} parent=0
    _
  %s21 = ssub.s32 1, %s19
  %s22 = scalar_select 0, %s21, %s19
  loop: start=0, step=1, limit=4
  $region2: #{bert_classifier_forward.1} parent=0 // loop_pre_header
    _
  $region3: #{bert_classifier_forward.1} parent=0 // loop_header
    %s24 = sphi 0, %s28
    %p25 = scmp.ge.s32.totalorder %s24, 4
    %s34 = sphi 0, %s36
    %s37 = sphi 0, %s34
    %s38 = sphi 0, %s37
    %s54 = sphi 0, %s38
    %s60 = sphi 0, %s62
    %s63 = sphi 0, %s60
    %s64 = sphi 0, %s63
    %s80 = sphi 0, %s64
    %s84 = sphi 0, %s84
    %s86 = sphi 0, %s84
    %s87 = sphi 0, %s86
    %s101 = sphi 0, %s87
    %s105 = sphi 0, %s105
    %s107 = sphi 0, %s105
    %s108 = sphi 0, %s107
    %s122 = sphi 0, %s108
    %s126 = sphi 0, %s126
    %s128 = sphi 0, %s126
    %s129 = sphi 0, %s128
    %s143 = sphi 0, %s129
    %s147 = sphi 0, %s147
    %s149 = sphi 0, %s147
    %s150 = sphi 0, %s149
    %s164 = sphi 0, %s150
    %s168 = sphi 0, %s168
    %s170 = sphi 0, %s168
    %s171 = sphi 0, %s170
    %s185 = sphi 0, %s171
    %s189 = sphi 0, %s189
    %s191 = sphi 0, %s189
    %s192 = sphi 0, %s191
    %s206 = sphi 0, %s192
    %s210 = sphi 0, %s210
    %s212 = sphi 0, %s210
    %s213 = sphi 0, %s212
    %s227 = sphi 0, %s213
    %s231 = sphi 0, %s231
    %s233 = sphi 0, %s231
    %s234 = sphi 0, %s233
    %s248 = sphi 0, %s234
    %s252 = sphi 0, %s252
    %s254 = sphi 0, %s252
    %s255 = sphi 0, %s254
    %s269 = sphi 0, %s255
    %s273 = sphi 0, %s273
    %s275 = sphi 0, %s273
    %s276 = sphi 0, %s275
    %s290 = sphi 0, %s276
    %s294 = sphi 0, %s294
    %s296 = sphi 0, %s294
    %s297 = sphi 0, %s296
    %s311 = sphi 0, %s297
    %s315 = sphi 0, %s315
    %s317 = sphi 0, %s315
    %s318 = sphi 0, %s317
    %s332 = sphi 0, %s318
    %s336 = sphi 0, %s336
    %s338 = sphi 0, %s336
    %s339 = sphi 0, %s338
    %s353 = sphi 0, %s339
    %s357 = sphi 0, %s357
    %s359 = sphi 0, %s357
    %s360 = sphi 0, %s359
    %s374 = sphi 0, %s360
    %s378 = sphi 0, %s378
    %s380 = sphi 0, %s378
    %s381 = sphi 0, %s380
    %s395 = sphi 0, %s381
    %s399 = sphi 0, %s399
    %s401 = sphi 0, %s399
    %s402 = sphi 0, %s401
    %s416 = sphi 0, %s402
    %s422 = sphi 0, %s424
    %s425 = sphi 0, %s422
    %s426 = sphi 0, %s425
    %s442 = sphi 0, %s426
  $region4: #{bert_classifier_forward.1} parent=0 // loop_header_branch
    %27 = sbr.rel (%p25) target = $region8
  $region5: #{bert_classifier_forward.1} parent=0 // loop_body
    %s29 = ssub.s32 %s24, 1
    %s30 = ssub.s32 %s24, 2
    %s31 = sadd.s32 %s24, 1
    %s32 = ssub.s32 %s24, %s31
    %p33 = scmp.eq.s32.totalorder %s32, 0
    %s35 = sadd.s32 %s34, 1
    %s36 = scalar_select %p33, %s34, %s35
    %p39 = pneg %p33
    %p40 = scmp.eq.s32.totalorder %s24, 1
    %p41 = por %p39, %p40
    %p42 = scmp.ne.s32.totalorder %s34, %s37
    %p43 = scmp.eq.s32.totalorder %s24, 0
    %p44 = por %p42, %p43
    %p45 = scmp.ne.s32.totalorder %s34, %s37
    %p46 = scmp.eq.s32.totalorder %s29, 1
    %p47 = por %p45, %p46
    %p48 = scmp.ne.s32.totalorder %s37, %s38
    %p49 = scmp.eq.s32.totalorder %s29, 0
    %p50 = por %p48, %p49
    %p51 = scmp.ne.s32.totalorder %s37, %s38
    %p52 = scmp.eq.s32.totalorder %s30, 1
    %p53 = por %p51, %p52
    %p55 = scmp.ne.s32.totalorder %s38, %s54
    %p56 = scmp.eq.s32.totalorder %s30, 0
    %p57 = por %p55, %p56
    %s58 = ssub.s32 %s24, %s31
    %p59 = scmp.eq.s32.totalorder %s58, 0
    %s61 = sadd.s32 %s60, 1
    %s62 = scalar_select %p59, %s60, %s61
    %p65 = pneg %p59
    %p66 = scmp.eq.s32.totalorder %s24, 1
    %p67 = por %p65, %p66
    %p68 = scmp.ne.s32.totalorder %s60, %s63
    %p69 = scmp.eq.s32.totalorder %s24, 0
    %p70 = por %p68, %p69
    %p71 = scmp.ne.s32.totalorder %s60, %s63
    %p72 = scmp.eq.s32.totalorder %s29, 1
    %p73 = por %p71, %p72
    %p74 = scmp.ne.s32.totalorder %s63, %s64
    %p75 = scmp.eq.s32.totalorder %s29, 0
    %p76 = por %p74, %p75
    %p77 = scmp.ne.s32.totalorder %s63, %s64
    %p78 = scmp.eq.s32.totalorder %s30, 1
    %p79 = por %p77, %p78
    %p81 = scmp.ne.s32.totalorder %s64, %s80
    %p82 = scmp.eq.s32.totalorder %s30, 0
    %p83 = por %p81, %p82
    %s85 = sadd.s32 %s84, 1
    %p88 = scmp.eq.s32.totalorder %s24, 1
    %p89 = scmp.ne.s32.totalorder %s84, %s86
    %p90 = scmp.eq.s32.totalorder %s24, 0
    %p91 = por %p89, %p90
    %p92 = scmp.ne.s32.totalorder %s84, %s86
    %p93 = scmp.eq.s32.totalorder %s29, 1
    %p94 = por %p92, %p93
    %p95 = scmp.ne.s32.totalorder %s86, %s87
    %p96 = scmp.eq.s32.totalorder %s29, 0
    %p97 = por %p95, %p96
    %p98 = scmp.ne.s32.totalorder %s86, %s87
    %p99 = scmp.eq.s32.totalorder %s30, 1
    %p100 = por %p98, %p99
    %p102 = scmp.ne.s32.totalorder %s87, %s101
    %p103 = scmp.eq.s32.totalorder %s30, 0
    %p104 = por %p102, %p103
    %s106 = sadd.s32 %s105, 1
    %p109 = scmp.eq.s32.totalorder %s24, 1
    %p110 = scmp.ne.s32.totalorder %s105, %s107
    %p111 = scmp.eq.s32.totalorder %s24, 0
    %p112 = por %p110, %p111
    %p113 = scmp.ne.s32.totalorder %s105, %s107
    %p114 = scmp.eq.s32.totalorder %s29, 1
    %p115 = por %p113, %p114
    %p116 = scmp.ne.s32.totalorder %s107, %s108
    %p117 = scmp.eq.s32.totalorder %s29, 0
    %p118 = por %p116, %p117
    %p119 = scmp.ne.s32.totalorder %s107, %s108
    %p120 = scmp.eq.s32.totalorder %s30, 1
    %p121 = por %p119, %p120
    %p123 = scmp.ne.s32.totalorder %s108, %s122
    %p124 = scmp.eq.s32.totalorder %s30, 0
    %p125 = por %p123, %p124
    %s127 = sadd.s32 %s126, 1
    %p130 = scmp.eq.s32.totalorder %s24, 1
    %p131 = scmp.ne.s32.totalorder %s126, %s128
    %p132 = scmp.eq.s32.totalorder %s24, 0
    %p133 = por %p131, %p132
    %p134 = scmp.ne.s32.totalorder %s126, %s128
    %p135 = scmp.eq.s32.totalorder %s29, 1
    %p136 = por %p134, %p135
    %p137 = scmp.ne.s32.totalorder %s128, %s129
    %p138 = scmp.eq.s32.totalorder %s29, 0
    %p139 = por %p137, %p138
    %p140 = scmp.ne.s32.totalorder %s128, %s129
    %p141 = scmp.eq.s32.totalorder %s30, 1
    %p142 = por %p140, %p141
    %p144 = scmp.ne.s32.totalorder %s129, %s143
    %p145 = scmp.eq.s32.totalorder %s30, 0
    %p146 = por %p144, %p145
    %s148 = sadd.s32 %s147, 1
    %p151 = scmp.eq.s32.totalorder %s24, 1
    %p152 = scmp.ne.s32.totalorder %s147, %s149
    %p153 = scmp.eq.s32.totalorder %s24, 0
    %p154 = por %p152, %p153
    %p155 = scmp.ne.s32.totalorder %s147, %s149
    %p156 = scmp.eq.s32.totalorder %s29, 1
    %p157 = por %p155, %p156
    %p158 = scmp.ne.s32.totalorder %s149, %s150
    %p159 = scmp.eq.s32.totalorder %s29, 0
    %p160 = por %p158, %p159
    %p161 = scmp.ne.s32.totalorder %s149, %s150
    %p162 = scmp.eq.s32.totalorder %s30, 1
    %p163 = por %p161, %p162
    %p165 = scmp.ne.s32.totalorder %s150, %s164
    %p166 = scmp.eq.s32.totalorder %s30, 0
    %p167 = por %p165, %p166
    %s169 = sadd.s32 %s168, 1
    %p172 = scmp.eq.s32.totalorder %s24, 1
    %p173 = scmp.ne.s32.totalorder %s168, %s170
    %p174 = scmp.eq.s32.totalorder %s24, 0
    %p175 = por %p173, %p174
    %p176 = scmp.ne.s32.totalorder %s168, %s170
    %p177 = scmp.eq.s32.totalorder %s29, 1
    %p178 = por %p176, %p177
    %p179 = scmp.ne.s32.totalorder %s170, %s171
    %p180 = scmp.eq.s32.totalorder %s29, 0
    %p181 = por %p179, %p180
    %p182 = scmp.ne.s32.totalorder %s170, %s171
    %p183 = scmp.eq.s32.totalorder %s30, 1
    %p184 = por %p182, %p183
    %p186 = scmp.ne.s32.totalorder %s171, %s185
    %p187 = scmp.eq.s32.totalorder %s30, 0
    %p188 = por %p186, %p187
    %s190 = sadd.s32 %s189, 1
    %p193 = scmp.eq.s32.totalorder %s24, 1
    %p194 = scmp.ne.s32.totalorder %s189, %s191
    %p195 = scmp.eq.s32.totalorder %s24, 0
    %p196 = por %p194, %p195
    %p197 = scmp.ne.s32.totalorder %s189, %s191
    %p198 = scmp.eq.s32.totalorder %s29, 1
    %p199 = por %p197, %p198
    %p200 = scmp.ne.s32.totalorder %s191, %s192
    %p201 = scmp.eq.s32.totalorder %s29, 0
    %p202 = por %p200, %p201
    %p203 = scmp.ne.s32.totalorder %s191, %s192
    %p204 = scmp.eq.s32.totalorder %s30, 1
    %p205 = por %p203, %p204
    %p207 = scmp.ne.s32.totalorder %s192, %s206
    %p208 = scmp.eq.s32.totalorder %s30, 0
    %p209 = por %p207, %p208
    %s211 = sadd.s32 %s210, 1
    %p214 = scmp.eq.s32.totalorder %s24, 1
    %p215 = scmp.ne.s32.totalorder %s210, %s212
    %p216 = scmp.eq.s32.totalorder %s24, 0
    %p217 = por %p215, %p216
    %p218 = scmp.ne.s32.totalorder %s210, %s212
    %p219 = scmp.eq.s32.totalorder %s29, 1
    %p220 = por %p218, %p219
    %p221 = scmp.ne.s32.totalorder %s212, %s213
    %p222 = scmp.eq.s32.totalorder %s29, 0
    %p223 = por %p221, %p222
    %p224 = scmp.ne.s32.totalorder %s212, %s213
    %p225 = scmp.eq.s32.totalorder %s30, 1
    %p226 = por %p224, %p225
    %p228 = scmp.ne.s32.totalorder %s213, %s227
    %p229 = scmp.eq.s32.totalorder %s30, 0
    %p230 = por %p228, %p229
    %s232 = sadd.s32 %s231, 1
    %p235 = scmp.eq.s32.totalorder %s24, 1
    %p236 = scmp.ne.s32.totalorder %s231, %s233
    %p237 = scmp.eq.s32.totalorder %s24, 0
    %p238 = por %p236, %p237
    %p239 = scmp.ne.s32.totalorder %s231, %s233
    %p240 = scmp.eq.s32.totalorder %s29, 1
    %p241 = por %p239, %p240
    %p242 = scmp.ne.s32.totalorder %s233, %s234
    %p243 = scmp.eq.s32.totalorder %s29, 0
    %p244 = por %p242, %p243
    %p245 = scmp.ne.s32.totalorder %s233, %s234
    %p246 = scmp.eq.s32.totalorder %s30, 1
    %p247 = por %p245, %p246
    %p249 = scmp.ne.s32.totalorder %s234, %s248
    %p250 = scmp.eq.s32.totalorder %s30, 0
    %p251 = por %p249, %p250
    %s253 = sadd.s32 %s252, 1
    %p256 = scmp.eq.s32.totalorder %s24, 1
    %p257 = scmp.ne.s32.totalorder %s252, %s254
    %p258 = scmp.eq.s32.totalorder %s24, 0
    %p259 = por %p257, %p258
    %p260 = scmp.ne.s32.totalorder %s252, %s254
    %p261 = scmp.eq.s32.totalorder %s29, 1
    %p262 = por %p260, %p261
    %p263 = scmp.ne.s32.totalorder %s254, %s255
    %p264 = scmp.eq.s32.totalorder %s29, 0
    %p265 = por %p263, %p264
    %p266 = scmp.ne.s32.totalorder %s254, %s255
    %p267 = scmp.eq.s32.totalorder %s30, 1
    %p268 = por %p266, %p267
    %p270 = scmp.ne.s32.totalorder %s255, %s269
    %p271 = scmp.eq.s32.totalorder %s30, 0
    %p272 = por %p270, %p271
    %s274 = sadd.s32 %s273, 1
    %p277 = scmp.eq.s32.totalorder %s24, 1
    %p278 = scmp.ne.s32.totalorder %s273, %s275
    %p279 = scmp.eq.s32.totalorder %s24, 0
    %p280 = por %p278, %p279
    %p281 = scmp.ne.s32.totalorder %s273, %s275
    %p282 = scmp.eq.s32.totalorder %s29, 1
    %p283 = por %p281, %p282
    %p284 = scmp.ne.s32.totalorder %s275, %s276
    %p285 = scmp.eq.s32.totalorder %s29, 0
    %p286 = por %p284, %p285
    %p287 = scmp.ne.s32.totalorder %s275, %s276
    %p288 = scmp.eq.s32.totalorder %s30, 1
    %p289 = por %p287, %p288
    %p291 = scmp.ne.s32.totalorder %s276, %s290
    %p292 = scmp.eq.s32.totalorder %s30, 0
    %p293 = por %p291, %p292
    %s295 = sadd.s32 %s294, 1
    %p298 = scmp.eq.s32.totalorder %s24, 1
    %p299 = scmp.ne.s32.totalorder %s294, %s296
    %p300 = scmp.eq.s32.totalorder %s24, 0
    %p301 = por %p299, %p300
    %p302 = scmp.ne.s32.totalorder %s294, %s296
    %p303 = scmp.eq.s32.totalorder %s29, 1
    %p304 = por %p302, %p303
    %p305 = scmp.ne.s32.totalorder %s296, %s297
    %p306 = scmp.eq.s32.totalorder %s29, 0
    %p307 = por %p305, %p306
    %p308 = scmp.ne.s32.totalorder %s296, %s297
    %p309 = scmp.eq.s32.totalorder %s30, 1
    %p310 = por %p308, %p309
    %p312 = scmp.ne.s32.totalorder %s297, %s311
    %p313 = scmp.eq.s32.totalorder %s30, 0
    %p314 = por %p312, %p313
    %s316 = sadd.s32 %s315, 1
    %p319 = scmp.eq.s32.totalorder %s24, 1
    %p320 = scmp.ne.s32.totalorder %s315, %s317
    %p321 = scmp.eq.s32.totalorder %s24, 0
    %p322 = por %p320, %p321
    %p323 = scmp.ne.s32.totalorder %s315, %s317
    %p324 = scmp.eq.s32.totalorder %s29, 1
    %p325 = por %p323, %p324
    %p326 = scmp.ne.s32.totalorder %s317, %s318
    %p327 = scmp.eq.s32.totalorder %s29, 0
    %p328 = por %p326, %p327
    %p329 = scmp.ne.s32.totalorder %s317, %s318
    %p330 = scmp.eq.s32.totalorder %s30, 1
    %p331 = por %p329, %p330
    %p333 = scmp.ne.s32.totalorder %s318, %s332
    %p334 = scmp.eq.s32.totalorder %s30, 0
    %p335 = por %p333, %p334
    %s337 = sadd.s32 %s336, 1
    %p340 = scmp.eq.s32.totalorder %s24, 1
    %p341 = scmp.ne.s32.totalorder %s336, %s338
    %p342 = scmp.eq.s32.totalorder %s24, 0
    %p343 = por %p341, %p342
    %p344 = scmp.ne.s32.totalorder %s336, %s338
    %p345 = scmp.eq.s32.totalorder %s29, 1
    %p346 = por %p344, %p345
    %p347 = scmp.ne.s32.totalorder %s338, %s339
    %p348 = scmp.eq.s32.totalorder %s29, 0
    %p349 = por %p347, %p348
    %p350 = scmp.ne.s32.totalorder %s338, %s339
    %p351 = scmp.eq.s32.totalorder %s30, 1
    %p352 = por %p350, %p351
    %p354 = scmp.ne.s32.totalorder %s339, %s353
    %p355 = scmp.eq.s32.totalorder %s30, 0
    %p356 = por %p354, %p355
    %s358 = sadd.s32 %s357, 1
    %p361 = scmp.eq.s32.totalorder %s24, 1
    %p362 = scmp.ne.s32.totalorder %s357, %s359
    %p363 = scmp.eq.s32.totalorder %s24, 0
    %p364 = por %p362, %p363
    %p365 = scmp.ne.s32.totalorder %s357, %s359
    %p366 = scmp.eq.s32.totalorder %s29, 1
    %p367 = por %p365, %p366
    %p368 = scmp.ne.s32.totalorder %s359, %s360
    %p369 = scmp.eq.s32.totalorder %s29, 0
    %p370 = por %p368, %p369
    %p371 = scmp.ne.s32.totalorder %s359, %s360
    %p372 = scmp.eq.s32.totalorder %s30, 1
    %p373 = por %p371, %p372
    %p375 = scmp.ne.s32.totalorder %s360, %s374
    %p376 = scmp.eq.s32.totalorder %s30, 0
    %p377 = por %p375, %p376
    %s379 = sadd.s32 %s378, 1
    %p382 = scmp.eq.s32.totalorder %s24, 1
    %p383 = scmp.ne.s32.totalorder %s378, %s380
    %p384 = scmp.eq.s32.totalorder %s24, 0
    %p385 = por %p383, %p384
    %p386 = scmp.ne.s32.totalorder %s378, %s380
    %p387 = scmp.eq.s32.totalorder %s29, 1
    %p388 = por %p386, %p387
    %p389 = scmp.ne.s32.totalorder %s380, %s381
    %p390 = scmp.eq.s32.totalorder %s29, 0
    %p391 = por %p389, %p390
    %p392 = scmp.ne.s32.totalorder %s380, %s381
    %p393 = scmp.eq.s32.totalorder %s30, 1
    %p394 = por %p392, %p393
    %p396 = scmp.ne.s32.totalorder %s381, %s395
    %p397 = scmp.eq.s32.totalorder %s30, 0
    %p398 = por %p396, %p397
    %s400 = sadd.s32 %s399, 1
    %p403 = scmp.eq.s32.totalorder %s24, 1
    %p404 = scmp.ne.s32.totalorder %s399, %s401
    %p405 = scmp.eq.s32.totalorder %s24, 0
    %p406 = por %p404, %p405
    %p407 = scmp.ne.s32.totalorder %s399, %s401
    %p408 = scmp.eq.s32.totalorder %s29, 1
    %p409 = por %p407, %p408
    %p410 = scmp.ne.s32.totalorder %s401, %s402
    %p411 = scmp.eq.s32.totalorder %s29, 0
    %p412 = por %p410, %p411
    %p413 = scmp.ne.s32.totalorder %s401, %s402
    %p414 = scmp.eq.s32.totalorder %s30, 1
    %p415 = por %p413, %p414
    %p417 = scmp.ne.s32.totalorder %s402, %s416
    %p418 = scmp.eq.s32.totalorder %s30, 0
    %p419 = por %p417, %p418
    %s420 = ssub.s32 %s24, %s31
    %p421 = scmp.eq.s32.totalorder %s420, 0
    %s423 = sadd.s32 %s422, 1
    %s424 = scalar_select %p421, %s422, %s423
    %p427 = pneg %p421
    %p428 = scmp.eq.s32.totalorder %s24, 1
    %p429 = por %p427, %p428
    %p430 = scmp.ne.s32.totalorder %s422, %s425
    %p431 = scmp.eq.s32.totalorder %s24, 0
    %p432 = por %p430, %p431
    %p433 = scmp.ne.s32.totalorder %s422, %s425
    %p434 = scmp.eq.s32.totalorder %s29, 1
    %p435 = por %p433, %p434
    %p436 = scmp.ne.s32.totalorder %s425, %s426
    %p437 = scmp.eq.s32.totalorder %s29, 0
    %p438 = por %p436, %p437
    %p439 = scmp.ne.s32.totalorder %s425, %s426
    %p440 = scmp.eq.s32.totalorder %s30, 1
    %p441 = por %p439, %p440
    %p443 = scmp.ne.s32.totalorder %s426, %s442
    %p444 = scmp.eq.s32.totalorder %s30, 0
    %p445 = por %p443, %p444
    %p446 = scmp.le.s32.totalorder 1, %s24
    %p447 = scmp.lt.s32.totalorder %s24, 3
    %p448 = pnand %p446, %p447
    %p449 = pneg %p448
    // Predicated region
    $region9: #{bert_classifier_forward.1} parent=5 // pred_check
      _
    $region10: #{bert_classifier_forward.1} parent=5 // pred_check_branch
      %451 = sbr.rel (%p448) target = $region12
    $region11: #{bert_classifier_forward.1} parent=5 // pred_region
      %s452 = ssub.s32 %s24, 1
      // Predicated region
      $region13: #{bert_classifier_forward.1} parent=11 // pred_check
        %p453 = pneg %p97
      $region14: #{bert_classifier_forward.1} parent=11 // pred_check_branch
        %455 = sbr.rel (%p453) target = $region16
      $region15: #{bert_classifier_forward.1} parent=11 // pred_region
        _
      $region16: #{bert_classifier_forward.1} parent=11 // pred_fallthru
        _
      // Predicated region
      $region17: #{bert_classifier_forward.1} parent=11 // pred_check
        %p456 = pneg %p118
      $region18: #{bert_classifier_forward.1} parent=11 // pred_check_branch
        %458 = sbr.rel (%p456) target = $region20
      $region19: #{bert_classifier_forward.1} parent=11 // pred_region
        _
      $region20: #{bert_classifier_forward.1} parent=11 // pred_fallthru
        _
      // Predicated region
      $region21: #{bert_classifier_forward.1} parent=11 // pred_check
        %p459 = pneg %p139
      $region22: #{bert_classifier_forward.1} parent=11 // pred_check_branch
        %461 = sbr.rel (%p459) target = $region24
      $region23: #{bert_classifier_forward.1} parent=11 // pred_region
        _
      $region24: #{bert_classifier_forward.1} parent=11 // pred_fallthru
        _
      // Predicated region
      $region25: #{bert_classifier_forward.1} parent=11 // pred_check
        %p462 = pneg %p160
      $region26: #{bert_classifier_forward.1} parent=11 // pred_check_branch
        %464 = sbr.rel (%p462) target = $region28
      $region27: #{bert_classifier_forward.1} parent=11 // pred_region
        _
      $region28: #{bert_classifier_forward.1} parent=11 // pred_fallthru
        _
      // Predicated region
      $region29: #{bert_classifier_forward.1} parent=11 // pred_check
        %p465 = pneg %p181
      $region30: #{bert_classifier_forward.1} parent=11 // pred_check_branch
        %467 = sbr.rel (%p465) target = $region32
      $region31: #{bert_classifier_forward.1} parent=11 // pred_region
        _
      $region32: #{bert_classifier_forward.1} parent=11 // pred_fallthru
        _
      // Predicated region
      $region33: #{bert_classifier_forward.1} parent=11 // pred_check
        %p468 = pneg %p202
      $region34: #{bert_classifier_forward.1} parent=11 // pred_check_branch
        %470 = sbr.rel (%p468) target = $region36
      $region35: #{bert_classifier_forward.1} parent=11 // pred_region
        _
      $region36: #{bert_classifier_forward.1} parent=11 // pred_fallthru
        _
      // Predicated region
      $region37: #{bert_classifier_forward.1} parent=11 // pred_check
        %p471 = pneg %p223
      $region38: #{bert_classifier_forward.1} parent=11 // pred_check_branch
        %473 = sbr.rel (%p471) target = $region40
      $region39: #{bert_classifier_forward.1} parent=11 // pred_region
        _
      $region40: #{bert_classifier_forward.1} parent=11 // pred_fallthru
        _
      // Predicated region
      $region41: #{bert_classifier_forward.1} parent=11 // pred_check
        %p474 = pneg %p244
      $region42: #{bert_classifier_forward.1} parent=11 // pred_check_branch
        %476 = sbr.rel (%p474) target = $region44
      $region43: #{bert_classifier_forward.1} parent=11 // pred_region
        _
      $region44: #{bert_classifier_forward.1} parent=11 // pred_fallthru
        _
      // Predicated region
      $region45: #{bert_classifier_forward.1} parent=11 // pred_check
        %p477 = pneg %p265
      $region46: #{bert_classifier_forward.1} parent=11 // pred_check_branch
        %479 = sbr.rel (%p477) target = $region48
      $region47: #{bert_classifier_forward.1} parent=11 // pred_region
        _
      $region48: #{bert_classifier_forward.1} parent=11 // pred_fallthru
        _
      // Predicated region
      $region49: #{bert_classifier_forward.1} parent=11 // pred_check
        %p480 = pneg %p286
      $region50: #{bert_classifier_forward.1} parent=11 // pred_check_branch
        %482 = sbr.rel (%p480) target = $region52
      $region51: #{bert_classifier_forward.1} parent=11 // pred_region
        _
      $region52: #{bert_classifier_forward.1} parent=11 // pred_fallthru
        _
      // Predicated region
      $region53: #{bert_classifier_forward.1} parent=11 // pred_check
        %p483 = pneg %p307
      $region54: #{bert_classifier_forward.1} parent=11 // pred_check_branch
        %485 = sbr.rel (%p483) target = $region56
      $region55: #{bert_classifier_forward.1} parent=11 // pred_region
        _
      $region56: #{bert_classifier_forward.1} parent=11 // pred_fallthru
        _
      // Predicated region
      $region57: #{bert_classifier_forward.1} parent=11 // pred_check
        %p486 = pneg %p328
      $region58: #{bert_classifier_forward.1} parent=11 // pred_check_branch
        %488 = sbr.rel (%p486) target = $region60
      $region59: #{bert_classifier_forward.1} parent=11 // pred_region
        _
      $region60: #{bert_classifier_forward.1} parent=11 // pred_fallthru
        _
      // Predicated region
      $region61: #{bert_classifier_forward.1} parent=11 // pred_check
        %p489 = pneg %p349
      $region62: #{bert_classifier_forward.1} parent=11 // pred_check_branch
        %491 = sbr.rel (%p489) target = $region64
      $region63: #{bert_classifier_forward.1} parent=11 // pred_region
        _
      $region64: #{bert_classifier_forward.1} parent=11 // pred_fallthru
        _
      // Predicated region
      $region65: #{bert_classifier_forward.1} parent=11 // pred_check
        %p492 = pneg %p370
      $region66: #{bert_classifier_forward.1} parent=11 // pred_check_branch
        %494 = sbr.rel (%p492) target = $region68
      $region67: #{bert_classifier_forward.1} parent=11 // pred_region
        _
      $region68: #{bert_classifier_forward.1} parent=11 // pred_fallthru
        _
      // Predicated region
      $region69: #{bert_classifier_forward.1} parent=11 // pred_check
        %p495 = pneg %p391
      $region70: #{bert_classifier_forward.1} parent=11 // pred_check_branch
        %497 = sbr.rel (%p495) target = $region72
      $region71: #{bert_classifier_forward.1} parent=11 // pred_region
        _
      $region72: #{bert_classifier_forward.1} parent=11 // pred_fallthru
        _
      // Predicated region
      $region73: #{bert_classifier_forward.1} parent=11 // pred_check
        %p498 = pneg %p412
      $region74: #{bert_classifier_forward.1} parent=11 // pred_check_branch
        %500 = sbr.rel (%p498) target = $region76
      $region75: #{bert_classifier_forward.1} parent=11 // pred_region
        _
      $region76: #{bert_classifier_forward.1} parent=11 // pred_fallthru
        _
    $region12: #{bert_classifier_forward.1} parent=5 // pred_fallthru
      _
    %p501 = scmp.lt.s32.totalorder %s24, 2
    // Predicated region
    $region77: #{bert_classifier_forward.1} parent=5 // pred_check
      %p502 = pneg %p501
    $region78: #{bert_classifier_forward.1} parent=5 // pred_check_branch
      %504 = sbr.rel (%p502) target = $region80
    $region79: #{bert_classifier_forward.1} parent=5 // pred_region
      // Predicated region
      $region81: #{bert_classifier_forward.1} parent=79 // pred_check
        %p505 = pneg %p44
      $region82: #{bert_classifier_forward.1} parent=79 // pred_check_branch
        %507 = sbr.rel (%p505) target = $region84
      $region83: #{bert_classifier_forward.1} parent=79 // pred_region
        %p508 = scmp.lt.s32.totalorder %s24, 1
        %s509 = scalar_select %p508, %s24, 1
        %s510 = smul.addr %s509, 2
        %s511 = smul.addr %s510, 8
        %s512 = scalar_lea.vmem %s0, %s511
      $region84: #{bert_classifier_forward.1} parent=79 // pred_fallthru
        _
      // Predicated region
      $region85: #{bert_classifier_forward.1} parent=79 // pred_check
        %p513 = pneg %p70
      $region86: #{bert_classifier_forward.1} parent=79 // pred_check_branch
        %515 = sbr.rel (%p513) target = $region88
      $region87: #{bert_classifier_forward.1} parent=79 // pred_region
        %p516 = scmp.lt.s32.totalorder %s24, 1
        %s517 = scalar_select %p516, %s24, 1
        %s518 = smul.addr %s517, 2
        %s519 = scalar_lea.vmem %s1, %s518
      $region88: #{bert_classifier_forward.1} parent=79 // pred_fallthru
        _
    $region80: #{bert_classifier_forward.1} parent=5 // pred_fallthru
      _
    %p520 = scmp.le.s32.totalorder 1, %s24
    %p521 = scmp.lt.s32.totalorder %s24, 3
    %p522 = pnand %p520, %p521
    %p523 = pneg %p522
    // Predicated region
    $region89: #{bert_classifier_forward.1} parent=5 // pred_check
      _
    $region90: #{bert_classifier_forward.1} parent=5 // pred_check_branch
      %525 = sbr.rel (%p522) target = $region92
    $region91: #{bert_classifier_forward.1} parent=5 // pred_region
      %s526 = ssub.s32 %s24, 1
      %p527 = scmp.lt.s32.totalorder %s29, 1
      %s528 = scalar_select %p527, %s29, 1
      %s529 = smul.addr %s528, 2
      %s530 = smul.addr %s529, 8
      %s531 = scalar_lea.vmem %s0, %s530
      %p532 = pneg %p50
      %p533 = pneg %p47
      %p534 = scmp.lt.s32.totalorder %s29, 1
      %s535 = scalar_select %p534, %s29, 1
      %s536 = smul.addr %s535, 2
      %s537 = scalar_lea.vmem %s1, %s536
      %p538 = pneg %p76
      %p539 = pneg %p73
      %p540 = pneg %p97
      %p541 = pneg %p94
      %p542 = pneg %p118
      %p543 = pneg %p115
      %p544 = pneg %p139
      %p545 = pneg %p136
      %p546 = pneg %p160
      %p547 = pneg %p157
      %p548 = pneg %p181
      %p549 = pneg %p178
      %p550 = pneg %p202
      %p551 = pneg %p199
      %p552 = pneg %p223
      %p553 = pneg %p220
      %p554 = pneg %p244
      %p555 = pneg %p241
      %p556 = pneg %p265
      %p557 = pneg %p262
      %p558 = pneg %p286
      %p559 = pneg %p283
      %p560 = pneg %p307
      %p561 = pneg %p304
      %p562 = pneg %p328
      %p563 = pneg %p325
      %p564 = pneg %p349
      %p565 = pneg %p346
      %p566 = pneg %p370
      %p567 = pneg %p367
      %p568 = pneg %p391
      %p569 = pneg %p388
      %p570 = pneg %p412
      %p571 = pneg %p409
      %p572 = pneg %p438
      %p573 = pneg %p435
      %p574 = scmp.lt.s32.totalorder %s29, 1
      %s575 = scalar_select %p574, %s29, 1
      %s576 = smul.addr %s575, 2
      %s577 = scalar_lea.vmem %s18, %s576
      %p578 = scmp.lt.s32.totalorder %s29, 1
      %s579 = scalar_select %p578, %s29, 1
      %s580 = smul.addr %s579, 2
      %s581 = smul.addr %s580, 8
      %s582 = scalar_lea.vmem %s0, %s581
      %p583 = scmp.lt.s32.totalorder %s29, 1
      %s584 = scalar_select %p583, %s29, 1
      %s585 = smul.addr %s584, 2
      %s586 = scalar_lea.vmem %s1, %s585
      %p587 = scmp.lt.s32.totalorder %s29, 1
      %s588 = scalar_select %p587, %s29, 1
      %s589 = smul.addr %s588, 2
      %s590 = scalar_lea.vmem %s18, %s589
      %v591 = vld [vmem:[%s582] sm:$0xff]
      %v592 = vld [vmem:[%s582 + $0x8] sm:$0xff]
      %v593 = vld [vmem:[%s586] sm:$0x3]
      %v594 = vld [vmem:[%s2] sm:$0x1]
      %v595 = vld [vmem:[%s3] sm:$0x1]
      %vm596 = vcmask 261120
      %v597 = vsel %vm596, %v591, 0.0
      %598 = vadd.xlane.f32.xlu0 %v597
      %v599 = vpop.xlane.xlu0 %598
      %v600 = vsel %vm596, %v592, 0.0
      %601 = vadd.xlane.f32.xlu0 %v600
      %v602 = vpop.xlane.xlu0 %601
      %v603 = vrcp.pop 32.0
      %v604 = vmul.f32 %v599, %v603
      %v605 = vmul.f32 %v602, %v603
      %v606 = vsub.f32 %v591, %v604
      %v607 = vsub.f32 %v592, %v605
      %v608 = vmul.f32 %v606, %v606
      %v609 = vmul.f32 %v607, %v607
      %v610 = vsel %vm596, %v608, 0.0
      %611 = vadd.xlane.f32.xlu0 %v610
      %v612 = vpop.xlane.xlu0 %611
      %v613 = vsel %vm596, %v609, 0.0
      %614 = vadd.xlane.f32.xlu0 %v613
      %v615 = vpop.xlane.xlu0 %614
      %v616 = vmul.f32 %v612, %v603
      %v617 = vmul.f32 %v615, %v603
      %v618 = vadd.f32 %v616, 1e-12
      %v619 = vadd.f32 %v617, 1e-12
      %v620 = vrsqrt.pop %v618
      %v621 = vrsqrt.pop %v619
      %v622 = vmul.f32 %v606, %v620
      %v623 = vmul.f32 %v607, %v621
      %v625 = vlaneseq
      %v626 = vshrl.u32 %v625, 7
      %v627 = vsub.s32 0, %v626
      %v628 = vrot.slane %v594, %v627
      %v630 = vmul.f32 %v622, %v628
      %v631 = vmul.f32 %v623, %v628
      %v633 = vlaneseq
      %v634 = vshrl.u32 %v633, 7
      %v635 = vsub.s32 0, %v634
      %v636 = vrot.slane %v595, %v635
      %v638 = vadd.f32 %v630, %v636
      %v639 = vadd.f32 %v631, %v636
      %v640 = vld [vmem:[%s4] sm:$0xff]
      %v641 = vld [vmem:[%s4 + $0x8] sm:$0xff]
      %v642 = vld [vmem:[%s4 + $0x10] sm:$0xff]
      %v643 = vld [vmem:[%s4 + $0x18] sm:$0xff]
      %v644 = vld [vmem:[%s5] sm:$0x1]
      %v646 = vlaneseq
      %v647 = vshrl.u32 %v646, 7
      %v648 = vsub.s32 0, %v647
      %v649 = vrot.slane %v644, %v648
      %v652 = vsel %vm596, %v638, 0
      %v655 = vsel %vm596, %v639, 0
      %657 = vmatprep.subr.mxu0 0.0
      %658 = vmatpush1.msra.mxu0 0.0
      %659 = vmatprep.subr.mxu0 0.0
      %660 = vmatpush1.msra.mxu0 0.0
      %661 = vmatprep.subr.mxu0 0.0
      %662 = vmatpush1.msra.mxu0 0.0
      %663 = vmatprep.subr.mxu0 0.0
      %664 = vmatpush1.msra.mxu0 0.0
      %665 = vmatprep.subr.mxu0 0.0
      %666 = vmatpush1.msra.mxu0 0.0
      %667 = vmatprep.subr.mxu0 0.0
      %668 = vmatpush1.msra.mxu0 0.0
      %669 = vmatprep.subr.mxu0 0.0
      %670 = vmatpush1.msra.mxu0 0.0
      %671 = vmatprep.subr.mxu0 0.0
      %672 = vmatpush1.msra.mxu0 0.0
      %673 = vmatprep.subr.mxu0 0.0
      %674 = vmatpush1.msra.mxu0 0.0
      %675 = vmatprep.subr.mxu0 0.0
      %676 = vmatpush1.msra.mxu0 0.0
      %677 = vmatprep.subr.mxu0 0.0
      %678 = vmatpush1.msra.mxu0 0.0
      %679 = vmatprep.subr.mxu0 0.0
      %680 = vmatpush1.msra.mxu0 0.0
      %681 = vmatprep.subr.mxu0 0.0
      %682 = vmatpush1.msra.mxu0 %v643
      %683 = vmatprep.subr.mxu0 0.0
      %684 = vmatpush1.msra.mxu0 %v642
      %685 = vmatprep.subr.mxu0 0.0
      %686 = vmatpush1.msra.mxu0 %v641
      %687 = vmatprep.subr.mxu0 0.0
      %688 = vmatpush1.msra.mxu0 %v640
      %689 = vmatprep.subr.mxu0 0.0
      %690 = vmatpush2.msra.mxu0 0.0
      %691 = vmatprep.subr.mxu0 0.0
      %692 = vmatpush2.msra.mxu0 0.0
      %693 = vmatprep.subr.mxu0 0.0
      %694 = vmatpush2.msra.mxu0 0.0
      %695 = vmatprep.subr.mxu0 0.0
      %696 = vmatpush2.msra.mxu0 0.0
      %697 = vmatprep.subr.mxu0 0.0
      %698 = vmatpush2.msra.mxu0 0.0
      %699 = vmatprep.subr.mxu0 0.0
      %700 = vmatpush2.msra.mxu0 0.0
      %701 = vmatprep.subr.mxu0 0.0
      %702 = vmatpush2.msra.mxu0 0.0
      %703 = vmatprep.subr.mxu0 0.0
      %704 = vmatpush2.msra.mxu0 0.0
      %705 = vmatprep.subr.mxu0 0.0
      %706 = vmatpush2.msra.mxu0 0.0
      %707 = vmatprep.subr.mxu0 0.0
      %708 = vmatpush2.msra.mxu0 0.0
      %709 = vmatprep.subr.mxu0 0.0
      %710 = vmatpush2.msra.mxu0 0.0
      %711 = vmatprep.subr.mxu0 0.0
      %712 = vmatpush2.msra.mxu0 0.0
      %713 = vmatprep.subr.mxu0 0.0
      %714 = vmatpush2.msra.mxu0 0.0
      %715 = vmatprep.subr.mxu0 0.0
      %716 = vmatpush2.msra.mxu0 0.0
      %717 = vmatprep.subr.mxu0 0.0
      %718 = vmatpush2.msra.mxu0 0.0
      %719 = vmatprep.subr.mxu0 0.0
      %720 = vmatpush2.msra.mxu0 0.0
      %721 = vmatprep.mubr.f32.mxu0 0.0
      %722 = vmatmul.mubr.f32.gmra.mxu0 %v652
      %v723 = vpop.f32.mrf.mxu0
      %v724 = vadd.f32 %v649, %v723
      %v725 = vpop.f32.mrf.mxu0
      %726 = vmatprep.mubr.f32.mxu0 0.0
      %727 = vmatmul.mubr.f32.gmra.mxu0 %v655
      %v728 = vpop.f32.mrf.mxu0
      %v729 = vadd.f32 %v649, %v728
      %v730 = vpop.f32.mrf.mxu0
      %731 = vdwg.mxu0
      %733 = vrot.lane.b32.xlu0 %v724, 120
      %v734 = vpop.permute.xlu0 %733
      %735 = vrot.lane.b32.xlu0 %v724, 112
      %v736 = vpop.permute.xlu0 %735
      %737 = vrot.lane.b32.xlu0 %v724, 104
      %v738 = vpop.permute.xlu0 %737
      %739 = vrot.lane.b32.xlu0 %v724, 96
      %v740 = vpop.permute.xlu0 %739
      %vm741 = vcmask 64512
      %v742 = vsel %vm741, %v724, 0
      %v744 = vsel %vm741, %v740, 0
      %746 = vmatprep.subr.mxu0 0.0
      %747 = vmatpush1.xpose.msra.mxu0 0.0
      %748 = vmatprep.subr.mxu0 0.0
      %749 = vmatpush1.xpose.msra.mxu0 0.0
      %750 = vmatprep.subr.mxu0 0.0
      %751 = vmatpush1.xpose.msra.mxu0 0.0
      %752 = vmatprep.subr.mxu0 0.0
      %753 = vmatpush1.xpose.msra.mxu0 0.0
      %754 = vmatprep.subr.mxu0 0.0
      %755 = vmatpush1.xpose.msra.mxu0 0.0
      %756 = vmatprep.subr.mxu0 0.0
      %757 = vmatpush1.xpose.msra.mxu0 0.0
      %758 = vmatprep.subr.mxu0 0.0
      %759 = vmatpush1.xpose.msra.mxu0 0.0
      %760 = vmatprep.subr.mxu0 0.0
      %761 = vmatpush1.xpose.msra.mxu0 0.0
      %762 = vmatprep.subr.mxu0 0.0
      %763 = vmatpush1.xpose.msra.mxu0 0.0
      %764 = vmatprep.subr.mxu0 0.0
      %765 = vmatpush1.xpose.msra.mxu0 0.0
      %766 = vmatprep.subr.mxu0 0.0
      %767 = vmatpush1.xpose.msra.mxu0 0.0
      %768 = vmatprep.subr.mxu0 0.0
      %769 = vmatpush1.xpose.msra.mxu0 0.0
      %770 = vmatprep.subr.mxu0 0.0
      %771 = vmatpush1.xpose.msra.mxu0 0.0
      %772 = vmatprep.subr.mxu0 0.0
      %773 = vmatpush1.xpose.msra.mxu0 0.0
      %774 = vmatprep.subr.mxu0 0.0
      %775 = vmatpush1.xpose.msra.mxu0 0.0
      %776 = vmatprep.subr.mxu0 0.0
      %777 = vmatpush1.xpose.msra.mxu0 %v744
      %778 = vmatprep.subr.mxu0 0.0
      %779 = vmatpush2.xpose.msra.mxu0 0.0
      %780 = vmatprep.subr.mxu0 0.0
      %781 = vmatpush2.xpose.msra.mxu0 0.0
      %782 = vmatprep.subr.mxu0 0.0
      %783 = vmatpush2.xpose.msra.mxu0 0.0
      %784 = vmatprep.subr.mxu0 0.0
      %785 = vmatpush2.xpose.msra.mxu0 0.0
      %786 = vmatprep.subr.mxu0 0.0
      %787 = vmatpush2.xpose.msra.mxu0 0.0
      %788 = vmatprep.subr.mxu0 0.0
      %789 = vmatpush2.xpose.msra.mxu0 0.0
      %790 = vmatprep.subr.mxu0 0.0
      %791 = vmatpush2.xpose.msra.mxu0 0.0
      %792 = vmatprep.subr.mxu0 0.0
      %793 = vmatpush2.xpose.msra.mxu0 0.0
      %794 = vmatprep.subr.mxu0 0.0
      %795 = vmatpush2.xpose.msra.mxu0 0.0
      %796 = vmatprep.subr.mxu0 0.0
      %797 = vmatpush2.xpose.msra.mxu0 0.0
      %798 = vmatprep.subr.mxu0 0.0
      %799 = vmatpush2.xpose.msra.mxu0 0.0
      %800 = vmatprep.subr.mxu0 0.0
      %801 = vmatpush2.xpose.msra.mxu0 0.0
      %802 = vmatprep.subr.mxu0 0.0
      %803 = vmatpush2.xpose.msra.mxu0 0.0
      %804 = vmatprep.subr.mxu0 0.0
      %805 = vmatpush2.xpose.msra.mxu0 0.0
      %806 = vmatprep.subr.mxu0 0.0
      %807 = vmatpush2.xpose.msra.mxu0 0.0
      %808 = vmatprep.subr.mxu0 0.0
      %809 = vmatpush2.xpose.msra.mxu0 0.0
      %810 = vmatprep.mubr.f32.mxu0 0.0
      %811 = vmatmul.mubr.f32.gmra.mxu0 %v742
      %v812 = vpop.f32.mrf.mxu0
      %v813 = vadd.f32 0.0, %v812
      %v814 = vpop.f32.mrf.mxu0
      %815 = vdwg.mxu0
      %816 = vrot.lane.b32.xlu0 %v734, 96
      %v817 = vpop.permute.xlu0 %816
      %v818 = vsel %vm741, %v734, 0
      %v820 = vsel %vm741, %v817, 0
      %822 = vmatprep.subr.mxu0 0.0
      %823 = vmatpush1.xpose.msra.mxu0 0.0
      %824 = vmatprep.subr.mxu0 0.0
      %825 = vmatpush1.xpose.msra.mxu0 0.0
      %826 = vmatprep.subr.mxu0 0.0
      %827 = vmatpush1.xpose.msra.mxu0 0.0
      %828 = vmatprep.subr.mxu0 0.0
      %829 = vmatpush1.xpose.msra.mxu0 0.0
      %830 = vmatprep.subr.mxu0 0.0
      %831 = vmatpush1.xpose.msra.mxu0 0.0
      %832 = vmatprep.subr.mxu0 0.0
      %833 = vmatpush1.xpose.msra.mxu0 0.0
      %834 = vmatprep.subr.mxu0 0.0
      %835 = vmatpush1.xpose.msra.mxu0 0.0
      %836 = vmatprep.subr.mxu0 0.0
      %837 = vmatpush1.xpose.msra.mxu0 0.0
      %838 = vmatprep.subr.mxu0 0.0
      %839 = vmatpush1.xpose.msra.mxu0 0.0
      %840 = vmatprep.subr.mxu0 0.0
      %841 = vmatpush1.xpose.msra.mxu0 0.0
      %842 = vmatprep.subr.mxu0 0.0
      %843 = vmatpush1.xpose.msra.mxu0 0.0
      %844 = vmatprep.subr.mxu0 0.0
      %845 = vmatpush1.xpose.msra.mxu0 0.0
      %846 = vmatprep.subr.mxu0 0.0
      %847 = vmatpush1.xpose.msra.mxu0 0.0
      %848 = vmatprep.subr.mxu0 0.0
      %849 = vmatpush1.xpose.msra.mxu0 0.0
      %850 = vmatprep.subr.mxu0 0.0
      %851 = vmatpush1.xpose.msra.mxu0 0.0
      %852 = vmatprep.subr.mxu0 0.0
      %853 = vmatpush1.xpose.msra.mxu0 %v820
      %854 = vmatprep.subr.mxu0 0.0
      %855 = vmatpush2.xpose.msra.mxu0 0.0
      %856 = vmatprep.subr.mxu0 0.0
      %857 = vmatpush2.xpose.msra.mxu0 0.0
      %858 = vmatprep.subr.mxu0 0.0
      %859 = vmatpush2.xpose.msra.mxu0 0.0
      %860 = vmatprep.subr.mxu0 0.0
      %861 = vmatpush2.xpose.msra.mxu0 0.0
      %862 = vmatprep.subr.mxu0 0.0
      %863 = vmatpush2.xpose.msra.mxu0 0.0
      %864 = vmatprep.subr.mxu0 0.0
      %865 = vmatpush2.xpose.msra.mxu0 0.0
      %866 = vmatprep.subr.mxu0 0.0
      %867 = vmatpush2.xpose.msra.mxu0 0.0
      %868 = vmatprep.subr.mxu0 0.0
      %869 = vmatpush2.xpose.msra.mxu0 0.0
      %870 = vmatprep.subr.mxu0 0.0
      %871 = vmatpush2.xpose.msra.mxu0 0.0
      %872 = vmatprep.subr.mxu0 0.0
      %873 = vmatpush2.xpose.msra.mxu0 0.0
      %874 = vmatprep.subr.mxu0 0.0
      %875 = vmatpush2.xpose.msra.mxu0 0.0
      %876 = vmatprep.subr.mxu0 0.0
      %877 = vmatpush2.xpose.msra.mxu0 0.0
      %878 = vmatprep.subr.mxu0 0.0
      %879 = vmatpush2.xpose.msra.mxu0 0.0
      %880 = vmatprep.subr.mxu0 0.0
      %881 = vmatpush2.xpose.msra.mxu0 0.0
      %882 = vmatprep.subr.mxu0 0.0
      %883 = vmatpush2.xpose.msra.mxu0 0.0
      %884 = vmatprep.subr.mxu0 0.0
      %885 = vmatpush2.xpose.msra.mxu0 0.0
      %886 = vmatprep.mubr.f32.mxu0 0.0
      %887 = vmatmul.mubr.f32.gmra.mxu0 %v818
      %v888 = vpop.f32.mrf.mxu0
      %v889 = vadd.f32 0.0, %v888
      %v890 = vpop.f32.mrf.mxu0
      %891 = vdwg.mxu0
      %892 = vrot.lane.b32.xlu0 %v736, 96
      %v893 = vpop.permute.xlu0 %892
      %v894 = vsel %vm741, %v736, 0
      %v896 = vsel %vm741, %v893, 0
      %898 = vmatprep.subr.mxu0 0.0
      %899 = vmatpush1.xpose.msra.mxu0 0.0
      %900 = vmatprep.subr.mxu0 0.0
      %901 = vmatpush1.xpose.msra.mxu0 0.0
      %902 = vmatprep.subr.mxu0 0.0
      %903 = vmatpush1.xpose.msra.mxu0 0.0
      %904 = vmatprep.subr.mxu0 0.0
      %905 = vmatpush1.xpose.msra.mxu0 0.0
      %906 = vmatprep.subr.mxu0 0.0
      %907 = vmatpush1.xpose.msra.mxu0 0.0
      %908 = vmatprep.subr.mxu0 0.0
      %909 = vmatpush1.xpose.msra.mxu0 0.0
      %910 = vmatprep.subr.mxu0 0.0
      %911 = vmatpush1.xpose.msra.mxu0 0.0
      %912 = vmatprep.subr.mxu0 0.0
      %913 = vmatpush1.xpose.msra.mxu0 0.0
      %914 = vmatprep.subr.mxu0 0.0
      %915 = vmatpush1.xpose.msra.mxu0 0.0
      %916 = vmatprep.subr.mxu0 0.0
      %917 = vmatpush1.xpose.msra.mxu0 0.0
      %918 = vmatprep.subr.mxu0 0.0
      %919 = vmatpush1.xpose.msra.mxu0 0.0
      %920 = vmatprep.subr.mxu0 0.0
      %921 = vmatpush1.xpose.msra.mxu0 0.0
      %922 = vmatprep.subr.mxu0 0.0
      %923 = vmatpush1.xpose.msra.mxu0 0.0
      %924 = vmatprep.subr.mxu0 0.0
      %925 = vmatpush1.xpose.msra.mxu0 0.0
      %926 = vmatprep.subr.mxu0 0.0
      %927 = vmatpush1.xpose.msra.mxu0 0.0
      %928 = vmatprep.subr.mxu0 0.0
      %929 = vmatpush1.xpose.msra.mxu0 %v896
      %930 = vmatprep.subr.mxu0 0.0
      %931 = vmatpush2.xpose.msra.mxu0 0.0
      %932 = vmatprep.subr.mxu0 0.0
      %933 = vmatpush2.xpose.msra.mxu0 0.0
      %934 = vmatprep.subr.mxu0 0.0
      %935 = vmatpush2.xpose.msra.mxu0 0.0
      %936 = vmatprep.subr.mxu0 0.0
      %937 = vmatpush2.xpose.msra.mxu0 0.0
      %938 = vmatprep.subr.mxu0 0.0
      %939 = vmatpush2.xpose.msra.mxu0 0.0
      %940 = vmatprep.subr.mxu0 0.0
      %941 = vmatpush2.xpose.msra.mxu0 0.0
      %942 = vmatprep.subr.mxu0 0.0
      %943 = vmatpush2.xpose.msra.mxu0 0.0
      %944 = vmatprep.subr.mxu0 0.0
      %945 = vmatpush2.xpose.msra.mxu0 0.0
      %946 = vmatprep.subr.mxu0 0.0
      %947 = vmatpush2.xpose.msra.mxu0 0.0
      %948 = vmatprep.subr.mxu0 0.0
      %949 = vmatpush2.xpose.msra.mxu0 0.0
      %950 = vmatprep.subr.mxu0 0.0
      %951 = vmatpush2.xpose.msra.mxu0 0.0
      %952 = vmatprep.subr.mxu0 0.0
      %953 = vmatpush2.xpose.msra.mxu0 0.0
      %954 = vmatprep.subr.mxu0 0.0
      %955 = vmatpush2.xpose.msra.mxu0 0.0
      %956 = vmatprep.subr.mxu0 0.0
      %957 = vmatpush2.xpose.msra.mxu0 0.0
      %958 = vmatprep.subr.mxu0 0.0
      %959 = vmatpush2.xpose.msra.mxu0 0.0
      %960 = vmatprep.subr.mxu0 0.0
      %961 = vmatpush2.xpose.msra.mxu0 0.0
      %962 = vmatprep.mubr.f32.mxu0 0.0
      %963 = vmatmul.mubr.f32.gmra.mxu0 %v894
      %v964 = vpop.f32.mrf.mxu0
      %v965 = vadd.f32 0.0, %v964
      %v966 = vpop.f32.mrf.mxu0
      %967 = vdwg.mxu0
      %968 = vrot.lane.b32.xlu0 %v738, 96
      %v969 = vpop.permute.xlu0 %968
      %v970 = vsel %vm741, %v738, 0
      %v972 = vsel %vm741, %v969, 0
      %974 = vmatprep.subr.mxu0 0.0
      %975 = vmatpush1.xpose.msra.mxu0 0.0
      %976 = vmatprep.subr.mxu0 0.0
      %977 = vmatpush1.xpose.msra.mxu0 0.0
      %978 = vmatprep.subr.mxu0 0.0
      %979 = vmatpush1.xpose.msra.mxu0 0.0
      %980 = vmatprep.subr.mxu0 0.0
      %981 = vmatpush1.xpose.msra.mxu0 0.0
      %982 = vmatprep.subr.mxu0 0.0
      %983 = vmatpush1.xpose.msra.mxu0 0.0
      %984 = vmatprep.subr.mxu0 0.0
      %985 = vmatpush1.xpose.msra.mxu0 0.0
      %986 = vmatprep.subr.mxu0 0.0
      %987 = vmatpush1.xpose.msra.mxu0 0.0
      %988 = vmatprep.subr.mxu0 0.0
      %989 = vmatpush1.xpose.msra.mxu0 0.0
      %990 = vmatprep.subr.mxu0 0.0
      %991 = vmatpush1.xpose.msra.mxu0 0.0
      %992 = vmatprep.subr.mxu0 0.0
      %993 = vmatpush1.xpose.msra.mxu0 0.0
      %994 = vmatprep.subr.mxu0 0.0
      %995 = vmatpush1.xpose.msra.mxu0 0.0
      %996 = vmatprep.subr.mxu0 0.0
      %997 = vmatpush1.xpose.msra.mxu0 0.0
      %998 = vmatprep.subr.mxu0 0.0
      %999 = vmatpush1.xpose.msra.mxu0 0.0
      %1000 = vmatprep.subr.mxu0 0.0
      %1001 = vmatpush1.xpose.msra.mxu0 0.0
      %1002 = vmatprep.subr.mxu0 0.0
      %1003 = vmatpush1.xpose.msra.mxu0 0.0
      %1004 = vmatprep.subr.mxu0 0.0
      %1005 = vmatpush1.xpose.msra.mxu0 %v972
      %1006 = vmatprep.subr.mxu0 0.0
      %1007 = vmatpush2.xpose.msra.mxu0 0.0
      %1008 = vmatprep.subr.mxu0 0.0
      %1009 = vmatpush2.xpose.msra.mxu0 0.0
      %1010 = vmatprep.subr.mxu0 0.0
      %1011 = vmatpush2.xpose.msra.mxu0 0.0
      %1012 = vmatprep.subr.mxu0 0.0
      %1013 = vmatpush2.xpose.msra.mxu0 0.0
      %1014 = vmatprep.subr.mxu0 0.0
      %1015 = vmatpush2.xpose.msra.mxu0 0.0
      %1016 = vmatprep.subr.mxu0 0.0
      %1017 = vmatpush2.xpose.msra.mxu0 0.0
      %1018 = vmatprep.subr.mxu0 0.0
      %1019 = vmatpush2.xpose.msra.mxu0 0.0
      %1020 = vmatprep.subr.mxu0 0.0
      %1021 = vmatpush2.xpose.msra.mxu0 0.0
      %1022 = vmatprep.subr.mxu0 0.0
      %1023 = vmatpush2.xpose.msra.mxu0 0.0
      %1024 = vmatprep.subr.mxu0 0.0
      %1025 = vmatpush2.xpose.msra.mxu0 0.0
      %1026 = vmatprep.subr.mxu0 0.0
      %1027 = vmatpush2.xpose.msra.mxu0 0.0
      %1028 = vmatprep.subr.mxu0 0.0
      %1029 = vmatpush2.xpose.msra.mxu0 0.0
      %1030 = vmatprep.subr.mxu0 0.0
      %1031 = vmatpush2.xpose.msra.mxu0 0.0
      %1032 = vmatprep.subr.mxu0 0.0
      %1033 = vmatpush2.xpose.msra.mxu0 0.0
      %1034 = vmatprep.subr.mxu0 0.0
      %1035 = vmatpush2.xpose.msra.mxu0 0.0
      %1036 = vmatprep.subr.mxu0 0.0
      %1037 = vmatpush2.xpose.msra.mxu0 0.0
      %1038 = vmatprep.mubr.f32.mxu0 0.0
      %1039 = vmatmul.mubr.f32.gmra.mxu0 %v970
      %v1040 = vpop.f32.mrf.mxu0
      %v1041 = vadd.f32 0.0, %v1040
      %v1042 = vpop.f32.mrf.mxu0
      %1043 = vdwg.mxu0
      %v1044 = vmul.f32 %v813, 0.35355338
      %v1045 = vmul.f32 %v889, 0.35355338
      %v1046 = vmul.f32 %v965, 0.35355338
      %v1047 = vmul.f32 %v1041, 0.35355338
      %v1048 = vlaneseq
      %v1049 = vshrl.u32 %v1048, 7
      %v1050 = vsub.s32 0, %v1049
      %v1051 = vrot.slane %v593, %v1050
      %v1052 = vadd.f32 %v1044, %v1051
      %v1053 = vadd.f32 %v1045, %v1051
      %v1054 = vadd.f32 %v1046, %v1051
      %v1055 = vadd.f32 %v1047, %v1051
      %v1056 = vsel %vm741, %v1052, -inf
      %1057 = vmax.xlane.f32.xlu0 %v1056
      %v1058 = vpop.xlane.xlu0 %1057
      %v1059 = vsel %vm741, %v1053, -inf
      %1060 = vmax.xlane.f32.xlu0 %v1059
      %v1061 = vpop.xlane.xlu0 %1060
      %v1062 = vsel %vm741, %v1054, -inf
      %1063 = vmax.xlane.f32.xlu0 %v1062
      %v1064 = vpop.xlane.xlu0 %1063
      %v1065 = vsel %vm741, %v1055, -inf
      %1066 = vmax.xlane.f32.xlu0 %v1065
      %v1067 = vpop.xlane.xlu0 %1066
      %v1068 = vsub.f32 %v1052, %v1058
      %v1069 = vsub.f32 %v1053, %v1061
      %v1070 = vsub.f32 %v1054, %v1064
      %v1071 = vsub.f32 %v1055, %v1067
      %v1072 = vmul.f32 %v1068, 1.442695
      %v1073 = vpow.pop %v1072
      %v1074 = vmul.f32 %v1069, 1.442695
      %v1075 = vpow.pop %v1074
      %v1076 = vmul.f32 %v1070, 1.442695
      %v1077 = vpow.pop %v1076
      %v1078 = vmul.f32 %v1071, 1.442695
      %v1079 = vpow.pop %v1078
      %v1080 = vsel %vm741, %v1073, 0.0
      %1081 = vadd.xlane.f32.xlu0 %v1080
      %v1082 = vpop.xlane.xlu0 %1081
      %v1083 = vsel %vm741, %v1075, 0.0
      %1084 = vadd.xlane.f32.xlu0 %v1083
      %v1085 = vpop.xlane.xlu0 %1084
      %v1086 = vsel %vm741, %v1077, 0.0
      %1087 = vadd.xlane.f32.xlu0 %v1086
      %v1088 = vpop.xlane.xlu0 %1087
      %v1089 = vsel %vm741, %v1079, 0.0
      %1090 = vadd.xlane.f32.xlu0 %v1089
      %v1091 = vpop.xlane.xlu0 %1090
      %v1092 = vrcp.pop %v1082
      %v1093 = vrcp.pop %v1085
      %v1094 = vrcp.pop %v1088
      %v1095 = vrcp.pop %v1091
      %v1096 = vmul.f32 %v1073, %v1092
      %v1097 = vmul.f32 %v1075, %v1093
      %v1098 = vmul.f32 %v1077, %v1094
      %v1099 = vmul.f32 %v1079, %v1095
      %1100 = vrot.lane.b32.xlu0 %v724, 64
      %v1101 = vpop.permute.xlu0 %1100
      %v1104 = vsel %vm741, %v1096, 0
      %1106 = vmatprep.subr.mxu0 0.0
      %1107 = vmatpush1.msra.mxu0 0.0
      %1108 = vmatprep.subr.mxu0 0.0
      %1109 = vmatpush1.msra.mxu0 0.0
      %1110 = vmatprep.subr.mxu0 0.0
      %1111 = vmatpush1.msra.mxu0 0.0
      %1112 = vmatprep.subr.mxu0 0.0
      %1113 = vmatpush1.msra.mxu0 0.0
      %1114 = vmatprep.subr.mxu0 0.0
      %1115 = vmatpush1.msra.mxu0 0.0
      %1116 = vmatprep.subr.mxu0 0.0
      %1117 = vmatpush1.msra.mxu0 0.0
      %1118 = vmatprep.subr.mxu0 0.0
      %1119 = vmatpush1.msra.mxu0 0.0
      %1120 = vmatprep.subr.mxu0 0.0
      %1121 = vmatpush1.msra.mxu0 0.0
      %1122 = vmatprep.subr.mxu0 0.0
      %1123 = vmatpush1.msra.mxu0 0.0
      %1124 = vmatprep.subr.mxu0 0.0
      %1125 = vmatpush1.msra.mxu0 0.0
      %1126 = vmatprep.subr.mxu0 0.0
      %1127 = vmatpush1.msra.mxu0 0.0
      %1128 = vmatprep.subr.mxu0 0.0
      %1129 = vmatpush1.msra.mxu0 0.0
      %1130 = vmatprep.subr.mxu0 0.0
      %1131 = vmatpush1.msra.mxu0 0.0
      %1132 = vmatprep.subr.mxu0 0.0
      %1133 = vmatpush1.msra.mxu0 0.0
      %1134 = vmatprep.subr.mxu0 0.0
      %1135 = vmatpush1.msra.mxu0 0.0
      %1136 = vmatprep.subr.mxu0 0.0
      %1137 = vmatpush1.msra.mxu0 %v1101
      %1138 = vmatprep.subr.mxu0 0.0
      %1139 = vmatpush2.msra.mxu0 0.0
      %1140 = vmatprep.subr.mxu0 0.0
      %1141 = vmatpush2.msra.mxu0 0.0
      %1142 = vmatprep.subr.mxu0 0.0
      %1143 = vmatpush2.msra.mxu0 0.0
      %1144 = vmatprep.subr.mxu0 0.0
      %1145 = vmatpush2.msra.mxu0 0.0
      %1146 = vmatprep.subr.mxu0 0.0
      %1147 = vmatpush2.msra.mxu0 0.0
      %1148 = vmatprep.subr.mxu0 0.0
      %1149 = vmatpush2.msra.mxu0 0.0
      %1150 = vmatprep.subr.mxu0 0.0
      %1151 = vmatpush2.msra.mxu0 0.0
      %1152 = vmatprep.subr.mxu0 0.0
      %1153 = vmatpush2.msra.mxu0 0.0
      %1154 = vmatprep.subr.mxu0 0.0
      %1155 = vmatpush2.msra.mxu0 0.0
      %1156 = vmatprep.subr.mxu0 0.0
      %1157 = vmatpush2.msra.mxu0 0.0
      %1158 = vmatprep.subr.mxu0 0.0
      %1159 = vmatpush2.msra.mxu0 0.0
      %1160 = vmatprep.subr.mxu0 0.0
      %1161 = vmatpush2.msra.mxu0 0.0
      %1162 = vmatprep.subr.mxu0 0.0
      %1163 = vmatpush2.msra.mxu0 0.0
      %1164 = vmatprep.subr.mxu0 0.0
      %1165 = vmatpush2.msra.mxu0 0.0
      %1166 = vmatprep.subr.mxu0 0.0
      %1167 = vmatpush2.msra.mxu0 0.0
      %1168 = vmatprep.subr.mxu0 0.0
      %1169 = vmatpush2.msra.mxu0 0.0
      %1170 = vmatprep.mubr.f32.mxu0 0.0
      %1171 = vmatmul.mubr.f32.gmra.mxu0 %v1104
      %v1172 = vpop.f32.mrf.mxu0
      %v1173 = vadd.f32 0.0, %v1172
      %v1174 = vpop.f32.mrf.mxu0
      %1175 = vdwg.mxu0
      %1176 = vrot.lane.b32.xlu0 %v734, 64
      %v1177 = vpop.permute.xlu0 %1176
      %v1180 = vsel %vm741, %v1097, 0
      %1182 = vmatprep.subr.mxu0 0.0
      %1183 = vmatpush1.msra.mxu0 0.0
      %1184 = vmatprep.subr.mxu0 0.0
      %1185 = vmatpush1.msra.mxu0 0.0
      %1186 = vmatprep.subr.mxu0 0.0
      %1187 = vmatpush1.msra.mxu0 0.0
      %1188 = vmatprep.subr.mxu0 0.0
      %1189 = vmatpush1.msra.mxu0 0.0
      %1190 = vmatprep.subr.mxu0 0.0
      %1191 = vmatpush1.msra.mxu0 0.0
      %1192 = vmatprep.subr.mxu0 0.0
      %1193 = vmatpush1.msra.mxu0 0.0
      %1194 = vmatprep.subr.mxu0 0.0
      %1195 = vmatpush1.msra.mxu0 0.0
      %1196 = vmatprep.subr.mxu0 0.0
      %1197 = vmatpush1.msra.mxu0 0.0
      %1198 = vmatprep.subr.mxu0 0.0
      %1199 = vmatpush1.msra.mxu0 0.0
      %1200 = vmatprep.subr.mxu0 0.0
      %1201 = vmatpush1.msra.mxu0 0.0
      %1202 = vmatprep.subr.mxu0 0.0
      %1203 = vmatpush1.msra.mxu0 0.0
      %1204 = vmatprep.subr.mxu0 0.0
      %1205 = vmatpush1.msra.mxu0 0.0
      %1206 = vmatprep.subr.mxu0 0.0
      %1207 = vmatpush1.msra.mxu0 0.0
      %1208 = vmatprep.subr.mxu0 0.0
      %1209 = vmatpush1.msra.mxu0 0.0
      %1210 = vmatprep.subr.mxu0 0.0
      %1211 = vmatpush1.msra.mxu0 0.0
      %1212 = vmatprep.subr.mxu0 0.0
      %1213 = vmatpush1.msra.mxu0 %v1177
      %1214 = vmatprep.subr.mxu0 0.0
      %1215 = vmatpush2.msra.mxu0 0.0
      %1216 = vmatprep.subr.mxu0 0.0
      %1217 = vmatpush2.msra.mxu0 0.0
      %1218 = vmatprep.subr.mxu0 0.0
      %1219 = vmatpush2.msra.mxu0 0.0
      %1220 = vmatprep.subr.mxu0 0.0
      %1221 = vmatpush2.msra.mxu0 0.0
      %1222 = vmatprep.subr.mxu0 0.0
      %1223 = vmatpush2.msra.mxu0 0.0
      %1224 = vmatprep.subr.mxu0 0.0
      %1225 = vmatpush2.msra.mxu0 0.0
      %1226 = vmatprep.subr.mxu0 0.0
      %1227 = vmatpush2.msra.mxu0 0.0
      %1228 = vmatprep.subr.mxu0 0.0
      %1229 = vmatpush2.msra.mxu0 0.0
      %1230 = vmatprep.subr.mxu0 0.0
      %1231 = vmatpush2.msra.mxu0 0.0
      %1232 = vmatprep.subr.mxu0 0.0
      %1233 = vmatpush2.msra.mxu0 0.0
      %1234 = vmatprep.subr.mxu0 0.0
      %1235 = vmatpush2.msra.mxu0 0.0
      %1236 = vmatprep.subr.mxu0 0.0
      %1237 = vmatpush2.msra.mxu0 0.0
      %1238 = vmatprep.subr.mxu0 0.0
      %1239 = vmatpush2.msra.mxu0 0.0
      %1240 = vmatprep.subr.mxu0 0.0
      %1241 = vmatpush2.msra.mxu0 0.0
      %1242 = vmatprep.subr.mxu0 0.0
      %1243 = vmatpush2.msra.mxu0 0.0
      %1244 = vmatprep.subr.mxu0 0.0
      %1245 = vmatpush2.msra.mxu0 0.0
      %1246 = vmatprep.mubr.f32.mxu0 0.0
      %1247 = vmatmul.mubr.f32.gmra.mxu0 %v1180
      %v1248 = vpop.f32.mrf.mxu0
      %v1249 = vadd.f32 0.0, %v1248
      %v1250 = vpop.f32.mrf.mxu0
      %1251 = vdwg.mxu0
      %1252 = vrot.lane.b32.xlu0 %v736, 64
      %v1253 = vpop.permute.xlu0 %1252
      %v1256 = vsel %vm741, %v1098, 0
      %1258 = vmatprep.subr.mxu0 0.0
      %1259 = vmatpush1.msra.mxu0 0.0
      %1260 = vmatprep.subr.mxu0 0.0
      %1261 = vmatpush1.msra.mxu0 0.0
      %1262 = vmatprep.subr.mxu0 0.0
      %1263 = vmatpush1.msra.mxu0 0.0
      %1264 = vmatprep.subr.mxu0 0.0
      %1265 = vmatpush1.msra.mxu0 0.0
      %1266 = vmatprep.subr.mxu0 0.0
      %1267 = vmatpush1.msra.mxu0 0.0
      %1268 = vmatprep.subr.mxu0 0.0
      %1269 = vmatpush1.msra.mxu0 0.0
      %1270 = vmatprep.subr.mxu0 0.0
      %1271 = vmatpush1.msra.mxu0 0.0
      %1272 = vmatprep.subr.mxu0 0.0
      %1273 = vmatpush1.msra.mxu0 0.0
      %1274 = vmatprep.subr.mxu0 0.0
      %1275 = vmatpush1.msra.mxu0 0.0
      %1276 = vmatprep.subr.mxu0 0.0
      %1277 = vmatpush1.msra.mxu0 0.0
      %1278 = vmatprep.subr.mxu0 0.0
      %1279 = vmatpush1.msra.mxu0 0.0
      %1280 = vmatprep.subr.mxu0 0.0
      %1281 = vmatpush1.msra.mxu0 0.0
      %1282 = vmatprep.subr.mxu0 0.0
      %1283 = vmatpush1.msra.mxu0 0.0
      %1284 = vmatprep.subr.mxu0 0.0
      %1285 = vmatpush1.msra.mxu0 0.0
      %1286 = vmatprep.subr.mxu0 0.0
      %1287 = vmatpush1.msra.mxu0 0.0
      %1288 = vmatprep.subr.mxu0 0.0
      %1289 = vmatpush1.msra.mxu0 %v1253
      %1290 = vmatprep.subr.mxu0 0.0
      %1291 = vmatpush2.msra.mxu0 0.0
      %1292 = vmatprep.subr.mxu0 0.0
      %1293 = vmatpush2.msra.mxu0 0.0
      %1294 = vmatprep.subr.mxu0 0.0
      %1295 = vmatpush2.msra.mxu0 0.0
      %1296 = vmatprep.subr.mxu0 0.0
      %1297 = vmatpush2.msra.mxu0 0.0
      %1298 = vmatprep.subr.mxu0 0.0
      %1299 = vmatpush2.msra.mxu0 0.0
      %1300 = vmatprep.subr.mxu0 0.0
      %1301 = vmatpush2.msra.mxu0 0.0
      %1302 = vmatprep.subr.mxu0 0.0
      %1303 = vmatpush2.msra.mxu0 0.0
      %1304 = vmatprep.subr.mxu0 0.0
      %1305 = vmatpush2.msra.mxu0 0.0
      %1306 = vmatprep.subr.mxu0 0.0
      %1307 = vmatpush2.msra.mxu0 0.0
      %1308 = vmatprep.subr.mxu0 0.0
      %1309 = vmatpush2.msra.mxu0 0.0
      %1310 = vmatprep.subr.mxu0 0.0
      %1311 = vmatpush2.msra.mxu0 0.0
      %1312 = vmatprep.subr.mxu0 0.0
      %1313 = vmatpush2.msra.mxu0 0.0
      %1314 = vmatprep.subr.mxu0 0.0
      %1315 = vmatpush2.msra.mxu0 0.0
      %1316 = vmatprep.subr.mxu0 0.0
      %1317 = vmatpush2.msra.mxu0 0.0
      %1318 = vmatprep.subr.mxu0 0.0
      %1319 = vmatpush2.msra.mxu0 0.0
      %1320 = vmatprep.subr.mxu0 0.0
      %1321 = vmatpush2.msra.mxu0 0.0
      %1322 = vmatprep.mubr.f32.mxu0 0.0
      %1323 = vmatmul.mubr.f32.gmra.mxu0 %v1256
      %v1324 = vpop.f32.mrf.mxu0
      %v1325 = vadd.f32 0.0, %v1324
      %v1326 = vpop.f32.mrf.mxu0
      %1327 = vdwg.mxu0
      %1328 = vrot.lane.b32.xlu0 %v738, 64
      %v1329 = vpop.permute.xlu0 %1328
      %v1332 = vsel %vm741, %v1099, 0
      %1334 = vmatprep.subr.mxu0 0.0
      %1335 = vmatpush1.msra.mxu0 0.0
      %1336 = vmatprep.subr.mxu0 0.0
      %1337 = vmatpush1.msra.mxu0 0.0
      %1338 = vmatprep.subr.mxu0 0.0
      %1339 = vmatpush1.msra.mxu0 0.0
      %1340 = vmatprep.subr.mxu0 0.0
      %1341 = vmatpush1.msra.mxu0 0.0
      %1342 = vmatprep.subr.mxu0 0.0
      %1343 = vmatpush1.msra.mxu0 0.0
      %1344 = vmatprep.subr.mxu0 0.0
      %1345 = vmatpush1.msra.mxu0 0.0
      %1346 = vmatprep.subr.mxu0 0.0
      %1347 = vmatpush1.msra.mxu0 0.0
      %1348 = vmatprep.subr.mxu0 0.0
      %1349 = vmatpush1.msra.mxu0 0.0
      %1350 = vmatprep.subr.mxu0 0.0
      %1351 = vmatpush1.msra.mxu0 0.0
      %1352 = vmatprep.subr.mxu0 0.0
      %1353 = vmatpush1.msra.mxu0 0.0
      %1354 = vmatprep.subr.mxu0 0.0
      %1355 = vmatpush1.msra.mxu0 0.0
      %1356 = vmatprep.subr.mxu0 0.0
      %1357 = vmatpush1.msra.mxu0 0.0
      %1358 = vmatprep.subr.mxu0 0.0
      %1359 = vmatpush1.msra.mxu0 0.0
      %1360 = vmatprep.subr.mxu0 0.0
      %1361 = vmatpush1.msra.mxu0 0.0
      %1362 = vmatprep.subr.mxu0 0.0
      %1363 = vmatpush1.msra.mxu0 0.0
      %1364 = vmatprep.subr.mxu0 0.0
      %1365 = vmatpush1.msra.mxu0 %v1329
      %1366 = vmatprep.subr.mxu0 0.0
      %1367 = vmatpush2.msra.mxu0 0.0
      %1368 = vmatprep.subr.mxu0 0.0
      %1369 = vmatpush2.msra.mxu0 0.0
      %1370 = vmatprep.subr.mxu0 0.0
      %1371 = vmatpush2.msra.mxu0 0.0
      %1372 = vmatprep.subr.mxu0 0.0
      %1373 = vmatpush2.msra.mxu0 0.0
      %1374 = vmatprep.subr.mxu0 0.0
      %1375 = vmatpush2.msra.mxu0 0.0
      %1376 = vmatprep.subr.mxu0 0.0
      %1377 = vmatpush2.msra.mxu0 0.0
      %1378 = vmatprep.subr.mxu0 0.0
      %1379 = vmatpush2.msra.mxu0 0.0
      %1380 = vmatprep.subr.mxu0 0.0
      %1381 = vmatpush2.msra.mxu0 0.0
      %1382 = vmatprep.subr.mxu0 0.0
      %1383 = vmatpush2.msra.mxu0 0.0
      %1384 = vmatprep.subr.mxu0 0.0
      %1385 = vmatpush2.msra.mxu0 0.0
      %1386 = vmatprep.subr.mxu0 0.0
      %1387 = vmatpush2.msra.mxu0 0.0
      %1388 = vmatprep.subr.mxu0 0.0
      %1389 = vmatpush2.msra.mxu0 0.0
      %1390 = vmatprep.subr.mxu0 0.0
      %1391 = vmatpush2.msra.mxu0 0.0
      %1392 = vmatprep.subr.mxu0 0.0
      %1393 = vmatpush2.msra.mxu0 0.0
      %1394 = vmatprep.subr.mxu0 0.0
      %1395 = vmatpush2.msra.mxu0 0.0
      %1396 = vmatprep.subr.mxu0 0.0
      %1397 = vmatpush2.msra.mxu0 0.0
      %1398 = vmatprep.mubr.f32.mxu0 0.0
      %1399 = vmatmul.mubr.f32.gmra.mxu0 %v1332
      %v1400 = vpop.f32.mrf.mxu0
      %v1401 = vadd.f32 0.0, %v1400
      %v1402 = vpop.f32.mrf.mxu0
      %1403 = vdwg.mxu0
      %v1404 = vld [vmem:[%s6] sm:$0xff]
      %s1405 = scalar_lea.vmem %s6, 8
      %v1406 = vld [vmem:[%s1405] sm:$0xff]
      %v1408 = vsel %vm741, %v1249, 0
      %1410 = vmatprep.subr.mxu0 0.0
      %1411 = vmatpush1.msra.mxu0 0.0
      %1412 = vmatprep.subr.mxu0 0.0
      %1413 = vmatpush1.msra.mxu0 0.0
      %1414 = vmatprep.subr.mxu0 0.0
      %1415 = vmatpush1.msra.mxu0 0.0
      %1416 = vmatprep.subr.mxu0 0.0
      %1417 = vmatpush1.msra.mxu0 0.0
      %1418 = vmatprep.subr.mxu0 0.0
      %1419 = vmatpush1.msra.mxu0 0.0
      %1420 = vmatprep.subr.mxu0 0.0
      %1421 = vmatpush1.msra.mxu0 0.0
      %1422 = vmatprep.subr.mxu0 0.0
      %1423 = vmatpush1.msra.mxu0 0.0
      %1424 = vmatprep.subr.mxu0 0.0
      %1425 = vmatpush1.msra.mxu0 0.0
      %1426 = vmatprep.subr.mxu0 0.0
      %1427 = vmatpush1.msra.mxu0 0.0
      %1428 = vmatprep.subr.mxu0 0.0
      %1429 = vmatpush1.msra.mxu0 0.0
      %1430 = vmatprep.subr.mxu0 0.0
      %1431 = vmatpush1.msra.mxu0 0.0
      %1432 = vmatprep.subr.mxu0 0.0
      %1433 = vmatpush1.msra.mxu0 0.0
      %1434 = vmatprep.subr.mxu0 0.0
      %1435 = vmatpush1.msra.mxu0 0.0
      %1436 = vmatprep.subr.mxu0 0.0
      %1437 = vmatpush1.msra.mxu0 0.0
      %1438 = vmatprep.subr.mxu0 0.0
      %1439 = vmatpush1.msra.mxu0 0.0
      %1440 = vmatprep.subr.mxu0 0.0
      %1441 = vmatpush1.msra.mxu0 %v1406
      %1442 = vmatprep.subr.mxu0 0.0
      %1443 = vmatpush2.msra.mxu0 0.0
      %1444 = vmatprep.subr.mxu0 0.0
      %1445 = vmatpush2.msra.mxu0 0.0
      %1446 = vmatprep.subr.mxu0 0.0
      %1447 = vmatpush2.msra.mxu0 0.0
      %1448 = vmatprep.subr.mxu0 0.0
      %1449 = vmatpush2.msra.mxu0 0.0
      %1450 = vmatprep.subr.mxu0 0.0
      %1451 = vmatpush2.msra.mxu0 0.0
      %1452 = vmatprep.subr.mxu0 0.0
      %1453 = vmatpush2.msra.mxu0 0.0
      %1454 = vmatprep.subr.mxu0 0.0
      %1455 = vmatpush2.msra.mxu0 0.0
      %1456 = vmatprep.subr.mxu0 0.0
      %1457 = vmatpush2.msra.mxu0 0.0
      %1458 = vmatprep.subr.mxu0 0.0
      %1459 = vmatpush2.msra.mxu0 0.0
      %1460 = vmatprep.subr.mxu0 0.0
      %1461 = vmatpush2.msra.mxu0 0.0
      %1462 = vmatprep.subr.mxu0 0.0
      %1463 = vmatpush2.msra.mxu0 0.0
      %1464 = vmatprep.subr.mxu0 0.0
      %1465 = vmatpush2.msra.mxu0 0.0
      %1466 = vmatprep.subr.mxu0 0.0
      %1467 = vmatpush2.msra.mxu0 0.0
      %1468 = vmatprep.subr.mxu0 0.0
      %1469 = vmatpush2.msra.mxu0 0.0
      %1470 = vmatprep.subr.mxu0 0.0
      %1471 = vmatpush2.msra.mxu0 0.0
      %1472 = vmatprep.subr.mxu0 0.0
      %1473 = vmatpush2.msra.mxu0 0.0
      %1474 = vmatprep.mubr.f32.mxu0 0.0
      %1475 = vmatmul.mubr.f32.gmra.mxu0 %v1408
      %v1476 = vpop.f32.mrf.mxu0
      %v1477 = vadd.f32 0.0, %v1476
      %v1478 = vpop.f32.mrf.mxu0
      %1479 = vdwg.mxu0
      %v1481 = vsel %vm741, %v1173, 0
      %1483 = vmatprep.subr.mxu0 0.0
      %1484 = vmatpush1.msra.mxu0 0.0
      %1485 = vmatprep.subr.mxu0 0.0
      %1486 = vmatpush1.msra.mxu0 0.0
      %1487 = vmatprep.subr.mxu0 0.0
      %1488 = vmatpush1.msra.mxu0 0.0
      %1489 = vmatprep.subr.mxu0 0.0
      %1490 = vmatpush1.msra.mxu0 0.0
      %1491 = vmatprep.subr.mxu0 0.0
      %1492 = vmatpush1.msra.mxu0 0.0
      %1493 = vmatprep.subr.mxu0 0.0
      %1494 = vmatpush1.msra.mxu0 0.0
      %1495 = vmatprep.subr.mxu0 0.0
      %1496 = vmatpush1.msra.mxu0 0.0
      %1497 = vmatprep.subr.mxu0 0.0
      %1498 = vmatpush1.msra.mxu0 0.0
      %1499 = vmatprep.subr.mxu0 0.0
      %1500 = vmatpush1.msra.mxu0 0.0
      %1501 = vmatprep.subr.mxu0 0.0
      %1502 = vmatpush1.msra.mxu0 0.0
      %1503 = vmatprep.subr.mxu0 0.0
      %1504 = vmatpush1.msra.mxu0 0.0
      %1505 = vmatprep.subr.mxu0 0.0
      %1506 = vmatpush1.msra.mxu0 0.0
      %1507 = vmatprep.subr.mxu0 0.0
      %1508 = vmatpush1.msra.mxu0 0.0
      %1509 = vmatprep.subr.mxu0 0.0
      %1510 = vmatpush1.msra.mxu0 0.0
      %1511 = vmatprep.subr.mxu0 0.0
      %1512 = vmatpush1.msra.mxu0 0.0
      %1513 = vmatprep.subr.mxu0 0.0
      %1514 = vmatpush1.msra.mxu0 %v1404
      %1515 = vmatprep.subr.mxu0 0.0
      %1516 = vmatpush2.msra.mxu0 0.0
      %1517 = vmatprep.subr.mxu0 0.0
      %1518 = vmatpush2.msra.mxu0 0.0
      %1519 = vmatprep.subr.mxu0 0.0
      %1520 = vmatpush2.msra.mxu0 0.0
      %1521 = vmatprep.subr.mxu0 0.0
      %1522 = vmatpush2.msra.mxu0 0.0
      %1523 = vmatprep.subr.mxu0 0.0
      %1524 = vmatpush2.msra.mxu0 0.0
      %1525 = vmatprep.subr.mxu0 0.0
      %1526 = vmatpush2.msra.mxu0 0.0
      %1527 = vmatprep.subr.mxu0 0.0
      %1528 = vmatpush2.msra.mxu0 0.0
      %1529 = vmatprep.subr.mxu0 0.0
      %1530 = vmatpush2.msra.mxu0 0.0
      %1531 = vmatprep.subr.mxu0 0.0
      %1532 = vmatpush2.msra.mxu0 0.0
      %1533 = vmatprep.subr.mxu0 0.0
      %1534 = vmatpush2.msra.mxu0 0.0
      %1535 = vmatprep.subr.mxu0 0.0
      %1536 = vmatpush2.msra.mxu0 0.0
      %1537 = vmatprep.subr.mxu0 0.0
      %1538 = vmatpush2.msra.mxu0 0.0
      %1539 = vmatprep.subr.mxu0 0.0
      %1540 = vmatpush2.msra.mxu0 0.0
      %1541 = vmatprep.subr.mxu0 0.0
      %1542 = vmatpush2.msra.mxu0 0.0
      %1543 = vmatprep.subr.mxu0 0.0
      %1544 = vmatpush2.msra.mxu0 0.0
      %1545 = vmatprep.subr.mxu0 0.0
      %1546 = vmatpush2.msra.mxu0 0.0
      %1547 = vmatprep.mubr.f32.mxu0 0.0
      %1548 = vmatmul.mubr.f32.gmra.mxu0 %v1481
      %v1549 = vpop.f32.mrf.mxu0
      %v1550 = vadd.f32 %v1477, %v1549
      %v1551 = vpop.f32.mrf.mxu0
      %1552 = vdwg.mxu0
      %s1553 = scalar_lea.vmem %s6, 16
      %v1554 = vld [vmem:[%s1553] sm:$0xff]
      %v1556 = vsel %vm741, %v1325, 0
      %1558 = vmatprep.subr.mxu0 0.0
      %1559 = vmatpush1.msra.mxu0 0.0
      %1560 = vmatprep.subr.mxu0 0.0
      %1561 = vmatpush1.msra.mxu0 0.0
      %1562 = vmatprep.subr.mxu0 0.0
      %1563 = vmatpush1.msra.mxu0 0.0
      %1564 = vmatprep.subr.mxu0 0.0
      %1565 = vmatpush1.msra.mxu0 0.0
      %1566 = vmatprep.subr.mxu0 0.0
      %1567 = vmatpush1.msra.mxu0 0.0
      %1568 = vmatprep.subr.mxu0 0.0
      %1569 = vmatpush1.msra.mxu0 0.0
      %1570 = vmatprep.subr.mxu0 0.0
      %1571 = vmatpush1.msra.mxu0 0.0
      %1572 = vmatprep.subr.mxu0 0.0
      %1573 = vmatpush1.msra.mxu0 0.0
      %1574 = vmatprep.subr.mxu0 0.0
      %1575 = vmatpush1.msra.mxu0 0.0
      %1576 = vmatprep.subr.mxu0 0.0
      %1577 = vmatpush1.msra.mxu0 0.0
      %1578 = vmatprep.subr.mxu0 0.0
      %1579 = vmatpush1.msra.mxu0 0.0
      %1580 = vmatprep.subr.mxu0 0.0
      %1581 = vmatpush1.msra.mxu0 0.0
      %1582 = vmatprep.subr.mxu0 0.0
      %1583 = vmatpush1.msra.mxu0 0.0
      %1584 = vmatprep.subr.mxu0 0.0
      %1585 = vmatpush1.msra.mxu0 0.0
      %1586 = vmatprep.subr.mxu0 0.0
      %1587 = vmatpush1.msra.mxu0 0.0
      %1588 = vmatprep.subr.mxu0 0.0
      %1589 = vmatpush1.msra.mxu0 %v1554
      %1590 = vmatprep.subr.mxu0 0.0
      %1591 = vmatpush2.msra.mxu0 0.0
      %1592 = vmatprep.subr.mxu0 0.0
      %1593 = vmatpush2.msra.mxu0 0.0
      %1594 = vmatprep.subr.mxu0 0.0
      %1595 = vmatpush2.msra.mxu0 0.0
      %1596 = vmatprep.subr.mxu0 0.0
      %1597 = vmatpush2.msra.mxu0 0.0
      %1598 = vmatprep.subr.mxu0 0.0
      %1599 = vmatpush2.msra.mxu0 0.0
      %1600 = vmatprep.subr.mxu0 0.0
      %1601 = vmatpush2.msra.mxu0 0.0
      %1602 = vmatprep.subr.mxu0 0.0
      %1603 = vmatpush2.msra.mxu0 0.0
      %1604 = vmatprep.subr.mxu0 0.0
      %1605 = vmatpush2.msra.mxu0 0.0
      %1606 = vmatprep.subr.mxu0 0.0
      %1607 = vmatpush2.msra.mxu0 0.0
      %1608 = vmatprep.subr.mxu0 0.0
      %1609 = vmatpush2.msra.mxu0 0.0
      %1610 = vmatprep.subr.mxu0 0.0
      %1611 = vmatpush2.msra.mxu0 0.0
      %1612 = vmatprep.subr.mxu0 0.0
      %1613 = vmatpush2.msra.mxu0 0.0
      %1614 = vmatprep.subr.mxu0 0.0
      %1615 = vmatpush2.msra.mxu0 0.0
      %1616 = vmatprep.subr.mxu0 0.0
      %1617 = vmatpush2.msra.mxu0 0.0
      %1618 = vmatprep.subr.mxu0 0.0
      %1619 = vmatpush2.msra.mxu0 0.0
      %1620 = vmatprep.subr.mxu0 0.0
      %1621 = vmatpush2.msra.mxu0 0.0
      %1622 = vmatprep.mubr.f32.mxu0 0.0
      %1623 = vmatmul.mubr.f32.gmra.mxu0 %v1556
      %v1624 = vpop.f32.mrf.mxu0
      %v1625 = vadd.f32 0.0, %v1624
      %v1626 = vpop.f32.mrf.mxu0
      %1627 = vdwg.mxu0
      %v1628 = vadd.f32 %v1550, %v1625
      %s1629 = scalar_lea.vmem %s6, 24
      %v1630 = vld [vmem:[%s1629] sm:$0xff]
      %v1632 = vsel %vm741, %v1401, 0
      %1634 = vmatprep.subr.mxu0 0.0
      %1635 = vmatpush1.msra.mxu0 0.0
      %1636 = vmatprep.subr.mxu0 0.0
      %1637 = vmatpush1.msra.mxu0 0.0
      %1638 = vmatprep.subr.mxu0 0.0
      %1639 = vmatpush1.msra.mxu0 0.0
      %1640 = vmatprep.subr.mxu0 0.0
      %1641 = vmatpush1.msra.mxu0 0.0
      %1642 = vmatprep.subr.mxu0 0.0
      %1643 = vmatpush1.msra.mxu0 0.0
      %1644 = vmatprep.subr.mxu0 0.0
      %1645 = vmatpush1.msra.mxu0 0.0
      %1646 = vmatprep.subr.mxu0 0.0
      %1647 = vmatpush1.msra.mxu0 0.0
      %1648 = vmatprep.subr.mxu0 0.0
      %1649 = vmatpush1.msra.mxu0 0.0
      %1650 = vmatprep.subr.mxu0 0.0
      %1651 = vmatpush1.msra.mxu0 0.0
      %1652 = vmatprep.subr.mxu0 0.0
      %1653 = vmatpush1.msra.mxu0 0.0
      %1654 = vmatprep.subr.mxu0 0.0
      %1655 = vmatpush1.msra.mxu0 0.0
      %1656 = vmatprep.subr.mxu0 0.0
      %1657 = vmatpush1.msra.mxu0 0.0
      %1658 = vmatprep.subr.mxu0 0.0
      %1659 = vmatpush1.msra.mxu0 0.0
      %1660 = vmatprep.subr.mxu0 0.0
      %1661 = vmatpush1.msra.mxu0 0.0
      %1662 = vmatprep.subr.mxu0 0.0
      %1663 = vmatpush1.msra.mxu0 0.0
      %1664 = vmatprep.subr.mxu0 0.0
      %1665 = vmatpush1.msra.mxu0 %v1630
      %1666 = vmatprep.subr.mxu0 0.0
      %1667 = vmatpush2.msra.mxu0 0.0
      %1668 = vmatprep.subr.mxu0 0.0
      %1669 = vmatpush2.msra.mxu0 0.0
      %1670 = vmatprep.subr.mxu0 0.0
      %1671 = vmatpush2.msra.mxu0 0.0
      %1672 = vmatprep.subr.mxu0 0.0
      %1673 = vmatpush2.msra.mxu0 0.0
      %1674 = vmatprep.subr.mxu0 0.0
      %1675 = vmatpush2.msra.mxu0 0.0
      %1676 = vmatprep.subr.mxu0 0.0
      %1677 = vmatpush2.msra.mxu0 0.0
      %1678 = vmatprep.subr.mxu0 0.0
      %1679 = vmatpush2.msra.mxu0 0.0
      %1680 = vmatprep.subr.mxu0 0.0
      %1681 = vmatpush2.msra.mxu0 0.0
      %1682 = vmatprep.subr.mxu0 0.0
      %1683 = vmatpush2.msra.mxu0 0.0
      %1684 = vmatprep.subr.mxu0 0.0
      %1685 = vmatpush2.msra.mxu0 0.0
      %1686 = vmatprep.subr.mxu0 0.0
      %1687 = vmatpush2.msra.mxu0 0.0
      %1688 = vmatprep.subr.mxu0 0.0
      %1689 = vmatpush2.msra.mxu0 0.0
      %1690 = vmatprep.subr.mxu0 0.0
      %1691 = vmatpush2.msra.mxu0 0.0
      %1692 = vmatprep.subr.mxu0 0.0
      %1693 = vmatpush2.msra.mxu0 0.0
      %1694 = vmatprep.subr.mxu0 0.0
      %1695 = vmatpush2.msra.mxu0 0.0
      %1696 = vmatprep.subr.mxu0 0.0
      %1697 = vmatpush2.msra.mxu0 0.0
      %1698 = vmatprep.mubr.f32.mxu0 0.0
      %1699 = vmatmul.mubr.f32.gmra.mxu0 %v1632
      %v1700 = vpop.f32.mrf.mxu0
      %v1701 = vadd.f32 0.0, %v1700
      %v1702 = vpop.f32.mrf.mxu0
      %1703 = vdwg.mxu0
      %v1704 = vadd.f32 %v1628, %v1701
      %1706 = vrot.lane.b32.xlu0 %v729, 120
      %v1707 = vpop.permute.xlu0 %1706
      %1708 = vrot.lane.b32.xlu0 %v729, 112
      %v1709 = vpop.permute.xlu0 %1708
      %1710 = vrot.lane.b32.xlu0 %v729, 104
      %v1711 = vpop.permute.xlu0 %1710
      %1712 = vrot.lane.b32.xlu0 %v729, 96
      %v1713 = vpop.permute.xlu0 %1712
      %v1714 = vsel %vm741, %v729, 0
      %v1716 = vsel %vm741, %v1713, 0
      %1718 = vmatprep.subr.mxu0 0.0
      %1719 = vmatpush1.xpose.msra.mxu0 0.0
      %1720 = vmatprep.subr.mxu0 0.0
      %1721 = vmatpush1.xpose.msra.mxu0 0.0
      %1722 = vmatprep.subr.mxu0 0.0
      %1723 = vmatpush1.xpose.msra.mxu0 0.0
      %1724 = vmatprep.subr.mxu0 0.0
      %1725 = vmatpush1.xpose.msra.mxu0 0.0
      %1726 = vmatprep.subr.mxu0 0.0
      %1727 = vmatpush1.xpose.msra.mxu0 0.0
      %1728 = vmatprep.subr.mxu0 0.0
      %1729 = vmatpush1.xpose.msra.mxu0 0.0
      %1730 = vmatprep.subr.mxu0 0.0
      %1731 = vmatpush1.xpose.msra.mxu0 0.0
      %1732 = vmatprep.subr.mxu0 0.0
      %1733 = vmatpush1.xpose.msra.mxu0 0.0
      %1734 = vmatprep.subr.mxu0 0.0
      %1735 = vmatpush1.xpose.msra.mxu0 0.0
      %1736 = vmatprep.subr.mxu0 0.0
      %1737 = vmatpush1.xpose.msra.mxu0 0.0
      %1738 = vmatprep.subr.mxu0 0.0
      %1739 = vmatpush1.xpose.msra.mxu0 0.0
      %1740 = vmatprep.subr.mxu0 0.0
      %1741 = vmatpush1.xpose.msra.mxu0 0.0
      %1742 = vmatprep.subr.mxu0 0.0
      %1743 = vmatpush1.xpose.msra.mxu0 0.0
      %1744 = vmatprep.subr.mxu0 0.0
      %1745 = vmatpush1.xpose.msra.mxu0 0.0
      %1746 = vmatprep.subr.mxu0 0.0
      %1747 = vmatpush1.xpose.msra.mxu0 0.0
      %1748 = vmatprep.subr.mxu0 0.0
      %1749 = vmatpush1.xpose.msra.mxu0 %v1716
      %1750 = vmatprep.subr.mxu0 0.0
      %1751 = vmatpush2.xpose.msra.mxu0 0.0
      %1752 = vmatprep.subr.mxu0 0.0
      %1753 = vmatpush2.xpose.msra.mxu0 0.0
      %1754 = vmatprep.subr.mxu0 0.0
      %1755 = vmatpush2.xpose.msra.mxu0 0.0
      %1756 = vmatprep.subr.mxu0 0.0
      %1757 = vmatpush2.xpose.msra.mxu0 0.0
      %1758 = vmatprep.subr.mxu0 0.0
      %1759 = vmatpush2.xpose.msra.mxu0 0.0
      %1760 = vmatprep.subr.mxu0 0.0
      %1761 = vmatpush2.xpose.msra.mxu0 0.0
      %1762 = vmatprep.subr.mxu0 0.0
      %1763 = vmatpush2.xpose.msra.mxu0 0.0
      %1764 = vmatprep.subr.mxu0 0.0
      %1765 = vmatpush2.xpose.msra.mxu0 0.0
      %1766 = vmatprep.subr.mxu0 0.0
      %1767 = vmatpush2.xpose.msra.mxu0 0.0
      %1768 = vmatprep.subr.mxu0 0.0
      %1769 = vmatpush2.xpose.msra.mxu0 0.0
      %1770 = vmatprep.subr.mxu0 0.0
      %1771 = vmatpush2.xpose.msra.mxu0 0.0
      %1772 = vmatprep.subr.mxu0 0.0
      %1773 = vmatpush2.xpose.msra.mxu0 0.0
      %1774 = vmatprep.subr.mxu0 0.0
      %1775 = vmatpush2.xpose.msra.mxu0 0.0
      %1776 = vmatprep.subr.mxu0 0.0
      %1777 = vmatpush2.xpose.msra.mxu0 0.0
      %1778 = vmatprep.subr.mxu0 0.0
      %1779 = vmatpush2.xpose.msra.mxu0 0.0
      %1780 = vmatprep.subr.mxu0 0.0
      %1781 = vmatpush2.xpose.msra.mxu0 0.0
      %1782 = vmatprep.mubr.f32.mxu0 0.0
      %1783 = vmatmul.mubr.f32.gmra.mxu0 %v1714
      %v1784 = vpop.f32.mrf.mxu0
      %v1785 = vadd.f32 0.0, %v1784
      %v1786 = vpop.f32.mrf.mxu0
      %1787 = vdwg.mxu0
      %1788 = vrot.lane.b32.xlu0 %v1707, 96
      %v1789 = vpop.permute.xlu0 %1788
      %v1790 = vsel %vm741, %v1707, 0
      %v1792 = vsel %vm741, %v1789, 0
      %1794 = vmatprep.subr.mxu0 0.0
      %1795 = vmatpush1.xpose.msra.mxu0 0.0
      %1796 = vmatprep.subr.mxu0 0.0
      %1797 = vmatpush1.xpose.msra.mxu0 0.0
      %1798 = vmatprep.subr.mxu0 0.0
      %1799 = vmatpush1.xpose.msra.mxu0 0.0
      %1800 = vmatprep.subr.mxu0 0.0
      %1801 = vmatpush1.xpose.msra.mxu0 0.0
      %1802 = vmatprep.subr.mxu0 0.0
      %1803 = vmatpush1.xpose.msra.mxu0 0.0
      %1804 = vmatprep.subr.mxu0 0.0
      %1805 = vmatpush1.xpose.msra.mxu0 0.0
      %1806 = vmatprep.subr.mxu0 0.0
      %1807 = vmatpush1.xpose.msra.mxu0 0.0
      %1808 = vmatprep.subr.mxu0 0.0
      %1809 = vmatpush1.xpose.msra.mxu0 0.0
      %1810 = vmatprep.subr.mxu0 0.0
      %1811 = vmatpush1.xpose.msra.mxu0 0.0
      %1812 = vmatprep.subr.mxu0 0.0
      %1813 = vmatpush1.xpose.msra.mxu0 0.0
      %1814 = vmatprep.subr.mxu0 0.0
      %1815 = vmatpush1.xpose.msra.mxu0 0.0
      %1816 = vmatprep.subr.mxu0 0.0
      %1817 = vmatpush1.xpose.msra.mxu0 0.0
      %1818 = vmatprep.subr.mxu0 0.0
      %1819 = vmatpush1.xpose.msra.mxu0 0.0
      %1820 = vmatprep.subr.mxu0 0.0
      %1821 = vmatpush1.xpose.msra.mxu0 0.0
      %1822 = vmatprep.subr.mxu0 0.0
      %1823 = vmatpush1.xpose.msra.mxu0 0.0
      %1824 = vmatprep.subr.mxu0 0.0
      %1825 = vmatpush1.xpose.msra.mxu0 %v1792
      %1826 = vmatprep.subr.mxu0 0.0
      %1827 = vmatpush2.xpose.msra.mxu0 0.0
      %1828 = vmatprep.subr.mxu0 0.0
      %1829 = vmatpush2.xpose.msra.mxu0 0.0
      %1830 = vmatprep.subr.mxu0 0.0
      %1831 = vmatpush2.xpose.msra.mxu0 0.0
      %1832 = vmatprep.subr.mxu0 0.0
      %1833 = vmatpush2.xpose.msra.mxu0 0.0
      %1834 = vmatprep.subr.mxu0 0.0
      %1835 = vmatpush2.xpose.msra.mxu0 0.0
      %1836 = vmatprep.subr.mxu0 0.0
      %1837 = vmatpush2.xpose.msra.mxu0 0.0
      %1838 = vmatprep.subr.mxu0 0.0
      %1839 = vmatpush2.xpose.msra.mxu0 0.0
      %1840 = vmatprep.subr.mxu0 0.0
      %1841 = vmatpush2.xpose.msra.mxu0 0.0
      %1842 = vmatprep.subr.mxu0 0.0
      %1843 = vmatpush2.xpose.msra.mxu0 0.0
      %1844 = vmatprep.subr.mxu0 0.0
      %1845 = vmatpush2.xpose.msra.mxu0 0.0
      %1846 = vmatprep.subr.mxu0 0.0
      %1847 = vmatpush2.xpose.msra.mxu0 0.0
      %1848 = vmatprep.subr.mxu0 0.0
      %1849 = vmatpush2.xpose.msra.mxu0 0.0
      %1850 = vmatprep.subr.mxu0 0.0
      %1851 = vmatpush2.xpose.msra.mxu0 0.0
      %1852 = vmatprep.subr.mxu0 0.0
      %1853 = vmatpush2.xpose.msra.mxu0 0.0
      %1854 = vmatprep.subr.mxu0 0.0
      %1855 = vmatpush2.xpose.msra.mxu0 0.0
      %1856 = vmatprep.subr.mxu0 0.0
      %1857 = vmatpush2.xpose.msra.mxu0 0.0
      %1858 = vmatprep.mubr.f32.mxu0 0.0
      %1859 = vmatmul.mubr.f32.gmra.mxu0 %v1790
      %v1860 = vpop.f32.mrf.mxu0
      %v1861 = vadd.f32 0.0, %v1860
      %v1862 = vpop.f32.mrf.mxu0
      %1863 = vdwg.mxu0
      %1864 = vrot.lane.b32.xlu0 %v1709, 96
      %v1865 = vpop.permute.xlu0 %1864
      %v1866 = vsel %vm741, %v1709, 0
      %v1868 = vsel %vm741, %v1865, 0
      %1870 = vmatprep.subr.mxu0 0.0
      %1871 = vmatpush1.xpose.msra.mxu0 0.0
      %1872 = vmatprep.subr.mxu0 0.0
      %1873 = vmatpush1.xpose.msra.mxu0 0.0
      %1874 = vmatprep.subr.mxu0 0.0
      %1875 = vmatpush1.xpose.msra.mxu0 0.0
      %1876 = vmatprep.subr.mxu0 0.0
      %1877 = vmatpush1.xpose.msra.mxu0 0.0
      %1878 = vmatprep.subr.mxu0 0.0
      %1879 = vmatpush1.xpose.msra.mxu0 0.0
      %1880 = vmatprep.subr.mxu0 0.0
      %1881 = vmatpush1.xpose.msra.mxu0 0.0
      %1882 = vmatprep.subr.mxu0 0.0
      %1883 = vmatpush1.xpose.msra.mxu0 0.0
      %1884 = vmatprep.subr.mxu0 0.0
      %1885 = vmatpush1.xpose.msra.mxu0 0.0
      %1886 = vmatprep.subr.mxu0 0.0
      %1887 = vmatpush1.xpose.msra.mxu0 0.0
      %1888 = vmatprep.subr.mxu0 0.0
      %1889 = vmatpush1.xpose.msra.mxu0 0.0
      %1890 = vmatprep.subr.mxu0 0.0
      %1891 = vmatpush1.xpose.msra.mxu0 0.0
      %1892 = vmatprep.subr.mxu0 0.0
      %1893 = vmatpush1.xpose.msra.mxu0 0.0
      %1894 = vmatprep.subr.mxu0 0.0
      %1895 = vmatpush1.xpose.msra.mxu0 0.0
      %1896 = vmatprep.subr.mxu0 0.0
      %1897 = vmatpush1.xpose.msra.mxu0 0.0
      %1898 = vmatprep.subr.mxu0 0.0
      %1899 = vmatpush1.xpose.msra.mxu0 0.0
      %1900 = vmatprep.subr.mxu0 0.0
      %1901 = vmatpush1.xpose.msra.mxu0 %v1868
      %1902 = vmatprep.subr.mxu0 0.0
      %1903 = vmatpush2.xpose.msra.mxu0 0.0
      %1904 = vmatprep.subr.mxu0 0.0
      %1905 = vmatpush2.xpose.msra.mxu0 0.0
      %1906 = vmatprep.subr.mxu0 0.0
      %1907 = vmatpush2.xpose.msra.mxu0 0.0
      %1908 = vmatprep.subr.mxu0 0.0
      %1909 = vmatpush2.xpose.msra.mxu0 0.0
      %1910 = vmatprep.subr.mxu0 0.0
      %1911 = vmatpush2.xpose.msra.mxu0 0.0
      %1912 = vmatprep.subr.mxu0 0.0
      %1913 = vmatpush2.xpose.msra.mxu0 0.0
      %1914 = vmatprep.subr.mxu0 0.0
      %1915 = vmatpush2.xpose.msra.mxu0 0.0
      %1916 = vmatprep.subr.mxu0 0.0
      %1917 = vmatpush2.xpose.msra.mxu0 0.0
      %1918 = vmatprep.subr.mxu0 0.0
      %1919 = vmatpush2.xpose.msra.mxu0 0.0
      %1920 = vmatprep.subr.mxu0 0.0
      %1921 = vmatpush2.xpose.msra.mxu0 0.0
      %1922 = vmatprep.subr.mxu0 0.0
      %1923 = vmatpush2.xpose.msra.mxu0 0.0
      %1924 = vmatprep.subr.mxu0 0.0
      %1925 = vmatpush2.xpose.msra.mxu0 0.0
      %1926 = vmatprep.subr.mxu0 0.0
      %1927 = vmatpush2.xpose.msra.mxu0 0.0
      %1928 = vmatprep.subr.mxu0 0.0
      %1929 = vmatpush2.xpose.msra.mxu0 0.0
      %1930 = vmatprep.subr.mxu0 0.0
      %1931 = vmatpush2.xpose.msra.mxu0 0.0
      %1932 = vmatprep.subr.mxu0 0.0
      %1933 = vmatpush2.xpose.msra.mxu0 0.0
      %1934 = vmatprep.mubr.f32.mxu0 0.0
      %1935 = vmatmul.mubr.f32.gmra.mxu0 %v1866
      %v1936 = vpop.f32.mrf.mxu0
      %v1937 = vadd.f32 0.0, %v1936
      %v1938 = vpop.f32.mrf.mxu0
      %1939 = vdwg.mxu0
      %1940 = vrot.lane.b32.xlu0 %v1711, 96
      %v1941 = vpop.permute.xlu0 %1940
      %v1942 = vsel %vm741, %v1711, 0
      %v1944 = vsel %vm741, %v1941, 0
      %1946 = vmatprep.subr.mxu0 0.0
      %1947 = vmatpush1.xpose.msra.mxu0 0.0
      %1948 = vmatprep.subr.mxu0 0.0
      %1949 = vmatpush1.xpose.msra.mxu0 0.0
      %1950 = vmatprep.subr.mxu0 0.0
      %1951 = vmatpush1.xpose.msra.mxu0 0.0
      %1952 = vmatprep.subr.mxu0 0.0
      %1953 = vmatpush1.xpose.msra.mxu0 0.0
      %1954 = vmatprep.subr.mxu0 0.0
      %1955 = vmatpush1.xpose.msra.mxu0 0.0
      %1956 = vmatprep.subr.mxu0 0.0
      %1957 = vmatpush1.xpose.msra.mxu0 0.0
      %1958 = vmatprep.subr.mxu0 0.0
      %1959 = vmatpush1.xpose.msra.mxu0 0.0
      %1960 = vmatprep.subr.mxu0 0.0
      %1961 = vmatpush1.xpose.msra.mxu0 0.0
      %1962 = vmatprep.subr.mxu0 0.0
      %1963 = vmatpush1.xpose.msra.mxu0 0.0
      %1964 = vmatprep.subr.mxu0 0.0
      %1965 = vmatpush1.xpose.msra.mxu0 0.0
      %1966 = vmatprep.subr.mxu0 0.0
      %1967 = vmatpush1.xpose.msra.mxu0 0.0
      %1968 = vmatprep.subr.mxu0 0.0
      %1969 = vmatpush1.xpose.msra.mxu0 0.0
      %1970 = vmatprep.subr.mxu0 0.0
      %1971 = vmatpush1.xpose.msra.mxu0 0.0
      %1972 = vmatprep.subr.mxu0 0.0
      %1973 = vmatpush1.xpose.msra.mxu0 0.0
      %1974 = vmatprep.subr.mxu0 0.0
      %1975 = vmatpush1.xpose.msra.mxu0 0.0
      %1976 = vmatprep.subr.mxu0 0.0
      %1977 = vmatpush1.xpose.msra.mxu0 %v1944
      %1978 = vmatprep.subr.mxu0 0.0
      %1979 = vmatpush2.xpose.msra.mxu0 0.0
      %1980 = vmatprep.subr.mxu0 0.0
      %1981 = vmatpush2.xpose.msra.mxu0 0.0
      %1982 = vmatprep.subr.mxu0 0.0
      %1983 = vmatpush2.xpose.msra.mxu0 0.0
      %1984 = vmatprep.subr.mxu0 0.0
      %1985 = vmatpush2.xpose.msra.mxu0 0.0
      %1986 = vmatprep.subr.mxu0 0.0
      %1987 = vmatpush2.xpose.msra.mxu0 0.0
      %1988 = vmatprep.subr.mxu0 0.0
      %1989 = vmatpush2.xpose.msra.mxu0 0.0
      %1990 = vmatprep.subr.mxu0 0.0
      %1991 = vmatpush2.xpose.msra.mxu0 0.0
      %1992 = vmatprep.subr.mxu0 0.0
      %1993 = vmatpush2.xpose.msra.mxu0 0.0
      %1994 = vmatprep.subr.mxu0 0.0
      %1995 = vmatpush2.xpose.msra.mxu0 0.0
      %1996 = vmatprep.subr.mxu0 0.0
      %1997 = vmatpush2.xpose.msra.mxu0 0.0
      %1998 = vmatprep.subr.mxu0 0.0
      %1999 = vmatpush2.xpose.msra.mxu0 0.0
      %2000 = vmatprep.subr.mxu0 0.0
      %2001 = vmatpush2.xpose.msra.mxu0 0.0
      %2002 = vmatprep.subr.mxu0 0.0
      %2003 = vmatpush2.xpose.msra.mxu0 0.0
      %2004 = vmatprep.subr.mxu0 0.0
      %2005 = vmatpush2.xpose.msra.mxu0 0.0
      %2006 = vmatprep.subr.mxu0 0.0
      %2007 = vmatpush2.xpose.msra.mxu0 0.0
      %2008 = vmatprep.subr.mxu0 0.0
      %2009 = vmatpush2.xpose.msra.mxu0 0.0
      %2010 = vmatprep.mubr.f32.mxu0 0.0
      %2011 = vmatmul.mubr.f32.gmra.mxu0 %v1942
      %v2012 = vpop.f32.mrf.mxu0
      %v2013 = vadd.f32 0.0, %v2012
      %v2014 = vpop.f32.mrf.mxu0
      %2015 = vdwg.mxu0
      %v2016 = vmul.f32 %v1785, 0.35355338
      %v2017 = vmul.f32 %v1861, 0.35355338
      %v2018 = vmul.f32 %v1937, 0.35355338
      %v2019 = vmul.f32 %v2013, 0.35355338
      %v2020 = vlaneseq
      %v2021 = vshrl.u32 %v2020, 7
      %v2022 = vsub.s32 1, %v2021
      %v2023 = vrot.slane %v593, %v2022
      %v2024 = vadd.f32 %v2016, %v2023
      %v2025 = vadd.f32 %v2017, %v2023
      %v2026 = vadd.f32 %v2018, %v2023
      %v2027 = vadd.f32 %v2019, %v2023
      %v2028 = vsel %vm741, %v2024, -inf
      %2029 = vmax.xlane.f32.xlu0 %v2028
      %v2030 = vpop.xlane.xlu0 %2029
      %v2031 = vsel %vm741, %v2025, -inf
      %2032 = vmax.xlane.f32.xlu0 %v2031
      %v2033 = vpop.xlane.xlu0 %2032
      %v2034 = vsel %vm741, %v2026, -inf
      %2035 = vmax.xlane.f32.xlu0 %v2034
      %v2036 = vpop.xlane.xlu0 %2035
      %v2037 = vsel %vm741, %v2027, -inf
      %2038 = vmax.xlane.f32.xlu0 %v2037
      %v2039 = vpop.xlane.xlu0 %2038
      %v2040 = vsub.f32 %v2024, %v2030
      %v2041 = vsub.f32 %v2025, %v2033
      %v2042 = vsub.f32 %v2026, %v2036
      %v2043 = vsub.f32 %v2027, %v2039
      %v2044 = vmul.f32 %v2040, 1.442695
      %v2045 = vpow.pop %v2044
      %v2046 = vmul.f32 %v2041, 1.442695
      %v2047 = vpow.pop %v2046
      %v2048 = vmul.f32 %v2042, 1.442695
      %v2049 = vpow.pop %v2048
      %v2050 = vmul.f32 %v2043, 1.442695
      %v2051 = vpow.pop %v2050
      %v2052 = vsel %vm741, %v2045, 0.0
      %2053 = vadd.xlane.f32.xlu0 %v2052
      %v2054 = vpop.xlane.xlu0 %2053
      %v2055 = vsel %vm741, %v2047, 0.0
      %2056 = vadd.xlane.f32.xlu0 %v2055
      %v2057 = vpop.xlane.xlu0 %2056
      %v2058 = vsel %vm741, %v2049, 0.0
      %2059 = vadd.xlane.f32.xlu0 %v2058
      %v2060 = vpop.xlane.xlu0 %2059
      %v2061 = vsel %vm741, %v2051, 0.0
      %2062 = vadd.xlane.f32.xlu0 %v2061
      %v2063 = vpop.xlane.xlu0 %2062
      %v2064 = vrcp.pop %v2054
      %v2065 = vrcp.pop %v2057
      %v2066 = vrcp.pop %v2060
      %v2067 = vrcp.pop %v2063
      %v2068 = vmul.f32 %v2045, %v2064
      %v2069 = vmul.f32 %v2047, %v2065
      %v2070 = vmul.f32 %v2049, %v2066
      %v2071 = vmul.f32 %v2051, %v2067
      %2072 = vrot.lane.b32.xlu0 %v729, 64
      %v2073 = vpop.permute.xlu0 %2072
      %v2076 = vsel %vm741, %v2068, 0
      %2078 = vmatprep.subr.mxu0 0.0
      %2079 = vmatpush1.msra.mxu0 0.0
      %2080 = vmatprep.subr.mxu0 0.0
      %2081 = vmatpush1.msra.mxu0 0.0
      %2082 = vmatprep.subr.mxu0 0.0
      %2083 = vmatpush1.msra.mxu0 0.0
      %2084 = vmatprep.subr.mxu0 0.0
      %2085 = vmatpush1.msra.mxu0 0.0
      %2086 = vmatprep.subr.mxu0 0.0
      %2087 = vmatpush1.msra.mxu0 0.0
      %2088 = vmatprep.subr.mxu0 0.0
      %2089 = vmatpush1.msra.mxu0 0.0
      %2090 = vmatprep.subr.mxu0 0.0
      %2091 = vmatpush1.msra.mxu0 0.0
      %2092 = vmatprep.subr.mxu0 0.0
      %2093 = vmatpush1.msra.mxu0 0.0
      %2094 = vmatprep.subr.mxu0 0.0
      %2095 = vmatpush1.msra.mxu0 0.0
      %2096 = vmatprep.subr.mxu0 0.0
      %2097 = vmatpush1.msra.mxu0 0.0
      %2098 = vmatprep.subr.mxu0 0.0
      %2099 = vmatpush1.msra.mxu0 0.0
      %2100 = vmatprep.subr.mxu0 0.0
      %2101 = vmatpush1.msra.mxu0 0.0
      %2102 = vmatprep.subr.mxu0 0.0
      %2103 = vmatpush1.msra.mxu0 0.0
      %2104 = vmatprep.subr.mxu0 0.0
      %2105 = vmatpush1.msra.mxu0 0.0
      %2106 = vmatprep.subr.mxu0 0.0
      %2107 = vmatpush1.msra.mxu0 0.0
      %2108 = vmatprep.subr.mxu0 0.0
      %2109 = vmatpush1.msra.mxu0 %v2073
      %2110 = vmatprep.subr.mxu0 0.0
      %2111 = vmatpush2.msra.mxu0 0.0
      %2112 = vmatprep.subr.mxu0 0.0
      %2113 = vmatpush2.msra.mxu0 0.0
      %2114 = vmatprep.subr.mxu0 0.0
      %2115 = vmatpush2.msra.mxu0 0.0
      %2116 = vmatprep.subr.mxu0 0.0
      %2117 = vmatpush2.msra.mxu0 0.0
      %2118 = vmatprep.subr.mxu0 0.0
      %2119 = vmatpush2.msra.mxu0 0.0
      %2120 = vmatprep.subr.mxu0 0.0
      %2121 = vmatpush2.msra.mxu0 0.0
      %2122 = vmatprep.subr.mxu0 0.0
      %2123 = vmatpush2.msra.mxu0 0.0
      %2124 = vmatprep.subr.mxu0 0.0
      %2125 = vmatpush2.msra.mxu0 0.0
      %2126 = vmatprep.subr.mxu0 0.0
      %2127 = vmatpush2.msra.mxu0 0.0
      %2128 = vmatprep.subr.mxu0 0.0
      %2129 = vmatpush2.msra.mxu0 0.0
      %2130 = vmatprep.subr.mxu0 0.0
      %2131 = vmatpush2.msra.mxu0 0.0
      %2132 = vmatprep.subr.mxu0 0.0
      %2133 = vmatpush2.msra.mxu0 0.0
      %2134 = vmatprep.subr.mxu0 0.0
      %2135 = vmatpush2.msra.mxu0 0.0
      %2136 = vmatprep.subr.mxu0 0.0
      %2137 = vmatpush2.msra.mxu0 0.0
      %2138 = vmatprep.subr.mxu0 0.0
      %2139 = vmatpush2.msra.mxu0 0.0
      %2140 = vmatprep.subr.mxu0 0.0
      %2141 = vmatpush2.msra.mxu0 0.0
      %2142 = vmatprep.mubr.f32.mxu0 0.0
      %2143 = vmatmul.mubr.f32.gmra.mxu0 %v2076
      %v2144 = vpop.f32.mrf.mxu0
      %v2145 = vadd.f32 0.0, %v2144
      %v2146 = vpop.f32.mrf.mxu0
      %2147 = vdwg.mxu0
      %2148 = vrot.lane.b32.xlu0 %v1707, 64
      %v2149 = vpop.permute.xlu0 %2148
      %v2152 = vsel %vm741, %v2069, 0
      %2154 = vmatprep.subr.mxu0 0.0
      %2155 = vmatpush1.msra.mxu0 0.0
      %2156 = vmatprep.subr.mxu0 0.0
      %2157 = vmatpush1.msra.mxu0 0.0
      %2158 = vmatprep.subr.mxu0 0.0
      %2159 = vmatpush1.msra.mxu0 0.0
      %2160 = vmatprep.subr.mxu0 0.0
      %2161 = vmatpush1.msra.mxu0 0.0
      %2162 = vmatprep.subr.mxu0 0.0
      %2163 = vmatpush1.msra.mxu0 0.0
      %2164 = vmatprep.subr.mxu0 0.0
      %2165 = vmatpush1.msra.mxu0 0.0
      %2166 = vmatprep.subr.mxu0 0.0
      %2167 = vmatpush1.msra.mxu0 0.0
      %2168 = vmatprep.subr.mxu0 0.0
      %2169 = vmatpush1.msra.mxu0 0.0
      %2170 = vmatprep.subr.mxu0 0.0
      %2171 = vmatpush1.msra.mxu0 0.0
      %2172 = vmatprep.subr.mxu0 0.0
      %2173 = vmatpush1.msra.mxu0 0.0
      %2174 = vmatprep.subr.mxu0 0.0
      %2175 = vmatpush1.msra.mxu0 0.0
      %2176 = vmatprep.subr.mxu0 0.0
      %2177 = vmatpush1.msra.mxu0 0.0
      %2178 = vmatprep.subr.mxu0 0.0
      %2179 = vmatpush1.msra.mxu0 0.0
      %2180 = vmatprep.subr.mxu0 0.0
      %2181 = vmatpush1.msra.mxu0 0.0
      %2182 = vmatprep.subr.mxu0 0.0
      %2183 = vmatpush1.msra.mxu0 0.0
      %2184 = vmatprep.subr.mxu0 0.0
      %2185 = vmatpush1.msra.mxu0 %v2149
      %2186 = vmatprep.subr.mxu0 0.0
      %2187 = vmatpush2.msra.mxu0 0.0
      %2188 = vmatprep.subr.mxu0 0.0
      %2189 = vmatpush2.msra.mxu0 0.0
      %2190 = vmatprep.subr.mxu0 0.0
      %2191 = vmatpush2.msra.mxu0 0.0
      %2192 = vmatprep.subr.mxu0 0.0
      %2193 = vmatpush2.msra.mxu0 0.0
      %2194 = vmatprep.subr.mxu0 0.0
      %2195 = vmatpush2.msra.mxu0 0.0
      %2196 = vmatprep.subr.mxu0 0.0
      %2197 = vmatpush2.msra.mxu0 0.0
      %2198 = vmatprep.subr.mxu0 0.0
      %2199 = vmatpush2.msra.mxu0 0.0
      %2200 = vmatprep.subr.mxu0 0.0
      %2201 = vmatpush2.msra.mxu0 0.0
      %2202 = vmatprep.subr.mxu0 0.0
      %2203 = vmatpush2.msra.mxu0 0.0
      %2204 = vmatprep.subr.mxu0 0.0
      %2205 = vmatpush2.msra.mxu0 0.0
      %2206 = vmatprep.subr.mxu0 0.0
      %2207 = vmatpush2.msra.mxu0 0.0
      %2208 = vmatprep.subr.mxu0 0.0
      %2209 = vmatpush2.msra.mxu0 0.0
      %2210 = vmatprep.subr.mxu0 0.0
      %2211 = vmatpush2.msra.mxu0 0.0
      %2212 = vmatprep.subr.mxu0 0.0
      %2213 = vmatpush2.msra.mxu0 0.0
      %2214 = vmatprep.subr.mxu0 0.0
      %2215 = vmatpush2.msra.mxu0 0.0
      %2216 = vmatprep.subr.mxu0 0.0
      %2217 = vmatpush2.msra.mxu0 0.0
      %2218 = vmatprep.mubr.f32.mxu0 0.0
      %2219 = vmatmul.mubr.f32.gmra.mxu0 %v2152
      %v2220 = vpop.f32.mrf.mxu0
      %v2221 = vadd.f32 0.0, %v2220
      %v2222 = vpop.f32.mrf.mxu0
      %2223 = vdwg.mxu0
      %2224 = vrot.lane.b32.xlu0 %v1709, 64
      %v2225 = vpop.permute.xlu0 %2224
      %v2228 = vsel %vm741, %v2070, 0
      %2230 = vmatprep.subr.mxu0 0.0
      %2231 = vmatpush1.msra.mxu0 0.0
      %2232 = vmatprep.subr.mxu0 0.0
      %2233 = vmatpush1.msra.mxu0 0.0
      %2234 = vmatprep.subr.mxu0 0.0
      %2235 = vmatpush1.msra.mxu0 0.0
      %2236 = vmatprep.subr.mxu0 0.0
      %2237 = vmatpush1.msra.mxu0 0.0
      %2238 = vmatprep.subr.mxu0 0.0
      %2239 = vmatpush1.msra.mxu0 0.0
      %2240 = vmatprep.subr.mxu0 0.0
      %2241 = vmatpush1.msra.mxu0 0.0
      %2242 = vmatprep.subr.mxu0 0.0
      %2243 = vmatpush1.msra.mxu0 0.0
      %2244 = vmatprep.subr.mxu0 0.0
      %2245 = vmatpush1.msra.mxu0 0.0
      %2246 = vmatprep.subr.mxu0 0.0
      %2247 = vmatpush1.msra.mxu0 0.0
      %2248 = vmatprep.subr.mxu0 0.0
      %2249 = vmatpush1.msra.mxu0 0.0
      %2250 = vmatprep.subr.mxu0 0.0
      %2251 = vmatpush1.msra.mxu0 0.0
      %2252 = vmatprep.subr.mxu0 0.0
      %2253 = vmatpush1.msra.mxu0 0.0
      %2254 = vmatprep.subr.mxu0 0.0
      %2255 = vmatpush1.msra.mxu0 0.0
      %2256 = vmatprep.subr.mxu0 0.0
      %2257 = vmatpush1.msra.mxu0 0.0
      %2258 = vmatprep.subr.mxu0 0.0
      %2259 = vmatpush1.msra.mxu0 0.0
      %2260 = vmatprep.subr.mxu0 0.0
      %2261 = vmatpush1.msra.mxu0 %v2225
      %2262 = vmatprep.subr.mxu0 0.0
      %2263 = vmatpush2.msra.mxu0 0.0
      %2264 = vmatprep.subr.mxu0 0.0
      %2265 = vmatpush2.msra.mxu0 0.0
      %2266 = vmatprep.subr.mxu0 0.0
      %2267 = vmatpush2.msra.mxu0 0.0
      %2268 = vmatprep.subr.mxu0 0.0
      %2269 = vmatpush2.msra.mxu0 0.0
      %2270 = vmatprep.subr.mxu0 0.0
      %2271 = vmatpush2.msra.mxu0 0.0
      %2272 = vmatprep.subr.mxu0 0.0
      %2273 = vmatpush2.msra.mxu0 0.0
      %2274 = vmatprep.subr.mxu0 0.0
      %2275 = vmatpush2.msra.mxu0 0.0
      %2276 = vmatprep.subr.mxu0 0.0
      %2277 = vmatpush2.msra.mxu0 0.0
      %2278 = vmatprep.subr.mxu0 0.0
      %2279 = vmatpush2.msra.mxu0 0.0
      %2280 = vmatprep.subr.mxu0 0.0
      %2281 = vmatpush2.msra.mxu0 0.0
      %2282 = vmatprep.subr.mxu0 0.0
      %2283 = vmatpush2.msra.mxu0 0.0
      %2284 = vmatprep.subr.mxu0 0.0
      %2285 = vmatpush2.msra.mxu0 0.0
      %2286 = vmatprep.subr.mxu0 0.0
      %2287 = vmatpush2.msra.mxu0 0.0
      %2288 = vmatprep.subr.mxu0 0.0
      %2289 = vmatpush2.msra.mxu0 0.0
      %2290 = vmatprep.subr.mxu0 0.0
      %2291 = vmatpush2.msra.mxu0 0.0
      %2292 = vmatprep.subr.mxu0 0.0
      %2293 = vmatpush2.msra.mxu0 0.0
      %2294 = vmatprep.mubr.f32.mxu0 0.0
      %2295 = vmatmul.mubr.f32.gmra.mxu0 %v2228
      %v2296 = vpop.f32.mrf.mxu0
      %v2297 = vadd.f32 0.0, %v2296
      %v2298 = vpop.f32.mrf.mxu0
      %2299 = vdwg.mxu0
      %2300 = vrot.lane.b32.xlu0 %v1711, 64
      %v2301 = vpop.permute.xlu0 %2300
      %v2304 = vsel %vm741, %v2071, 0
      %2306 = vmatprep.subr.mxu0 0.0
      %2307 = vmatpush1.msra.mxu0 0.0
      %2308 = vmatprep.subr.mxu0 0.0
      %2309 = vmatpush1.msra.mxu0 0.0
      %2310 = vmatprep.subr.mxu0 0.0
      %2311 = vmatpush1.msra.mxu0 0.0
      %2312 = vmatprep.subr.mxu0 0.0
      %2313 = vmatpush1.msra.mxu0 0.0
      %2314 = vmatprep.subr.mxu0 0.0
      %2315 = vmatpush1.msra.mxu0 0.0
      %2316 = vmatprep.subr.mxu0 0.0
      %2317 = vmatpush1.msra.mxu0 0.0
      %2318 = vmatprep.subr.mxu0 0.0
      %2319 = vmatpush1.msra.mxu0 0.0
      %2320 = vmatprep.subr.mxu0 0.0
      %2321 = vmatpush1.msra.mxu0 0.0
      %2322 = vmatprep.subr.mxu0 0.0
      %2323 = vmatpush1.msra.mxu0 0.0
      %2324 = vmatprep.subr.mxu0 0.0
      %2325 = vmatpush1.msra.mxu0 0.0
      %2326 = vmatprep.subr.mxu0 0.0
      %2327 = vmatpush1.msra.mxu0 0.0
      %2328 = vmatprep.subr.mxu0 0.0
      %2329 = vmatpush1.msra.mxu0 0.0
      %2330 = vmatprep.subr.mxu0 0.0
      %2331 = vmatpush1.msra.mxu0 0.0
      %2332 = vmatprep.subr.mxu0 0.0
      %2333 = vmatpush1.msra.mxu0 0.0
      %2334 = vmatprep.subr.mxu0 0.0
      %2335 = vmatpush1.msra.mxu0 0.0
      %2336 = vmatprep.subr.mxu0 0.0
      %2337 = vmatpush1.msra.mxu0 %v2301
      %2338 = vmatprep.subr.mxu0 0.0
      %2339 = vmatpush2.msra.mxu0 0.0
      %2340 = vmatprep.subr.mxu0 0.0
      %2341 = vmatpush2.msra.mxu0 0.0
      %2342 = vmatprep.subr.mxu0 0.0
      %2343 = vmatpush2.msra.mxu0 0.0
      %2344 = vmatprep.subr.mxu0 0.0
      %2345 = vmatpush2.msra.mxu0 0.0
      %2346 = vmatprep.subr.mxu0 0.0
      %2347 = vmatpush2.msra.mxu0 0.0
      %2348 = vmatprep.subr.mxu0 0.0
      %2349 = vmatpush2.msra.mxu0 0.0
      %2350 = vmatprep.subr.mxu0 0.0
      %2351 = vmatpush2.msra.mxu0 0.0
      %2352 = vmatprep.subr.mxu0 0.0
      %2353 = vmatpush2.msra.mxu0 0.0
      %2354 = vmatprep.subr.mxu0 0.0
      %2355 = vmatpush2.msra.mxu0 0.0
      %2356 = vmatprep.subr.mxu0 0.0
      %2357 = vmatpush2.msra.mxu0 0.0
      %2358 = vmatprep.subr.mxu0 0.0
      %2359 = vmatpush2.msra.mxu0 0.0
      %2360 = vmatprep.subr.mxu0 0.0
      %2361 = vmatpush2.msra.mxu0 0.0
      %2362 = vmatprep.subr.mxu0 0.0
      %2363 = vmatpush2.msra.mxu0 0.0
      %2364 = vmatprep.subr.mxu0 0.0
      %2365 = vmatpush2.msra.mxu0 0.0
      %2366 = vmatprep.subr.mxu0 0.0
      %2367 = vmatpush2.msra.mxu0 0.0
      %2368 = vmatprep.subr.mxu0 0.0
      %2369 = vmatpush2.msra.mxu0 0.0
      %2370 = vmatprep.mubr.f32.mxu0 0.0
      %2371 = vmatmul.mubr.f32.gmra.mxu0 %v2304
      %v2372 = vpop.f32.mrf.mxu0
      %v2373 = vadd.f32 0.0, %v2372
      %v2374 = vpop.f32.mrf.mxu0
      %2375 = vdwg.mxu0
      %v2376 = vld [vmem:[%s6] sm:$0xff]
      %v2377 = vld [vmem:[%s1405] sm:$0xff]
      %v2379 = vsel %vm741, %v2221, 0
      %2381 = vmatprep.subr.mxu0 0.0
      %2382 = vmatpush1.msra.mxu0 0.0
      %2383 = vmatprep.subr.mxu0 0.0
      %2384 = vmatpush1.msra.mxu0 0.0
      %2385 = vmatprep.subr.mxu0 0.0
      %2386 = vmatpush1.msra.mxu0 0.0
      %2387 = vmatprep.subr.mxu0 0.0
      %2388 = vmatpush1.msra.mxu0 0.0
      %2389 = vmatprep.subr.mxu0 0.0
      %2390 = vmatpush1.msra.mxu0 0.0
      %2391 = vmatprep.subr.mxu0 0.0
      %2392 = vmatpush1.msra.mxu0 0.0
      %2393 = vmatprep.subr.mxu0 0.0
      %2394 = vmatpush1.msra.mxu0 0.0
      %2395 = vmatprep.subr.mxu0 0.0
      %2396 = vmatpush1.msra.mxu0 0.0
      %2397 = vmatprep.subr.mxu0 0.0
      %2398 = vmatpush1.msra.mxu0 0.0
      %2399 = vmatprep.subr.mxu0 0.0
      %2400 = vmatpush1.msra.mxu0 0.0
      %2401 = vmatprep.subr.mxu0 0.0
      %2402 = vmatpush1.msra.mxu0 0.0
      %2403 = vmatprep.subr.mxu0 0.0
      %2404 = vmatpush1.msra.mxu0 0.0
      %2405 = vmatprep.subr.mxu0 0.0
      %2406 = vmatpush1.msra.mxu0 0.0
      %2407 = vmatprep.subr.mxu0 0.0
      %2408 = vmatpush1.msra.mxu0 0.0
      %2409 = vmatprep.subr.mxu0 0.0
      %2410 = vmatpush1.msra.mxu0 0.0
      %2411 = vmatprep.subr.mxu0 0.0
      %2412 = vmatpush1.msra.mxu0 %v2377
      %2413 = vmatprep.subr.mxu0 0.0
      %2414 = vmatpush2.msra.mxu0 0.0
      %2415 = vmatprep.subr.mxu0 0.0
      %2416 = vmatpush2.msra.mxu0 0.0
      %2417 = vmatprep.subr.mxu0 0.0
      %2418 = vmatpush2.msra.mxu0 0.0
      %2419 = vmatprep.subr.mxu0 0.0
      %2420 = vmatpush2.msra.mxu0 0.0
      %2421 = vmatprep.subr.mxu0 0.0
      %2422 = vmatpush2.msra.mxu0 0.0
      %2423 = vmatprep.subr.mxu0 0.0
      %2424 = vmatpush2.msra.mxu0 0.0
      %2425 = vmatprep.subr.mxu0 0.0
      %2426 = vmatpush2.msra.mxu0 0.0
      %2427 = vmatprep.subr.mxu0 0.0
      %2428 = vmatpush2.msra.mxu0 0.0
      %2429 = vmatprep.subr.mxu0 0.0
      %2430 = vmatpush2.msra.mxu0 0.0
      %2431 = vmatprep.subr.mxu0 0.0
      %2432 = vmatpush2.msra.mxu0 0.0
      %2433 = vmatprep.subr.mxu0 0.0
      %2434 = vmatpush2.msra.mxu0 0.0
      %2435 = vmatprep.subr.mxu0 0.0
      %2436 = vmatpush2.msra.mxu0 0.0
      %2437 = vmatprep.subr.mxu0 0.0
      %2438 = vmatpush2.msra.mxu0 0.0
      %2439 = vmatprep.subr.mxu0 0.0
      %2440 = vmatpush2.msra.mxu0 0.0
      %2441 = vmatprep.subr.mxu0 0.0
      %2442 = vmatpush2.msra.mxu0 0.0
      %2443 = vmatprep.subr.mxu0 0.0
      %2444 = vmatpush2.msra.mxu0 0.0
      %2445 = vmatprep.mubr.f32.mxu0 0.0
      %2446 = vmatmul.mubr.f32.gmra.mxu0 %v2379
      %v2447 = vpop.f32.mrf.mxu0
      %v2448 = vadd.f32 0.0, %v2447
      %v2449 = vpop.f32.mrf.mxu0
      %2450 = vdwg.mxu0
      %v2452 = vsel %vm741, %v2145, 0
      %2454 = vmatprep.subr.mxu0 0.0
      %2455 = vmatpush1.msra.mxu0 0.0
      %2456 = vmatprep.subr.mxu0 0.0
      %2457 = vmatpush1.msra.mxu0 0.0
      %2458 = vmatprep.subr.mxu0 0.0
      %2459 = vmatpush1.msra.mxu0 0.0
      %2460 = vmatprep.subr.mxu0 0.0
      %2461 = vmatpush1.msra.mxu0 0.0
      %2462 = vmatprep.subr.mxu0 0.0
      %2463 = vmatpush1.msra.mxu0 0.0
      %2464 = vmatprep.subr.mxu0 0.0
      %2465 = vmatpush1.msra.mxu0 0.0
      %2466 = vmatprep.subr.mxu0 0.0
      %2467 = vmatpush1.msra.mxu0 0.0
      %2468 = vmatprep.subr.mxu0 0.0
      %2469 = vmatpush1.msra.mxu0 0.0
      %2470 = vmatprep.subr.mxu0 0.0
      %2471 = vmatpush1.msra.mxu0 0.0
      %2472 = vmatprep.subr.mxu0 0.0
      %2473 = vmatpush1.msra.mxu0 0.0
      %2474 = vmatprep.subr.mxu0 0.0
      %2475 = vmatpush1.msra.mxu0 0.0
      %2476 = vmatprep.subr.mxu0 0.0
      %2477 = vmatpush1.msra.mxu0 0.0
      %2478 = vmatprep.subr.mxu0 0.0
      %2479 = vmatpush1.msra.mxu0 0.0
      %2480 = vmatprep.subr.mxu0 0.0
      %2481 = vmatpush1.msra.mxu0 0.0
      %2482 = vmatprep.subr.mxu0 0.0
      %2483 = vmatpush1.msra.mxu0 0.0
      %2484 = vmatprep.subr.mxu0 0.0
      %2485 = vmatpush1.msra.mxu0 %v2376
      %2486 = vmatprep.subr.mxu0 0.0
      %2487 = vmatpush2.msra.mxu0 0.0
      %2488 = vmatprep.subr.mxu0 0.0
      %2489 = vmatpush2.msra.mxu0 0.0
      %2490 = vmatprep.subr.mxu0 0.0
      %2491 = vmatpush2.msra.mxu0 0.0
      %2492 = vmatprep.subr.mxu0 0.0
      %2493 = vmatpush2.msra.mxu0 0.0
      %2494 = vmatprep.subr.mxu0 0.0
      %2495 = vmatpush2.msra.mxu0 0.0
      %2496 = vmatprep.subr.mxu0 0.0
      %2497 = vmatpush2.msra.mxu0 0.0
      %2498 = vmatprep.subr.mxu0 0.0
      %2499 = vmatpush2.msra.mxu0 0.0
      %2500 = vmatprep.subr.mxu0 0.0
      %2501 = vmatpush2.msra.mxu0 0.0
      %2502 = vmatprep.subr.mxu0 0.0
      %2503 = vmatpush2.msra.mxu0 0.0
      %2504 = vmatprep.subr.mxu0 0.0
      %2505 = vmatpush2.msra.mxu0 0.0
      %2506 = vmatprep.subr.mxu0 0.0
      %2507 = vmatpush2.msra.mxu0 0.0
      %2508 = vmatprep.subr.mxu0 0.0
      %2509 = vmatpush2.msra.mxu0 0.0
      %2510 = vmatprep.subr.mxu0 0.0
      %2511 = vmatpush2.msra.mxu0 0.0
      %2512 = vmatprep.subr.mxu0 0.0
      %2513 = vmatpush2.msra.mxu0 0.0
      %2514 = vmatprep.subr.mxu0 0.0
      %2515 = vmatpush2.msra.mxu0 0.0
      %2516 = vmatprep.subr.mxu0 0.0
      %2517 = vmatpush2.msra.mxu0 0.0
      %2518 = vmatprep.mubr.f32.mxu0 0.0
      %2519 = vmatmul.mubr.f32.gmra.mxu0 %v2452
      %v2520 = vpop.f32.mrf.mxu0
      %v2521 = vadd.f32 %v2448, %v2520
      %v2522 = vpop.f32.mrf.mxu0
      %2523 = vdwg.mxu0
      %v2524 = vld [vmem:[%s1553] sm:$0xff]
      %v2526 = vsel %vm741, %v2297, 0
      %2528 = vmatprep.subr.mxu0 0.0
      %2529 = vmatpush1.msra.mxu0 0.0
      %2530 = vmatprep.subr.mxu0 0.0
      %2531 = vmatpush1.msra.mxu0 0.0
      %2532 = vmatprep.subr.mxu0 0.0
      %2533 = vmatpush1.msra.mxu0 0.0
      %2534 = vmatprep.subr.mxu0 0.0
      %2535 = vmatpush1.msra.mxu0 0.0
      %2536 = vmatprep.subr.mxu0 0.0
      %2537 = vmatpush1.msra.mxu0 0.0
      %2538 = vmatprep.subr.mxu0 0.0
      %2539 = vmatpush1.msra.mxu0 0.0
      %2540 = vmatprep.subr.mxu0 0.0
      %2541 = vmatpush1.msra.mxu0 0.0
      %2542 = vmatprep.subr.mxu0 0.0
      %2543 = vmatpush1.msra.mxu0 0.0
      %2544 = vmatprep.subr.mxu0 0.0
      %2545 = vmatpush1.msra.mxu0 0.0
      %2546 = vmatprep.subr.mxu0 0.0
      %2547 = vmatpush1.msra.mxu0 0.0
      %2548 = vmatprep.subr.mxu0 0.0
      %2549 = vmatpush1.msra.mxu0 0.0
      %2550 = vmatprep.subr.mxu0 0.0
      %2551 = vmatpush1.msra.mxu0 0.0
      %2552 = vmatprep.subr.mxu0 0.0
      %2553 = vmatpush1.msra.mxu0 0.0
      %2554 = vmatprep.subr.mxu0 0.0
      %2555 = vmatpush1.msra.mxu0 0.0
      %2556 = vmatprep.subr.mxu0 0.0
      %2557 = vmatpush1.msra.mxu0 0.0
      %2558 = vmatprep.subr.mxu0 0.0
      %2559 = vmatpush1.msra.mxu0 %v2524
      %2560 = vmatprep.subr.mxu0 0.0
      %2561 = vmatpush2.msra.mxu0 0.0
      %2562 = vmatprep.subr.mxu0 0.0
      %2563 = vmatpush2.msra.mxu0 0.0
      %2564 = vmatprep.subr.mxu0 0.0
      %2565 = vmatpush2.msra.mxu0 0.0
      %2566 = vmatprep.subr.mxu0 0.0
      %2567 = vmatpush2.msra.mxu0 0.0
      %2568 = vmatprep.subr.mxu0 0.0
      %2569 = vmatpush2.msra.mxu0 0.0
      %2570 = vmatprep.subr.mxu0 0.0
      %2571 = vmatpush2.msra.mxu0 0.0
      %2572 = vmatprep.subr.mxu0 0.0
      %2573 = vmatpush2.msra.mxu0 0.0
      %2574 = vmatprep.subr.mxu0 0.0
      %2575 = vmatpush2.msra.mxu0 0.0
      %2576 = vmatprep.subr.mxu0 0.0
      %2577 = vmatpush2.msra.mxu0 0.0
      %2578 = vmatprep.subr.mxu0 0.0
      %2579 = vmatpush2.msra.mxu0 0.0
      %2580 = vmatprep.subr.mxu0 0.0
      %2581 = vmatpush2.msra.mxu0 0.0
      %2582 = vmatprep.subr.mxu0 0.0
      %2583 = vmatpush2.msra.mxu0 0.0
      %2584 = vmatprep.subr.mxu0 0.0
      %2585 = vmatpush2.msra.mxu0 0.0
      %2586 = vmatprep.subr.mxu0 0.0
      %2587 = vmatpush2.msra.mxu0 0.0
      %2588 = vmatprep.subr.mxu0 0.0
      %2589 = vmatpush2.msra.mxu0 0.0
      %2590 = vmatprep.subr.mxu0 0.0
      %2591 = vmatpush2.msra.mxu0 0.0
      %2592 = vmatprep.mubr.f32.mxu0 0.0
      %2593 = vmatmul.mubr.f32.gmra.mxu0 %v2526
      %v2594 = vpop.f32.mrf.mxu0
      %v2595 = vadd.f32 0.0, %v2594
      %v2596 = vpop.f32.mrf.mxu0
      %2597 = vdwg.mxu0
      %v2598 = vadd.f32 %v2521, %v2595
      %v2599 = vld [vmem:[%s1629] sm:$0xff]
      %v2601 = vsel %vm741, %v2373, 0
      %2603 = vmatprep.subr.mxu0 0.0
      %2604 = vmatpush1.msra.mxu0 0.0
      %2605 = vmatprep.subr.mxu0 0.0
      %2606 = vmatpush1.msra.mxu0 0.0
      %2607 = vmatprep.subr.mxu0 0.0
      %2608 = vmatpush1.msra.mxu0 0.0
      %2609 = vmatprep.subr.mxu0 0.0
      %2610 = vmatpush1.msra.mxu0 0.0
      %2611 = vmatprep.subr.mxu0 0.0
      %2612 = vmatpush1.msra.mxu0 0.0
      %2613 = vmatprep.subr.mxu0 0.0
      %2614 = vmatpush1.msra.mxu0 0.0
      %2615 = vmatprep.subr.mxu0 0.0
      %2616 = vmatpush1.msra.mxu0 0.0
      %2617 = vmatprep.subr.mxu0 0.0
      %2618 = vmatpush1.msra.mxu0 0.0
      %2619 = vmatprep.subr.mxu0 0.0
      %2620 = vmatpush1.msra.mxu0 0.0
      %2621 = vmatprep.subr.mxu0 0.0
      %2622 = vmatpush1.msra.mxu0 0.0
      %2623 = vmatprep.subr.mxu0 0.0
      %2624 = vmatpush1.msra.mxu0 0.0
      %2625 = vmatprep.subr.mxu0 0.0
      %2626 = vmatpush1.msra.mxu0 0.0
      %2627 = vmatprep.subr.mxu0 0.0
      %2628 = vmatpush1.msra.mxu0 0.0
      %2629 = vmatprep.subr.mxu0 0.0
      %2630 = vmatpush1.msra.mxu0 0.0
      %2631 = vmatprep.subr.mxu0 0.0
      %2632 = vmatpush1.msra.mxu0 0.0
      %2633 = vmatprep.subr.mxu0 0.0
      %2634 = vmatpush1.msra.mxu0 %v2599
      %2635 = vmatprep.subr.mxu0 0.0
      %2636 = vmatpush2.msra.mxu0 0.0
      %2637 = vmatprep.subr.mxu0 0.0
      %2638 = vmatpush2.msra.mxu0 0.0
      %2639 = vmatprep.subr.mxu0 0.0
      %2640 = vmatpush2.msra.mxu0 0.0
      %2641 = vmatprep.subr.mxu0 0.0
      %2642 = vmatpush2.msra.mxu0 0.0
      %2643 = vmatprep.subr.mxu0 0.0
      %2644 = vmatpush2.msra.mxu0 0.0
      %2645 = vmatprep.subr.mxu0 0.0
      %2646 = vmatpush2.msra.mxu0 0.0
      %2647 = vmatprep.subr.mxu0 0.0
      %2648 = vmatpush2.msra.mxu0 0.0
      %2649 = vmatprep.subr.mxu0 0.0
      %2650 = vmatpush2.msra.mxu0 0.0
      %2651 = vmatprep.subr.mxu0 0.0
      %2652 = vmatpush2.msra.mxu0 0.0
      %2653 = vmatprep.subr.mxu0 0.0
      %2654 = vmatpush2.msra.mxu0 0.0
      %2655 = vmatprep.subr.mxu0 0.0
      %2656 = vmatpush2.msra.mxu0 0.0
      %2657 = vmatprep.subr.mxu0 0.0
      %2658 = vmatpush2.msra.mxu0 0.0
      %2659 = vmatprep.subr.mxu0 0.0
      %2660 = vmatpush2.msra.mxu0 0.0
      %2661 = vmatprep.subr.mxu0 0.0
      %2662 = vmatpush2.msra.mxu0 0.0
      %2663 = vmatprep.subr.mxu0 0.0
      %2664 = vmatpush2.msra.mxu0 0.0
      %2665 = vmatprep.subr.mxu0 0.0
      %2666 = vmatpush2.msra.mxu0 0.0
      %2667 = vmatprep.mubr.f32.mxu0 0.0
      %2668 = vmatmul.mubr.f32.gmra.mxu0 %v2601
      %v2669 = vpop.f32.mrf.mxu0
      %v2670 = vadd.f32 0.0, %v2669
      %v2671 = vpop.f32.mrf.mxu0
      %2672 = vdwg.mxu0
      %v2673 = vadd.f32 %v2598, %v2670
      %v2674 = vld [vmem:[%s7] sm:$0x1]
      %v2676 = vlaneseq
      %v2677 = vshrl.u32 %v2676, 7
      %v2678 = vsub.s32 0, %v2677
      %v2679 = vrot.slane %v2674, %v2678
      %v2681 = vadd.f32 %v1704, %v2679
      %v2682 = vadd.f32 %v2673, %v2679
      %v2683 = vadd.f32 %v2681, %v638
      %v2684 = vadd.f32 %v2682, %v639
      %v2685 = vld [vmem:[%s8] sm:$0x1]
      %v2686 = vld [vmem:[%s9] sm:$0x1]
      %v2687 = vsel %vm596, %v2683, 0.0
      %2688 = vadd.xlane.f32.xlu0 %v2687
      %v2689 = vpop.xlane.xlu0 %2688
      %v2690 = vsel %vm596, %v2684, 0.0
      %2691 = vadd.xlane.f32.xlu0 %v2690
      %v2692 = vpop.xlane.xlu0 %2691
      %v2693 = vmul.f32 %v2689, %v603
      %v2694 = vmul.f32 %v2692, %v603
      %v2695 = vsub.f32 %v2683, %v2693
      %v2696 = vsub.f32 %v2684, %v2694
      %v2697 = vmul.f32 %v2695, %v2695
      %v2698 = vmul.f32 %v2696, %v2696
      %v2699 = vsel %vm596, %v2697, 0.0
      %2700 = vadd.xlane.f32.xlu0 %v2699
      %v2701 = vpop.xlane.xlu0 %2700
      %v2702 = vsel %vm596, %v2698, 0.0
      %2703 = vadd.xlane.f32.xlu0 %v2702
      %v2704 = vpop.xlane.xlu0 %2703
      %v2705 = vmul.f32 %v2701, %v603
      %v2706 = vmul.f32 %v2704, %v603
      %v2707 = vadd.f32 %v2705, 1e-12
      %v2708 = vadd.f32 %v2706, 1e-12
      %v2709 = vrsqrt.pop %v2707
      %v2710 = vrsqrt.pop %v2708
      %v2711 = vmul.f32 %v2695, %v2709
      %v2712 = vmul.f32 %v2696, %v2710
      %v2714 = vlaneseq
      %v2715 = vshrl.u32 %v2714, 7
      %v2716 = vsub.s32 0, %v2715
      %v2717 = vrot.slane %v2685, %v2716
      %v2719 = vmul.f32 %v2711, %v2717
      %v2720 = vmul.f32 %v2712, %v2717
      %v2722 = vlaneseq
      %v2723 = vshrl.u32 %v2722, 7
      %v2724 = vsub.s32 0, %v2723
      %v2725 = vrot.slane %v2686, %v2724
      %v2727 = vadd.f32 %v2719, %v2725
      %v2728 = vadd.f32 %v2720, %v2725
      %v2729 = vld [vmem:[%s10] sm:$0xff]
      %v2730 = vld [vmem:[%s10 + $0x8] sm:$0xff]
      %v2731 = vld [vmem:[%s10 + $0x10] sm:$0xff]
      %v2732 = vld [vmem:[%s10 + $0x18] sm:$0xff]
      %v2733 = vld [vmem:[%s11] sm:$0x1]
      %v2735 = vlaneseq
      %v2736 = vshrl.u32 %v2735, 7
      %v2737 = vsub.s32 0, %v2736
      %v2738 = vrot.slane %v2733, %v2737
      %v2741 = vsel %vm596, %v2727, 0
      %v2744 = vsel %vm596, %v2728, 0
      %2746 = vmatprep.subr.mxu0 0.0
      %2747 = vmatpush1.msra.mxu0 0.0
      %2748 = vmatprep.subr.mxu0 0.0
      %2749 = vmatpush1.msra.mxu0 0.0
      %2750 = vmatprep.subr.mxu0 0.0
      %2751 = vmatpush1.msra.mxu0 0.0
      %2752 = vmatprep.subr.mxu0 0.0
      %2753 = vmatpush1.msra.mxu0 0.0
      %2754 = vmatprep.subr.mxu0 0.0
      %2755 = vmatpush1.msra.mxu0 0.0
      %2756 = vmatprep.subr.mxu0 0.0
      %2757 = vmatpush1.msra.mxu0 0.0
      %2758 = vmatprep.subr.mxu0 0.0
      %2759 = vmatpush1.msra.mxu0 0.0
      %2760 = vmatprep.subr.mxu0 0.0
      %2761 = vmatpush1.msra.mxu0 0.0
      %2762 = vmatprep.subr.mxu0 0.0
      %2763 = vmatpush1.msra.mxu0 0.0
      %2764 = vmatprep.subr.mxu0 0.0
      %2765 = vmatpush1.msra.mxu0 0.0
      %2766 = vmatprep.subr.mxu0 0.0
      %2767 = vmatpush1.msra.mxu0 0.0
      %2768 = vmatprep.subr.mxu0 0.0
      %2769 = vmatpush1.msra.mxu0 0.0
      %2770 = vmatprep.subr.mxu0 0.0
      %2771 = vmatpush1.msra.mxu0 %v2732
      %2772 = vmatprep.subr.mxu0 0.0
      %2773 = vmatpush1.msra.mxu0 %v2731
      %2774 = vmatprep.subr.mxu0 0.0
      %2775 = vmatpush1.msra.mxu0 %v2730
      %2776 = vmatprep.subr.mxu0 0.0
      %2777 = vmatpush1.msra.mxu0 %v2729
      %2778 = vmatprep.subr.mxu0 0.0
      %2779 = vmatpush2.msra.mxu0 0.0
      %2780 = vmatprep.subr.mxu0 0.0
      %2781 = vmatpush2.msra.mxu0 0.0
      %2782 = vmatprep.subr.mxu0 0.0
      %2783 = vmatpush2.msra.mxu0 0.0
      %2784 = vmatprep.subr.mxu0 0.0
      %2785 = vmatpush2.msra.mxu0 0.0
      %2786 = vmatprep.subr.mxu0 0.0
      %2787 = vmatpush2.msra.mxu0 0.0
      %2788 = vmatprep.subr.mxu0 0.0
      %2789 = vmatpush2.msra.mxu0 0.0
      %2790 = vmatprep.subr.mxu0 0.0
      %2791 = vmatpush2.msra.mxu0 0.0
      %2792 = vmatprep.subr.mxu0 0.0
      %2793 = vmatpush2.msra.mxu0 0.0
      %2794 = vmatprep.subr.mxu0 0.0
      %2795 = vmatpush2.msra.mxu0 0.0
      %2796 = vmatprep.subr.mxu0 0.0
      %2797 = vmatpush2.msra.mxu0 0.0
      %2798 = vmatprep.subr.mxu0 0.0
      %2799 = vmatpush2.msra.mxu0 0.0
      %2800 = vmatprep.subr.mxu0 0.0
      %2801 = vmatpush2.msra.mxu0 0.0
      %2802 = vmatprep.subr.mxu0 0.0
      %2803 = vmatpush2.msra.mxu0 0.0
      %2804 = vmatprep.subr.mxu0 0.0
      %2805 = vmatpush2.msra.mxu0 0.0
      %2806 = vmatprep.subr.mxu0 0.0
      %2807 = vmatpush2.msra.mxu0 0.0
      %2808 = vmatprep.subr.mxu0 0.0
      %2809 = vmatpush2.msra.mxu0 0.0
      %2810 = vmatprep.mubr.f32.mxu0 0.0
      %2811 = vmatmul.mubr.f32.gmra.mxu0 %v2741
      %v2812 = vpop.f32.mrf.mxu0
      %v2813 = vadd.f32 %v2738, %v2812
      %v2814 = vpop.f32.mrf.mxu0
      %2815 = vmatprep.mubr.f32.mxu0 0.0
      %2816 = vmatmul.mubr.f32.gmra.mxu0 %v2744
      %v2817 = vpop.f32.mrf.mxu0
      %v2818 = vadd.f32 %v2738, %v2817
      %v2819 = vpop.f32.mrf.mxu0
      %2820 = vdwg.mxu0
      %v2821 = vmul.f32 %v2813, 0.5
      %v2822 = vmul.f32 %v2818, 0.5
      %v2823 = vmul.f32 %v2813, 0.70710677
      %v2824 = vmul.f32 %v2818, 0.70710677
      %vm2825 = vcmp.ge.f32.partialorder %v2823, 0.0
      %vm2826 = vcmp.ge.f32.partialorder %v2824, 0.0
      %v2827 = vsel %vm2825, 1.0, -1.0
      %v2828 = vsel %vm2826, 1.0, -1.0
      %v2829 = vand.u32 2147483647, %v2823
      %v2830 = vand.u32 2147483647, %v2824
      %v2831 = vmul.f32 %v2829, 0.3275911
      %v2832 = vmul.f32 %v2830, 0.3275911
      %v2833 = vadd.f32 %v2831, 1.0
      %v2834 = vadd.f32 %v2832, 1.0
      %v2835 = vrcp.pop %v2833
      %v2836 = vmul.f32 1.0, %v2835
      %v2837 = vrcp.pop %v2834
      %v2838 = vmul.f32 1.0, %v2837
      %v2839 = vmul.f32 %v2836, 1.0614054
      %v2840 = vmul.f32 %v2838, 1.0614054
      %v2841 = vadd.f32 %v2839, -1.4531521
      %v2842 = vadd.f32 %v2840, -1.4531521
      %v2843 = vmul.f32 %v2841, %v2836
      %v2844 = vmul.f32 %v2842, %v2838
      %v2845 = vadd.f32 %v2843, 1.4214138
      %v2846 = vadd.f32 %v2844, 1.4214138
      %v2847 = vmul.f32 %v2845, %v2836
      %v2848 = vmul.f32 %v2846, %v2838
      %v2849 = vadd.f32 %v2847, -0.28449672
      %v2850 = vadd.f32 %v2848, -0.28449672
      %v2851 = vmul.f32 %v2849, %v2836
      %v2852 = vmul.f32 %v2850, %v2838
      %v2853 = vadd.f32 %v2851, 0.2548296
      %v2854 = vadd.f32 %v2852, 0.2548296
      %v2855 = vmul.f32 %v2853, %v2836
      %v2856 = vmul.f32 %v2854, %v2838
      %v2857 = vsub.f32 0.0, %v2829
      %v2858 = vsub.f32 0.0, %v2830
      %v2859 = vmul.f32 %v2857, %v2829
      %v2860 = vmul.f32 %v2858, %v2830
      %v2861 = vmul.f32 %v2859, 1.442695
      %v2862 = vpow.pop %v2861
      %v2863 = vmul.f32 %v2860, 1.442695
      %v2864 = vpow.pop %v2863
      %v2865 = vmul.f32 %v2855, %v2862
      %v2866 = vmul.f32 %v2856, %v2864
      %v2867 = vsub.f32 1.0, %v2865
      %v2868 = vsub.f32 1.0, %v2866
      %v2869 = vmul.f32 %v2827, %v2867
      %v2870 = vmul.f32 %v2828, %v2868
      %v2871 = vadd.f32 %v2869, 1.0
      %v2872 = vadd.f32 %v2870, 1.0
      %v2873 = vmul.f32 %v2821, %v2871
      %v2874 = vmul.f32 %v2822, %v2872
      %v2875 = vld [vmem:[%s12] sm:$0xff]
      %v2876 = vld [vmem:[%s12 + $0x8] sm:$0xff]
      %v2877 = vld [vmem:[%s12 + $0x10] sm:$0xff]
      %v2878 = vld [vmem:[%s12 + $0x18] sm:$0xff]
      %v2879 = vld [vmem:[%s12 + $0x20] sm:$0xff]
      %v2880 = vld [vmem:[%s12 + $0x28] sm:$0xff]
      %v2881 = vld [vmem:[%s12 + $0x30] sm:$0xff]
      %v2882 = vld [vmem:[%s12 + $0x38] sm:$0xff]
      %v2883 = vld [vmem:[%s13] sm:$0x1]
      %v2885 = vlaneseq
      %v2886 = vshrl.u32 %v2885, 7
      %v2887 = vsub.s32 0, %v2886
      %v2888 = vrot.slane %v2883, %v2887
      %vm2890 = vcmask 523264
      %v2892 = vsel %vm2890, %v2873, 0
      %v2895 = vsel %vm2890, %v2874, 0
      %2897 = vmatprep.subr.mxu0 0.0
      %2898 = vmatpush1.msra.mxu0 0.0
      %2899 = vmatprep.subr.mxu0 0.0
      %2900 = vmatpush1.msra.mxu0 0.0
      %2901 = vmatprep.subr.mxu0 0.0
      %2902 = vmatpush1.msra.mxu0 0.0
      %2903 = vmatprep.subr.mxu0 0.0
      %2904 = vmatpush1.msra.mxu0 0.0
      %2905 = vmatprep.subr.mxu0 0.0
      %2906 = vmatpush1.msra.mxu0 0.0
      %2907 = vmatprep.subr.mxu0 0.0
      %2908 = vmatpush1.msra.mxu0 0.0
      %2909 = vmatprep.subr.mxu0 0.0
      %2910 = vmatpush1.msra.mxu0 0.0
      %2911 = vmatprep.subr.mxu0 0.0
      %2912 = vmatpush1.msra.mxu0 0.0
      %2913 = vmatprep.subr.mxu0 0.0
      %2914 = vmatpush1.msra.mxu0 %v2882
      %2915 = vmatprep.subr.mxu0 0.0
      %2916 = vmatpush1.msra.mxu0 %v2881
      %2917 = vmatprep.subr.mxu0 0.0
      %2918 = vmatpush1.msra.mxu0 %v2880
      %2919 = vmatprep.subr.mxu0 0.0
      %2920 = vmatpush1.msra.mxu0 %v2879
      %2921 = vmatprep.subr.mxu0 0.0
      %2922 = vmatpush1.msra.mxu0 %v2878
      %2923 = vmatprep.subr.mxu0 0.0
      %2924 = vmatpush1.msra.mxu0 %v2877
      %2925 = vmatprep.subr.mxu0 0.0
      %2926 = vmatpush1.msra.mxu0 %v2876
      %2927 = vmatprep.subr.mxu0 0.0
      %2928 = vmatpush1.msra.mxu0 %v2875
      %2929 = vmatprep.subr.mxu0 0.0
      %2930 = vmatpush2.msra.mxu0 0.0
      %2931 = vmatprep.subr.mxu0 0.0
      %2932 = vmatpush2.msra.mxu0 0.0
      %2933 = vmatprep.subr.mxu0 0.0
      %2934 = vmatpush2.msra.mxu0 0.0
      %2935 = vmatprep.subr.mxu0 0.0
      %2936 = vmatpush2.msra.mxu0 0.0
      %2937 = vmatprep.subr.mxu0 0.0
      %2938 = vmatpush2.msra.mxu0 0.0
      %2939 = vmatprep.subr.mxu0 0.0
      %2940 = vmatpush2.msra.mxu0 0.0
      %2941 = vmatprep.subr.mxu0 0.0
      %2942 = vmatpush2.msra.mxu0 0.0
      %2943 = vmatprep.subr.mxu0 0.0
      %2944 = vmatpush2.msra.mxu0 0.0
      %2945 = vmatprep.subr.mxu0 0.0
      %2946 = vmatpush2.msra.mxu0 0.0
      %2947 = vmatprep.subr.mxu0 0.0
      %2948 = vmatpush2.msra.mxu0 0.0
      %2949 = vmatprep.subr.mxu0 0.0
      %2950 = vmatpush2.msra.mxu0 0.0
      %2951 = vmatprep.subr.mxu0 0.0
      %2952 = vmatpush2.msra.mxu0 0.0
      %2953 = vmatprep.subr.mxu0 0.0
      %2954 = vmatpush2.msra.mxu0 0.0
      %2955 = vmatprep.subr.mxu0 0.0
      %2956 = vmatpush2.msra.mxu0 0.0
      %2957 = vmatprep.subr.mxu0 0.0
      %2958 = vmatpush2.msra.mxu0 0.0
      %2959 = vmatprep.subr.mxu0 0.0
      %2960 = vmatpush2.msra.mxu0 0.0
      %2961 = vmatprep.mubr.f32.mxu0 0.0
      %2962 = vmatmul.mubr.f32.gmra.mxu0 %v2892
      %v2963 = vpop.f32.mrf.mxu0
      %v2964 = vadd.f32 %v2888, %v2963
      %v2965 = vpop.f32.mrf.mxu0
      %2966 = vmatprep.mubr.f32.mxu0 0.0
      %2967 = vmatmul.mubr.f32.gmra.mxu0 %v2895
      %v2968 = vpop.f32.mrf.mxu0
      %v2969 = vadd.f32 %v2888, %v2968
      %v2970 = vpop.f32.mrf.mxu0
      %2971 = vdwg.mxu0
      %v2972 = vadd.f32 %v2964, %v2727
      %v2973 = vadd.f32 %v2969, %v2728
      %v2974 = vld [vmem:[%s14] sm:$0x1]
      %v2975 = vld [vmem:[%s15] sm:$0x1]
      %v2976 = vsel %vm596, %v2972, 0.0
      %2977 = vadd.xlane.f32.xlu0 %v2976
      %v2978 = vpop.xlane.xlu0 %2977
      %v2979 = vsel %vm596, %v2973, 0.0
      %2980 = vadd.xlane.f32.xlu0 %v2979
      %v2981 = vpop.xlane.xlu0 %2980
      %v2982 = vmul.f32 %v2978, %v603
      %v2983 = vmul.f32 %v2981, %v603
      %v2984 = vsub.f32 %v2972, %v2982
      %v2985 = vsub.f32 %v2973, %v2983
      %v2986 = vmul.f32 %v2984, %v2984
      %v2987 = vmul.f32 %v2985, %v2985
      %v2988 = vsel %vm596, %v2986, 0.0
      %2989 = vadd.xlane.f32.xlu0 %v2988
      %v2990 = vpop.xlane.xlu0 %2989
      %v2991 = vsel %vm596, %v2987, 0.0
      %2992 = vadd.xlane.f32.xlu0 %v2991
      %v2993 = vpop.xlane.xlu0 %2992
      %v2994 = vmul.f32 %v2990, %v603
      %v2995 = vmul.f32 %v2993, %v603
      %v2996 = vadd.f32 %v2994, 1e-12
      %v2997 = vadd.f32 %v2995, 1e-12
      %v2998 = vrsqrt.pop %v2996
      %v2999 = vrsqrt.pop %v2997
      %v3000 = vmul.f32 %v2984, %v2998
      %v3001 = vmul.f32 %v2985, %v2999
      %v3003 = vlaneseq
      %v3004 = vshrl.u32 %v3003, 7
      %v3005 = vsub.s32 0, %v3004
      %v3006 = vrot.slane %v2974, %v3005
      %v3008 = vmul.f32 %v3000, %v3006
      %v3009 = vmul.f32 %v3001, %v3006
      %v3011 = vlaneseq
      %v3012 = vshrl.u32 %v3011, 7
      %v3013 = vsub.s32 0, %v3012
      %v3014 = vrot.slane %v2975, %v3013
      %v3016 = vadd.f32 %v3008, %v3014
      %v3017 = vadd.f32 %v3009, %v3014
      %s3018 = scalar_lea.vmem %s4, 32
      %v3019 = vld [vmem:[%s3018] sm:$0xff]
      %v3020 = vld [vmem:[%s3018 + $0x8] sm:$0xff]
      %v3021 = vld [vmem:[%s3018 + $0x10] sm:$0xff]
      %v3022 = vld [vmem:[%s3018 + $0x18] sm:$0xff]
      %s3023 = scalar_lea.vmem %s5, 1
      %v3024 = vld [vmem:[%s3023] sm:$0x1]
      %v3026 = vlaneseq
      %v3027 = vshrl.u32 %v3026, 7
      %v3028 = vsub.s32 0, %v3027
      %v3029 = vrot.slane %v3024, %v3028
      %v3032 = vsel %vm596, %v3016, 0
      %v3035 = vsel %vm596, %v3017, 0
      %3037 = vmatprep.subr.mxu0 0.0
      %3038 = vmatpush1.msra.mxu0 0.0
      %3039 = vmatprep.subr.mxu0 0.0
      %3040 = vmatpush1.msra.mxu0 0.0
      %3041 = vmatprep.subr.mxu0 0.0
      %3042 = vmatpush1.msra.mxu0 0.0
      %3043 = vmatprep.subr.mxu0 0.0
      %3044 = vmatpush1.msra.mxu0 0.0
      %3045 = vmatprep.subr.mxu0 0.0
      %3046 = vmatpush1.msra.mxu0 0.0
      %3047 = vmatprep.subr.mxu0 0.0
      %3048 = vmatpush1.msra.mxu0 0.0
      %3049 = vmatprep.subr.mxu0 0.0
      %3050 = vmatpush1.msra.mxu0 0.0
      %3051 = vmatprep.subr.mxu0 0.0
      %3052 = vmatpush1.msra.mxu0 0.0
      %3053 = vmatprep.subr.mxu0 0.0
      %3054 = vmatpush1.msra.mxu0 0.0
      %3055 = vmatprep.subr.mxu0 0.0
      %3056 = vmatpush1.msra.mxu0 0.0
      %3057 = vmatprep.subr.mxu0 0.0
      %3058 = vmatpush1.msra.mxu0 0.0
      %3059 = vmatprep.subr.mxu0 0.0
      %3060 = vmatpush1.msra.mxu0 0.0
      %3061 = vmatprep.subr.mxu0 0.0
      %3062 = vmatpush1.msra.mxu0 %v3022
      %3063 = vmatprep.subr.mxu0 0.0
      %3064 = vmatpush1.msra.mxu0 %v3021
      %3065 = vmatprep.subr.mxu0 0.0
      %3066 = vmatpush1.msra.mxu0 %v3020
      %3067 = vmatprep.subr.mxu0 0.0
      %3068 = vmatpush1.msra.mxu0 %v3019
      %3069 = vmatprep.subr.mxu0 0.0
      %3070 = vmatpush2.msra.mxu0 0.0
      %3071 = vmatprep.subr.mxu0 0.0
      %3072 = vmatpush2.msra.mxu0 0.0
      %3073 = vmatprep.subr.mxu0 0.0
      %3074 = vmatpush2.msra.mxu0 0.0
      %3075 = vmatprep.subr.mxu0 0.0
      %3076 = vmatpush2.msra.mxu0 0.0
      %3077 = vmatprep.subr.mxu0 0.0
      %3078 = vmatpush2.msra.mxu0 0.0
      %3079 = vmatprep.subr.mxu0 0.0
      %3080 = vmatpush2.msra.mxu0 0.0
      %3081 = vmatprep.subr.mxu0 0.0
      %3082 = vmatpush2.msra.mxu0 0.0
      %3083 = vmatprep.subr.mxu0 0.0
      %3084 = vmatpush2.msra.mxu0 0.0
      %3085 = vmatprep.subr.mxu0 0.0
      %3086 = vmatpush2.msra.mxu0 0.0
      %3087 = vmatprep.subr.mxu0 0.0
      %3088 = vmatpush2.msra.mxu0 0.0
      %3089 = vmatprep.subr.mxu0 0.0
      %3090 = vmatpush2.msra.mxu0 0.0
      %3091 = vmatprep.subr.mxu0 0.0
      %3092 = vmatpush2.msra.mxu0 0.0
      %3093 = vmatprep.subr.mxu0 0.0
      %3094 = vmatpush2.msra.mxu0 0.0
      %3095 = vmatprep.subr.mxu0 0.0
      %3096 = vmatpush2.msra.mxu0 0.0
      %3097 = vmatprep.subr.mxu0 0.0
      %3098 = vmatpush2.msra.mxu0 0.0
      %3099 = vmatprep.subr.mxu0 0.0
      %3100 = vmatpush2.msra.mxu0 0.0
      %3101 = vmatprep.mubr.f32.mxu0 0.0
      %3102 = vmatmul.mubr.f32.gmra.mxu0 %v3032
      %v3103 = vpop.f32.mrf.mxu0
      %v3104 = vadd.f32 %v3029, %v3103
      %v3105 = vpop.f32.mrf.mxu0
      %3106 = vmatprep.mubr.f32.mxu0 0.0
      %3107 = vmatmul.mubr.f32.gmra.mxu0 %v3035
      %v3108 = vpop.f32.mrf.mxu0
      %v3109 = vadd.f32 %v3029, %v3108
      %v3110 = vpop.f32.mrf.mxu0
      %3111 = vdwg.mxu0
      %3113 = vrot.lane.b32.xlu0 %v3104, 120
      %v3114 = vpop.permute.xlu0 %3113
      %3115 = vrot.lane.b32.xlu0 %v3104, 112
      %v3116 = vpop.permute.xlu0 %3115
      %3117 = vrot.lane.b32.xlu0 %v3104, 104
      %v3118 = vpop.permute.xlu0 %3117
      %3119 = vrot.lane.b32.xlu0 %v3104, 96
      %v3120 = vpop.permute.xlu0 %3119
      %v3121 = vsel %vm741, %v3104, 0
      %v3123 = vsel %vm741, %v3120, 0
      %3125 = vmatprep.subr.mxu0 0.0
      %3126 = vmatpush1.xpose.msra.mxu0 0.0
      %3127 = vmatprep.subr.mxu0 0.0
      %3128 = vmatpush1.xpose.msra.mxu0 0.0
      %3129 = vmatprep.subr.mxu0 0.0
      %3130 = vmatpush1.xpose.msra.mxu0 0.0
      %3131 = vmatprep.subr.mxu0 0.0
      %3132 = vmatpush1.xpose.msra.mxu0 0.0
      %3133 = vmatprep.subr.mxu0 0.0
      %3134 = vmatpush1.xpose.msra.mxu0 0.0
      %3135 = vmatprep.subr.mxu0 0.0
      %3136 = vmatpush1.xpose.msra.mxu0 0.0
      %3137 = vmatprep.subr.mxu0 0.0
      %3138 = vmatpush1.xpose.msra.mxu0 0.0
      %3139 = vmatprep.subr.mxu0 0.0
      %3140 = vmatpush1.xpose.msra.mxu0 0.0
      %3141 = vmatprep.subr.mxu0 0.0
      %3142 = vmatpush1.xpose.msra.mxu0 0.0
      %3143 = vmatprep.subr.mxu0 0.0
      %3144 = vmatpush1.xpose.msra.mxu0 0.0
      %3145 = vmatprep.subr.mxu0 0.0
      %3146 = vmatpush1.xpose.msra.mxu0 0.0
      %3147 = vmatprep.subr.mxu0 0.0
      %3148 = vmatpush1.xpose.msra.mxu0 0.0
      %3149 = vmatprep.subr.mxu0 0.0
      %3150 = vmatpush1.xpose.msra.mxu0 0.0
      %3151 = vmatprep.subr.mxu0 0.0
      %3152 = vmatpush1.xpose.msra.mxu0 0.0
      %3153 = vmatprep.subr.mxu0 0.0
      %3154 = vmatpush1.xpose.msra.mxu0 0.0
      %3155 = vmatprep.subr.mxu0 0.0
      %3156 = vmatpush1.xpose.msra.mxu0 %v3123
      %3157 = vmatprep.subr.mxu0 0.0
      %3158 = vmatpush2.xpose.msra.mxu0 0.0
      %3159 = vmatprep.subr.mxu0 0.0
      %3160 = vmatpush2.xpose.msra.mxu0 0.0
      %3161 = vmatprep.subr.mxu0 0.0
      %3162 = vmatpush2.xpose.msra.mxu0 0.0
      %3163 = vmatprep.subr.mxu0 0.0
      %3164 = vmatpush2.xpose.msra.mxu0 0.0
      %3165 = vmatprep.subr.mxu0 0.0
      %3166 = vmatpush2.xpose.msra.mxu0 0.0
      %3167 = vmatprep.subr.mxu0 0.0
      %3168 = vmatpush2.xpose.msra.mxu0 0.0
      %3169 = vmatprep.subr.mxu0 0.0
      %3170 = vmatpush2.xpose.msra.mxu0 0.0
      %3171 = vmatprep.subr.mxu0 0.0
      %3172 = vmatpush2.xpose.msra.mxu0 0.0
      %3173 = vmatprep.subr.mxu0 0.0
      %3174 = vmatpush2.xpose.msra.mxu0 0.0
      %3175 = vmatprep.subr.mxu0 0.0
      %3176 = vmatpush2.xpose.msra.mxu0 0.0
      %3177 = vmatprep.subr.mxu0 0.0
      %3178 = vmatpush2.xpose.msra.mxu0 0.0
      %3179 = vmatprep.subr.mxu0 0.0
      %3180 = vmatpush2.xpose.msra.mxu0 0.0
      %3181 = vmatprep.subr.mxu0 0.0
      %3182 = vmatpush2.xpose.msra.mxu0 0.0
      %3183 = vmatprep.subr.mxu0 0.0
      %3184 = vmatpush2.xpose.msra.mxu0 0.0
      %3185 = vmatprep.subr.mxu0 0.0
      %3186 = vmatpush2.xpose.msra.mxu0 0.0
      %3187 = vmatprep.subr.mxu0 0.0
      %3188 = vmatpush2.xpose.msra.mxu0 0.0
      %3189 = vmatprep.mubr.f32.mxu0 0.0
      %3190 = vmatmul.mubr.f32.gmra.mxu0 %v3121
      %v3191 = vpop.f32.mrf.mxu0
      %v3192 = vadd.f32 0.0, %v3191
      %v3193 = vpop.f32.mrf.mxu0
      %3194 = vdwg.mxu0
      %3195 = vrot.lane.b32.xlu0 %v3114, 96
      %v3196 = vpop.permute.xlu0 %3195
      %v3197 = vsel %vm741, %v3114, 0
      %v3199 = vsel %vm741, %v3196, 0
      %3201 = vmatprep.subr.mxu0 0.0
      %3202 = vmatpush1.xpose.msra.mxu0 0.0
      %3203 = vmatprep.subr.mxu0 0.0
      %3204 = vmatpush1.xpose.msra.mxu0 0.0
      %3205 = vmatprep.subr.mxu0 0.0
      %3206 = vmatpush1.xpose.msra.mxu0 0.0
      %3207 = vmatprep.subr.mxu0 0.0
      %3208 = vmatpush1.xpose.msra.mxu0 0.0
      %3209 = vmatprep.subr.mxu0 0.0
      %3210 = vmatpush1.xpose.msra.mxu0 0.0
      %3211 = vmatprep.subr.mxu0 0.0
      %3212 = vmatpush1.xpose.msra.mxu0 0.0
      %3213 = vmatprep.subr.mxu0 0.0
      %3214 = vmatpush1.xpose.msra.mxu0 0.0
      %3215 = vmatprep.subr.mxu0 0.0
      %3216 = vmatpush1.xpose.msra.mxu0 0.0
      %3217 = vmatprep.subr.mxu0 0.0
      %3218 = vmatpush1.xpose.msra.mxu0 0.0
      %3219 = vmatprep.subr.mxu0 0.0
      %3220 = vmatpush1.xpose.msra.mxu0 0.0
      %3221 = vmatprep.subr.mxu0 0.0
      %3222 = vmatpush1.xpose.msra.mxu0 0.0
      %3223 = vmatprep.subr.mxu0 0.0
      %3224 = vmatpush1.xpose.msra.mxu0 0.0
      %3225 = vmatprep.subr.mxu0 0.0
      %3226 = vmatpush1.xpose.msra.mxu0 0.0
      %3227 = vmatprep.subr.mxu0 0.0
      %3228 = vmatpush1.xpose.msra.mxu0 0.0
      %3229 = vmatprep.subr.mxu0 0.0
      %3230 = vmatpush1.xpose.msra.mxu0 0.0
      %3231 = vmatprep.subr.mxu0 0.0
      %3232 = vmatpush1.xpose.msra.mxu0 %v3199
      %3233 = vmatprep.subr.mxu0 0.0
      %3234 = vmatpush2.xpose.msra.mxu0 0.0
      %3235 = vmatprep.subr.mxu0 0.0
      %3236 = vmatpush2.xpose.msra.mxu0 0.0
      %3237 = vmatprep.subr.mxu0 0.0
      %3238 = vmatpush2.xpose.msra.mxu0 0.0
      %3239 = vmatprep.subr.mxu0 0.0
      %3240 = vmatpush2.xpose.msra.mxu0 0.0
      %3241 = vmatprep.subr.mxu0 0.0
      %3242 = vmatpush2.xpose.msra.mxu0 0.0
      %3243 = vmatprep.subr.mxu0 0.0
      %3244 = vmatpush2.xpose.msra.mxu0 0.0
      %3245 = vmatprep.subr.mxu0 0.0
      %3246 = vmatpush2.xpose.msra.mxu0 0.0
      %3247 = vmatprep.subr.mxu0 0.0
      %3248 = vmatpush2.xpose.msra.mxu0 0.0
      %3249 = vmatprep.subr.mxu0 0.0
      %3250 = vmatpush2.xpose.msra.mxu0 0.0
      %3251 = vmatprep.subr.mxu0 0.0
      %3252 = vmatpush2.xpose.msra.mxu0 0.0
      %3253 = vmatprep.subr.mxu0 0.0
      %3254 = vmatpush2.xpose.msra.mxu0 0.0
      %3255 = vmatprep.subr.mxu0 0.0
      %3256 = vmatpush2.xpose.msra.mxu0 0.0
      %3257 = vmatprep.subr.mxu0 0.0
      %3258 = vmatpush2.xpose.msra.mxu0 0.0
      %3259 = vmatprep.subr.mxu0 0.0
      %3260 = vmatpush2.xpose.msra.mxu0 0.0
      %3261 = vmatprep.subr.mxu0 0.0
      %3262 = vmatpush2.xpose.msra.mxu0 0.0
      %3263 = vmatprep.subr.mxu0 0.0
      %3264 = vmatpush2.xpose.msra.mxu0 0.0
      %3265 = vmatprep.mubr.f32.mxu0 0.0
      %3266 = vmatmul.mubr.f32.gmra.mxu0 %v3197
      %v3267 = vpop.f32.mrf.mxu0
      %v3268 = vadd.f32 0.0, %v3267
      %v3269 = vpop.f32.mrf.mxu0
      %3270 = vdwg.mxu0
      %3271 = vrot.lane.b32.xlu0 %v3116, 96
      %v3272 = vpop.permute.xlu0 %3271
      %v3273 = vsel %vm741, %v3116, 0
      %v3275 = vsel %vm741, %v3272, 0
      %3277 = vmatprep.subr.mxu0 0.0
      %3278 = vmatpush1.xpose.msra.mxu0 0.0
      %3279 = vmatprep.subr.mxu0 0.0
      %3280 = vmatpush1.xpose.msra.mxu0 0.0
      %3281 = vmatprep.subr.mxu0 0.0
      %3282 = vmatpush1.xpose.msra.mxu0 0.0
      %3283 = vmatprep.subr.mxu0 0.0
      %3284 = vmatpush1.xpose.msra.mxu0 0.0
      %3285 = vmatprep.subr.mxu0 0.0
      %3286 = vmatpush1.xpose.msra.mxu0 0.0
      %3287 = vmatprep.subr.mxu0 0.0
      %3288 = vmatpush1.xpose.msra.mxu0 0.0
      %3289 = vmatprep.subr.mxu0 0.0
      %3290 = vmatpush1.xpose.msra.mxu0 0.0
      %3291 = vmatprep.subr.mxu0 0.0
      %3292 = vmatpush1.xpose.msra.mxu0 0.0
      %3293 = vmatprep.subr.mxu0 0.0
      %3294 = vmatpush1.xpose.msra.mxu0 0.0
      %3295 = vmatprep.subr.mxu0 0.0
      %3296 = vmatpush1.xpose.msra.mxu0 0.0
      %3297 = vmatprep.subr.mxu0 0.0
      %3298 = vmatpush1.xpose.msra.mxu0 0.0
      %3299 = vmatprep.subr.mxu0 0.0
      %3300 = vmatpush1.xpose.msra.mxu0 0.0
      %3301 = vmatprep.subr.mxu0 0.0
      %3302 = vmatpush1.xpose.msra.mxu0 0.0
      %3303 = vmatprep.subr.mxu0 0.0
      %3304 = vmatpush1.xpose.msra.mxu0 0.0
      %3305 = vmatprep.subr.mxu0 0.0
      %3306 = vmatpush1.xpose.msra.mxu0 0.0
      %3307 = vmatprep.subr.mxu0 0.0
      %3308 = vmatpush1.xpose.msra.mxu0 %v3275
      %3309 = vmatprep.subr.mxu0 0.0
      %3310 = vmatpush2.xpose.msra.mxu0 0.0
      %3311 = vmatprep.subr.mxu0 0.0
      %3312 = vmatpush2.xpose.msra.mxu0 0.0
      %3313 = vmatprep.subr.mxu0 0.0
      %3314 = vmatpush2.xpose.msra.mxu0 0.0
      %3315 = vmatprep.subr.mxu0 0.0
      %3316 = vmatpush2.xpose.msra.mxu0 0.0
      %3317 = vmatprep.subr.mxu0 0.0
      %3318 = vmatpush2.xpose.msra.mxu0 0.0
      %3319 = vmatprep.subr.mxu0 0.0
      %3320 = vmatpush2.xpose.msra.mxu0 0.0
      %3321 = vmatprep.subr.mxu0 0.0
      %3322 = vmatpush2.xpose.msra.mxu0 0.0
      %3323 = vmatprep.subr.mxu0 0.0
      %3324 = vmatpush2.xpose.msra.mxu0 0.0
      %3325 = vmatprep.subr.mxu0 0.0
      %3326 = vmatpush2.xpose.msra.mxu0 0.0
      %3327 = vmatprep.subr.mxu0 0.0
      %3328 = vmatpush2.xpose.msra.mxu0 0.0
      %3329 = vmatprep.subr.mxu0 0.0
      %3330 = vmatpush2.xpose.msra.mxu0 0.0
      %3331 = vmatprep.subr.mxu0 0.0
      %3332 = vmatpush2.xpose.msra.mxu0 0.0
      %3333 = vmatprep.subr.mxu0 0.0
      %3334 = vmatpush2.xpose.msra.mxu0 0.0
      %3335 = vmatprep.subr.mxu0 0.0
      %3336 = vmatpush2.xpose.msra.mxu0 0.0
      %3337 = vmatprep.subr.mxu0 0.0
      %3338 = vmatpush2.xpose.msra.mxu0 0.0
      %3339 = vmatprep.subr.mxu0 0.0
      %3340 = vmatpush2.xpose.msra.mxu0 0.0
      %3341 = vmatprep.mubr.f32.mxu0 0.0
      %3342 = vmatmul.mubr.f32.gmra.mxu0 %v3273
      %v3343 = vpop.f32.mrf.mxu0
      %v3344 = vadd.f32 0.0, %v3343
      %v3345 = vpop.f32.mrf.mxu0
      %3346 = vdwg.mxu0
      %3347 = vrot.lane.b32.xlu0 %v3118, 96
      %v3348 = vpop.permute.xlu0 %3347
      %v3349 = vsel %vm741, %v3118, 0
      %v3351 = vsel %vm741, %v3348, 0
      %3353 = vmatprep.subr.mxu0 0.0
      %3354 = vmatpush1.xpose.msra.mxu0 0.0
      %3355 = vmatprep.subr.mxu0 0.0
      %3356 = vmatpush1.xpose.msra.mxu0 0.0
      %3357 = vmatprep.subr.mxu0 0.0
      %3358 = vmatpush1.xpose.msra.mxu0 0.0
      %3359 = vmatprep.subr.mxu0 0.0
      %3360 = vmatpush1.xpose.msra.mxu0 0.0
      %3361 = vmatprep.subr.mxu0 0.0
      %3362 = vmatpush1.xpose.msra.mxu0 0.0
      %3363 = vmatprep.subr.mxu0 0.0
      %3364 = vmatpush1.xpose.msra.mxu0 0.0
      %3365 = vmatprep.subr.mxu0 0.0
      %3366 = vmatpush1.xpose.msra.mxu0 0.0
      %3367 = vmatprep.subr.mxu0 0.0
      %3368 = vmatpush1.xpose.msra.mxu0 0.0
      %3369 = vmatprep.subr.mxu0 0.0
      %3370 = vmatpush1.xpose.msra.mxu0 0.0
      %3371 = vmatprep.subr.mxu0 0.0
      %3372 = vmatpush1.xpose.msra.mxu0 0.0
      %3373 = vmatprep.subr.mxu0 0.0
      %3374 = vmatpush1.xpose.msra.mxu0 0.0
      %3375 = vmatprep.subr.mxu0 0.0
      %3376 = vmatpush1.xpose.msra.mxu0 0.0
      %3377 = vmatprep.subr.mxu0 0.0
      %3378 = vmatpush1.xpose.msra.mxu0 0.0
      %3379 = vmatprep.subr.mxu0 0.0
      %3380 = vmatpush1.xpose.msra.mxu0 0.0
      %3381 = vmatprep.subr.mxu0 0.0
      %3382 = vmatpush1.xpose.msra.mxu0 0.0
      %3383 = vmatprep.subr.mxu0 0.0
      %3384 = vmatpush1.xpose.msra.mxu0 %v3351
      %3385 = vmatprep.subr.mxu0 0.0
      %3386 = vmatpush2.xpose.msra.mxu0 0.0
      %3387 = vmatprep.subr.mxu0 0.0
      %3388 = vmatpush2.xpose.msra.mxu0 0.0
      %3389 = vmatprep.subr.mxu0 0.0
      %3390 = vmatpush2.xpose.msra.mxu0 0.0
      %3391 = vmatprep.subr.mxu0 0.0
      %3392 = vmatpush2.xpose.msra.mxu0 0.0
      %3393 = vmatprep.subr.mxu0 0.0
      %3394 = vmatpush2.xpose.msra.mxu0 0.0
      %3395 = vmatprep.subr.mxu0 0.0
      %3396 = vmatpush2.xpose.msra.mxu0 0.0
      %3397 = vmatprep.subr.mxu0 0.0
      %3398 = vmatpush2.xpose.msra.mxu0 0.0
      %3399 = vmatprep.subr.mxu0 0.0
      %3400 = vmatpush2.xpose.msra.mxu0 0.0
      %3401 = vmatprep.subr.mxu0 0.0
      %3402 = vmatpush2.xpose.msra.mxu0 0.0
      %3403 = vmatprep.subr.mxu0 0.0
      %3404 = vmatpush2.xpose.msra.mxu0 0.0
      %3405 = vmatprep.subr.mxu0 0.0
      %3406 = vmatpush2.xpose.msra.mxu0 0.0
      %3407 = vmatprep.subr.mxu0 0.0
      %3408 = vmatpush2.xpose.msra.mxu0 0.0
      %3409 = vmatprep.subr.mxu0 0.0
      %3410 = vmatpush2.xpose.msra.mxu0 0.0
      %3411 = vmatprep.subr.mxu0 0.0
      %3412 = vmatpush2.xpose.msra.mxu0 0.0
      %3413 = vmatprep.subr.mxu0 0.0
      %3414 = vmatpush2.xpose.msra.mxu0 0.0
      %3415 = vmatprep.subr.mxu0 0.0
      %3416 = vmatpush2.xpose.msra.mxu0 0.0
      %3417 = vmatprep.mubr.f32.mxu0 0.0
      %3418 = vmatmul.mubr.f32.gmra.mxu0 %v3349
      %v3419 = vpop.f32.mrf.mxu0
      %v3420 = vadd.f32 0.0, %v3419
      %v3421 = vpop.f32.mrf.mxu0
      %3422 = vdwg.mxu0
      %v3423 = vmul.f32 %v3192, 0.35355338
      %v3424 = vmul.f32 %v3268, 0.35355338
      %v3425 = vmul.f32 %v3344, 0.35355338
      %v3426 = vmul.f32 %v3420, 0.35355338
      %v3427 = vadd.f32 %v3423, %v1051
      %v3428 = vadd.f32 %v3424, %v1051
      %v3429 = vadd.f32 %v3425, %v1051
      %v3430 = vadd.f32 %v3426, %v1051
      %v3431 = vsel %vm741, %v3427, -inf
      %3432 = vmax.xlane.f32.xlu0 %v3431
      %v3433 = vpop.xlane.xlu0 %3432
      %v3434 = vsel %vm741, %v3428, -inf
      %3435 = vmax.xlane.f32.xlu0 %v3434
      %v3436 = vpop.xlane.xlu0 %3435
      %v3437 = vsel %vm741, %v3429, -inf
      %3438 = vmax.xlane.f32.xlu0 %v3437
      %v3439 = vpop.xlane.xlu0 %3438
      %v3440 = vsel %vm741, %v3430, -inf
      %3441 = vmax.xlane.f32.xlu0 %v3440
      %v3442 = vpop.xlane.xlu0 %3441
      %v3443 = vsub.f32 %v3427, %v3433
      %v3444 = vsub.f32 %v3428, %v3436
      %v3445 = vsub.f32 %v3429, %v3439
      %v3446 = vsub.f32 %v3430, %v3442
      %v3447 = vmul.f32 %v3443, 1.442695
      %v3448 = vpow.pop %v3447
      %v3449 = vmul.f32 %v3444, 1.442695
      %v3450 = vpow.pop %v3449
      %v3451 = vmul.f32 %v3445, 1.442695
      %v3452 = vpow.pop %v3451
      %v3453 = vmul.f32 %v3446, 1.442695
      %v3454 = vpow.pop %v3453
      %v3455 = vsel %vm741, %v3448, 0.0
      %3456 = vadd.xlane.f32.xlu0 %v3455
      %v3457 = vpop.xlane.xlu0 %3456
      %v3458 = vsel %vm741, %v3450, 0.0
      %3459 = vadd.xlane.f32.xlu0 %v3458
      %v3460 = vpop.xlane.xlu0 %3459
      %v3461 = vsel %vm741, %v3452, 0.0
      %3462 = vadd.xlane.f32.xlu0 %v3461
      %v3463 = vpop.xlane.xlu0 %3462
      %v3464 = vsel %vm741, %v3454, 0.0
      %3465 = vadd.xlane.f32.xlu0 %v3464
      %v3466 = vpop.xlane.xlu0 %3465
      %v3467 = vrcp.pop %v3457
      %v3468 = vrcp.pop %v3460
      %v3469 = vrcp.pop %v3463
      %v3470 = vrcp.pop %v3466
      %v3471 = vmul.f32 %v3448, %v3467
      %v3472 = vmul.f32 %v3450, %v3468
      %v3473 = vmul.f32 %v3452, %v3469
      %v3474 = vmul.f32 %v3454, %v3470
      %3475 = vrot.lane.b32.xlu0 %v3104, 64
      %v3476 = vpop.permute.xlu0 %3475
      %v3479 = vsel %vm741, %v3471, 0
      %3481 = vmatprep.subr.mxu0 0.0
      %3482 = vmatpush1.msra.mxu0 0.0
      %3483 = vmatprep.subr.mxu0 0.0
      %3484 = vmatpush1.msra.mxu0 0.0
      %3485 = vmatprep.subr.mxu0 0.0
      %3486 = vmatpush1.msra.mxu0 0.0
      %3487 = vmatprep.subr.mxu0 0.0
      %3488 = vmatpush1.msra.mxu0 0.0
      %3489 = vmatprep.subr.mxu0 0.0
      %3490 = vmatpush1.msra.mxu0 0.0
      %3491 = vmatprep.subr.mxu0 0.0
      %3492 = vmatpush1.msra.mxu0 0.0
      %3493 = vmatprep.subr.mxu0 0.0
      %3494 = vmatpush1.msra.mxu0 0.0
      %3495 = vmatprep.subr.mxu0 0.0
      %3496 = vmatpush1.msra.mxu0 0.0
      %3497 = vmatprep.subr.mxu0 0.0
      %3498 = vmatpush1.msra.mxu0 0.0
      %3499 = vmatprep.subr.mxu0 0.0
      %3500 = vmatpush1.msra.mxu0 0.0
      %3501 = vmatprep.subr.mxu0 0.0
      %3502 = vmatpush1.msra.mxu0 0.0
      %3503 = vmatprep.subr.mxu0 0.0
      %3504 = vmatpush1.msra.mxu0 0.0
      %3505 = vmatprep.subr.mxu0 0.0
      %3506 = vmatpush1.msra.mxu0 0.0
      %3507 = vmatprep.subr.mxu0 0.0
      %3508 = vmatpush1.msra.mxu0 0.0
      %3509 = vmatprep.subr.mxu0 0.0
      %3510 = vmatpush1.msra.mxu0 0.0
      %3511 = vmatprep.subr.mxu0 0.0
      %3512 = vmatpush1.msra.mxu0 %v3476
      %3513 = vmatprep.subr.mxu0 0.0
      %3514 = vmatpush2.msra.mxu0 0.0
      %3515 = vmatprep.subr.mxu0 0.0
      %3516 = vmatpush2.msra.mxu0 0.0
      %3517 = vmatprep.subr.mxu0 0.0
      %3518 = vmatpush2.msra.mxu0 0.0
      %3519 = vmatprep.subr.mxu0 0.0
      %3520 = vmatpush2.msra.mxu0 0.0
      %3521 = vmatprep.subr.mxu0 0.0
      %3522 = vmatpush2.msra.mxu0 0.0
      %3523 = vmatprep.subr.mxu0 0.0
      %3524 = vmatpush2.msra.mxu0 0.0
      %3525 = vmatprep.subr.mxu0 0.0
      %3526 = vmatpush2.msra.mxu0 0.0
      %3527 = vmatprep.subr.mxu0 0.0
      %3528 = vmatpush2.msra.mxu0 0.0
      %3529 = vmatprep.subr.mxu0 0.0
      %3530 = vmatpush2.msra.mxu0 0.0
      %3531 = vmatprep.subr.mxu0 0.0
      %3532 = vmatpush2.msra.mxu0 0.0
      %3533 = vmatprep.subr.mxu0 0.0
      %3534 = vmatpush2.msra.mxu0 0.0
      %3535 = vmatprep.subr.mxu0 0.0
      %3536 = vmatpush2.msra.mxu0 0.0
      %3537 = vmatprep.subr.mxu0 0.0
      %3538 = vmatpush2.msra.mxu0 0.0
      %3539 = vmatprep.subr.mxu0 0.0
      %3540 = vmatpush2.msra.mxu0 0.0
      %3541 = vmatprep.subr.mxu0 0.0
      %3542 = vmatpush2.msra.mxu0 0.0
      %3543 = vmatprep.subr.mxu0 0.0
      %3544 = vmatpush2.msra.mxu0 0.0
      %3545 = vmatprep.mubr.f32.mxu0 0.0
      %3546 = vmatmul.mubr.f32.gmra.mxu0 %v3479
      %v3547 = vpop.f32.mrf.mxu0
      %v3548 = vadd.f32 0.0, %v3547
      %v3549 = vpop.f32.mrf.mxu0
      %3550 = vdwg.mxu0
      %3551 = vrot.lane.b32.xlu0 %v3114, 64
      %v3552 = vpop.permute.xlu0 %3551
      %v3555 = vsel %vm741, %v3472, 0
      %3557 = vmatprep.subr.mxu0 0.0
      %3558 = vmatpush1.msra.mxu0 0.0
      %3559 = vmatprep.subr.mxu0 0.0
      %3560 = vmatpush1.msra.mxu0 0.0
      %3561 = vmatprep.subr.mxu0 0.0
      %3562 = vmatpush1.msra.mxu0 0.0
      %3563 = vmatprep.subr.mxu0 0.0
      %3564 = vmatpush1.msra.mxu0 0.0
      %3565 = vmatprep.subr.mxu0 0.0
      %3566 = vmatpush1.msra.mxu0 0.0
      %3567 = vmatprep.subr.mxu0 0.0
      %3568 = vmatpush1.msra.mxu0 0.0
      %3569 = vmatprep.subr.mxu0 0.0
      %3570 = vmatpush1.msra.mxu0 0.0
      %3571 = vmatprep.subr.mxu0 0.0
      %3572 = vmatpush1.msra.mxu0 0.0
      %3573 = vmatprep.subr.mxu0 0.0
      %3574 = vmatpush1.msra.mxu0 0.0
      %3575 = vmatprep.subr.mxu0 0.0
      %3576 = vmatpush1.msra.mxu0 0.0
      %3577 = vmatprep.subr.mxu0 0.0
      %3578 = vmatpush1.msra.mxu0 0.0
      %3579 = vmatprep.subr.mxu0 0.0
      %3580 = vmatpush1.msra.mxu0 0.0
      %3581 = vmatprep.subr.mxu0 0.0
      %3582 = vmatpush1.msra.mxu0 0.0
      %3583 = vmatprep.subr.mxu0 0.0
      %3584 = vmatpush1.msra.mxu0 0.0
      %3585 = vmatprep.subr.mxu0 0.0
      %3586 = vmatpush1.msra.mxu0 0.0
      %3587 = vmatprep.subr.mxu0 0.0
      %3588 = vmatpush1.msra.mxu0 %v3552
      %3589 = vmatprep.subr.mxu0 0.0
      %3590 = vmatpush2.msra.mxu0 0.0
      %3591 = vmatprep.subr.mxu0 0.0
      %3592 = vmatpush2.msra.mxu0 0.0
      %3593 = vmatprep.subr.mxu0 0.0
      %3594 = vmatpush2.msra.mxu0 0.0
      %3595 = vmatprep.subr.mxu0 0.0
      %3596 = vmatpush2.msra.mxu0 0.0
      %3597 = vmatprep.subr.mxu0 0.0
      %3598 = vmatpush2.msra.mxu0 0.0
      %3599 = vmatprep.subr.mxu0 0.0
      %3600 = vmatpush2.msra.mxu0 0.0
      %3601 = vmatprep.subr.mxu0 0.0
      %3602 = vmatpush2.msra.mxu0 0.0
      %3603 = vmatprep.subr.mxu0 0.0
      %3604 = vmatpush2.msra.mxu0 0.0
      %3605 = vmatprep.subr.mxu0 0.0
      %3606 = vmatpush2.msra.mxu0 0.0
      %3607 = vmatprep.subr.mxu0 0.0
      %3608 = vmatpush2.msra.mxu0 0.0
      %3609 = vmatprep.subr.mxu0 0.0
      %3610 = vmatpush2.msra.mxu0 0.0
      %3611 = vmatprep.subr.mxu0 0.0
      %3612 = vmatpush2.msra.mxu0 0.0
      %3613 = vmatprep.subr.mxu0 0.0
      %3614 = vmatpush2.msra.mxu0 0.0
      %3615 = vmatprep.subr.mxu0 0.0
      %3616 = vmatpush2.msra.mxu0 0.0
      %3617 = vmatprep.subr.mxu0 0.0
      %3618 = vmatpush2.msra.mxu0 0.0
      %3619 = vmatprep.subr.mxu0 0.0
      %3620 = vmatpush2.msra.mxu0 0.0
      %3621 = vmatprep.mubr.f32.mxu0 0.0
      %3622 = vmatmul.mubr.f32.gmra.mxu0 %v3555
      %v3623 = vpop.f32.mrf.mxu0
      %v3624 = vadd.f32 0.0, %v3623
      %v3625 = vpop.f32.mrf.mxu0
      %3626 = vdwg.mxu0
      %3627 = vrot.lane.b32.xlu0 %v3116, 64
      %v3628 = vpop.permute.xlu0 %3627
      %v3631 = vsel %vm741, %v3473, 0
      %3633 = vmatprep.subr.mxu0 0.0
      %3634 = vmatpush1.msra.mxu0 0.0
      %3635 = vmatprep.subr.mxu0 0.0
      %3636 = vmatpush1.msra.mxu0 0.0
      %3637 = vmatprep.subr.mxu0 0.0
      %3638 = vmatpush1.msra.mxu0 0.0
      %3639 = vmatprep.subr.mxu0 0.0
      %3640 = vmatpush1.msra.mxu0 0.0
      %3641 = vmatprep.subr.mxu0 0.0
      %3642 = vmatpush1.msra.mxu0 0.0
      %3643 = vmatprep.subr.mxu0 0.0
      %3644 = vmatpush1.msra.mxu0 0.0
      %3645 = vmatprep.subr.mxu0 0.0
      %3646 = vmatpush1.msra.mxu0 0.0
      %3647 = vmatprep.subr.mxu0 0.0
      %3648 = vmatpush1.msra.mxu0 0.0
      %3649 = vmatprep.subr.mxu0 0.0
      %3650 = vmatpush1.msra.mxu0 0.0
      %3651 = vmatprep.subr.mxu0 0.0
      %3652 = vmatpush1.msra.mxu0 0.0
      %3653 = vmatprep.subr.mxu0 0.0
      %3654 = vmatpush1.msra.mxu0 0.0
      %3655 = vmatprep.subr.mxu0 0.0
      %3656 = vmatpush1.msra.mxu0 0.0
      %3657 = vmatprep.subr.mxu0 0.0
      %3658 = vmatpush1.msra.mxu0 0.0
      %3659 = vmatprep.subr.mxu0 0.0
      %3660 = vmatpush1.msra.mxu0 0.0
      %3661 = vmatprep.subr.mxu0 0.0
      %3662 = vmatpush1.msra.mxu0 0.0
      %3663 = vmatprep.subr.mxu0 0.0
      %3664 = vmatpush1.msra.mxu0 %v3628
      %3665 = vmatprep.subr.mxu0 0.0
      %3666 = vmatpush2.msra.mxu0 0.0
      %3667 = vmatprep.subr.mxu0 0.0
      %3668 = vmatpush2.msra.mxu0 0.0
      %3669 = vmatprep.subr.mxu0 0.0
      %3670 = vmatpush2.msra.mxu0 0.0
      %3671 = vmatprep.subr.mxu0 0.0
      %3672 = vmatpush2.msra.mxu0 0.0
      %3673 = vmatprep.subr.mxu0 0.0
      %3674 = vmatpush2.msra.mxu0 0.0
      %3675 = vmatprep.subr.mxu0 0.0
      %3676 = vmatpush2.msra.mxu0 0.0
      %3677 = vmatprep.subr.mxu0 0.0
      %3678 = vmatpush2.msra.mxu0 0.0
      %3679 = vmatprep.subr.mxu0 0.0
      %3680 = vmatpush2.msra.mxu0 0.0
      %3681 = vmatprep.subr.mxu0 0.0
      %3682 = vmatpush2.msra.mxu0 0.0
      %3683 = vmatprep.subr.mxu0 0.0
      %3684 = vmatpush2.msra.mxu0 0.0
      %3685 = vmatprep.subr.mxu0 0.0
      %3686 = vmatpush2.msra.mxu0 0.0
      %3687 = vmatprep.subr.mxu0 0.0
      %3688 = vmatpush2.msra.mxu0 0.0
      %3689 = vmatprep.subr.mxu0 0.0
      %3690 = vmatpush2.msra.mxu0 0.0
      %3691 = vmatprep.subr.mxu0 0.0
      %3692 = vmatpush2.msra.mxu0 0.0
      %3693 = vmatprep.subr.mxu0 0.0
      %3694 = vmatpush2.msra.mxu0 0.0
      %3695 = vmatprep.subr.mxu0 0.0
      %3696 = vmatpush2.msra.mxu0 0.0
      %3697 = vmatprep.mubr.f32.mxu0 0.0
      %3698 = vmatmul.mubr.f32.gmra.mxu0 %v3631
      %v3699 = vpop.f32.mrf.mxu0
      %v3700 = vadd.f32 0.0, %v3699
      %v3701 = vpop.f32.mrf.mxu0
      %3702 = vdwg.mxu0
      %3703 = vrot.lane.b32.xlu0 %v3118, 64
      %v3704 = vpop.permute.xlu0 %3703
      %v3707 = vsel %vm741, %v3474, 0
      %3709 = vmatprep.subr.mxu0 0.0
      %3710 = vmatpush1.msra.mxu0 0.0
      %3711 = vmatprep.subr.mxu0 0.0
      %3712 = vmatpush1.msra.mxu0 0.0
      %3713 = vmatprep.subr.mxu0 0.0
      %3714 = vmatpush1.msra.mxu0 0.0
      %3715 = vmatprep.subr.mxu0 0.0
      %3716 = vmatpush1.msra.mxu0 0.0
      %3717 = vmatprep.subr.mxu0 0.0
      %3718 = vmatpush1.msra.mxu0 0.0
      %3719 = vmatprep.subr.mxu0 0.0
      %3720 = vmatpush1.msra.mxu0 0.0
      %3721 = vmatprep.subr.mxu0 0.0
      %3722 = vmatpush1.msra.mxu0 0.0
      %3723 = vmatprep.subr.mxu0 0.0
      %3724 = vmatpush1.msra.mxu0 0.0
      %3725 = vmatprep.subr.mxu0 0.0
      %3726 = vmatpush1.msra.mxu0 0.0
      %3727 = vmatprep.subr.mxu0 0.0
      %3728 = vmatpush1.msra.mxu0 0.0
      %3729 = vmatprep.subr.mxu0 0.0
      %3730 = vmatpush1.msra.mxu0 0.0
      %3731 = vmatprep.subr.mxu0 0.0
      %3732 = vmatpush1.msra.mxu0 0.0
      %3733 = vmatprep.subr.mxu0 0.0
      %3734 = vmatpush1.msra.mxu0 0.0
      %3735 = vmatprep.subr.mxu0 0.0
      %3736 = vmatpush1.msra.mxu0 0.0
      %3737 = vmatprep.subr.mxu0 0.0
      %3738 = vmatpush1.msra.mxu0 0.0
      %3739 = vmatprep.subr.mxu0 0.0
      %3740 = vmatpush1.msra.mxu0 %v3704
      %3741 = vmatprep.subr.mxu0 0.0
      %3742 = vmatpush2.msra.mxu0 0.0
      %3743 = vmatprep.subr.mxu0 0.0
      %3744 = vmatpush2.msra.mxu0 0.0
      %3745 = vmatprep.subr.mxu0 0.0
      %3746 = vmatpush2.msra.mxu0 0.0
      %3747 = vmatprep.subr.mxu0 0.0
      %3748 = vmatpush2.msra.mxu0 0.0
      %3749 = vmatprep.subr.mxu0 0.0
      %3750 = vmatpush2.msra.mxu0 0.0
      %3751 = vmatprep.subr.mxu0 0.0
      %3752 = vmatpush2.msra.mxu0 0.0
      %3753 = vmatprep.subr.mxu0 0.0
      %3754 = vmatpush2.msra.mxu0 0.0
      %3755 = vmatprep.subr.mxu0 0.0
      %3756 = vmatpush2.msra.mxu0 0.0
      %3757 = vmatprep.subr.mxu0 0.0
      %3758 = vmatpush2.msra.mxu0 0.0
      %3759 = vmatprep.subr.mxu0 0.0
      %3760 = vmatpush2.msra.mxu0 0.0
      %3761 = vmatprep.subr.mxu0 0.0
      %3762 = vmatpush2.msra.mxu0 0.0
      %3763 = vmatprep.subr.mxu0 0.0
      %3764 = vmatpush2.msra.mxu0 0.0
      %3765 = vmatprep.subr.mxu0 0.0
      %3766 = vmatpush2.msra.mxu0 0.0
      %3767 = vmatprep.subr.mxu0 0.0
      %3768 = vmatpush2.msra.mxu0 0.0
      %3769 = vmatprep.subr.mxu0 0.0
      %3770 = vmatpush2.msra.mxu0 0.0
      %3771 = vmatprep.subr.mxu0 0.0
      %3772 = vmatpush2.msra.mxu0 0.0
      %3773 = vmatprep.mubr.f32.mxu0 0.0
      %3774 = vmatmul.mubr.f32.gmra.mxu0 %v3707
      %v3775 = vpop.f32.mrf.mxu0
      %v3776 = vadd.f32 0.0, %v3775
      %v3777 = vpop.f32.mrf.mxu0
      %3778 = vdwg.mxu0
      %s3779 = scalar_lea.vmem %s6, 32
      %v3780 = vld [vmem:[%s3779] sm:$0xff]
      %s3781 = scalar_lea.vmem %s6, 40
      %v3782 = vld [vmem:[%s3781] sm:$0xff]
      %v3784 = vsel %vm741, %v3624, 0
      %3786 = vmatprep.subr.mxu0 0.0
      %3787 = vmatpush1.msra.mxu0 0.0
      %3788 = vmatprep.subr.mxu0 0.0
      %3789 = vmatpush1.msra.mxu0 0.0
      %3790 = vmatprep.subr.mxu0 0.0
      %3791 = vmatpush1.msra.mxu0 0.0
      %3792 = vmatprep.subr.mxu0 0.0
      %3793 = vmatpush1.msra.mxu0 0.0
      %3794 = vmatprep.subr.mxu0 0.0
      %3795 = vmatpush1.msra.mxu0 0.0
      %3796 = vmatprep.subr.mxu0 0.0
      %3797 = vmatpush1.msra.mxu0 0.0
      %3798 = vmatprep.subr.mxu0 0.0
      %3799 = vmatpush1.msra.mxu0 0.0
      %3800 = vmatprep.subr.mxu0 0.0
      %3801 = vmatpush1.msra.mxu0 0.0
      %3802 = vmatprep.subr.mxu0 0.0
      %3803 = vmatpush1.msra.mxu0 0.0
      %3804 = vmatprep.subr.mxu0 0.0
      %3805 = vmatpush1.msra.mxu0 0.0
      %3806 = vmatprep.subr.mxu0 0.0
      %3807 = vmatpush1.msra.mxu0 0.0
      %3808 = vmatprep.subr.mxu0 0.0
      %3809 = vmatpush1.msra.mxu0 0.0
      %3810 = vmatprep.subr.mxu0 0.0
      %3811 = vmatpush1.msra.mxu0 0.0
      %3812 = vmatprep.subr.mxu0 0.0
      %3813 = vmatpush1.msra.mxu0 0.0
      %3814 = vmatprep.subr.mxu0 0.0
      %3815 = vmatpush1.msra.mxu0 0.0
      %3816 = vmatprep.subr.mxu0 0.0
      %3817 = vmatpush1.msra.mxu0 %v3782
      %3818 = vmatprep.subr.mxu0 0.0
      %3819 = vmatpush2.msra.mxu0 0.0
      %3820 = vmatprep.subr.mxu0 0.0
      %3821 = vmatpush2.msra.mxu0 0.0
      %3822 = vmatprep.subr.mxu0 0.0
      %3823 = vmatpush2.msra.mxu0 0.0
      %3824 = vmatprep.subr.mxu0 0.0
      %3825 = vmatpush2.msra.mxu0 0.0
      %3826 = vmatprep.subr.mxu0 0.0
      %3827 = vmatpush2.msra.mxu0 0.0
      %3828 = vmatprep.subr.mxu0 0.0
      %3829 = vmatpush2.msra.mxu0 0.0
      %3830 = vmatprep.subr.mxu0 0.0
      %3831 = vmatpush2.msra.mxu0 0.0
      %3832 = vmatprep.subr.mxu0 0.0
      %3833 = vmatpush2.msra.mxu0 0.0
      %3834 = vmatprep.subr.mxu0 0.0
      %3835 = vmatpush2.msra.mxu0 0.0
      %3836 = vmatprep.subr.mxu0 0.0
      %3837 = vmatpush2.msra.mxu0 0.0
      %3838 = vmatprep.subr.mxu0 0.0
      %3839 = vmatpush2.msra.mxu0 0.0
      %3840 = vmatprep.subr.mxu0 0.0
      %3841 = vmatpush2.msra.mxu0 0.0
      %3842 = vmatprep.subr.mxu0 0.0
      %3843 = vmatpush2.msra.mxu0 0.0
      %3844 = vmatprep.subr.mxu0 0.0
      %3845 = vmatpush2.msra.mxu0 0.0
      %3846 = vmatprep.subr.mxu0 0.0
      %3847 = vmatpush2.msra.mxu0 0.0
      %3848 = vmatprep.subr.mxu0 0.0
      %3849 = vmatpush2.msra.mxu0 0.0
      %3850 = vmatprep.mubr.f32.mxu0 0.0
      %3851 = vmatmul.mubr.f32.gmra.mxu0 %v3784
      %v3852 = vpop.f32.mrf.mxu0
      %v3853 = vadd.f32 0.0, %v3852
      %v3854 = vpop.f32.mrf.mxu0
      %3855 = vdwg.mxu0
      %v3857 = vsel %vm741, %v3548, 0
      %3859 = vmatprep.subr.mxu0 0.0
      %3860 = vmatpush1.msra.mxu0 0.0
      %3861 = vmatprep.subr.mxu0 0.0
      %3862 = vmatpush1.msra.mxu0 0.0
      %3863 = vmatprep.subr.mxu0 0.0
      %3864 = vmatpush1.msra.mxu0 0.0
      %3865 = vmatprep.subr.mxu0 0.0
      %3866 = vmatpush1.msra.mxu0 0.0
      %3867 = vmatprep.subr.mxu0 0.0
      %3868 = vmatpush1.msra.mxu0 0.0
      %3869 = vmatprep.subr.mxu0 0.0
      %3870 = vmatpush1.msra.mxu0 0.0
      %3871 = vmatprep.subr.mxu0 0.0
      %3872 = vmatpush1.msra.mxu0 0.0
      %3873 = vmatprep.subr.mxu0 0.0
      %3874 = vmatpush1.msra.mxu0 0.0
      %3875 = vmatprep.subr.mxu0 0.0
      %3876 = vmatpush1.msra.mxu0 0.0
      %3877 = vmatprep.subr.mxu0 0.0
      %3878 = vmatpush1.msra.mxu0 0.0
      %3879 = vmatprep.subr.mxu0 0.0
      %3880 = vmatpush1.msra.mxu0 0.0
      %3881 = vmatprep.subr.mxu0 0.0
      %3882 = vmatpush1.msra.mxu0 0.0
      %3883 = vmatprep.subr.mxu0 0.0
      %3884 = vmatpush1.msra.mxu0 0.0
      %3885 = vmatprep.subr.mxu0 0.0
      %3886 = vmatpush1.msra.mxu0 0.0
      %3887 = vmatprep.subr.mxu0 0.0
      %3888 = vmatpush1.msra.mxu0 0.0
      %3889 = vmatprep.subr.mxu0 0.0
      %3890 = vmatpush1.msra.mxu0 %v3780
      %3891 = vmatprep.subr.mxu0 0.0
      %3892 = vmatpush2.msra.mxu0 0.0
      %3893 = vmatprep.subr.mxu0 0.0
      %3894 = vmatpush2.msra.mxu0 0.0
      %3895 = vmatprep.subr.mxu0 0.0
      %3896 = vmatpush2.msra.mxu0 0.0
      %3897 = vmatprep.subr.mxu0 0.0
      %3898 = vmatpush2.msra.mxu0 0.0
      %3899 = vmatprep.subr.mxu0 0.0
      %3900 = vmatpush2.msra.mxu0 0.0
      %3901 = vmatprep.subr.mxu0 0.0
      %3902 = vmatpush2.msra.mxu0 0.0
      %3903 = vmatprep.subr.mxu0 0.0
      %3904 = vmatpush2.msra.mxu0 0.0
      %3905 = vmatprep.subr.mxu0 0.0
      %3906 = vmatpush2.msra.mxu0 0.0
      %3907 = vmatprep.subr.mxu0 0.0
      %3908 = vmatpush2.msra.mxu0 0.0
      %3909 = vmatprep.subr.mxu0 0.0
      %3910 = vmatpush2.msra.mxu0 0.0
      %3911 = vmatprep.subr.mxu0 0.0
      %3912 = vmatpush2.msra.mxu0 0.0
      %3913 = vmatprep.subr.mxu0 0.0
      %3914 = vmatpush2.msra.mxu0 0.0
      %3915 = vmatprep.subr.mxu0 0.0
      %3916 = vmatpush2.msra.mxu0 0.0
      %3917 = vmatprep.subr.mxu0 0.0
      %3918 = vmatpush2.msra.mxu0 0.0
      %3919 = vmatprep.subr.mxu0 0.0
      %3920 = vmatpush2.msra.mxu0 0.0
      %3921 = vmatprep.subr.mxu0 0.0
      %3922 = vmatpush2.msra.mxu0 0.0
      %3923 = vmatprep.mubr.f32.mxu0 0.0
      %3924 = vmatmul.mubr.f32.gmra.mxu0 %v3857
      %v3925 = vpop.f32.mrf.mxu0
      %v3926 = vadd.f32 %v3853, %v3925
      %v3927 = vpop.f32.mrf.mxu0
      %3928 = vdwg.mxu0
      %s3929 = scalar_lea.vmem %s6, 48
      %v3930 = vld [vmem:[%s3929] sm:$0xff]
      %v3932 = vsel %vm741, %v3700, 0
      %3934 = vmatprep.subr.mxu0 0.0
      %3935 = vmatpush1.msra.mxu0 0.0
      %3936 = vmatprep.subr.mxu0 0.0
      %3937 = vmatpush1.msra.mxu0 0.0
      %3938 = vmatprep.subr.mxu0 0.0
      %3939 = vmatpush1.msra.mxu0 0.0
      %3940 = vmatprep.subr.mxu0 0.0
      %3941 = vmatpush1.msra.mxu0 0.0
      %3942 = vmatprep.subr.mxu0 0.0
      %3943 = vmatpush1.msra.mxu0 0.0
      %3944 = vmatprep.subr.mxu0 0.0
      %3945 = vmatpush1.msra.mxu0 0.0
      %3946 = vmatprep.subr.mxu0 0.0
      %3947 = vmatpush1.msra.mxu0 0.0
      %3948 = vmatprep.subr.mxu0 0.0
      %3949 = vmatpush1.msra.mxu0 0.0
      %3950 = vmatprep.subr.mxu0 0.0
      %3951 = vmatpush1.msra.mxu0 0.0
      %3952 = vmatprep.subr.mxu0 0.0
      %3953 = vmatpush1.msra.mxu0 0.0
      %3954 = vmatprep.subr.mxu0 0.0
      %3955 = vmatpush1.msra.mxu0 0.0
      %3956 = vmatprep.subr.mxu0 0.0
      %3957 = vmatpush1.msra.mxu0 0.0
      %3958 = vmatprep.subr.mxu0 0.0
      %3959 = vmatpush1.msra.mxu0 0.0
      %3960 = vmatprep.subr.mxu0 0.0
      %3961 = vmatpush1.msra.mxu0 0.0
      %3962 = vmatprep.subr.mxu0 0.0
      %3963 = vmatpush1.msra.mxu0 0.0
      %3964 = vmatprep.subr.mxu0 0.0
      %3965 = vmatpush1.msra.mxu0 %v3930
      %3966 = vmatprep.subr.mxu0 0.0
      %3967 = vmatpush2.msra.mxu0 0.0
      %3968 = vmatprep.subr.mxu0 0.0
      %3969 = vmatpush2.msra.mxu0 0.0
      %3970 = vmatprep.subr.mxu0 0.0
      %3971 = vmatpush2.msra.mxu0 0.0
      %3972 = vmatprep.subr.mxu0 0.0
      %3973 = vmatpush2.msra.mxu0 0.0
      %3974 = vmatprep.subr.mxu0 0.0
      %3975 = vmatpush2.msra.mxu0 0.0
      %3976 = vmatprep.subr.mxu0 0.0
      %3977 = vmatpush2.msra.mxu0 0.0
      %3978 = vmatprep.subr.mxu0 0.0
      %3979 = vmatpush2.msra.mxu0 0.0
      %3980 = vmatprep.subr.mxu0 0.0
      %3981 = vmatpush2.msra.mxu0 0.0
      %3982 = vmatprep.subr.mxu0 0.0
      %3983 = vmatpush2.msra.mxu0 0.0
      %3984 = vmatprep.subr.mxu0 0.0
      %3985 = vmatpush2.msra.mxu0 0.0
      %3986 = vmatprep.subr.mxu0 0.0
      %3987 = vmatpush2.msra.mxu0 0.0
      %3988 = vmatprep.subr.mxu0 0.0
      %3989 = vmatpush2.msra.mxu0 0.0
      %3990 = vmatprep.subr.mxu0 0.0
      %3991 = vmatpush2.msra.mxu0 0.0
      %3992 = vmatprep.subr.mxu0 0.0
      %3993 = vmatpush2.msra.mxu0 0.0
      %3994 = vmatprep.subr.mxu0 0.0
      %3995 = vmatpush2.msra.mxu0 0.0
      %3996 = vmatprep.subr.mxu0 0.0
      %3997 = vmatpush2.msra.mxu0 0.0
      %3998 = vmatprep.mubr.f32.mxu0 0.0
      %3999 = vmatmul.mubr.f32.gmra.mxu0 %v3932
      %v4000 = vpop.f32.mrf.mxu0
      %v4001 = vadd.f32 0.0, %v4000
      %v4002 = vpop.f32.mrf.mxu0
      %4003 = vdwg.mxu0
      %v4004 = vadd.f32 %v3926, %v4001
      %s4005 = scalar_lea.vmem %s6, 56
      %v4006 = vld [vmem:[%s4005] sm:$0xff]
      %v4008 = vsel %vm741, %v3776, 0
      %4010 = vmatprep.subr.mxu0 0.0
      %4011 = vmatpush1.msra.mxu0 0.0
      %4012 = vmatprep.subr.mxu0 0.0
      %4013 = vmatpush1.msra.mxu0 0.0
      %4014 = vmatprep.subr.mxu0 0.0
      %4015 = vmatpush1.msra.mxu0 0.0
      %4016 = vmatprep.subr.mxu0 0.0
      %4017 = vmatpush1.msra.mxu0 0.0
      %4018 = vmatprep.subr.mxu0 0.0
      %4019 = vmatpush1.msra.mxu0 0.0
      %4020 = vmatprep.subr.mxu0 0.0
      %4021 = vmatpush1.msra.mxu0 0.0
      %4022 = vmatprep.subr.mxu0 0.0
      %4023 = vmatpush1.msra.mxu0 0.0
      %4024 = vmatprep.subr.mxu0 0.0
      %4025 = vmatpush1.msra.mxu0 0.0
      %4026 = vmatprep.subr.mxu0 0.0
      %4027 = vmatpush1.msra.mxu0 0.0
      %4028 = vmatprep.subr.mxu0 0.0
      %4029 = vmatpush1.msra.mxu0 0.0
      %4030 = vmatprep.subr.mxu0 0.0
      %4031 = vmatpush1.msra.mxu0 0.0
      %4032 = vmatprep.subr.mxu0 0.0
      %4033 = vmatpush1.msra.mxu0 0.0
      %4034 = vmatprep.subr.mxu0 0.0
      %4035 = vmatpush1.msra.mxu0 0.0
      %4036 = vmatprep.subr.mxu0 0.0
      %4037 = vmatpush1.msra.mxu0 0.0
      %4038 = vmatprep.subr.mxu0 0.0
      %4039 = vmatpush1.msra.mxu0 0.0
      %4040 = vmatprep.subr.mxu0 0.0
      %4041 = vmatpush1.msra.mxu0 %v4006
      %4042 = vmatprep.subr.mxu0 0.0
      %4043 = vmatpush2.msra.mxu0 0.0
      %4044 = vmatprep.subr.mxu0 0.0
      %4045 = vmatpush2.msra.mxu0 0.0
      %4046 = vmatprep.subr.mxu0 0.0
      %4047 = vmatpush2.msra.mxu0 0.0
      %4048 = vmatprep.subr.mxu0 0.0
      %4049 = vmatpush2.msra.mxu0 0.0
      %4050 = vmatprep.subr.mxu0 0.0
      %4051 = vmatpush2.msra.mxu0 0.0
      %4052 = vmatprep.subr.mxu0 0.0
      %4053 = vmatpush2.msra.mxu0 0.0
      %4054 = vmatprep.subr.mxu0 0.0
      %4055 = vmatpush2.msra.mxu0 0.0
      %4056 = vmatprep.subr.mxu0 0.0
      %4057 = vmatpush2.msra.mxu0 0.0
      %4058 = vmatprep.subr.mxu0 0.0
      %4059 = vmatpush2.msra.mxu0 0.0
      %4060 = vmatprep.subr.mxu0 0.0
      %4061 = vmatpush2.msra.mxu0 0.0
      %4062 = vmatprep.subr.mxu0 0.0
      %4063 = vmatpush2.msra.mxu0 0.0
      %4064 = vmatprep.subr.mxu0 0.0
      %4065 = vmatpush2.msra.mxu0 0.0
      %4066 = vmatprep.subr.mxu0 0.0
      %4067 = vmatpush2.msra.mxu0 0.0
      %4068 = vmatprep.subr.mxu0 0.0
      %4069 = vmatpush2.msra.mxu0 0.0
      %4070 = vmatprep.subr.mxu0 0.0
      %4071 = vmatpush2.msra.mxu0 0.0
      %4072 = vmatprep.subr.mxu0 0.0
      %4073 = vmatpush2.msra.mxu0 0.0
      %4074 = vmatprep.mubr.f32.mxu0 0.0
      %4075 = vmatmul.mubr.f32.gmra.mxu0 %v4008
      %v4076 = vpop.f32.mrf.mxu0
      %v4077 = vadd.f32 0.0, %v4076
      %v4078 = vpop.f32.mrf.mxu0
      %4079 = vdwg.mxu0
      %v4080 = vadd.f32 %v4004, %v4077
      %4082 = vrot.lane.b32.xlu0 %v3109, 120
      %v4083 = vpop.permute.xlu0 %4082
      %4084 = vrot.lane.b32.xlu0 %v3109, 112
      %v4085 = vpop.permute.xlu0 %4084
      %4086 = vrot.lane.b32.xlu0 %v3109, 104
      %v4087 = vpop.permute.xlu0 %4086
      %4088 = vrot.lane.b32.xlu0 %v3109, 96
      %v4089 = vpop.permute.xlu0 %4088
      %v4090 = vsel %vm741, %v3109, 0
      %v4092 = vsel %vm741, %v4089, 0
      %4094 = vmatprep.subr.mxu0 0.0
      %4095 = vmatpush1.xpose.msra.mxu0 0.0
      %4096 = vmatprep.subr.mxu0 0.0
      %4097 = vmatpush1.xpose.msra.mxu0 0.0
      %4098 = vmatprep.subr.mxu0 0.0
      %4099 = vmatpush1.xpose.msra.mxu0 0.0
      %4100 = vmatprep.subr.mxu0 0.0
      %4101 = vmatpush1.xpose.msra.mxu0 0.0
      %4102 = vmatprep.subr.mxu0 0.0
      %4103 = vmatpush1.xpose.msra.mxu0 0.0
      %4104 = vmatprep.subr.mxu0 0.0
      %4105 = vmatpush1.xpose.msra.mxu0 0.0
      %4106 = vmatprep.subr.mxu0 0.0
      %4107 = vmatpush1.xpose.msra.mxu0 0.0
      %4108 = vmatprep.subr.mxu0 0.0
      %4109 = vmatpush1.xpose.msra.mxu0 0.0
      %4110 = vmatprep.subr.mxu0 0.0
      %4111 = vmatpush1.xpose.msra.mxu0 0.0
      %4112 = vmatprep.subr.mxu0 0.0
      %4113 = vmatpush1.xpose.msra.mxu0 0.0
      %4114 = vmatprep.subr.mxu0 0.0
      %4115 = vmatpush1.xpose.msra.mxu0 0.0
      %4116 = vmatprep.subr.mxu0 0.0
      %4117 = vmatpush1.xpose.msra.mxu0 0.0
      %4118 = vmatprep.subr.mxu0 0.0
      %4119 = vmatpush1.xpose.msra.mxu0 0.0
      %4120 = vmatprep.subr.mxu0 0.0
      %4121 = vmatpush1.xpose.msra.mxu0 0.0
      %4122 = vmatprep.subr.mxu0 0.0
      %4123 = vmatpush1.xpose.msra.mxu0 0.0
      %4124 = vmatprep.subr.mxu0 0.0
      %4125 = vmatpush1.xpose.msra.mxu0 %v4092
      %4126 = vmatprep.subr.mxu0 0.0
      %4127 = vmatpush2.xpose.msra.mxu0 0.0
      %4128 = vmatprep.subr.mxu0 0.0
      %4129 = vmatpush2.xpose.msra.mxu0 0.0
      %4130 = vmatprep.subr.mxu0 0.0
      %4131 = vmatpush2.xpose.msra.mxu0 0.0
      %4132 = vmatprep.subr.mxu0 0.0
      %4133 = vmatpush2.xpose.msra.mxu0 0.0
      %4134 = vmatprep.subr.mxu0 0.0
      %4135 = vmatpush2.xpose.msra.mxu0 0.0
      %4136 = vmatprep.subr.mxu0 0.0
      %4137 = vmatpush2.xpose.msra.mxu0 0.0
      %4138 = vmatprep.subr.mxu0 0.0
      %4139 = vmatpush2.xpose.msra.mxu0 0.0
      %4140 = vmatprep.subr.mxu0 0.0
      %4141 = vmatpush2.xpose.msra.mxu0 0.0
      %4142 = vmatprep.subr.mxu0 0.0
      %4143 = vmatpush2.xpose.msra.mxu0 0.0
      %4144 = vmatprep.subr.mxu0 0.0
      %4145 = vmatpush2.xpose.msra.mxu0 0.0
      %4146 = vmatprep.subr.mxu0 0.0
      %4147 = vmatpush2.xpose.msra.mxu0 0.0
      %4148 = vmatprep.subr.mxu0 0.0
      %4149 = vmatpush2.xpose.msra.mxu0 0.0
      %4150 = vmatprep.subr.mxu0 0.0
      %4151 = vmatpush2.xpose.msra.mxu0 0.0
      %4152 = vmatprep.subr.mxu0 0.0
      %4153 = vmatpush2.xpose.msra.mxu0 0.0
      %4154 = vmatprep.subr.mxu0 0.0
      %4155 = vmatpush2.xpose.msra.mxu0 0.0
      %4156 = vmatprep.subr.mxu0 0.0
      %4157 = vmatpush2.xpose.msra.mxu0 0.0
      %4158 = vmatprep.mubr.f32.mxu0 0.0
      %4159 = vmatmul.mubr.f32.gmra.mxu0 %v4090
      %v4160 = vpop.f32.mrf.mxu0
      %v4161 = vadd.f32 0.0, %v4160
      %v4162 = vpop.f32.mrf.mxu0
      %4163 = vdwg.mxu0
      %4164 = vrot.lane.b32.xlu0 %v4083, 96
      %v4165 = vpop.permute.xlu0 %4164
      %v4166 = vsel %vm741, %v4083, 0
      %v4168 = vsel %vm741, %v4165, 0
      %4170 = vmatprep.subr.mxu0 0.0
      %4171 = vmatpush1.xpose.msra.mxu0 0.0
      %4172 = vmatprep.subr.mxu0 0.0
      %4173 = vmatpush1.xpose.msra.mxu0 0.0
      %4174 = vmatprep.subr.mxu0 0.0
      %4175 = vmatpush1.xpose.msra.mxu0 0.0
      %4176 = vmatprep.subr.mxu0 0.0
      %4177 = vmatpush1.xpose.msra.mxu0 0.0
      %4178 = vmatprep.subr.mxu0 0.0
      %4179 = vmatpush1.xpose.msra.mxu0 0.0
      %4180 = vmatprep.subr.mxu0 0.0
      %4181 = vmatpush1.xpose.msra.mxu0 0.0
      %4182 = vmatprep.subr.mxu0 0.0
      %4183 = vmatpush1.xpose.msra.mxu0 0.0
      %4184 = vmatprep.subr.mxu0 0.0
      %4185 = vmatpush1.xpose.msra.mxu0 0.0
      %4186 = vmatprep.subr.mxu0 0.0
      %4187 = vmatpush1.xpose.msra.mxu0 0.0
      %4188 = vmatprep.subr.mxu0 0.0
      %4189 = vmatpush1.xpose.msra.mxu0 0.0
      %4190 = vmatprep.subr.mxu0 0.0
      %4191 = vmatpush1.xpose.msra.mxu0 0.0
      %4192 = vmatprep.subr.mxu0 0.0
      %4193 = vmatpush1.xpose.msra.mxu0 0.0
      %4194 = vmatprep.subr.mxu0 0.0
      %4195 = vmatpush1.xpose.msra.mxu0 0.0
      %4196 = vmatprep.subr.mxu0 0.0
      %4197 = vmatpush1.xpose.msra.mxu0 0.0
      %4198 = vmatprep.subr.mxu0 0.0
      %4199 = vmatpush1.xpose.msra.mxu0 0.0
      %4200 = vmatprep.subr.mxu0 0.0
      %4201 = vmatpush1.xpose.msra.mxu0 %v4168
      %4202 = vmatprep.subr.mxu0 0.0
      %4203 = vmatpush2.xpose.msra.mxu0 0.0
      %4204 = vmatprep.subr.mxu0 0.0
      %4205 = vmatpush2.xpose.msra.mxu0 0.0
      %4206 = vmatprep.subr.mxu0 0.0
      %4207 = vmatpush2.xpose.msra.mxu0 0.0
      %4208 = vmatprep.subr.mxu0 0.0
      %4209 = vmatpush2.xpose.msra.mxu0 0.0
      %4210 = vmatprep.subr.mxu0 0.0
      %4211 = vmatpush2.xpose.msra.mxu0 0.0
      %4212 = vmatprep.subr.mxu0 0.0
      %4213 = vmatpush2.xpose.msra.mxu0 0.0
      %4214 = vmatprep.subr.mxu0 0.0
      %4215 = vmatpush2.xpose.msra.mxu0 0.0
      %4216 = vmatprep.subr.mxu0 0.0
      %4217 = vmatpush2.xpose.msra.mxu0 0.0
      %4218 = vmatprep.subr.mxu0 0.0
      %4219 = vmatpush2.xpose.msra.mxu0 0.0
      %4220 = vmatprep.subr.mxu0 0.0
      %4221 = vmatpush2.xpose.msra.mxu0 0.0
      %4222 = vmatprep.subr.mxu0 0.0
      %4223 = vmatpush2.xpose.msra.mxu0 0.0
      %4224 = vmatprep.subr.mxu0 0.0
      %4225 = vmatpush2.xpose.msra.mxu0 0.0
      %4226 = vmatprep.subr.mxu0 0.0
      %4227 = vmatpush2.xpose.msra.mxu0 0.0
      %4228 = vmatprep.subr.mxu0 0.0
      %4229 = vmatpush2.xpose.msra.mxu0 0.0
      %4230 = vmatprep.subr.mxu0 0.0
      %4231 = vmatpush2.xpose.msra.mxu0 0.0
      %4232 = vmatprep.subr.mxu0 0.0
      %4233 = vmatpush2.xpose.msra.mxu0 0.0
      %4234 = vmatprep.mubr.f32.mxu0 0.0
      %4235 = vmatmul.mubr.f32.gmra.mxu0 %v4166
      %v4236 = vpop.f32.mrf.mxu0
      %v4237 = vadd.f32 0.0, %v4236
      %v4238 = vpop.f32.mrf.mxu0
      %4239 = vdwg.mxu0
      %4240 = vrot.lane.b32.xlu0 %v4085, 96
      %v4241 = vpop.permute.xlu0 %4240
      %v4242 = vsel %vm741, %v4085, 0
      %v4244 = vsel %vm741, %v4241, 0
      %4246 = vmatprep.subr.mxu0 0.0
      %4247 = vmatpush1.xpose.msra.mxu0 0.0
      %4248 = vmatprep.subr.mxu0 0.0
      %4249 = vmatpush1.xpose.msra.mxu0 0.0
      %4250 = vmatprep.subr.mxu0 0.0
      %4251 = vmatpush1.xpose.msra.mxu0 0.0
      %4252 = vmatprep.subr.mxu0 0.0
      %4253 = vmatpush1.xpose.msra.mxu0 0.0
      %4254 = vmatprep.subr.mxu0 0.0
      %4255 = vmatpush1.xpose.msra.mxu0 0.0
      %4256 = vmatprep.subr.mxu0 0.0
      %4257 = vmatpush1.xpose.msra.mxu0 0.0
      %4258 = vmatprep.subr.mxu0 0.0
      %4259 = vmatpush1.xpose.msra.mxu0 0.0
      %4260 = vmatprep.subr.mxu0 0.0
      %4261 = vmatpush1.xpose.msra.mxu0 0.0
      %4262 = vmatprep.subr.mxu0 0.0
      %4263 = vmatpush1.xpose.msra.mxu0 0.0
      %4264 = vmatprep.subr.mxu0 0.0
      %4265 = vmatpush1.xpose.msra.mxu0 0.0
      %4266 = vmatprep.subr.mxu0 0.0
      %4267 = vmatpush1.xpose.msra.mxu0 0.0
      %4268 = vmatprep.subr.mxu0 0.0
      %4269 = vmatpush1.xpose.msra.mxu0 0.0
      %4270 = vmatprep.subr.mxu0 0.0
      %4271 = vmatpush1.xpose.msra.mxu0 0.0
      %4272 = vmatprep.subr.mxu0 0.0
      %4273 = vmatpush1.xpose.msra.mxu0 0.0
      %4274 = vmatprep.subr.mxu0 0.0
      %4275 = vmatpush1.xpose.msra.mxu0 0.0
      %4276 = vmatprep.subr.mxu0 0.0
      %4277 = vmatpush1.xpose.msra.mxu0 %v4244
      %4278 = vmatprep.subr.mxu0 0.0
      %4279 = vmatpush2.xpose.msra.mxu0 0.0
      %4280 = vmatprep.subr.mxu0 0.0
      %4281 = vmatpush2.xpose.msra.mxu0 0.0
      %4282 = vmatprep.subr.mxu0 0.0
      %4283 = vmatpush2.xpose.msra.mxu0 0.0
      %4284 = vmatprep.subr.mxu0 0.0
      %4285 = vmatpush2.xpose.msra.mxu0 0.0
      %4286 = vmatprep.subr.mxu0 0.0
      %4287 = vmatpush2.xpose.msra.mxu0 0.0
      %4288 = vmatprep.subr.mxu0 0.0
      %4289 = vmatpush2.xpose.msra.mxu0 0.0
      %4290 = vmatprep.subr.mxu0 0.0
      %4291 = vmatpush2.xpose.msra.mxu0 0.0
      %4292 = vmatprep.subr.mxu0 0.0
      %4293 = vmatpush2.xpose.msra.mxu0 0.0
      %4294 = vmatprep.subr.mxu0 0.0
      %4295 = vmatpush2.xpose.msra.mxu0 0.0
      %4296 = vmatprep.subr.mxu0 0.0
      %4297 = vmatpush2.xpose.msra.mxu0 0.0
      %4298 = vmatprep.subr.mxu0 0.0
      %4299 = vmatpush2.xpose.msra.mxu0 0.0
      %4300 = vmatprep.subr.mxu0 0.0
      %4301 = vmatpush2.xpose.msra.mxu0 0.0
      %4302 = vmatprep.subr.mxu0 0.0
      %4303 = vmatpush2.xpose.msra.mxu0 0.0
      %4304 = vmatprep.subr.mxu0 0.0
      %4305 = vmatpush2.xpose.msra.mxu0 0.0
      %4306 = vmatprep.subr.mxu0 0.0
      %4307 = vmatpush2.xpose.msra.mxu0 0.0
      %4308 = vmatprep.subr.mxu0 0.0
      %4309 = vmatpush2.xpose.msra.mxu0 0.0
      %4310 = vmatprep.mubr.f32.mxu0 0.0
      %4311 = vmatmul.mubr.f32.gmra.mxu0 %v4242
      %v4312 = vpop.f32.mrf.mxu0
      %v4313 = vadd.f32 0.0, %v4312
      %v4314 = vpop.f32.mrf.mxu0
      %4315 = vdwg.mxu0
      %4316 = vrot.lane.b32.xlu0 %v4087, 96
      %v4317 = vpop.permute.xlu0 %4316
      %v4318 = vsel %vm741, %v4087, 0
      %v4320 = vsel %vm741, %v4317, 0
      %4322 = vmatprep.subr.mxu0 0.0
      %4323 = vmatpush1.xpose.msra.mxu0 0.0
      %4324 = vmatprep.subr.mxu0 0.0
      %4325 = vmatpush1.xpose.msra.mxu0 0.0
      %4326 = vmatprep.subr.mxu0 0.0
      %4327 = vmatpush1.xpose.msra.mxu0 0.0
      %4328 = vmatprep.subr.mxu0 0.0
      %4329 = vmatpush1.xpose.msra.mxu0 0.0
      %4330 = vmatprep.subr.mxu0 0.0
      %4331 = vmatpush1.xpose.msra.mxu0 0.0
      %4332 = vmatprep.subr.mxu0 0.0
      %4333 = vmatpush1.xpose.msra.mxu0 0.0
      %4334 = vmatprep.subr.mxu0 0.0
      %4335 = vmatpush1.xpose.msra.mxu0 0.0
      %4336 = vmatprep.subr.mxu0 0.0
      %4337 = vmatpush1.xpose.msra.mxu0 0.0
      %4338 = vmatprep.subr.mxu0 0.0
      %4339 = vmatpush1.xpose.msra.mxu0 0.0
      %4340 = vmatprep.subr.mxu0 0.0
      %4341 = vmatpush1.xpose.msra.mxu0 0.0
      %4342 = vmatprep.subr.mxu0 0.0
      %4343 = vmatpush1.xpose.msra.mxu0 0.0
      %4344 = vmatprep.subr.mxu0 0.0
      %4345 = vmatpush1.xpose.msra.mxu0 0.0
      %4346 = vmatprep.subr.mxu0 0.0
      %4347 = vmatpush1.xpose.msra.mxu0 0.0
      %4348 = vmatprep.subr.mxu0 0.0
      %4349 = vmatpush1.xpose.msra.mxu0 0.0
      %4350 = vmatprep.subr.mxu0 0.0
      %4351 = vmatpush1.xpose.msra.mxu0 0.0
      %4352 = vmatprep.subr.mxu0 0.0
      %4353 = vmatpush1.xpose.msra.mxu0 %v4320
      %4354 = vmatprep.subr.mxu0 0.0
      %4355 = vmatpush2.xpose.msra.mxu0 0.0
      %4356 = vmatprep.subr.mxu0 0.0
      %4357 = vmatpush2.xpose.msra.mxu0 0.0
      %4358 = vmatprep.subr.mxu0 0.0
      %4359 = vmatpush2.xpose.msra.mxu0 0.0
      %4360 = vmatprep.subr.mxu0 0.0
      %4361 = vmatpush2.xpose.msra.mxu0 0.0
      %4362 = vmatprep.subr.mxu0 0.0
      %4363 = vmatpush2.xpose.msra.mxu0 0.0
      %4364 = vmatprep.subr.mxu0 0.0
      %4365 = vmatpush2.xpose.msra.mxu0 0.0
      %4366 = vmatprep.subr.mxu0 0.0
      %4367 = vmatpush2.xpose.msra.mxu0 0.0
      %4368 = vmatprep.subr.mxu0 0.0
      %4369 = vmatpush2.xpose.msra.mxu0 0.0
      %4370 = vmatprep.subr.mxu0 0.0
      %4371 = vmatpush2.xpose.msra.mxu0 0.0
      %4372 = vmatprep.subr.mxu0 0.0
      %4373 = vmatpush2.xpose.msra.mxu0 0.0
      %4374 = vmatprep.subr.mxu0 0.0
      %4375 = vmatpush2.xpose.msra.mxu0 0.0
      %4376 = vmatprep.subr.mxu0 0.0
      %4377 = vmatpush2.xpose.msra.mxu0 0.0
      %4378 = vmatprep.subr.mxu0 0.0
      %4379 = vmatpush2.xpose.msra.mxu0 0.0
      %4380 = vmatprep.subr.mxu0 0.0
      %4381 = vmatpush2.xpose.msra.mxu0 0.0
      %4382 = vmatprep.subr.mxu0 0.0
      %4383 = vmatpush2.xpose.msra.mxu0 0.0
      %4384 = vmatprep.subr.mxu0 0.0
      %4385 = vmatpush2.xpose.msra.mxu0 0.0
      %4386 = vmatprep.mubr.f32.mxu0 0.0
      %4387 = vmatmul.mubr.f32.gmra.mxu0 %v4318
      %v4388 = vpop.f32.mrf.mxu0
      %v4389 = vadd.f32 0.0, %v4388
      %v4390 = vpop.f32.mrf.mxu0
      %4391 = vdwg.mxu0
      %v4392 = vmul.f32 %v4161, 0.35355338
      %v4393 = vmul.f32 %v4237, 0.35355338
      %v4394 = vmul.f32 %v4313, 0.35355338
      %v4395 = vmul.f32 %v4389, 0.35355338
      %v4396 = vadd.f32 %v4392, %v2023
      %v4397 = vadd.f32 %v4393, %v2023
      %v4398 = vadd.f32 %v4394, %v2023
      %v4399 = vadd.f32 %v4395, %v2023
      %v4400 = vsel %vm741, %v4396, -inf
      %4401 = vmax.xlane.f32.xlu0 %v4400
      %v4402 = vpop.xlane.xlu0 %4401
      %v4403 = vsel %vm741, %v4397, -inf
      %4404 = vmax.xlane.f32.xlu0 %v4403
      %v4405 = vpop.xlane.xlu0 %4404
      %v4406 = vsel %vm741, %v4398, -inf
      %4407 = vmax.xlane.f32.xlu0 %v4406
      %v4408 = vpop.xlane.xlu0 %4407
      %v4409 = vsel %vm741, %v4399, -inf
      %4410 = vmax.xlane.f32.xlu0 %v4409
      %v4411 = vpop.xlane.xlu0 %4410
      %v4412 = vsub.f32 %v4396, %v4402
      %v4413 = vsub.f32 %v4397, %v4405
      %v4414 = vsub.f32 %v4398, %v4408
      %v4415 = vsub.f32 %v4399, %v4411
      %v4416 = vmul.f32 %v4412, 1.442695
      %v4417 = vpow.pop %v4416
      %v4418 = vmul.f32 %v4413, 1.442695
      %v4419 = vpow.pop %v4418
      %v4420 = vmul.f32 %v4414, 1.442695
      %v4421 = vpow.pop %v4420
      %v4422 = vmul.f32 %v4415, 1.442695
      %v4423 = vpow.pop %v4422
      %v4424 = vsel %vm741, %v4417, 0.0
      %4425 = vadd.xlane.f32.xlu0 %v4424
      %v4426 = vpop.xlane.xlu0 %4425
      %v4427 = vsel %vm741, %v4419, 0.0
      %4428 = vadd.xlane.f32.xlu0 %v4427
      %v4429 = vpop.xlane.xlu0 %4428
      %v4430 = vsel %vm741, %v4421, 0.0
      %4431 = vadd.xlane.f32.xlu0 %v4430
      %v4432 = vpop.xlane.xlu0 %4431
      %v4433 = vsel %vm741, %v4423, 0.0
      %4434 = vadd.xlane.f32.xlu0 %v4433
      %v4435 = vpop.xlane.xlu0 %4434
      %v4436 = vrcp.pop %v4426
      %v4437 = vrcp.pop %v4429
      %v4438 = vrcp.pop %v4432
      %v4439 = vrcp.pop %v4435
      %v4440 = vmul.f32 %v4417, %v4436
      %v4441 = vmul.f32 %v4419, %v4437
      %v4442 = vmul.f32 %v4421, %v4438
      %v4443 = vmul.f32 %v4423, %v4439
      %4444 = vrot.lane.b32.xlu0 %v3109, 64
      %v4445 = vpop.permute.xlu0 %4444
      %v4448 = vsel %vm741, %v4440, 0
      %4450 = vmatprep.subr.mxu0 0.0
      %4451 = vmatpush1.msra.mxu0 0.0
      %4452 = vmatprep.subr.mxu0 0.0
      %4453 = vmatpush1.msra.mxu0 0.0
      %4454 = vmatprep.subr.mxu0 0.0
      %4455 = vmatpush1.msra.mxu0 0.0
      %4456 = vmatprep.subr.mxu0 0.0
      %4457 = vmatpush1.msra.mxu0 0.0
      %4458 = vmatprep.subr.mxu0 0.0
      %4459 = vmatpush1.msra.mxu0 0.0
      %4460 = vmatprep.subr.mxu0 0.0
      %4461 = vmatpush1.msra.mxu0 0.0
      %4462 = vmatprep.subr.mxu0 0.0
      %4463 = vmatpush1.msra.mxu0 0.0
      %4464 = vmatprep.subr.mxu0 0.0
      %4465 = vmatpush1.msra.mxu0 0.0
      %4466 = vmatprep.subr.mxu0 0.0
      %4467 = vmatpush1.msra.mxu0 0.0
      %4468 = vmatprep.subr.mxu0 0.0
      %4469 = vmatpush1.msra.mxu0 0.0
      %4470 = vmatprep.subr.mxu0 0.0
      %4471 = vmatpush1.msra.mxu0 0.0
      %4472 = vmatprep.subr.mxu0 0.0
      %4473 = vmatpush1.msra.mxu0 0.0
      %4474 = vmatprep.subr.mxu0 0.0
      %4475 = vmatpush1.msra.mxu0 0.0
      %4476 = vmatprep.subr.mxu0 0.0
      %4477 = vmatpush1.msra.mxu0 0.0
      %4478 = vmatprep.subr.mxu0 0.0
      %4479 = vmatpush1.msra.mxu0 0.0
      %4480 = vmatprep.subr.mxu0 0.0
      %4481 = vmatpush1.msra.mxu0 %v4445
      %4482 = vmatprep.subr.mxu0 0.0
      %4483 = vmatpush2.msra.mxu0 0.0
      %4484 = vmatprep.subr.mxu0 0.0
      %4485 = vmatpush2.msra.mxu0 0.0
      %4486 = vmatprep.subr.mxu0 0.0
      %4487 = vmatpush2.msra.mxu0 0.0
      %4488 = vmatprep.subr.mxu0 0.0
      %4489 = vmatpush2.msra.mxu0 0.0
      %4490 = vmatprep.subr.mxu0 0.0
      %4491 = vmatpush2.msra.mxu0 0.0
      %4492 = vmatprep.subr.mxu0 0.0
      %4493 = vmatpush2.msra.mxu0 0.0
      %4494 = vmatprep.subr.mxu0 0.0
      %4495 = vmatpush2.msra.mxu0 0.0
      %4496 = vmatprep.subr.mxu0 0.0
      %4497 = vmatpush2.msra.mxu0 0.0
      %4498 = vmatprep.subr.mxu0 0.0
      %4499 = vmatpush2.msra.mxu0 0.0
      %4500 = vmatprep.subr.mxu0 0.0
      %4501 = vmatpush2.msra.mxu0 0.0
      %4502 = vmatprep.subr.mxu0 0.0
      %4503 = vmatpush2.msra.mxu0 0.0
      %4504 = vmatprep.subr.mxu0 0.0
      %4505 = vmatpush2.msra.mxu0 0.0
      %4506 = vmatprep.subr.mxu0 0.0
      %4507 = vmatpush2.msra.mxu0 0.0
      %4508 = vmatprep.subr.mxu0 0.0
      %4509 = vmatpush2.msra.mxu0 0.0
      %4510 = vmatprep.subr.mxu0 0.0
      %4511 = vmatpush2.msra.mxu0 0.0
      %4512 = vmatprep.subr.mxu0 0.0
      %4513 = vmatpush2.msra.mxu0 0.0
      %4514 = vmatprep.mubr.f32.mxu0 0.0
      %4515 = vmatmul.mubr.f32.gmra.mxu0 %v4448
      %v4516 = vpop.f32.mrf.mxu0
      %v4517 = vadd.f32 0.0, %v4516
      %v4518 = vpop.f32.mrf.mxu0
      %4519 = vdwg.mxu0
      %4520 = vrot.lane.b32.xlu0 %v4083, 64
      %v4521 = vpop.permute.xlu0 %4520
      %v4524 = vsel %vm741, %v4441, 0
      %4526 = vmatprep.subr.mxu0 0.0
      %4527 = vmatpush1.msra.mxu0 0.0
      %4528 = vmatprep.subr.mxu0 0.0
      %4529 = vmatpush1.msra.mxu0 0.0
      %4530 = vmatprep.subr.mxu0 0.0
      %4531 = vmatpush1.msra.mxu0 0.0
      %4532 = vmatprep.subr.mxu0 0.0
      %4533 = vmatpush1.msra.mxu0 0.0
      %4534 = vmatprep.subr.mxu0 0.0
      %4535 = vmatpush1.msra.mxu0 0.0
      %4536 = vmatprep.subr.mxu0 0.0
      %4537 = vmatpush1.msra.mxu0 0.0
      %4538 = vmatprep.subr.mxu0 0.0
      %4539 = vmatpush1.msra.mxu0 0.0
      %4540 = vmatprep.subr.mxu0 0.0
      %4541 = vmatpush1.msra.mxu0 0.0
      %4542 = vmatprep.subr.mxu0 0.0
      %4543 = vmatpush1.msra.mxu0 0.0
      %4544 = vmatprep.subr.mxu0 0.0
      %4545 = vmatpush1.msra.mxu0 0.0
      %4546 = vmatprep.subr.mxu0 0.0
      %4547 = vmatpush1.msra.mxu0 0.0
      %4548 = vmatprep.subr.mxu0 0.0
      %4549 = vmatpush1.msra.mxu0 0.0
      %4550 = vmatprep.subr.mxu0 0.0
      %4551 = vmatpush1.msra.mxu0 0.0
      %4552 = vmatprep.subr.mxu0 0.0
      %4553 = vmatpush1.msra.mxu0 0.0
      %4554 = vmatprep.subr.mxu0 0.0
      %4555 = vmatpush1.msra.mxu0 0.0
      %4556 = vmatprep.subr.mxu0 0.0
      %4557 = vmatpush1.msra.mxu0 %v4521
      %4558 = vmatprep.subr.mxu0 0.0
      %4559 = vmatpush2.msra.mxu0 0.0
      %4560 = vmatprep.subr.mxu0 0.0
      %4561 = vmatpush2.msra.mxu0 0.0
      %4562 = vmatprep.subr.mxu0 0.0
      %4563 = vmatpush2.msra.mxu0 0.0
      %4564 = vmatprep.subr.mxu0 0.0
      %4565 = vmatpush2.msra.mxu0 0.0
      %4566 = vmatprep.subr.mxu0 0.0
      %4567 = vmatpush2.msra.mxu0 0.0
      %4568 = vmatprep.subr.mxu0 0.0
      %4569 = vmatpush2.msra.mxu0 0.0
      %4570 = vmatprep.subr.mxu0 0.0
      %4571 = vmatpush2.msra.mxu0 0.0
      %4572 = vmatprep.subr.mxu0 0.0
      %4573 = vmatpush2.msra.mxu0 0.0
      %4574 = vmatprep.subr.mxu0 0.0
      %4575 = vmatpush2.msra.mxu0 0.0
      %4576 = vmatprep.subr.mxu0 0.0
      %4577 = vmatpush2.msra.mxu0 0.0
      %4578 = vmatprep.subr.mxu0 0.0
      %4579 = vmatpush2.msra.mxu0 0.0
      %4580 = vmatprep.subr.mxu0 0.0
      %4581 = vmatpush2.msra.mxu0 0.0
      %4582 = vmatprep.subr.mxu0 0.0
      %4583 = vmatpush2.msra.mxu0 0.0
      %4584 = vmatprep.subr.mxu0 0.0
      %4585 = vmatpush2.msra.mxu0 0.0
      %4586 = vmatprep.subr.mxu0 0.0
      %4587 = vmatpush2.msra.mxu0 0.0
      %4588 = vmatprep.subr.mxu0 0.0
      %4589 = vmatpush2.msra.mxu0 0.0
      %4590 = vmatprep.mubr.f32.mxu0 0.0
      %4591 = vmatmul.mubr.f32.gmra.mxu0 %v4524
      %v4592 = vpop.f32.mrf.mxu0
      %v4593 = vadd.f32 0.0, %v4592
      %v4594 = vpop.f32.mrf.mxu0
      %4595 = vdwg.mxu0
      %4596 = vrot.lane.b32.xlu0 %v4085, 64
      %v4597 = vpop.permute.xlu0 %4596
      %v4600 = vsel %vm741, %v4442, 0
      %4602 = vmatprep.subr.mxu0 0.0
      %4603 = vmatpush1.msra.mxu0 0.0
      %4604 = vmatprep.subr.mxu0 0.0
      %4605 = vmatpush1.msra.mxu0 0.0
      %4606 = vmatprep.subr.mxu0 0.0
      %4607 = vmatpush1.msra.mxu0 0.0
      %4608 = vmatprep.subr.mxu0 0.0
      %4609 = vmatpush1.msra.mxu0 0.0
      %4610 = vmatprep.subr.mxu0 0.0
      %4611 = vmatpush1.msra.mxu0 0.0
      %4612 = vmatprep.subr.mxu0 0.0
      %4613 = vmatpush1.msra.mxu0 0.0
      %4614 = vmatprep.subr.mxu0 0.0
      %4615 = vmatpush1.msra.mxu0 0.0
      %4616 = vmatprep.subr.mxu0 0.0
      %4617 = vmatpush1.msra.mxu0 0.0
      %4618 = vmatprep.subr.mxu0 0.0
      %4619 = vmatpush1.msra.mxu0 0.0
      %4620 = vmatprep.subr.mxu0 0.0
      %4621 = vmatpush1.msra.mxu0 0.0
      %4622 = vmatprep.subr.mxu0 0.0
      %4623 = vmatpush1.msra.mxu0 0.0
      %4624 = vmatprep.subr.mxu0 0.0
      %4625 = vmatpush1.msra.mxu0 0.0
      %4626 = vmatprep.subr.mxu0 0.0
      %4627 = vmatpush1.msra.mxu0 0.0
      %4628 = vmatprep.subr.mxu0 0.0
      %4629 = vmatpush1.msra.mxu0 0.0
      %4630 = vmatprep.subr.mxu0 0.0
      %4631 = vmatpush1.msra.mxu0 0.0
      %4632 = vmatprep.subr.mxu0 0.0
      %4633 = vmatpush1.msra.mxu0 %v4597
      %4634 = vmatprep.subr.mxu0 0.0
      %4635 = vmatpush2.msra.mxu0 0.0
      %4636 = vmatprep.subr.mxu0 0.0
      %4637 = vmatpush2.msra.mxu0 0.0
      %4638 = vmatprep.subr.mxu0 0.0
      %4639 = vmatpush2.msra.mxu0 0.0
      %4640 = vmatprep.subr.mxu0 0.0
      %4641 = vmatpush2.msra.mxu0 0.0
      %4642 = vmatprep.subr.mxu0 0.0
      %4643 = vmatpush2.msra.mxu0 0.0
      %4644 = vmatprep.subr.mxu0 0.0
      %4645 = vmatpush2.msra.mxu0 0.0
      %4646 = vmatprep.subr.mxu0 0.0
      %4647 = vmatpush2.msra.mxu0 0.0
      %4648 = vmatprep.subr.mxu0 0.0
      %4649 = vmatpush2.msra.mxu0 0.0
      %4650 = vmatprep.subr.mxu0 0.0
      %4651 = vmatpush2.msra.mxu0 0.0
      %4652 = vmatprep.subr.mxu0 0.0
      %4653 = vmatpush2.msra.mxu0 0.0
      %4654 = vmatprep.subr.mxu0 0.0
      %4655 = vmatpush2.msra.mxu0 0.0
      %4656 = vmatprep.subr.mxu0 0.0
      %4657 = vmatpush2.msra.mxu0 0.0
      %4658 = vmatprep.subr.mxu0 0.0
      %4659 = vmatpush2.msra.mxu0 0.0
      %4660 = vmatprep.subr.mxu0 0.0
      %4661 = vmatpush2.msra.mxu0 0.0
      %4662 = vmatprep.subr.mxu0 0.0
      %4663 = vmatpush2.msra.mxu0 0.0
      %4664 = vmatprep.subr.mxu0 0.0
      %4665 = vmatpush2.msra.mxu0 0.0
      %4666 = vmatprep.mubr.f32.mxu0 0.0
      %4667 = vmatmul.mubr.f32.gmra.mxu0 %v4600
      %v4668 = vpop.f32.mrf.mxu0
      %v4669 = vadd.f32 0.0, %v4668
      %v4670 = vpop.f32.mrf.mxu0
      %4671 = vdwg.mxu0
      %4672 = vrot.lane.b32.xlu0 %v4087, 64
      %v4673 = vpop.permute.xlu0 %4672
      %v4676 = vsel %vm741, %v4443, 0
      %4678 = vmatprep.subr.mxu0 0.0
      %4679 = vmatpush1.msra.mxu0 0.0
      %4680 = vmatprep.subr.mxu0 0.0
      %4681 = vmatpush1.msra.mxu0 0.0
      %4682 = vmatprep.subr.mxu0 0.0
      %4683 = vmatpush1.msra.mxu0 0.0
      %4684 = vmatprep.subr.mxu0 0.0
      %4685 = vmatpush1.msra.mxu0 0.0
      %4686 = vmatprep.subr.mxu0 0.0
      %4687 = vmatpush1.msra.mxu0 0.0
      %4688 = vmatprep.subr.mxu0 0.0
      %4689 = vmatpush1.msra.mxu0 0.0
      %4690 = vmatprep.subr.mxu0 0.0
      %4691 = vmatpush1.msra.mxu0 0.0
      %4692 = vmatprep.subr.mxu0 0.0
      %4693 = vmatpush1.msra.mxu0 0.0
      %4694 = vmatprep.subr.mxu0 0.0
      %4695 = vmatpush1.msra.mxu0 0.0
      %4696 = vmatprep.subr.mxu0 0.0
      %4697 = vmatpush1.msra.mxu0 0.0
      %4698 = vmatprep.subr.mxu0 0.0
      %4699 = vmatpush1.msra.mxu0 0.0
      %4700 = vmatprep.subr.mxu0 0.0
      %4701 = vmatpush1.msra.mxu0 0.0
      %4702 = vmatprep.subr.mxu0 0.0
      %4703 = vmatpush1.msra.mxu0 0.0
      %4704 = vmatprep.subr.mxu0 0.0
      %4705 = vmatpush1.msra.mxu0 0.0
      %4706 = vmatprep.subr.mxu0 0.0
      %4707 = vmatpush1.msra.mxu0 0.0
      %4708 = vmatprep.subr.mxu0 0.0
      %4709 = vmatpush1.msra.mxu0 %v4673
      %4710 = vmatprep.subr.mxu0 0.0
      %4711 = vmatpush2.msra.mxu0 0.0
      %4712 = vmatprep.subr.mxu0 0.0
      %4713 = vmatpush2.msra.mxu0 0.0
      %4714 = vmatprep.subr.mxu0 0.0
      %4715 = vmatpush2.msra.mxu0 0.0
      %4716 = vmatprep.subr.mxu0 0.0
      %4717 = vmatpush2.msra.mxu0 0.0
      %4718 = vmatprep.subr.mxu0 0.0
      %4719 = vmatpush2.msra.mxu0 0.0
      %4720 = vmatprep.subr.mxu0 0.0
      %4721 = vmatpush2.msra.mxu0 0.0
      %4722 = vmatprep.subr.mxu0 0.0
      %4723 = vmatpush2.msra.mxu0 0.0
      %4724 = vmatprep.subr.mxu0 0.0
      %4725 = vmatpush2.msra.mxu0 0.0
      %4726 = vmatprep.subr.mxu0 0.0
      %4727 = vmatpush2.msra.mxu0 0.0
      %4728 = vmatprep.subr.mxu0 0.0
      %4729 = vmatpush2.msra.mxu0 0.0
      %4730 = vmatprep.subr.mxu0 0.0
      %4731 = vmatpush2.msra.mxu0 0.0
      %4732 = vmatprep.subr.mxu0 0.0
      %4733 = vmatpush2.msra.mxu0 0.0
      %4734 = vmatprep.subr.mxu0 0.0
      %4735 = vmatpush2.msra.mxu0 0.0
      %4736 = vmatprep.subr.mxu0 0.0
      %4737 = vmatpush2.msra.mxu0 0.0
      %4738 = vmatprep.subr.mxu0 0.0
      %4739 = vmatpush2.msra.mxu0 0.0
      %4740 = vmatprep.subr.mxu0 0.0
      %4741 = vmatpush2.msra.mxu0 0.0
      %4742 = vmatprep.mubr.f32.mxu0 0.0
      %4743 = vmatmul.mubr.f32.gmra.mxu0 %v4676
      %v4744 = vpop.f32.mrf.mxu0
      %v4745 = vadd.f32 0.0, %v4744
      %v4746 = vpop.f32.mrf.mxu0
      %4747 = vdwg.mxu0
      %v4748 = vld [vmem:[%s3779] sm:$0xff]
      %v4749 = vld [vmem:[%s3781] sm:$0xff]
      %v4751 = vsel %vm741, %v4593, 0
      %4753 = vmatprep.subr.mxu0 0.0
      %4754 = vmatpush1.msra.mxu0 0.0
      %4755 = vmatprep.subr.mxu0 0.0
      %4756 = vmatpush1.msra.mxu0 0.0
      %4757 = vmatprep.subr.mxu0 0.0
      %4758 = vmatpush1.msra.mxu0 0.0
      %4759 = vmatprep.subr.mxu0 0.0
      %4760 = vmatpush1.msra.mxu0 0.0
      %4761 = vmatprep.subr.mxu0 0.0
      %4762 = vmatpush1.msra.mxu0 0.0
      %4763 = vmatprep.subr.mxu0 0.0
      %4764 = vmatpush1.msra.mxu0 0.0
      %4765 = vmatprep.subr.mxu0 0.0
      %4766 = vmatpush1.msra.mxu0 0.0
      %4767 = vmatprep.subr.mxu0 0.0
      %4768 = vmatpush1.msra.mxu0 0.0
      %4769 = vmatprep.subr.mxu0 0.0
      %4770 = vmatpush1.msra.mxu0 0.0
      %4771 = vmatprep.subr.mxu0 0.0
      %4772 = vmatpush1.msra.mxu0 0.0
      %4773 = vmatprep.subr.mxu0 0.0
      %4774 = vmatpush1.msra.mxu0 0.0
      %4775 = vmatprep.subr.mxu0 0.0
      %4776 = vmatpush1.msra.mxu0 0.0
      %4777 = vmatprep.subr.mxu0 0.0
      %4778 = vmatpush1.msra.mxu0 0.0
      %4779 = vmatprep.subr.mxu0 0.0
      %4780 = vmatpush1.msra.mxu0 0.0
      %4781 = vmatprep.subr.mxu0 0.0
      %4782 = vmatpush1.msra.mxu0 0.0
      %4783 = vmatprep.subr.mxu0 0.0
      %4784 = vmatpush1.msra.mxu0 %v4749
      %4785 = vmatprep.subr.mxu0 0.0
      %4786 = vmatpush2.msra.mxu0 0.0
      %4787 = vmatprep.subr.mxu0 0.0
      %4788 = vmatpush2.msra.mxu0 0.0
      %4789 = vmatprep.subr.mxu0 0.0
      %4790 = vmatpush2.msra.mxu0 0.0
      %4791 = vmatprep.subr.mxu0 0.0
      %4792 = vmatpush2.msra.mxu0 0.0
      %4793 = vmatprep.subr.mxu0 0.0
      %4794 = vmatpush2.msra.mxu0 0.0
      %4795 = vmatprep.subr.mxu0 0.0
      %4796 = vmatpush2.msra.mxu0 0.0
      %4797 = vmatprep.subr.mxu0 0.0
      %4798 = vmatpush2.msra.mxu0 0.0
      %4799 = vmatprep.subr.mxu0 0.0
      %4800 = vmatpush2.msra.mxu0 0.0
      %4801 = vmatprep.subr.mxu0 0.0
      %4802 = vmatpush2.msra.mxu0 0.0
      %4803 = vmatprep.subr.mxu0 0.0
      %4804 = vmatpush2.msra.mxu0 0.0
      %4805 = vmatprep.subr.mxu0 0.0
      %4806 = vmatpush2.msra.mxu0 0.0
      %4807 = vmatprep.subr.mxu0 0.0
      %4808 = vmatpush2.msra.mxu0 0.0
      %4809 = vmatprep.subr.mxu0 0.0
      %4810 = vmatpush2.msra.mxu0 0.0
      %4811 = vmatprep.subr.mxu0 0.0
      %4812 = vmatpush2.msra.mxu0 0.0
      %4813 = vmatprep.subr.mxu0 0.0
      %4814 = vmatpush2.msra.mxu0 0.0
      %4815 = vmatprep.subr.mxu0 0.0
      %4816 = vmatpush2.msra.mxu0 0.0
      %4817 = vmatprep.mubr.f32.mxu0 0.0
      %4818 = vmatmul.mubr.f32.gmra.mxu0 %v4751
      %v4819 = vpop.f32.mrf.mxu0
      %v4820 = vadd.f32 0.0, %v4819
      %v4821 = vpop.f32.mrf.mxu0
      %4822 = vdwg.mxu0
      %v4824 = vsel %vm741, %v4517, 0
      %4826 = vmatprep.subr.mxu0 0.0
      %4827 = vmatpush1.msra.mxu0 0.0
      %4828 = vmatprep.subr.mxu0 0.0
      %4829 = vmatpush1.msra.mxu0 0.0
      %4830 = vmatprep.subr.mxu0 0.0
      %4831 = vmatpush1.msra.mxu0 0.0
      %4832 = vmatprep.subr.mxu0 0.0
      %4833 = vmatpush1.msra.mxu0 0.0
      %4834 = vmatprep.subr.mxu0 0.0
      %4835 = vmatpush1.msra.mxu0 0.0
      %4836 = vmatprep.subr.mxu0 0.0
      %4837 = vmatpush1.msra.mxu0 0.0
      %4838 = vmatprep.subr.mxu0 0.0
      %4839 = vmatpush1.msra.mxu0 0.0
      %4840 = vmatprep.subr.mxu0 0.0
      %4841 = vmatpush1.msra.mxu0 0.0
      %4842 = vmatprep.subr.mxu0 0.0
      %4843 = vmatpush1.msra.mxu0 0.0
      %4844 = vmatprep.subr.mxu0 0.0
      %4845 = vmatpush1.msra.mxu0 0.0
      %4846 = vmatprep.subr.mxu0 0.0
      %4847 = vmatpush1.msra.mxu0 0.0
      %4848 = vmatprep.subr.mxu0 0.0
      %4849 = vmatpush1.msra.mxu0 0.0
      %4850 = vmatprep.subr.mxu0 0.0
      %4851 = vmatpush1.msra.mxu0 0.0
      %4852 = vmatprep.subr.mxu0 0.0
      %4853 = vmatpush1.msra.mxu0 0.0
      %4854 = vmatprep.subr.mxu0 0.0
      %4855 = vmatpush1.msra.mxu0 0.0
      %4856 = vmatprep.subr.mxu0 0.0
      %4857 = vmatpush1.msra.mxu0 %v4748
      %4858 = vmatprep.subr.mxu0 0.0
      %4859 = vmatpush2.msra.mxu0 0.0
      %4860 = vmatprep.subr.mxu0 0.0
      %4861 = vmatpush2.msra.mxu0 0.0
      %4862 = vmatprep.subr.mxu0 0.0
      %4863 = vmatpush2.msra.mxu0 0.0
      %4864 = vmatprep.subr.mxu0 0.0
      %4865 = vmatpush2.msra.mxu0 0.0
      %4866 = vmatprep.subr.mxu0 0.0
      %4867 = vmatpush2.msra.mxu0 0.0
      %4868 = vmatprep.subr.mxu0 0.0
      %4869 = vmatpush2.msra.mxu0 0.0
      %4870 = vmatprep.subr.mxu0 0.0
      %4871 = vmatpush2.msra.mxu0 0.0
      %4872 = vmatprep.subr.mxu0 0.0
      %4873 = vmatpush2.msra.mxu0 0.0
      %4874 = vmatprep.subr.mxu0 0.0
      %4875 = vmatpush2.msra.mxu0 0.0
      %4876 = vmatprep.subr.mxu0 0.0
      %4877 = vmatpush2.msra.mxu0 0.0
      %4878 = vmatprep.subr.mxu0 0.0
      %4879 = vmatpush2.msra.mxu0 0.0
      %4880 = vmatprep.subr.mxu0 0.0
      %4881 = vmatpush2.msra.mxu0 0.0
      %4882 = vmatprep.subr.mxu0 0.0
      %4883 = vmatpush2.msra.mxu0 0.0
      %4884 = vmatprep.subr.mxu0 0.0
      %4885 = vmatpush2.msra.mxu0 0.0
      %4886 = vmatprep.subr.mxu0 0.0
      %4887 = vmatpush2.msra.mxu0 0.0
      %4888 = vmatprep.subr.mxu0 0.0
      %4889 = vmatpush2.msra.mxu0 0.0
      %4890 = vmatprep.mubr.f32.mxu0 0.0
      %4891 = vmatmul.mubr.f32.gmra.mxu0 %v4824
      %v4892 = vpop.f32.mrf.mxu0
      %v4893 = vadd.f32 %v4820, %v4892
      %v4894 = vpop.f32.mrf.mxu0
      %4895 = vdwg.mxu0
      %v4896 = vld [vmem:[%s3929] sm:$0xff]
      %v4898 = vsel %vm741, %v4669, 0
      %4900 = vmatprep.subr.mxu0 0.0
      %4901 = vmatpush1.msra.mxu0 0.0
      %4902 = vmatprep.subr.mxu0 0.0
      %4903 = vmatpush1.msra.mxu0 0.0
      %4904 = vmatprep.subr.mxu0 0.0
      %4905 = vmatpush1.msra.mxu0 0.0
      %4906 = vmatprep.subr.mxu0 0.0
      %4907 = vmatpush1.msra.mxu0 0.0
      %4908 = vmatprep.subr.mxu0 0.0
      %4909 = vmatpush1.msra.mxu0 0.0
      %4910 = vmatprep.subr.mxu0 0.0
      %4911 = vmatpush1.msra.mxu0 0.0
      %4912 = vmatprep.subr.mxu0 0.0
      %4913 = vmatpush1.msra.mxu0 0.0
      %4914 = vmatprep.subr.mxu0 0.0
      %4915 = vmatpush1.msra.mxu0 0.0
      %4916 = vmatprep.subr.mxu0 0.0
      %4917 = vmatpush1.msra.mxu0 0.0
      %4918 = vmatprep.subr.mxu0 0.0
      %4919 = vmatpush1.msra.mxu0 0.0
      %4920 = vmatprep.subr.mxu0 0.0
      %4921 = vmatpush1.msra.mxu0 0.0
      %4922 = vmatprep.subr.mxu0 0.0
      %4923 = vmatpush1.msra.mxu0 0.0
      %4924 = vmatprep.subr.mxu0 0.0
      %4925 = vmatpush1.msra.mxu0 0.0
      %4926 = vmatprep.subr.mxu0 0.0
      %4927 = vmatpush1.msra.mxu0 0.0
      %4928 = vmatprep.subr.mxu0 0.0
      %4929 = vmatpush1.msra.mxu0 0.0
      %4930 = vmatprep.subr.mxu0 0.0
      %4931 = vmatpush1.msra.mxu0 %v4896
      %4932 = vmatprep.subr.mxu0 0.0
      %4933 = vmatpush2.msra.mxu0 0.0
      %4934 = vmatprep.subr.mxu0 0.0
      %4935 = vmatpush2.msra.mxu0 0.0
      %4936 = vmatprep.subr.mxu0 0.0
      %4937 = vmatpush2.msra.mxu0 0.0
      %4938 = vmatprep.subr.mxu0 0.0
      %4939 = vmatpush2.msra.mxu0 0.0
      %4940 = vmatprep.subr.mxu0 0.0
      %4941 = vmatpush2.msra.mxu0 0.0
      %4942 = vmatprep.subr.mxu0 0.0
      %4943 = vmatpush2.msra.mxu0 0.0
      %4944 = vmatprep.subr.mxu0 0.0
      %4945 = vmatpush2.msra.mxu0 0.0
      %4946 = vmatprep.subr.mxu0 0.0
      %4947 = vmatpush2.msra.mxu0 0.0
      %4948 = vmatprep.subr.mxu0 0.0
      %4949 = vmatpush2.msra.mxu0 0.0
      %4950 = vmatprep.subr.mxu0 0.0
      %4951 = vmatpush2.msra.mxu0 0.0
      %4952 = vmatprep.subr.mxu0 0.0
      %4953 = vmatpush2.msra.mxu0 0.0
      %4954 = vmatprep.subr.mxu0 0.0
      %4955 = vmatpush2.msra.mxu0 0.0
      %4956 = vmatprep.subr.mxu0 0.0
      %4957 = vmatpush2.msra.mxu0 0.0
      %4958 = vmatprep.subr.mxu0 0.0
      %4959 = vmatpush2.msra.mxu0 0.0
      %4960 = vmatprep.subr.mxu0 0.0
      %4961 = vmatpush2.msra.mxu0 0.0
      %4962 = vmatprep.subr.mxu0 0.0
      %4963 = vmatpush2.msra.mxu0 0.0
      %4964 = vmatprep.mubr.f32.mxu0 0.0
      %4965 = vmatmul.mubr.f32.gmra.mxu0 %v4898
      %v4966 = vpop.f32.mrf.mxu0
      %v4967 = vadd.f32 0.0, %v4966
      %v4968 = vpop.f32.mrf.mxu0
      %4969 = vdwg.mxu0
      %v4970 = vadd.f32 %v4893, %v4967
      %v4971 = vld [vmem:[%s4005] sm:$0xff]
      %v4973 = vsel %vm741, %v4745, 0
      %4975 = vmatprep.subr.mxu0 0.0
      %4976 = vmatpush1.msra.mxu0 0.0
      %4977 = vmatprep.subr.mxu0 0.0
      %4978 = vmatpush1.msra.mxu0 0.0
      %4979 = vmatprep.subr.mxu0 0.0
      %4980 = vmatpush1.msra.mxu0 0.0
      %4981 = vmatprep.subr.mxu0 0.0
      %4982 = vmatpush1.msra.mxu0 0.0
      %4983 = vmatprep.subr.mxu0 0.0
      %4984 = vmatpush1.msra.mxu0 0.0
      %4985 = vmatprep.subr.mxu0 0.0
      %4986 = vmatpush1.msra.mxu0 0.0
      %4987 = vmatprep.subr.mxu0 0.0
      %4988 = vmatpush1.msra.mxu0 0.0
      %4989 = vmatprep.subr.mxu0 0.0
      %4990 = vmatpush1.msra.mxu0 0.0
      %4991 = vmatprep.subr.mxu0 0.0
      %4992 = vmatpush1.msra.mxu0 0.0
      %4993 = vmatprep.subr.mxu0 0.0
      %4994 = vmatpush1.msra.mxu0 0.0
      %4995 = vmatprep.subr.mxu0 0.0
      %4996 = vmatpush1.msra.mxu0 0.0
      %4997 = vmatprep.subr.mxu0 0.0
      %4998 = vmatpush1.msra.mxu0 0.0
      %4999 = vmatprep.subr.mxu0 0.0
      %5000 = vmatpush1.msra.mxu0 0.0
      %5001 = vmatprep.subr.mxu0 0.0
      %5002 = vmatpush1.msra.mxu0 0.0
      %5003 = vmatprep.subr.mxu0 0.0
      %5004 = vmatpush1.msra.mxu0 0.0
      %5005 = vmatprep.subr.mxu0 0.0
      %5006 = vmatpush1.msra.mxu0 %v4971
      %5007 = vmatprep.subr.mxu0 0.0
      %5008 = vmatpush2.msra.mxu0 0.0
      %5009 = vmatprep.subr.mxu0 0.0
      %5010 = vmatpush2.msra.mxu0 0.0
      %5011 = vmatprep.subr.mxu0 0.0
      %5012 = vmatpush2.msra.mxu0 0.0
      %5013 = vmatprep.subr.mxu0 0.0
      %5014 = vmatpush2.msra.mxu0 0.0
      %5015 = vmatprep.subr.mxu0 0.0
      %5016 = vmatpush2.msra.mxu0 0.0
      %5017 = vmatprep.subr.mxu0 0.0
      %5018 = vmatpush2.msra.mxu0 0.0
      %5019 = vmatprep.subr.mxu0 0.0
      %5020 = vmatpush2.msra.mxu0 0.0
      %5021 = vmatprep.subr.mxu0 0.0
      %5022 = vmatpush2.msra.mxu0 0.0
      %5023 = vmatprep.subr.mxu0 0.0
      %5024 = vmatpush2.msra.mxu0 0.0
      %5025 = vmatprep.subr.mxu0 0.0
      %5026 = vmatpush2.msra.mxu0 0.0
      %5027 = vmatprep.subr.mxu0 0.0
      %5028 = vmatpush2.msra.mxu0 0.0
      %5029 = vmatprep.subr.mxu0 0.0
      %5030 = vmatpush2.msra.mxu0 0.0
      %5031 = vmatprep.subr.mxu0 0.0
      %5032 = vmatpush2.msra.mxu0 0.0
      %5033 = vmatprep.subr.mxu0 0.0
      %5034 = vmatpush2.msra.mxu0 0.0
      %5035 = vmatprep.subr.mxu0 0.0
      %5036 = vmatpush2.msra.mxu0 0.0
      %5037 = vmatprep.subr.mxu0 0.0
      %5038 = vmatpush2.msra.mxu0 0.0
      %5039 = vmatprep.mubr.f32.mxu0 0.0
      %5040 = vmatmul.mubr.f32.gmra.mxu0 %v4973
      %v5041 = vpop.f32.mrf.mxu0
      %v5042 = vadd.f32 0.0, %v5041
      %v5043 = vpop.f32.mrf.mxu0
      %5044 = vdwg.mxu0
      %v5045 = vadd.f32 %v4970, %v5042
      %s5046 = scalar_lea.vmem %s7, 1
      %v5047 = vld [vmem:[%s5046] sm:$0x1]
      %v5049 = vlaneseq
      %v5050 = vshrl.u32 %v5049, 7
      %v5051 = vsub.s32 0, %v5050
      %v5052 = vrot.slane %v5047, %v5051
      %v5054 = vadd.f32 %v4080, %v5052
      %v5055 = vadd.f32 %v5045, %v5052
      %v5056 = vadd.f32 %v5054, %v3016
      %v5057 = vadd.f32 %v5055, %v3017
      %s5058 = scalar_lea.vmem %s8, 1
      %v5059 = vld [vmem:[%s5058] sm:$0x1]
      %s5060 = scalar_lea.vmem %s9, 1
      %v5061 = vld [vmem:[%s5060] sm:$0x1]
      %v5062 = vsel %vm596, %v5056, 0.0
      %5063 = vadd.xlane.f32.xlu0 %v5062
      %v5064 = vpop.xlane.xlu0 %5063
      %v5065 = vsel %vm596, %v5057, 0.0
      %5066 = vadd.xlane.f32.xlu0 %v5065
      %v5067 = vpop.xlane.xlu0 %5066
      %v5068 = vmul.f32 %v5064, %v603
      %v5069 = vmul.f32 %v5067, %v603
      %v5070 = vsub.f32 %v5056, %v5068
      %v5071 = vsub.f32 %v5057, %v5069
      %v5072 = vmul.f32 %v5070, %v5070
      %v5073 = vmul.f32 %v5071, %v5071
      %v5074 = vsel %vm596, %v5072, 0.0
      %5075 = vadd.xlane.f32.xlu0 %v5074
      %v5076 = vpop.xlane.xlu0 %5075
      %v5077 = vsel %vm596, %v5073, 0.0
      %5078 = vadd.xlane.f32.xlu0 %v5077
      %v5079 = vpop.xlane.xlu0 %5078
      %v5080 = vmul.f32 %v5076, %v603
      %v5081 = vmul.f32 %v5079, %v603
      %v5082 = vadd.f32 %v5080, 1e-12
      %v5083 = vadd.f32 %v5081, 1e-12
      %v5084 = vrsqrt.pop %v5082
      %v5085 = vrsqrt.pop %v5083
      %v5086 = vmul.f32 %v5070, %v5084
      %v5087 = vmul.f32 %v5071, %v5085
      %v5089 = vlaneseq
      %v5090 = vshrl.u32 %v5089, 7
      %v5091 = vsub.s32 0, %v5090
      %v5092 = vrot.slane %v5059, %v5091
      %v5094 = vmul.f32 %v5086, %v5092
      %v5095 = vmul.f32 %v5087, %v5092
      %v5097 = vlaneseq
      %v5098 = vshrl.u32 %v5097, 7
      %v5099 = vsub.s32 0, %v5098
      %v5100 = vrot.slane %v5061, %v5099
      %v5102 = vadd.f32 %v5094, %v5100
      %v5103 = vadd.f32 %v5095, %v5100
      %s5104 = scalar_lea.vmem %s10, 32
      %v5105 = vld [vmem:[%s5104] sm:$0xff]
      %v5106 = vld [vmem:[%s5104 + $0x8] sm:$0xff]
      %v5107 = vld [vmem:[%s5104 + $0x10] sm:$0xff]
      %v5108 = vld [vmem:[%s5104 + $0x18] sm:$0xff]
      %s5109 = scalar_lea.vmem %s11, 1
      %v5110 = vld [vmem:[%s5109] sm:$0x1]
      %v5112 = vlaneseq
      %v5113 = vshrl.u32 %v5112, 7
      %v5114 = vsub.s32 0, %v5113
      %v5115 = vrot.slane %v5110, %v5114
      %v5118 = vsel %vm596, %v5102, 0
      %v5121 = vsel %vm596, %v5103, 0
      %5123 = vmatprep.subr.mxu0 0.0
      %5124 = vmatpush1.msra.mxu0 0.0
      %5125 = vmatprep.subr.mxu0 0.0
      %5126 = vmatpush1.msra.mxu0 0.0
      %5127 = vmatprep.subr.mxu0 0.0
      %5128 = vmatpush1.msra.mxu0 0.0
      %5129 = vmatprep.subr.mxu0 0.0
      %5130 = vmatpush1.msra.mxu0 0.0
      %5131 = vmatprep.subr.mxu0 0.0
      %5132 = vmatpush1.msra.mxu0 0.0
      %5133 = vmatprep.subr.mxu0 0.0
      %5134 = vmatpush1.msra.mxu0 0.0
      %5135 = vmatprep.subr.mxu0 0.0
      %5136 = vmatpush1.msra.mxu0 0.0
      %5137 = vmatprep.subr.mxu0 0.0
      %5138 = vmatpush1.msra.mxu0 0.0
      %5139 = vmatprep.subr.mxu0 0.0
      %5140 = vmatpush1.msra.mxu0 0.0
      %5141 = vmatprep.subr.mxu0 0.0
      %5142 = vmatpush1.msra.mxu0 0.0
      %5143 = vmatprep.subr.mxu0 0.0
      %5144 = vmatpush1.msra.mxu0 0.0
      %5145 = vmatprep.subr.mxu0 0.0
      %5146 = vmatpush1.msra.mxu0 0.0
      %5147 = vmatprep.subr.mxu0 0.0
      %5148 = vmatpush1.msra.mxu0 %v5108
      %5149 = vmatprep.subr.mxu0 0.0
      %5150 = vmatpush1.msra.mxu0 %v5107
      %5151 = vmatprep.subr.mxu0 0.0
      %5152 = vmatpush1.msra.mxu0 %v5106
      %5153 = vmatprep.subr.mxu0 0.0
      %5154 = vmatpush1.msra.mxu0 %v5105
      %5155 = vmatprep.subr.mxu0 0.0
      %5156 = vmatpush2.msra.mxu0 0.0
      %5157 = vmatprep.subr.mxu0 0.0
      %5158 = vmatpush2.msra.mxu0 0.0
      %5159 = vmatprep.subr.mxu0 0.0
      %5160 = vmatpush2.msra.mxu0 0.0
      %5161 = vmatprep.subr.mxu0 0.0
      %5162 = vmatpush2.msra.mxu0 0.0
      %5163 = vmatprep.subr.mxu0 0.0
      %5164 = vmatpush2.msra.mxu0 0.0
      %5165 = vmatprep.subr.mxu0 0.0
      %5166 = vmatpush2.msra.mxu0 0.0
      %5167 = vmatprep.subr.mxu0 0.0
      %5168 = vmatpush2.msra.mxu0 0.0
      %5169 = vmatprep.subr.mxu0 0.0
      %5170 = vmatpush2.msra.mxu0 0.0
      %5171 = vmatprep.subr.mxu0 0.0
      %5172 = vmatpush2.msra.mxu0 0.0
      %5173 = vmatprep.subr.mxu0 0.0
      %5174 = vmatpush2.msra.mxu0 0.0
      %5175 = vmatprep.subr.mxu0 0.0
      %5176 = vmatpush2.msra.mxu0 0.0
      %5177 = vmatprep.subr.mxu0 0.0
      %5178 = vmatpush2.msra.mxu0 0.0
      %5179 = vmatprep.subr.mxu0 0.0
      %5180 = vmatpush2.msra.mxu0 0.0
      %5181 = vmatprep.subr.mxu0 0.0
      %5182 = vmatpush2.msra.mxu0 0.0
      %5183 = vmatprep.subr.mxu0 0.0
      %5184 = vmatpush2.msra.mxu0 0.0
      %5185 = vmatprep.subr.mxu0 0.0
      %5186 = vmatpush2.msra.mxu0 0.0
      %5187 = vmatprep.mubr.f32.mxu0 0.0
      %5188 = vmatmul.mubr.f32.gmra.mxu0 %v5118
      %v5189 = vpop.f32.mrf.mxu0
      %v5190 = vadd.f32 %v5115, %v5189
      %v5191 = vpop.f32.mrf.mxu0
      %5192 = vmatprep.mubr.f32.mxu0 0.0
      %5193 = vmatmul.mubr.f32.gmra.mxu0 %v5121
      %v5194 = vpop.f32.mrf.mxu0
      %v5195 = vadd.f32 %v5115, %v5194
      %v5196 = vpop.f32.mrf.mxu0
      %5197 = vdwg.mxu0
      %v5198 = vmul.f32 %v5190, 0.5
      %v5199 = vmul.f32 %v5195, 0.5
      %v5200 = vmul.f32 %v5190, 0.70710677
      %v5201 = vmul.f32 %v5195, 0.70710677
      %vm5202 = vcmp.ge.f32.partialorder %v5200, 0.0
      %vm5203 = vcmp.ge.f32.partialorder %v5201, 0.0
      %v5204 = vsel %vm5202, 1.0, -1.0
      %v5205 = vsel %vm5203, 1.0, -1.0
      %v5206 = vand.u32 2147483647, %v5200
      %v5207 = vand.u32 2147483647, %v5201
      %v5208 = vmul.f32 %v5206, 0.3275911
      %v5209 = vmul.f32 %v5207, 0.3275911
      %v5210 = vadd.f32 %v5208, 1.0
      %v5211 = vadd.f32 %v5209, 1.0
      %v5212 = vrcp.pop %v5210
      %v5213 = vmul.f32 1.0, %v5212
      %v5214 = vrcp.pop %v5211
      %v5215 = vmul.f32 1.0, %v5214
      %v5216 = vmul.f32 %v5213, 1.0614054
      %v5217 = vmul.f32 %v5215, 1.0614054
      %v5218 = vadd.f32 %v5216, -1.4531521
      %v5219 = vadd.f32 %v5217, -1.4531521
      %v5220 = vmul.f32 %v5218, %v5213
      %v5221 = vmul.f32 %v5219, %v5215
      %v5222 = vadd.f32 %v5220, 1.4214138
      %v5223 = vadd.f32 %v5221, 1.4214138
      %v5224 = vmul.f32 %v5222, %v5213
      %v5225 = vmul.f32 %v5223, %v5215
      %v5226 = vadd.f32 %v5224, -0.28449672
      %v5227 = vadd.f32 %v5225, -0.28449672
      %v5228 = vmul.f32 %v5226, %v5213
      %v5229 = vmul.f32 %v5227, %v5215
      %v5230 = vadd.f32 %v5228, 0.2548296
      %v5231 = vadd.f32 %v5229, 0.2548296
      %v5232 = vmul.f32 %v5230, %v5213
      %v5233 = vmul.f32 %v5231, %v5215
      %v5234 = vsub.f32 0.0, %v5206
      %v5235 = vsub.f32 0.0, %v5207
      %v5236 = vmul.f32 %v5234, %v5206
      %v5237 = vmul.f32 %v5235, %v5207
      %v5238 = vmul.f32 %v5236, 1.442695
      %v5239 = vpow.pop %v5238
      %v5240 = vmul.f32 %v5237, 1.442695
      %v5241 = vpow.pop %v5240
      %v5242 = vmul.f32 %v5232, %v5239
      %v5243 = vmul.f32 %v5233, %v5241
      %v5244 = vsub.f32 1.0, %v5242
      %v5245 = vsub.f32 1.0, %v5243
      %v5246 = vmul.f32 %v5204, %v5244
      %v5247 = vmul.f32 %v5205, %v5245
      %v5248 = vadd.f32 %v5246, 1.0
      %v5249 = vadd.f32 %v5247, 1.0
      %v5250 = vmul.f32 %v5198, %v5248
      %v5251 = vmul.f32 %v5199, %v5249
      %s5252 = scalar_lea.vmem %s12, 64
      %v5253 = vld [vmem:[%s5252] sm:$0xff]
      %v5254 = vld [vmem:[%s5252 + $0x8] sm:$0xff]
      %v5255 = vld [vmem:[%s5252 + $0x10] sm:$0xff]
      %v5256 = vld [vmem:[%s5252 + $0x18] sm:$0xff]
      %v5257 = vld [vmem:[%s5252 + $0x20] sm:$0xff]
      %v5258 = vld [vmem:[%s5252 + $0x28] sm:$0xff]
      %v5259 = vld [vmem:[%s5252 + $0x30] sm:$0xff]
      %v5260 = vld [vmem:[%s5252 + $0x38] sm:$0xff]
      %s5261 = scalar_lea.vmem %s13, 1
      %v5262 = vld [vmem:[%s5261] sm:$0x1]
      %v5264 = vlaneseq
      %v5265 = vshrl.u32 %v5264, 7
      %v5266 = vsub.s32 0, %v5265
      %v5267 = vrot.slane %v5262, %v5266
      %v5270 = vsel %vm2890, %v5250, 0
      %v5273 = vsel %vm2890, %v5251, 0
      %5275 = vmatprep.subr.mxu0 0.0
      %5276 = vmatpush1.msra.mxu0 0.0
      %5277 = vmatprep.subr.mxu0 0.0
      %5278 = vmatpush1.msra.mxu0 0.0
      %5279 = vmatprep.subr.mxu0 0.0
      %5280 = vmatpush1.msra.mxu0 0.0
      %5281 = vmatprep.subr.mxu0 0.0
      %5282 = vmatpush1.msra.mxu0 0.0
      %5283 = vmatprep.subr.mxu0 0.0
      %5284 = vmatpush1.msra.mxu0 0.0
      %5285 = vmatprep.subr.mxu0 0.0
      %5286 = vmatpush1.msra.mxu0 0.0
      %5287 = vmatprep.subr.mxu0 0.0
      %5288 = vmatpush1.msra.mxu0 0.0
      %5289 = vmatprep.subr.mxu0 0.0
      %5290 = vmatpush1.msra.mxu0 0.0
      %5291 = vmatprep.subr.mxu0 0.0
      %5292 = vmatpush1.msra.mxu0 %v5260
      %5293 = vmatprep.subr.mxu0 0.0
      %5294 = vmatpush1.msra.mxu0 %v5259
      %5295 = vmatprep.subr.mxu0 0.0
      %5296 = vmatpush1.msra.mxu0 %v5258
      %5297 = vmatprep.subr.mxu0 0.0
      %5298 = vmatpush1.msra.mxu0 %v5257
      %5299 = vmatprep.subr.mxu0 0.0
      %5300 = vmatpush1.msra.mxu0 %v5256
      %5301 = vmatprep.subr.mxu0 0.0
      %5302 = vmatpush1.msra.mxu0 %v5255
      %5303 = vmatprep.subr.mxu0 0.0
      %5304 = vmatpush1.msra.mxu0 %v5254
      %5305 = vmatprep.subr.mxu0 0.0
      %5306 = vmatpush1.msra.mxu0 %v5253
      %5307 = vmatprep.subr.mxu0 0.0
      %5308 = vmatpush2.msra.mxu0 0.0
      %5309 = vmatprep.subr.mxu0 0.0
      %5310 = vmatpush2.msra.mxu0 0.0
      %5311 = vmatprep.subr.mxu0 0.0
      %5312 = vmatpush2.msra.mxu0 0.0
      %5313 = vmatprep.subr.mxu0 0.0
      %5314 = vmatpush2.msra.mxu0 0.0
      %5315 = vmatprep.subr.mxu0 0.0
      %5316 = vmatpush2.msra.mxu0 0.0
      %5317 = vmatprep.subr.mxu0 0.0
      %5318 = vmatpush2.msra.mxu0 0.0
      %5319 = vmatprep.subr.mxu0 0.0
      %5320 = vmatpush2.msra.mxu0 0.0
      %5321 = vmatprep.subr.mxu0 0.0
      %5322 = vmatpush2.msra.mxu0 0.0
      %5323 = vmatprep.subr.mxu0 0.0
      %5324 = vmatpush2.msra.mxu0 0.0
      %5325 = vmatprep.subr.mxu0 0.0
      %5326 = vmatpush2.msra.mxu0 0.0
      %5327 = vmatprep.subr.mxu0 0.0
      %5328 = vmatpush2.msra.mxu0 0.0
      %5329 = vmatprep.subr.mxu0 0.0
      %5330 = vmatpush2.msra.mxu0 0.0
      %5331 = vmatprep.subr.mxu0 0.0
      %5332 = vmatpush2.msra.mxu0 0.0
      %5333 = vmatprep.subr.mxu0 0.0
      %5334 = vmatpush2.msra.mxu0 0.0
      %5335 = vmatprep.subr.mxu0 0.0
      %5336 = vmatpush2.msra.mxu0 0.0
      %5337 = vmatprep.subr.mxu0 0.0
      %5338 = vmatpush2.msra.mxu0 0.0
      %5339 = vmatprep.mubr.f32.mxu0 0.0
      %5340 = vmatmul.mubr.f32.gmra.mxu0 %v5270
      %v5341 = vpop.f32.mrf.mxu0
      %v5342 = vadd.f32 %v5267, %v5341
      %v5343 = vpop.f32.mrf.mxu0
      %5344 = vmatprep.mubr.f32.mxu0 0.0
      %5345 = vmatmul.mubr.f32.gmra.mxu0 %v5273
      %v5346 = vpop.f32.mrf.mxu0
      %v5347 = vadd.f32 %v5267, %v5346
      %v5348 = vpop.f32.mrf.mxu0
      %5349 = vdwg.mxu0
      %v5350 = vadd.f32 %v5342, %v5102
      %v5351 = vadd.f32 %v5347, %v5103
      %s5352 = scalar_lea.vmem %s14, 1
      %v5353 = vld [vmem:[%s5352] sm:$0x1]
      %s5354 = scalar_lea.vmem %s15, 1
      %v5355 = vld [vmem:[%s5354] sm:$0x1]
      %v5356 = vsel %vm596, %v5350, 0.0
      %5357 = vadd.xlane.f32.xlu0 %v5356
      %v5358 = vpop.xlane.xlu0 %5357
      %v5359 = vsel %vm596, %v5351, 0.0
      %5360 = vadd.xlane.f32.xlu0 %v5359
      %v5361 = vpop.xlane.xlu0 %5360
      %v5362 = vmul.f32 %v5358, %v603
      %v5363 = vmul.f32 %v5361, %v603
      %v5364 = vsub.f32 %v5350, %v5362
      %v5365 = vsub.f32 %v5351, %v5363
      %v5366 = vmul.f32 %v5364, %v5364
      %v5367 = vmul.f32 %v5365, %v5365
      %v5368 = vsel %vm596, %v5366, 0.0
      %5369 = vadd.xlane.f32.xlu0 %v5368
      %v5370 = vpop.xlane.xlu0 %5369
      %v5371 = vsel %vm596, %v5367, 0.0
      %5372 = vadd.xlane.f32.xlu0 %v5371
      %v5373 = vpop.xlane.xlu0 %5372
      %v5374 = vmul.f32 %v5370, %v603
      %v5375 = vmul.f32 %v5373, %v603
      %v5376 = vadd.f32 %v5374, 1e-12
      %v5377 = vadd.f32 %v5375, 1e-12
      %v5378 = vrsqrt.pop %v5376
      %v5379 = vrsqrt.pop %v5377
      %v5380 = vmul.f32 %v5364, %v5378
      %v5381 = vmul.f32 %v5365, %v5379
      %v5383 = vlaneseq
      %v5384 = vshrl.u32 %v5383, 7
      %v5385 = vsub.s32 0, %v5384
      %v5386 = vrot.slane %v5353, %v5385
      %v5388 = vmul.f32 %v5380, %v5386
      %v5389 = vmul.f32 %v5381, %v5386
      %v5391 = vlaneseq
      %v5392 = vshrl.u32 %v5391, 7
      %v5393 = vsub.s32 0, %v5392
      %v5394 = vrot.slane %v5355, %v5393
      %v5396 = vadd.f32 %v5388, %v5394
      %v5397 = vadd.f32 %v5389, %v5394
      %s5398 = scalar_lea.vmem %s4, 64
      %v5399 = vld [vmem:[%s5398] sm:$0xff]
      %v5400 = vld [vmem:[%s5398 + $0x8] sm:$0xff]
      %v5401 = vld [vmem:[%s5398 + $0x10] sm:$0xff]
      %v5402 = vld [vmem:[%s5398 + $0x18] sm:$0xff]
      %s5403 = scalar_lea.vmem %s5, 2
      %v5404 = vld [vmem:[%s5403] sm:$0x1]
      %v5406 = vlaneseq
      %v5407 = vshrl.u32 %v5406, 7
      %v5408 = vsub.s32 0, %v5407
      %v5409 = vrot.slane %v5404, %v5408
      %v5412 = vsel %vm596, %v5396, 0
      %v5415 = vsel %vm596, %v5397, 0
      %5417 = vmatprep.subr.mxu0 0.0
      %5418 = vmatpush1.msra.mxu0 0.0
      %5419 = vmatprep.subr.mxu0 0.0
      %5420 = vmatpush1.msra.mxu0 0.0
      %5421 = vmatprep.subr.mxu0 0.0
      %5422 = vmatpush1.msra.mxu0 0.0
      %5423 = vmatprep.subr.mxu0 0.0
      %5424 = vmatpush1.msra.mxu0 0.0
      %5425 = vmatprep.subr.mxu0 0.0
      %5426 = vmatpush1.msra.mxu0 0.0
      %5427 = vmatprep.subr.mxu0 0.0
      %5428 = vmatpush1.msra.mxu0 0.0
      %5429 = vmatprep.subr.mxu0 0.0
      %5430 = vmatpush1.msra.mxu0 0.0
      %5431 = vmatprep.subr.mxu0 0.0
      %5432 = vmatpush1.msra.mxu0 0.0
      %5433 = vmatprep.subr.mxu0 0.0
      %5434 = vmatpush1.msra.mxu0 0.0
      %5435 = vmatprep.subr.mxu0 0.0
      %5436 = vmatpush1.msra.mxu0 0.0
      %5437 = vmatprep.subr.mxu0 0.0
      %5438 = vmatpush1.msra.mxu0 0.0
      %5439 = vmatprep.subr.mxu0 0.0
      %5440 = vmatpush1.msra.mxu0 0.0
      %5441 = vmatprep.subr.mxu0 0.0
      %5442 = vmatpush1.msra.mxu0 %v5402
      %5443 = vmatprep.subr.mxu0 0.0
      %5444 = vmatpush1.msra.mxu0 %v5401
      %5445 = vmatprep.subr.mxu0 0.0
      %5446 = vmatpush1.msra.mxu0 %v5400
      %5447 = vmatprep.subr.mxu0 0.0
      %5448 = vmatpush1.msra.mxu0 %v5399
      %5449 = vmatprep.subr.mxu0 0.0
      %5450 = vmatpush2.msra.mxu0 0.0
      %5451 = vmatprep.subr.mxu0 0.0
      %5452 = vmatpush2.msra.mxu0 0.0
      %5453 = vmatprep.subr.mxu0 0.0
      %5454 = vmatpush2.msra.mxu0 0.0
      %5455 = vmatprep.subr.mxu0 0.0
      %5456 = vmatpush2.msra.mxu0 0.0
      %5457 = vmatprep.subr.mxu0 0.0
      %5458 = vmatpush2.msra.mxu0 0.0
      %5459 = vmatprep.subr.mxu0 0.0
      %5460 = vmatpush2.msra.mxu0 0.0
      %5461 = vmatprep.subr.mxu0 0.0
      %5462 = vmatpush2.msra.mxu0 0.0
      %5463 = vmatprep.subr.mxu0 0.0
      %5464 = vmatpush2.msra.mxu0 0.0
      %5465 = vmatprep.subr.mxu0 0.0
      %5466 = vmatpush2.msra.mxu0 0.0
      %5467 = vmatprep.subr.mxu0 0.0
      %5468 = vmatpush2.msra.mxu0 0.0
      %5469 = vmatprep.subr.mxu0 0.0
      %5470 = vmatpush2.msra.mxu0 0.0
      %5471 = vmatprep.subr.mxu0 0.0
      %5472 = vmatpush2.msra.mxu0 0.0
      %5473 = vmatprep.subr.mxu0 0.0
      %5474 = vmatpush2.msra.mxu0 0.0
      %5475 = vmatprep.subr.mxu0 0.0
      %5476 = vmatpush2.msra.mxu0 0.0
      %5477 = vmatprep.subr.mxu0 0.0
      %5478 = vmatpush2.msra.mxu0 0.0
      %5479 = vmatprep.subr.mxu0 0.0
      %5480 = vmatpush2.msra.mxu0 0.0
      %5481 = vmatprep.mubr.f32.mxu0 0.0
      %5482 = vmatmul.mubr.f32.gmra.mxu0 %v5412
      %v5483 = vpop.f32.mrf.mxu0
      %v5484 = vadd.f32 %v5409, %v5483
      %v5485 = vpop.f32.mrf.mxu0
      %5486 = vmatprep.mubr.f32.mxu0 0.0
      %5487 = vmatmul.mubr.f32.gmra.mxu0 %v5415
      %v5488 = vpop.f32.mrf.mxu0
      %v5489 = vadd.f32 %v5409, %v5488
      %v5490 = vpop.f32.mrf.mxu0
      %5491 = vdwg.mxu0
      %5493 = vrot.lane.b32.xlu0 %v5484, 120
      %v5494 = vpop.permute.xlu0 %5493
      %5495 = vrot.lane.b32.xlu0 %v5484, 112
      %v5496 = vpop.permute.xlu0 %5495
      %5497 = vrot.lane.b32.xlu0 %v5484, 104
      %v5498 = vpop.permute.xlu0 %5497
      %5499 = vrot.lane.b32.xlu0 %v5484, 96
      %v5500 = vpop.permute.xlu0 %5499
      %v5501 = vsel %vm741, %v5484, 0
      %v5503 = vsel %vm741, %v5500, 0
      %5505 = vmatprep.subr.mxu0 0.0
      %5506 = vmatpush1.xpose.msra.mxu0 0.0
      %5507 = vmatprep.subr.mxu0 0.0
      %5508 = vmatpush1.xpose.msra.mxu0 0.0
      %5509 = vmatprep.subr.mxu0 0.0
      %5510 = vmatpush1.xpose.msra.mxu0 0.0
      %5511 = vmatprep.subr.mxu0 0.0
      %5512 = vmatpush1.xpose.msra.mxu0 0.0
      %5513 = vmatprep.subr.mxu0 0.0
      %5514 = vmatpush1.xpose.msra.mxu0 0.0
      %5515 = vmatprep.subr.mxu0 0.0
      %5516 = vmatpush1.xpose.msra.mxu0 0.0
      %5517 = vmatprep.subr.mxu0 0.0
      %5518 = vmatpush1.xpose.msra.mxu0 0.0
      %5519 = vmatprep.subr.mxu0 0.0
      %5520 = vmatpush1.xpose.msra.mxu0 0.0
      %5521 = vmatprep.subr.mxu0 0.0
      %5522 = vmatpush1.xpose.msra.mxu0 0.0
      %5523 = vmatprep.subr.mxu0 0.0
      %5524 = vmatpush1.xpose.msra.mxu0 0.0
      %5525 = vmatprep.subr.mxu0 0.0
      %5526 = vmatpush1.xpose.msra.mxu0 0.0
      %5527 = vmatprep.subr.mxu0 0.0
      %5528 = vmatpush1.xpose.msra.mxu0 0.0
      %5529 = vmatprep.subr.mxu0 0.0
      %5530 = vmatpush1.xpose.msra.mxu0 0.0
      %5531 = vmatprep.subr.mxu0 0.0
      %5532 = vmatpush1.xpose.msra.mxu0 0.0
      %5533 = vmatprep.subr.mxu0 0.0
      %5534 = vmatpush1.xpose.msra.mxu0 0.0
      %5535 = vmatprep.subr.mxu0 0.0
      %5536 = vmatpush1.xpose.msra.mxu0 %v5503
      %5537 = vmatprep.subr.mxu0 0.0
      %5538 = vmatpush2.xpose.msra.mxu0 0.0
      %5539 = vmatprep.subr.mxu0 0.0
      %5540 = vmatpush2.xpose.msra.mxu0 0.0
      %5541 = vmatprep.subr.mxu0 0.0
      %5542 = vmatpush2.xpose.msra.mxu0 0.0
      %5543 = vmatprep.subr.mxu0 0.0
      %5544 = vmatpush2.xpose.msra.mxu0 0.0
      %5545 = vmatprep.subr.mxu0 0.0
      %5546 = vmatpush2.xpose.msra.mxu0 0.0
      %5547 = vmatprep.subr.mxu0 0.0
      %5548 = vmatpush2.xpose.msra.mxu0 0.0
      %5549 = vmatprep.subr.mxu0 0.0
      %5550 = vmatpush2.xpose.msra.mxu0 0.0
      %5551 = vmatprep.subr.mxu0 0.0
      %5552 = vmatpush2.xpose.msra.mxu0 0.0
      %5553 = vmatprep.subr.mxu0 0.0
      %5554 = vmatpush2.xpose.msra.mxu0 0.0
      %5555 = vmatprep.subr.mxu0 0.0
      %5556 = vmatpush2.xpose.msra.mxu0 0.0
      %5557 = vmatprep.subr.mxu0 0.0
      %5558 = vmatpush2.xpose.msra.mxu0 0.0
      %5559 = vmatprep.subr.mxu0 0.0
      %5560 = vmatpush2.xpose.msra.mxu0 0.0
      %5561 = vmatprep.subr.mxu0 0.0
      %5562 = vmatpush2.xpose.msra.mxu0 0.0
      %5563 = vmatprep.subr.mxu0 0.0
      %5564 = vmatpush2.xpose.msra.mxu0 0.0
      %5565 = vmatprep.subr.mxu0 0.0
      %5566 = vmatpush2.xpose.msra.mxu0 0.0
      %5567 = vmatprep.subr.mxu0 0.0
      %5568 = vmatpush2.xpose.msra.mxu0 0.0
      %5569 = vmatprep.mubr.f32.mxu0 0.0
      %5570 = vmatmul.mubr.f32.gmra.mxu0 %v5501
      %v5571 = vpop.f32.mrf.mxu0
      %v5572 = vadd.f32 0.0, %v5571
      %v5573 = vpop.f32.mrf.mxu0
      %5574 = vdwg.mxu0
      %5575 = vrot.lane.b32.xlu0 %v5494, 96
      %v5576 = vpop.permute.xlu0 %5575
      %v5577 = vsel %vm741, %v5494, 0
      %v5579 = vsel %vm741, %v5576, 0
      %5581 = vmatprep.subr.mxu0 0.0
      %5582 = vmatpush1.xpose.msra.mxu0 0.0
      %5583 = vmatprep.subr.mxu0 0.0
      %5584 = vmatpush1.xpose.msra.mxu0 0.0
      %5585 = vmatprep.subr.mxu0 0.0
      %5586 = vmatpush1.xpose.msra.mxu0 0.0
      %5587 = vmatprep.subr.mxu0 0.0
      %5588 = vmatpush1.xpose.msra.mxu0 0.0
      %5589 = vmatprep.subr.mxu0 0.0
      %5590 = vmatpush1.xpose.msra.mxu0 0.0
      %5591 = vmatprep.subr.mxu0 0.0
      %5592 = vmatpush1.xpose.msra.mxu0 0.0
      %5593 = vmatprep.subr.mxu0 0.0
      %5594 = vmatpush1.xpose.msra.mxu0 0.0
      %5595 = vmatprep.subr.mxu0 0.0
      %5596 = vmatpush1.xpose.msra.mxu0 0.0
      %5597 = vmatprep.subr.mxu0 0.0
      %5598 = vmatpush1.xpose.msra.mxu0 0.0
      %5599 = vmatprep.subr.mxu0 0.0
      %5600 = vmatpush1.xpose.msra.mxu0 0.0
      %5601 = vmatprep.subr.mxu0 0.0
      %5602 = vmatpush1.xpose.msra.mxu0 0.0
      %5603 = vmatprep.subr.mxu0 0.0
      %5604 = vmatpush1.xpose.msra.mxu0 0.0
      %5605 = vmatprep.subr.mxu0 0.0
      %5606 = vmatpush1.xpose.msra.mxu0 0.0
      %5607 = vmatprep.subr.mxu0 0.0
      %5608 = vmatpush1.xpose.msra.mxu0 0.0
      %5609 = vmatprep.subr.mxu0 0.0
      %5610 = vmatpush1.xpose.msra.mxu0 0.0
      %5611 = vmatprep.subr.mxu0 0.0
      %5612 = vmatpush1.xpose.msra.mxu0 %v5579
      %5613 = vmatprep.subr.mxu0 0.0
      %5614 = vmatpush2.xpose.msra.mxu0 0.0
      %5615 = vmatprep.subr.mxu0 0.0
      %5616 = vmatpush2.xpose.msra.mxu0 0.0
      %5617 = vmatprep.subr.mxu0 0.0
      %5618 = vmatpush2.xpose.msra.mxu0 0.0
      %5619 = vmatprep.subr.mxu0 0.0
      %5620 = vmatpush2.xpose.msra.mxu0 0.0
      %5621 = vmatprep.subr.mxu0 0.0
      %5622 = vmatpush2.xpose.msra.mxu0 0.0
      %5623 = vmatprep.subr.mxu0 0.0
      %5624 = vmatpush2.xpose.msra.mxu0 0.0
      %5625 = vmatprep.subr.mxu0 0.0
      %5626 = vmatpush2.xpose.msra.mxu0 0.0
      %5627 = vmatprep.subr.mxu0 0.0
      %5628 = vmatpush2.xpose.msra.mxu0 0.0
      %5629 = vmatprep.subr.mxu0 0.0
      %5630 = vmatpush2.xpose.msra.mxu0 0.0
      %5631 = vmatprep.subr.mxu0 0.0
      %5632 = vmatpush2.xpose.msra.mxu0 0.0
      %5633 = vmatprep.subr.mxu0 0.0
      %5634 = vmatpush2.xpose.msra.mxu0 0.0
      %5635 = vmatprep.subr.mxu0 0.0
      %5636 = vmatpush2.xpose.msra.mxu0 0.0
      %5637 = vmatprep.subr.mxu0 0.0
      %5638 = vmatpush2.xpose.msra.mxu0 0.0
      %5639 = vmatprep.subr.mxu0 0.0
      %5640 = vmatpush2.xpose.msra.mxu0 0.0
      %5641 = vmatprep.subr.mxu0 0.0
      %5642 = vmatpush2.xpose.msra.mxu0 0.0
      %5643 = vmatprep.subr.mxu0 0.0
      %5644 = vmatpush2.xpose.msra.mxu0 0.0
      %5645 = vmatprep.mubr.f32.mxu0 0.0
      %5646 = vmatmul.mubr.f32.gmra.mxu0 %v5577
      %v5647 = vpop.f32.mrf.mxu0
      %v5648 = vadd.f32 0.0, %v5647
      %v5649 = vpop.f32.mrf.mxu0
      %5650 = vdwg.mxu0
      %5651 = vrot.lane.b32.xlu0 %v5496, 96
      %v5652 = vpop.permute.xlu0 %5651
      %v5653 = vsel %vm741, %v5496, 0
      %v5655 = vsel %vm741, %v5652, 0
      %5657 = vmatprep.subr.mxu0 0.0
      %5658 = vmatpush1.xpose.msra.mxu0 0.0
      %5659 = vmatprep.subr.mxu0 0.0
      %5660 = vmatpush1.xpose.msra.mxu0 0.0
      %5661 = vmatprep.subr.mxu0 0.0
      %5662 = vmatpush1.xpose.msra.mxu0 0.0
      %5663 = vmatprep.subr.mxu0 0.0
      %5664 = vmatpush1.xpose.msra.mxu0 0.0
      %5665 = vmatprep.subr.mxu0 0.0
      %5666 = vmatpush1.xpose.msra.mxu0 0.0
      %5667 = vmatprep.subr.mxu0 0.0
      %5668 = vmatpush1.xpose.msra.mxu0 0.0
      %5669 = vmatprep.subr.mxu0 0.0
      %5670 = vmatpush1.xpose.msra.mxu0 0.0
      %5671 = vmatprep.subr.mxu0 0.0
      %5672 = vmatpush1.xpose.msra.mxu0 0.0
      %5673 = vmatprep.subr.mxu0 0.0
      %5674 = vmatpush1.xpose.msra.mxu0 0.0
      %5675 = vmatprep.subr.mxu0 0.0
      %5676 = vmatpush1.xpose.msra.mxu0 0.0
      %5677 = vmatprep.subr.mxu0 0.0
      %5678 = vmatpush1.xpose.msra.mxu0 0.0
      %5679 = vmatprep.subr.mxu0 0.0
      %5680 = vmatpush1.xpose.msra.mxu0 0.0
      %5681 = vmatprep.subr.mxu0 0.0
      %5682 = vmatpush1.xpose.msra.mxu0 0.0
      %5683 = vmatprep.subr.mxu0 0.0
      %5684 = vmatpush1.xpose.msra.mxu0 0.0
      %5685 = vmatprep.subr.mxu0 0.0
      %5686 = vmatpush1.xpose.msra.mxu0 0.0
      %5687 = vmatprep.subr.mxu0 0.0
      %5688 = vmatpush1.xpose.msra.mxu0 %v5655
      %5689 = vmatprep.subr.mxu0 0.0
      %5690 = vmatpush2.xpose.msra.mxu0 0.0
      %5691 = vmatprep.subr.mxu0 0.0
      %5692 = vmatpush2.xpose.msra.mxu0 0.0
      %5693 = vmatprep.subr.mxu0 0.0
      %5694 = vmatpush2.xpose.msra.mxu0 0.0
      %5695 = vmatprep.subr.mxu0 0.0
      %5696 = vmatpush2.xpose.msra.mxu0 0.0
      %5697 = vmatprep.subr.mxu0 0.0
      %5698 = vmatpush2.xpose.msra.mxu0 0.0
      %5699 = vmatprep.subr.mxu0 0.0
      %5700 = vmatpush2.xpose.msra.mxu0 0.0
      %5701 = vmatprep.subr.mxu0 0.0
      %5702 = vmatpush2.xpose.msra.mxu0 0.0
      %5703 = vmatprep.subr.mxu0 0.0
      %5704 = vmatpush2.xpose.msra.mxu0 0.0
      %5705 = vmatprep.subr.mxu0 0.0
      %5706 = vmatpush2.xpose.msra.mxu0 0.0
      %5707 = vmatprep.subr.mxu0 0.0
      %5708 = vmatpush2.xpose.msra.mxu0 0.0
      %5709 = vmatprep.subr.mxu0 0.0
      %5710 = vmatpush2.xpose.msra.mxu0 0.0
      %5711 = vmatprep.subr.mxu0 0.0
      %5712 = vmatpush2.xpose.msra.mxu0 0.0
      %5713 = vmatprep.subr.mxu0 0.0
      %5714 = vmatpush2.xpose.msra.mxu0 0.0
      %5715 = vmatprep.subr.mxu0 0.0
      %5716 = vmatpush2.xpose.msra.mxu0 0.0
      %5717 = vmatprep.subr.mxu0 0.0
      %5718 = vmatpush2.xpose.msra.mxu0 0.0
      %5719 = vmatprep.subr.mxu0 0.0
      %5720 = vmatpush2.xpose.msra.mxu0 0.0
      %5721 = vmatprep.mubr.f32.mxu0 0.0
      %5722 = vmatmul.mubr.f32.gmra.mxu0 %v5653
      %v5723 = vpop.f32.mrf.mxu0
      %v5724 = vadd.f32 0.0, %v5723
      %v5725 = vpop.f32.mrf.mxu0
      %5726 = vdwg.mxu0
      %5727 = vrot.lane.b32.xlu0 %v5498, 96
      %v5728 = vpop.permute.xlu0 %5727
      %v5729 = vsel %vm741, %v5498, 0
      %v5731 = vsel %vm741, %v5728, 0
      %5733 = vmatprep.subr.mxu0 0.0
      %5734 = vmatpush1.xpose.msra.mxu0 0.0
      %5735 = vmatprep.subr.mxu0 0.0
      %5736 = vmatpush1.xpose.msra.mxu0 0.0
      %5737 = vmatprep.subr.mxu0 0.0
      %5738 = vmatpush1.xpose.msra.mxu0 0.0
      %5739 = vmatprep.subr.mxu0 0.0
      %5740 = vmatpush1.xpose.msra.mxu0 0.0
      %5741 = vmatprep.subr.mxu0 0.0
      %5742 = vmatpush1.xpose.msra.mxu0 0.0
      %5743 = vmatprep.subr.mxu0 0.0
      %5744 = vmatpush1.xpose.msra.mxu0 0.0
      %5745 = vmatprep.subr.mxu0 0.0
      %5746 = vmatpush1.xpose.msra.mxu0 0.0
      %5747 = vmatprep.subr.mxu0 0.0
      %5748 = vmatpush1.xpose.msra.mxu0 0.0
      %5749 = vmatprep.subr.mxu0 0.0
      %5750 = vmatpush1.xpose.msra.mxu0 0.0
      %5751 = vmatprep.subr.mxu0 0.0
      %5752 = vmatpush1.xpose.msra.mxu0 0.0
      %5753 = vmatprep.subr.mxu0 0.0
      %5754 = vmatpush1.xpose.msra.mxu0 0.0
      %5755 = vmatprep.subr.mxu0 0.0
      %5756 = vmatpush1.xpose.msra.mxu0 0.0
      %5757 = vmatprep.subr.mxu0 0.0
      %5758 = vmatpush1.xpose.msra.mxu0 0.0
      %5759 = vmatprep.subr.mxu0 0.0
      %5760 = vmatpush1.xpose.msra.mxu0 0.0
      %5761 = vmatprep.subr.mxu0 0.0
      %5762 = vmatpush1.xpose.msra.mxu0 0.0
      %5763 = vmatprep.subr.mxu0 0.0
      %5764 = vmatpush1.xpose.msra.mxu0 %v5731
      %5765 = vmatprep.subr.mxu0 0.0
      %5766 = vmatpush2.xpose.msra.mxu0 0.0
      %5767 = vmatprep.subr.mxu0 0.0
      %5768 = vmatpush2.xpose.msra.mxu0 0.0
      %5769 = vmatprep.subr.mxu0 0.0
      %5770 = vmatpush2.xpose.msra.mxu0 0.0
      %5771 = vmatprep.subr.mxu0 0.0
      %5772 = vmatpush2.xpose.msra.mxu0 0.0
      %5773 = vmatprep.subr.mxu0 0.0
      %5774 = vmatpush2.xpose.msra.mxu0 0.0
      %5775 = vmatprep.subr.mxu0 0.0
      %5776 = vmatpush2.xpose.msra.mxu0 0.0
      %5777 = vmatprep.subr.mxu0 0.0
      %5778 = vmatpush2.xpose.msra.mxu0 0.0
      %5779 = vmatprep.subr.mxu0 0.0
      %5780 = vmatpush2.xpose.msra.mxu0 0.0
      %5781 = vmatprep.subr.mxu0 0.0
      %5782 = vmatpush2.xpose.msra.mxu0 0.0
      %5783 = vmatprep.subr.mxu0 0.0
      %5784 = vmatpush2.xpose.msra.mxu0 0.0
      %5785 = vmatprep.subr.mxu0 0.0
      %5786 = vmatpush2.xpose.msra.mxu0 0.0
      %5787 = vmatprep.subr.mxu0 0.0
      %5788 = vmatpush2.xpose.msra.mxu0 0.0
      %5789 = vmatprep.subr.mxu0 0.0
      %5790 = vmatpush2.xpose.msra.mxu0 0.0
      %5791 = vmatprep.subr.mxu0 0.0
      %5792 = vmatpush2.xpose.msra.mxu0 0.0
      %5793 = vmatprep.subr.mxu0 0.0
      %5794 = vmatpush2.xpose.msra.mxu0 0.0
      %5795 = vmatprep.subr.mxu0 0.0
      %5796 = vmatpush2.xpose.msra.mxu0 0.0
      %5797 = vmatprep.mubr.f32.mxu0 0.0
      %5798 = vmatmul.mubr.f32.gmra.mxu0 %v5729
      %v5799 = vpop.f32.mrf.mxu0
      %v5800 = vadd.f32 0.0, %v5799
      %v5801 = vpop.f32.mrf.mxu0
      %5802 = vdwg.mxu0
      %v5803 = vmul.f32 %v5572, 0.35355338
      %v5804 = vmul.f32 %v5648, 0.35355338
      %v5805 = vmul.f32 %v5724, 0.35355338
      %v5806 = vmul.f32 %v5800, 0.35355338
      %v5807 = vadd.f32 %v5803, %v1051
      %v5808 = vadd.f32 %v5804, %v1051
      %v5809 = vadd.f32 %v5805, %v1051
      %v5810 = vadd.f32 %v5806, %v1051
      %v5811 = vsel %vm741, %v5807, -inf
      %5812 = vmax.xlane.f32.xlu0 %v5811
      %v5813 = vpop.xlane.xlu0 %5812
      %v5814 = vsel %vm741, %v5808, -inf
      %5815 = vmax.xlane.f32.xlu0 %v5814
      %v5816 = vpop.xlane.xlu0 %5815
      %v5817 = vsel %vm741, %v5809, -inf
      %5818 = vmax.xlane.f32.xlu0 %v5817
      %v5819 = vpop.xlane.xlu0 %5818
      %v5820 = vsel %vm741, %v5810, -inf
      %5821 = vmax.xlane.f32.xlu0 %v5820
      %v5822 = vpop.xlane.xlu0 %5821
      %v5823 = vsub.f32 %v5807, %v5813
      %v5824 = vsub.f32 %v5808, %v5816
      %v5825 = vsub.f32 %v5809, %v5819
      %v5826 = vsub.f32 %v5810, %v5822
      %v5827 = vmul.f32 %v5823, 1.442695
      %v5828 = vpow.pop %v5827
      %v5829 = vmul.f32 %v5824, 1.442695
      %v5830 = vpow.pop %v5829
      %v5831 = vmul.f32 %v5825, 1.442695
      %v5832 = vpow.pop %v5831
      %v5833 = vmul.f32 %v5826, 1.442695
      %v5834 = vpow.pop %v5833
      %v5835 = vsel %vm741, %v5828, 0.0
      %5836 = vadd.xlane.f32.xlu0 %v5835
      %v5837 = vpop.xlane.xlu0 %5836
      %v5838 = vsel %vm741, %v5830, 0.0
      %5839 = vadd.xlane.f32.xlu0 %v5838
      %v5840 = vpop.xlane.xlu0 %5839
      %v5841 = vsel %vm741, %v5832, 0.0
      %5842 = vadd.xlane.f32.xlu0 %v5841
      %v5843 = vpop.xlane.xlu0 %5842
      %v5844 = vsel %vm741, %v5834, 0.0
      %5845 = vadd.xlane.f32.xlu0 %v5844
      %v5846 = vpop.xlane.xlu0 %5845
      %v5847 = vrcp.pop %v5837
      %v5848 = vrcp.pop %v5840
      %v5849 = vrcp.pop %v5843
      %v5850 = vrcp.pop %v5846
      %v5851 = vmul.f32 %v5828, %v5847
      %v5852 = vmul.f32 %v5830, %v5848
      %v5853 = vmul.f32 %v5832, %v5849
      %v5854 = vmul.f32 %v5834, %v5850
      %5855 = vrot.lane.b32.xlu0 %v5484, 64
      %v5856 = vpop.permute.xlu0 %5855
      %v5859 = vsel %vm741, %v5851, 0
      %5861 = vmatprep.subr.mxu0 0.0
      %5862 = vmatpush1.msra.mxu0 0.0
      %5863 = vmatprep.subr.mxu0 0.0
      %5864 = vmatpush1.msra.mxu0 0.0
      %5865 = vmatprep.subr.mxu0 0.0
      %5866 = vmatpush1.msra.mxu0 0.0
      %5867 = vmatprep.subr.mxu0 0.0
      %5868 = vmatpush1.msra.mxu0 0.0
      %5869 = vmatprep.subr.mxu0 0.0
      %5870 = vmatpush1.msra.mxu0 0.0
      %5871 = vmatprep.subr.mxu0 0.0
      %5872 = vmatpush1.msra.mxu0 0.0
      %5873 = vmatprep.subr.mxu0 0.0
      %5874 = vmatpush1.msra.mxu0 0.0
      %5875 = vmatprep.subr.mxu0 0.0
      %5876 = vmatpush1.msra.mxu0 0.0
      %5877 = vmatprep.subr.mxu0 0.0
      %5878 = vmatpush1.msra.mxu0 0.0
      %5879 = vmatprep.subr.mxu0 0.0
      %5880 = vmatpush1.msra.mxu0 0.0
      %5881 = vmatprep.subr.mxu0 0.0
      %5882 = vmatpush1.msra.mxu0 0.0
      %5883 = vmatprep.subr.mxu0 0.0
      %5884 = vmatpush1.msra.mxu0 0.0
      %5885 = vmatprep.subr.mxu0 0.0
      %5886 = vmatpush1.msra.mxu0 0.0
      %5887 = vmatprep.subr.mxu0 0.0
      %5888 = vmatpush1.msra.mxu0 0.0
      %5889 = vmatprep.subr.mxu0 0.0
      %5890 = vmatpush1.msra.mxu0 0.0
      %5891 = vmatprep.subr.mxu0 0.0
      %5892 = vmatpush1.msra.mxu0 %v5856
      %5893 = vmatprep.subr.mxu0 0.0
      %5894 = vmatpush2.msra.mxu0 0.0
      %5895 = vmatprep.subr.mxu0 0.0
      %5896 = vmatpush2.msra.mxu0 0.0
      %5897 = vmatprep.subr.mxu0 0.0
      %5898 = vmatpush2.msra.mxu0 0.0
      %5899 = vmatprep.subr.mxu0 0.0
      %5900 = vmatpush2.msra.mxu0 0.0
      %5901 = vmatprep.subr.mxu0 0.0
      %5902 = vmatpush2.msra.mxu0 0.0
      %5903 = vmatprep.subr.mxu0 0.0
      %5904 = vmatpush2.msra.mxu0 0.0
      %5905 = vmatprep.subr.mxu0 0.0
      %5906 = vmatpush2.msra.mxu0 0.0
      %5907 = vmatprep.subr.mxu0 0.0
      %5908 = vmatpush2.msra.mxu0 0.0
      %5909 = vmatprep.subr.mxu0 0.0
      %5910 = vmatpush2.msra.mxu0 0.0
      %5911 = vmatprep.subr.mxu0 0.0
      %5912 = vmatpush2.msra.mxu0 0.0
      %5913 = vmatprep.subr.mxu0 0.0
      %5914 = vmatpush2.msra.mxu0 0.0
      %5915 = vmatprep.subr.mxu0 0.0
      %5916 = vmatpush2.msra.mxu0 0.0
      %5917 = vmatprep.subr.mxu0 0.0
      %5918 = vmatpush2.msra.mxu0 0.0
      %5919 = vmatprep.subr.mxu0 0.0
      %5920 = vmatpush2.msra.mxu0 0.0
      %5921 = vmatprep.subr.mxu0 0.0
      %5922 = vmatpush2.msra.mxu0 0.0
      %5923 = vmatprep.subr.mxu0 0.0
      %5924 = vmatpush2.msra.mxu0 0.0
      %5925 = vmatprep.mubr.f32.mxu0 0.0
      %5926 = vmatmul.mubr.f32.gmra.mxu0 %v5859
      %v5927 = vpop.f32.mrf.mxu0
      %v5928 = vadd.f32 0.0, %v5927
      %v5929 = vpop.f32.mrf.mxu0
      %5930 = vdwg.mxu0
      %5931 = vrot.lane.b32.xlu0 %v5494, 64
      %v5932 = vpop.permute.xlu0 %5931
      %v5935 = vsel %vm741, %v5852, 0
      %5937 = vmatprep.subr.mxu0 0.0
      %5938 = vmatpush1.msra.mxu0 0.0
      %5939 = vmatprep.subr.mxu0 0.0
      %5940 = vmatpush1.msra.mxu0 0.0
      %5941 = vmatprep.subr.mxu0 0.0
      %5942 = vmatpush1.msra.mxu0 0.0
      %5943 = vmatprep.subr.mxu0 0.0
      %5944 = vmatpush1.msra.mxu0 0.0
      %5945 = vmatprep.subr.mxu0 0.0
      %5946 = vmatpush1.msra.mxu0 0.0
      %5947 = vmatprep.subr.mxu0 0.0
      %5948 = vmatpush1.msra.mxu0 0.0
      %5949 = vmatprep.subr.mxu0 0.0
      %5950 = vmatpush1.msra.mxu0 0.0
      %5951 = vmatprep.subr.mxu0 0.0
      %5952 = vmatpush1.msra.mxu0 0.0
      %5953 = vmatprep.subr.mxu0 0.0
      %5954 = vmatpush1.msra.mxu0 0.0
      %5955 = vmatprep.subr.mxu0 0.0
      %5956 = vmatpush1.msra.mxu0 0.0
      %5957 = vmatprep.subr.mxu0 0.0
      %5958 = vmatpush1.msra.mxu0 0.0
      %5959 = vmatprep.subr.mxu0 0.0
      %5960 = vmatpush1.msra.mxu0 0.0
      %5961 = vmatprep.subr.mxu0 0.0
      %5962 = vmatpush1.msra.mxu0 0.0
      %5963 = vmatprep.subr.mxu0 0.0
      %5964 = vmatpush1.msra.mxu0 0.0
      %5965 = vmatprep.subr.mxu0 0.0
      %5966 = vmatpush1.msra.mxu0 0.0
      %5967 = vmatprep.subr.mxu0 0.0
      %5968 = vmatpush1.msra.mxu0 %v5932
      %5969 = vmatprep.subr.mxu0 0.0
      %5970 = vmatpush2.msra.mxu0 0.0
      %5971 = vmatprep.subr.mxu0 0.0
      %5972 = vmatpush2.msra.mxu0 0.0
      %5973 = vmatprep.subr.mxu0 0.0
      %5974 = vmatpush2.msra.mxu0 0.0
      %5975 = vmatprep.subr.mxu0 0.0
      %5976 = vmatpush2.msra.mxu0 0.0
      %5977 = vmatprep.subr.mxu0 0.0
      %5978 = vmatpush2.msra.mxu0 0.0
      %5979 = vmatprep.subr.mxu0 0.0
      %5980 = vmatpush2.msra.mxu0 0.0
      %5981 = vmatprep.subr.mxu0 0.0
      %5982 = vmatpush2.msra.mxu0 0.0
      %5983 = vmatprep.subr.mxu0 0.0
      %5984 = vmatpush2.msra.mxu0 0.0
      %5985 = vmatprep.subr.mxu0 0.0
      %5986 = vmatpush2.msra.mxu0 0.0
      %5987 = vmatprep.subr.mxu0 0.0
      %5988 = vmatpush2.msra.mxu0 0.0
      %5989 = vmatprep.subr.mxu0 0.0
      %5990 = vmatpush2.msra.mxu0 0.0
      %5991 = vmatprep.subr.mxu0 0.0
      %5992 = vmatpush2.msra.mxu0 0.0
      %5993 = vmatprep.subr.mxu0 0.0
      %5994 = vmatpush2.msra.mxu0 0.0
      %5995 = vmatprep.subr.mxu0 0.0
      %5996 = vmatpush2.msra.mxu0 0.0
      %5997 = vmatprep.subr.mxu0 0.0
      %5998 = vmatpush2.msra.mxu0 0.0
      %5999 = vmatprep.subr.mxu0 0.0
      %6000 = vmatpush2.msra.mxu0 0.0
      %6001 = vmatprep.mubr.f32.mxu0 0.0
      %6002 = vmatmul.mubr.f32.gmra.mxu0 %v5935
      %v6003 = vpop.f32.mrf.mxu0
      %v6004 = vadd.f32 0.0, %v6003
      %v6005 = vpop.f32.mrf.mxu0
      %6006 = vdwg.mxu0
      %6007 = vrot.lane.b32.xlu0 %v5496, 64
      %v6008 = vpop.permute.xlu0 %6007
      %v6011 = vsel %vm741, %v5853, 0
      %6013 = vmatprep.subr.mxu0 0.0
      %6014 = vmatpush1.msra.mxu0 0.0
      %6015 = vmatprep.subr.mxu0 0.0
      %6016 = vmatpush1.msra.mxu0 0.0
      %6017 = vmatprep.subr.mxu0 0.0
      %6018 = vmatpush1.msra.mxu0 0.0
      %6019 = vmatprep.subr.mxu0 0.0
      %6020 = vmatpush1.msra.mxu0 0.0
      %6021 = vmatprep.subr.mxu0 0.0
      %6022 = vmatpush1.msra.mxu0 0.0
      %6023 = vmatprep.subr.mxu0 0.0
      %6024 = vmatpush1.msra.mxu0 0.0
      %6025 = vmatprep.subr.mxu0 0.0
      %6026 = vmatpush1.msra.mxu0 0.0
      %6027 = vmatprep.subr.mxu0 0.0
      %6028 = vmatpush1.msra.mxu0 0.0
      %6029 = vmatprep.subr.mxu0 0.0
      %6030 = vmatpush1.msra.mxu0 0.0
      %6031 = vmatprep.subr.mxu0 0.0
      %6032 = vmatpush1.msra.mxu0 0.0
      %6033 = vmatprep.subr.mxu0 0.0
      %6034 = vmatpush1.msra.mxu0 0.0
      %6035 = vmatprep.subr.mxu0 0.0
      %6036 = vmatpush1.msra.mxu0 0.0
      %6037 = vmatprep.subr.mxu0 0.0
      %6038 = vmatpush1.msra.mxu0 0.0
      %6039 = vmatprep.subr.mxu0 0.0
      %6040 = vmatpush1.msra.mxu0 0.0
      %6041 = vmatprep.subr.mxu0 0.0
      %6042 = vmatpush1.msra.mxu0 0.0
      %6043 = vmatprep.subr.mxu0 0.0
      %6044 = vmatpush1.msra.mxu0 %v6008
      %6045 = vmatprep.subr.mxu0 0.0
      %6046 = vmatpush2.msra.mxu0 0.0
      %6047 = vmatprep.subr.mxu0 0.0
      %6048 = vmatpush2.msra.mxu0 0.0
      %6049 = vmatprep.subr.mxu0 0.0
      %6050 = vmatpush2.msra.mxu0 0.0
      %6051 = vmatprep.subr.mxu0 0.0
      %6052 = vmatpush2.msra.mxu0 0.0
      %6053 = vmatprep.subr.mxu0 0.0
      %6054 = vmatpush2.msra.mxu0 0.0
      %6055 = vmatprep.subr.mxu0 0.0
      %6056 = vmatpush2.msra.mxu0 0.0
      %6057 = vmatprep.subr.mxu0 0.0
      %6058 = vmatpush2.msra.mxu0 0.0
      %6059 = vmatprep.subr.mxu0 0.0
      %6060 = vmatpush2.msra.mxu0 0.0
      %6061 = vmatprep.subr.mxu0 0.0
      %6062 = vmatpush2.msra.mxu0 0.0
      %6063 = vmatprep.subr.mxu0 0.0
      %6064 = vmatpush2.msra.mxu0 0.0
      %6065 = vmatprep.subr.mxu0 0.0
      %6066 = vmatpush2.msra.mxu0 0.0
      %6067 = vmatprep.subr.mxu0 0.0
      %6068 = vmatpush2.msra.mxu0 0.0
      %6069 = vmatprep.subr.mxu0 0.0
      %6070 = vmatpush2.msra.mxu0 0.0
      %6071 = vmatprep.subr.mxu0 0.0
      %6072 = vmatpush2.msra.mxu0 0.0
      %6073 = vmatprep.subr.mxu0 0.0
      %6074 = vmatpush2.msra.mxu0 0.0
      %6075 = vmatprep.subr.mxu0 0.0
      %6076 = vmatpush2.msra.mxu0 0.0
      %6077 = vmatprep.mubr.f32.mxu0 0.0
      %6078 = vmatmul.mubr.f32.gmra.mxu0 %v6011
      %v6079 = vpop.f32.mrf.mxu0
      %v6080 = vadd.f32 0.0, %v6079
      %v6081 = vpop.f32.mrf.mxu0
      %6082 = vdwg.mxu0
      %6083 = vrot.lane.b32.xlu0 %v5498, 64
      %v6084 = vpop.permute.xlu0 %6083
      %v6087 = vsel %vm741, %v5854, 0
      %6089 = vmatprep.subr.mxu0 0.0
      %6090 = vmatpush1.msra.mxu0 0.0
      %6091 = vmatprep.subr.mxu0 0.0
      %6092 = vmatpush1.msra.mxu0 0.0
      %6093 = vmatprep.subr.mxu0 0.0
      %6094 = vmatpush1.msra.mxu0 0.0
      %6095 = vmatprep.subr.mxu0 0.0
      %6096 = vmatpush1.msra.mxu0 0.0
      %6097 = vmatprep.subr.mxu0 0.0
      %6098 = vmatpush1.msra.mxu0 0.0
      %6099 = vmatprep.subr.mxu0 0.0
      %6100 = vmatpush1.msra.mxu0 0.0
      %6101 = vmatprep.subr.mxu0 0.0
      %6102 = vmatpush1.msra.mxu0 0.0
      %6103 = vmatprep.subr.mxu0 0.0
      %6104 = vmatpush1.msra.mxu0 0.0
      %6105 = vmatprep.subr.mxu0 0.0
      %6106 = vmatpush1.msra.mxu0 0.0
      %6107 = vmatprep.subr.mxu0 0.0
      %6108 = vmatpush1.msra.mxu0 0.0
      %6109 = vmatprep.subr.mxu0 0.0
      %6110 = vmatpush1.msra.mxu0 0.0
      %6111 = vmatprep.subr.mxu0 0.0
      %6112 = vmatpush1.msra.mxu0 0.0
      %6113 = vmatprep.subr.mxu0 0.0
      %6114 = vmatpush1.msra.mxu0 0.0
      %6115 = vmatprep.subr.mxu0 0.0
      %6116 = vmatpush1.msra.mxu0 0.0
      %6117 = vmatprep.subr.mxu0 0.0
      %6118 = vmatpush1.msra.mxu0 0.0
      %6119 = vmatprep.subr.mxu0 0.0
      %6120 = vmatpush1.msra.mxu0 %v6084
      %6121 = vmatprep.subr.mxu0 0.0
      %6122 = vmatpush2.msra.mxu0 0.0
      %6123 = vmatprep.subr.mxu0 0.0
      %6124 = vmatpush2.msra.mxu0 0.0
      %6125 = vmatprep.subr.mxu0 0.0
      %6126 = vmatpush2.msra.mxu0 0.0
      %6127 = vmatprep.subr.mxu0 0.0
      %6128 = vmatpush2.msra.mxu0 0.0
      %6129 = vmatprep.subr.mxu0 0.0
      %6130 = vmatpush2.msra.mxu0 0.0
      %6131 = vmatprep.subr.mxu0 0.0
      %6132 = vmatpush2.msra.mxu0 0.0
      %6133 = vmatprep.subr.mxu0 0.0
      %6134 = vmatpush2.msra.mxu0 0.0
      %6135 = vmatprep.subr.mxu0 0.0
      %6136 = vmatpush2.msra.mxu0 0.0
      %6137 = vmatprep.subr.mxu0 0.0
      %6138 = vmatpush2.msra.mxu0 0.0
      %6139 = vmatprep.subr.mxu0 0.0
      %6140 = vmatpush2.msra.mxu0 0.0
      %6141 = vmatprep.subr.mxu0 0.0
      %6142 = vmatpush2.msra.mxu0 0.0
      %6143 = vmatprep.subr.mxu0 0.0
      %6144 = vmatpush2.msra.mxu0 0.0
      %6145 = vmatprep.subr.mxu0 0.0
      %6146 = vmatpush2.msra.mxu0 0.0
      %6147 = vmatprep.subr.mxu0 0.0
      %6148 = vmatpush2.msra.mxu0 0.0
      %6149 = vmatprep.subr.mxu0 0.0
      %6150 = vmatpush2.msra.mxu0 0.0
      %6151 = vmatprep.subr.mxu0 0.0
      %6152 = vmatpush2.msra.mxu0 0.0
      %6153 = vmatprep.mubr.f32.mxu0 0.0
      %6154 = vmatmul.mubr.f32.gmra.mxu0 %v6087
      %v6155 = vpop.f32.mrf.mxu0
      %v6156 = vadd.f32 0.0, %v6155
      %v6157 = vpop.f32.mrf.mxu0
      %6158 = vdwg.mxu0
      %s6159 = scalar_lea.vmem %s6, 64
      %v6160 = vld [vmem:[%s6159] sm:$0xff]
      %s6161 = scalar_lea.vmem %s6, 72
      %v6162 = vld [vmem:[%s6161] sm:$0xff]
      %v6164 = vsel %vm741, %v6004, 0
      %6166 = vmatprep.subr.mxu0 0.0
      %6167 = vmatpush1.msra.mxu0 0.0
      %6168 = vmatprep.subr.mxu0 0.0
      %6169 = vmatpush1.msra.mxu0 0.0
      %6170 = vmatprep.subr.mxu0 0.0
      %6171 = vmatpush1.msra.mxu0 0.0
      %6172 = vmatprep.subr.mxu0 0.0
      %6173 = vmatpush1.msra.mxu0 0.0
      %6174 = vmatprep.subr.mxu0 0.0
      %6175 = vmatpush1.msra.mxu0 0.0
      %6176 = vmatprep.subr.mxu0 0.0
      %6177 = vmatpush1.msra.mxu0 0.0
      %6178 = vmatprep.subr.mxu0 0.0
      %6179 = vmatpush1.msra.mxu0 0.0
      %6180 = vmatprep.subr.mxu0 0.0
      %6181 = vmatpush1.msra.mxu0 0.0
      %6182 = vmatprep.subr.mxu0 0.0
      %6183 = vmatpush1.msra.mxu0 0.0
      %6184 = vmatprep.subr.mxu0 0.0
      %6185 = vmatpush1.msra.mxu0 0.0
      %6186 = vmatprep.subr.mxu0 0.0
      %6187 = vmatpush1.msra.mxu0 0.0
      %6188 = vmatprep.subr.mxu0 0.0
      %6189 = vmatpush1.msra.mxu0 0.0
      %6190 = vmatprep.subr.mxu0 0.0
      %6191 = vmatpush1.msra.mxu0 0.0
      %6192 = vmatprep.subr.mxu0 0.0
      %6193 = vmatpush1.msra.mxu0 0.0
      %6194 = vmatprep.subr.mxu0 0.0
      %6195 = vmatpush1.msra.mxu0 0.0
      %6196 = vmatprep.subr.mxu0 0.0
      %6197 = vmatpush1.msra.mxu0 %v6162
      %6198 = vmatprep.subr.mxu0 0.0
      %6199 = vmatpush2.msra.mxu0 0.0
      %6200 = vmatprep.subr.mxu0 0.0
      %6201 = vmatpush2.msra.mxu0 0.0
      %6202 = vmatprep.subr.mxu0 0.0
      %6203 = vmatpush2.msra.mxu0 0.0
      %6204 = vmatprep.subr.mxu0 0.0
      %6205 = vmatpush2.msra.mxu0 0.0
      %6206 = vmatprep.subr.mxu0 0.0
      %6207 = vmatpush2.msra.mxu0 0.0
      %6208 = vmatprep.subr.mxu0 0.0
      %6209 = vmatpush2.msra.mxu0 0.0
      %6210 = vmatprep.subr.mxu0 0.0
      %6211 = vmatpush2.msra.mxu0 0.0
      %6212 = vmatprep.subr.mxu0 0.0
      %6213 = vmatpush2.msra.mxu0 0.0
      %6214 = vmatprep.subr.mxu0 0.0
      %6215 = vmatpush2.msra.mxu0 0.0
      %6216 = vmatprep.subr.mxu0 0.0
      %6217 = vmatpush2.msra.mxu0 0.0
      %6218 = vmatprep.subr.mxu0 0.0
      %6219 = vmatpush2.msra.mxu0 0.0
      %6220 = vmatprep.subr.mxu0 0.0
      %6221 = vmatpush2.msra.mxu0 0.0
      %6222 = vmatprep.subr.mxu0 0.0
      %6223 = vmatpush2.msra.mxu0 0.0
      %6224 = vmatprep.subr.mxu0 0.0
      %6225 = vmatpush2.msra.mxu0 0.0
      %6226 = vmatprep.subr.mxu0 0.0
      %6227 = vmatpush2.msra.mxu0 0.0
      %6228 = vmatprep.subr.mxu0 0.0
      %6229 = vmatpush2.msra.mxu0 0.0
      %6230 = vmatprep.mubr.f32.mxu0 0.0
      %6231 = vmatmul.mubr.f32.gmra.mxu0 %v6164
      %v6232 = vpop.f32.mrf.mxu0
      %v6233 = vadd.f32 0.0, %v6232
      %v6234 = vpop.f32.mrf.mxu0
      %6235 = vdwg.mxu0
      %v6237 = vsel %vm741, %v5928, 0
      %6239 = vmatprep.subr.mxu0 0.0
      %6240 = vmatpush1.msra.mxu0 0.0
      %6241 = vmatprep.subr.mxu0 0.0
      %6242 = vmatpush1.msra.mxu0 0.0
      %6243 = vmatprep.subr.mxu0 0.0
      %6244 = vmatpush1.msra.mxu0 0.0
      %6245 = vmatprep.subr.mxu0 0.0
      %6246 = vmatpush1.msra.mxu0 0.0
      %6247 = vmatprep.subr.mxu0 0.0
      %6248 = vmatpush1.msra.mxu0 0.0
      %6249 = vmatprep.subr.mxu0 0.0
      %6250 = vmatpush1.msra.mxu0 0.0
      %6251 = vmatprep.subr.mxu0 0.0
      %6252 = vmatpush1.msra.mxu0 0.0
      %6253 = vmatprep.subr.mxu0 0.0
      %6254 = vmatpush1.msra.mxu0 0.0
      %6255 = vmatprep.subr.mxu0 0.0
      %6256 = vmatpush1.msra.mxu0 0.0
      %6257 = vmatprep.subr.mxu0 0.0
      %6258 = vmatpush1.msra.mxu0 0.0
      %6259 = vmatprep.subr.mxu0 0.0
      %6260 = vmatpush1.msra.mxu0 0.0
      %6261 = vmatprep.subr.mxu0 0.0
      %6262 = vmatpush1.msra.mxu0 0.0
      %6263 = vmatprep.subr.mxu0 0.0
      %6264 = vmatpush1.msra.mxu0 0.0
      %6265 = vmatprep.subr.mxu0 0.0
      %6266 = vmatpush1.msra.mxu0 0.0
      %6267 = vmatprep.subr.mxu0 0.0
      %6268 = vmatpush1.msra.mxu0 0.0
      %6269 = vmatprep.subr.mxu0 0.0
      %6270 = vmatpush1.msra.mxu0 %v6160
      %6271 = vmatprep.subr.mxu0 0.0
      %6272 = vmatpush2.msra.mxu0 0.0
      %6273 = vmatprep.subr.mxu0 0.0
      %6274 = vmatpush2.msra.mxu0 0.0
      %6275 = vmatprep.subr.mxu0 0.0
      %6276 = vmatpush2.msra.mxu0 0.0
      %6277 = vmatprep.subr.mxu0 0.0
      %6278 = vmatpush2.msra.mxu0 0.0
      %6279 = vmatprep.subr.mxu0 0.0
      %6280 = vmatpush2.msra.mxu0 0.0
      %6281 = vmatprep.subr.mxu0 0.0
      %6282 = vmatpush2.msra.mxu0 0.0
      %6283 = vmatprep.subr.mxu0 0.0
      %6284 = vmatpush2.msra.mxu0 0.0
      %6285 = vmatprep.subr.mxu0 0.0
      %6286 = vmatpush2.msra.mxu0 0.0
      %6287 = vmatprep.subr.mxu0 0.0
      %6288 = vmatpush2.msra.mxu0 0.0
      %6289 = vmatprep.subr.mxu0 0.0
      %6290 = vmatpush2.msra.mxu0 0.0
      %6291 = vmatprep.subr.mxu0 0.0
      %6292 = vmatpush2.msra.mxu0 0.0
      %6293 = vmatprep.subr.mxu0 0.0
      %6294 = vmatpush2.msra.mxu0 0.0
      %6295 = vmatprep.subr.mxu0 0.0
      %6296 = vmatpush2.msra.mxu0 0.0
      %6297 = vmatprep.subr.mxu0 0.0
      %6298 = vmatpush2.msra.mxu0 0.0
      %6299 = vmatprep.subr.mxu0 0.0
      %6300 = vmatpush2.msra.mxu0 0.0
      %6301 = vmatprep.subr.mxu0 0.0
      %6302 = vmatpush2.msra.mxu0 0.0
      %6303 = vmatprep.mubr.f32.mxu0 0.0
      %6304 = vmatmul.mubr.f32.gmra.mxu0 %v6237
      %v6305 = vpop.f32.mrf.mxu0
      %v6306 = vadd.f32 %v6233, %v6305
      %v6307 = vpop.f32.mrf.mxu0
      %6308 = vdwg.mxu0
      %s6309 = scalar_lea.vmem %s6, 80
      %v6310 = vld [vmem:[%s6309] sm:$0xff]
      %v6312 = vsel %vm741, %v6080, 0
      %6314 = vmatprep.subr.mxu0 0.0
      %6315 = vmatpush1.msra.mxu0 0.0
      %6316 = vmatprep.subr.mxu0 0.0
      %6317 = vmatpush1.msra.mxu0 0.0
      %6318 = vmatprep.subr.mxu0 0.0
      %6319 = vmatpush1.msra.mxu0 0.0
      %6320 = vmatprep.subr.mxu0 0.0
      %6321 = vmatpush1.msra.mxu0 0.0
      %6322 = vmatprep.subr.mxu0 0.0
      %6323 = vmatpush1.msra.mxu0 0.0
      %6324 = vmatprep.subr.mxu0 0.0
      %6325 = vmatpush1.msra.mxu0 0.0
      %6326 = vmatprep.subr.mxu0 0.0
      %6327 = vmatpush1.msra.mxu0 0.0
      %6328 = vmatprep.subr.mxu0 0.0
      %6329 = vmatpush1.msra.mxu0 0.0
      %6330 = vmatprep.subr.mxu0 0.0
      %6331 = vmatpush1.msra.mxu0 0.0
      %6332 = vmatprep.subr.mxu0 0.0
      %6333 = vmatpush1.msra.mxu0 0.0
      %6334 = vmatprep.subr.mxu0 0.0
      %6335 = vmatpush1.msra.mxu0 0.0
      %6336 = vmatprep.subr.mxu0 0.0
      %6337 = vmatpush1.msra.mxu0 0.0
      %6338 = vmatprep.subr.mxu0 0.0
      %6339 = vmatpush1.msra.mxu0 0.0
      %6340 = vmatprep.subr.mxu0 0.0
      %6341 = vmatpush1.msra.mxu0 0.0
      %6342 = vmatprep.subr.mxu0 0.0
      %6343 = vmatpush1.msra.mxu0 0.0
      %6344 = vmatprep.subr.mxu0 0.0
      %6345 = vmatpush1.msra.mxu0 %v6310
      %6346 = vmatprep.subr.mxu0 0.0
      %6347 = vmatpush2.msra.mxu0 0.0
      %6348 = vmatprep.subr.mxu0 0.0
      %6349 = vmatpush2.msra.mxu0 0.0
      %6350 = vmatprep.subr.mxu0 0.0
      %6351 = vmatpush2.msra.mxu0 0.0
      %6352 = vmatprep.subr.mxu0 0.0
      %6353 = vmatpush2.msra.mxu0 0.0
      %6354 = vmatprep.subr.mxu0 0.0
      %6355 = vmatpush2.msra.mxu0 0.0
      %6356 = vmatprep.subr.mxu0 0.0
      %6357 = vmatpush2.msra.mxu0 0.0
      %6358 = vmatprep.subr.mxu0 0.0
      %6359 = vmatpush2.msra.mxu0 0.0
      %6360 = vmatprep.subr.mxu0 0.0
      %6361 = vmatpush2.msra.mxu0 0.0
      %6362 = vmatprep.subr.mxu0 0.0
      %6363 = vmatpush2.msra.mxu0 0.0
      %6364 = vmatprep.subr.mxu0 0.0
      %6365 = vmatpush2.msra.mxu0 0.0
      %6366 = vmatprep.subr.mxu0 0.0
      %6367 = vmatpush2.msra.mxu0 0.0
      %6368 = vmatprep.subr.mxu0 0.0
      %6369 = vmatpush2.msra.mxu0 0.0
      %6370 = vmatprep.subr.mxu0 0.0
      %6371 = vmatpush2.msra.mxu0 0.0
      %6372 = vmatprep.subr.mxu0 0.0
      %6373 = vmatpush2.msra.mxu0 0.0
      %6374 = vmatprep.subr.mxu0 0.0
      %6375 = vmatpush2.msra.mxu0 0.0
      %6376 = vmatprep.subr.mxu0 0.0
      %6377 = vmatpush2.msra.mxu0 0.0
      %6378 = vmatprep.mubr.f32.mxu0 0.0
      %6379 = vmatmul.mubr.f32.gmra.mxu0 %v6312
      %v6380 = vpop.f32.mrf.mxu0
      %v6381 = vadd.f32 0.0, %v6380
      %v6382 = vpop.f32.mrf.mxu0
      %6383 = vdwg.mxu0
      %v6384 = vadd.f32 %v6306, %v6381
      %s6385 = scalar_lea.vmem %s6, 88
      %v6386 = vld [vmem:[%s6385] sm:$0xff]
      %v6388 = vsel %vm741, %v6156, 0
      %6390 = vmatprep.subr.mxu0 0.0
      %6391 = vmatpush1.msra.mxu0 0.0
      %6392 = vmatprep.subr.mxu0 0.0
      %6393 = vmatpush1.msra.mxu0 0.0
      %6394 = vmatprep.subr.mxu0 0.0
      %6395 = vmatpush1.msra.mxu0 0.0
      %6396 = vmatprep.subr.mxu0 0.0
      %6397 = vmatpush1.msra.mxu0 0.0
      %6398 = vmatprep.subr.mxu0 0.0
      %6399 = vmatpush1.msra.mxu0 0.0
      %6400 = vmatprep.subr.mxu0 0.0
      %6401 = vmatpush1.msra.mxu0 0.0
      %6402 = vmatprep.subr.mxu0 0.0
      %6403 = vmatpush1.msra.mxu0 0.0
      %6404 = vmatprep.subr.mxu0 0.0
      %6405 = vmatpush1.msra.mxu0 0.0
      %6406 = vmatprep.subr.mxu0 0.0
      %6407 = vmatpush1.msra.mxu0 0.0
      %6408 = vmatprep.subr.mxu0 0.0
      %6409 = vmatpush1.msra.mxu0 0.0
      %6410 = vmatprep.subr.mxu0 0.0
      %6411 = vmatpush1.msra.mxu0 0.0
      %6412 = vmatprep.subr.mxu0 0.0
      %6413 = vmatpush1.msra.mxu0 0.0
      %6414 = vmatprep.subr.mxu0 0.0
      %6415 = vmatpush1.msra.mxu0 0.0
      %6416 = vmatprep.subr.mxu0 0.0
      %6417 = vmatpush1.msra.mxu0 0.0
      %6418 = vmatprep.subr.mxu0 0.0
      %6419 = vmatpush1.msra.mxu0 0.0
      %6420 = vmatprep.subr.mxu0 0.0
      %6421 = vmatpush1.msra.mxu0 %v6386
      %6422 = vmatprep.subr.mxu0 0.0
      %6423 = vmatpush2.msra.mxu0 0.0
      %6424 = vmatprep.subr.mxu0 0.0
      %6425 = vmatpush2.msra.mxu0 0.0
      %6426 = vmatprep.subr.mxu0 0.0
      %6427 = vmatpush2.msra.mxu0 0.0
      %6428 = vmatprep.subr.mxu0 0.0
      %6429 = vmatpush2.msra.mxu0 0.0
      %6430 = vmatprep.subr.mxu0 0.0
      %6431 = vmatpush2.msra.mxu0 0.0
      %6432 = vmatprep.subr.mxu0 0.0
      %6433 = vmatpush2.msra.mxu0 0.0
      %6434 = vmatprep.subr.mxu0 0.0
      %6435 = vmatpush2.msra.mxu0 0.0
      %6436 = vmatprep.subr.mxu0 0.0
      %6437 = vmatpush2.msra.mxu0 0.0
      %6438 = vmatprep.subr.mxu0 0.0
      %6439 = vmatpush2.msra.mxu0 0.0
      %6440 = vmatprep.subr.mxu0 0.0
      %6441 = vmatpush2.msra.mxu0 0.0
      %6442 = vmatprep.subr.mxu0 0.0
      %6443 = vmatpush2.msra.mxu0 0.0
      %6444 = vmatprep.subr.mxu0 0.0
      %6445 = vmatpush2.msra.mxu0 0.0
      %6446 = vmatprep.subr.mxu0 0.0
      %6447 = vmatpush2.msra.mxu0 0.0
      %6448 = vmatprep.subr.mxu0 0.0
      %6449 = vmatpush2.msra.mxu0 0.0
      %6450 = vmatprep.subr.mxu0 0.0
      %6451 = vmatpush2.msra.mxu0 0.0
      %6452 = vmatprep.subr.mxu0 0.0
      %6453 = vmatpush2.msra.mxu0 0.0
      %6454 = vmatprep.mubr.f32.mxu0 0.0
      %6455 = vmatmul.mubr.f32.gmra.mxu0 %v6388
      %v6456 = vpop.f32.mrf.mxu0
      %v6457 = vadd.f32 0.0, %v6456
      %v6458 = vpop.f32.mrf.mxu0
      %6459 = vdwg.mxu0
      %v6460 = vadd.f32 %v6384, %v6457
      %6462 = vrot.lane.b32.xlu0 %v5489, 120
      %v6463 = vpop.permute.xlu0 %6462
      %6464 = vrot.lane.b32.xlu0 %v5489, 112
      %v6465 = vpop.permute.xlu0 %6464
      %6466 = vrot.lane.b32.xlu0 %v5489, 104
      %v6467 = vpop.permute.xlu0 %6466
      %6468 = vrot.lane.b32.xlu0 %v5489, 96
      %v6469 = vpop.permute.xlu0 %6468
      %v6470 = vsel %vm741, %v5489, 0
      %v6472 = vsel %vm741, %v6469, 0
      %6474 = vmatprep.subr.mxu0 0.0
      %6475 = vmatpush1.xpose.msra.mxu0 0.0
      %6476 = vmatprep.subr.mxu0 0.0
      %6477 = vmatpush1.xpose.msra.mxu0 0.0
      %6478 = vmatprep.subr.mxu0 0.0
      %6479 = vmatpush1.xpose.msra.mxu0 0.0
      %6480 = vmatprep.subr.mxu0 0.0
      %6481 = vmatpush1.xpose.msra.mxu0 0.0
      %6482 = vmatprep.subr.mxu0 0.0
      %6483 = vmatpush1.xpose.msra.mxu0 0.0
      %6484 = vmatprep.subr.mxu0 0.0
      %6485 = vmatpush1.xpose.msra.mxu0 0.0
      %6486 = vmatprep.subr.mxu0 0.0
      %6487 = vmatpush1.xpose.msra.mxu0 0.0
      %6488 = vmatprep.subr.mxu0 0.0
      %6489 = vmatpush1.xpose.msra.mxu0 0.0
      %6490 = vmatprep.subr.mxu0 0.0
      %6491 = vmatpush1.xpose.msra.mxu0 0.0
      %6492 = vmatprep.subr.mxu0 0.0
      %6493 = vmatpush1.xpose.msra.mxu0 0.0
      %6494 = vmatprep.subr.mxu0 0.0
      %6495 = vmatpush1.xpose.msra.mxu0 0.0
      %6496 = vmatprep.subr.mxu0 0.0
      %6497 = vmatpush1.xpose.msra.mxu0 0.0
      %6498 = vmatprep.subr.mxu0 0.0
      %6499 = vmatpush1.xpose.msra.mxu0 0.0
      %6500 = vmatprep.subr.mxu0 0.0
      %6501 = vmatpush1.xpose.msra.mxu0 0.0
      %6502 = vmatprep.subr.mxu0 0.0
      %6503 = vmatpush1.xpose.msra.mxu0 0.0
      %6504 = vmatprep.subr.mxu0 0.0
      %6505 = vmatpush1.xpose.msra.mxu0 %v6472
      %6506 = vmatprep.subr.mxu0 0.0
      %6507 = vmatpush2.xpose.msra.mxu0 0.0
      %6508 = vmatprep.subr.mxu0 0.0
      %6509 = vmatpush2.xpose.msra.mxu0 0.0
      %6510 = vmatprep.subr.mxu0 0.0
      %6511 = vmatpush2.xpose.msra.mxu0 0.0
      %6512 = vmatprep.subr.mxu0 0.0
      %6513 = vmatpush2.xpose.msra.mxu0 0.0
      %6514 = vmatprep.subr.mxu0 0.0
      %6515 = vmatpush2.xpose.msra.mxu0 0.0
      %6516 = vmatprep.subr.mxu0 0.0
      %6517 = vmatpush2.xpose.msra.mxu0 0.0
      %6518 = vmatprep.subr.mxu0 0.0
      %6519 = vmatpush2.xpose.msra.mxu0 0.0
      %6520 = vmatprep.subr.mxu0 0.0
      %6521 = vmatpush2.xpose.msra.mxu0 0.0
      %6522 = vmatprep.subr.mxu0 0.0
      %6523 = vmatpush2.xpose.msra.mxu0 0.0
      %6524 = vmatprep.subr.mxu0 0.0
      %6525 = vmatpush2.xpose.msra.mxu0 0.0
      %6526 = vmatprep.subr.mxu0 0.0
      %6527 = vmatpush2.xpose.msra.mxu0 0.0
      %6528 = vmatprep.subr.mxu0 0.0
      %6529 = vmatpush2.xpose.msra.mxu0 0.0
      %6530 = vmatprep.subr.mxu0 0.0
      %6531 = vmatpush2.xpose.msra.mxu0 0.0
      %6532 = vmatprep.subr.mxu0 0.0
      %6533 = vmatpush2.xpose.msra.mxu0 0.0
      %6534 = vmatprep.subr.mxu0 0.0
      %6535 = vmatpush2.xpose.msra.mxu0 0.0
      %6536 = vmatprep.subr.mxu0 0.0
      %6537 = vmatpush2.xpose.msra.mxu0 0.0
      %6538 = vmatprep.mubr.f32.mxu0 0.0
      %6539 = vmatmul.mubr.f32.gmra.mxu0 %v6470
      %v6540 = vpop.f32.mrf.mxu0
      %v6541 = vadd.f32 0.0, %v6540
      %v6542 = vpop.f32.mrf.mxu0
      %6543 = vdwg.mxu0
      %6544 = vrot.lane.b32.xlu0 %v6463, 96
      %v6545 = vpop.permute.xlu0 %6544
      %v6546 = vsel %vm741, %v6463, 0
      %v6548 = vsel %vm741, %v6545, 0
      %6550 = vmatprep.subr.mxu0 0.0
      %6551 = vmatpush1.xpose.msra.mxu0 0.0
      %6552 = vmatprep.subr.mxu0 0.0
      %6553 = vmatpush1.xpose.msra.mxu0 0.0
      %6554 = vmatprep.subr.mxu0 0.0
      %6555 = vmatpush1.xpose.msra.mxu0 0.0
      %6556 = vmatprep.subr.mxu0 0.0
      %6557 = vmatpush1.xpose.msra.mxu0 0.0
      %6558 = vmatprep.subr.mxu0 0.0
      %6559 = vmatpush1.xpose.msra.mxu0 0.0
      %6560 = vmatprep.subr.mxu0 0.0
      %6561 = vmatpush1.xpose.msra.mxu0 0.0
      %6562 = vmatprep.subr.mxu0 0.0
      %6563 = vmatpush1.xpose.msra.mxu0 0.0
      %6564 = vmatprep.subr.mxu0 0.0
      %6565 = vmatpush1.xpose.msra.mxu0 0.0
      %6566 = vmatprep.subr.mxu0 0.0
      %6567 = vmatpush1.xpose.msra.mxu0 0.0
      %6568 = vmatprep.subr.mxu0 0.0
      %6569 = vmatpush1.xpose.msra.mxu0 0.0
      %6570 = vmatprep.subr.mxu0 0.0
      %6571 = vmatpush1.xpose.msra.mxu0 0.0
      %6572 = vmatprep.subr.mxu0 0.0
      %6573 = vmatpush1.xpose.msra.mxu0 0.0
      %6574 = vmatprep.subr.mxu0 0.0
      %6575 = vmatpush1.xpose.msra.mxu0 0.0
      %6576 = vmatprep.subr.mxu0 0.0
      %6577 = vmatpush1.xpose.msra.mxu0 0.0
      %6578 = vmatprep.subr.mxu0 0.0
      %6579 = vmatpush1.xpose.msra.mxu0 0.0
      %6580 = vmatprep.subr.mxu0 0.0
      %6581 = vmatpush1.xpose.msra.mxu0 %v6548
      %6582 = vmatprep.subr.mxu0 0.0
      %6583 = vmatpush2.xpose.msra.mxu0 0.0
      %6584 = vmatprep.subr.mxu0 0.0
      %6585 = vmatpush2.xpose.msra.mxu0 0.0
      %6586 = vmatprep.subr.mxu0 0.0
      %6587 = vmatpush2.xpose.msra.mxu0 0.0
      %6588 = vmatprep.subr.mxu0 0.0
      %6589 = vmatpush2.xpose.msra.mxu0 0.0
      %6590 = vmatprep.subr.mxu0 0.0
      %6591 = vmatpush2.xpose.msra.mxu0 0.0
      %6592 = vmatprep.subr.mxu0 0.0
      %6593 = vmatpush2.xpose.msra.mxu0 0.0
      %6594 = vmatprep.subr.mxu0 0.0
      %6595 = vmatpush2.xpose.msra.mxu0 0.0
      %6596 = vmatprep.subr.mxu0 0.0
      %6597 = vmatpush2.xpose.msra.mxu0 0.0
      %6598 = vmatprep.subr.mxu0 0.0
      %6599 = vmatpush2.xpose.msra.mxu0 0.0
      %6600 = vmatprep.subr.mxu0 0.0
      %6601 = vmatpush2.xpose.msra.mxu0 0.0
      %6602 = vmatprep.subr.mxu0 0.0
      %6603 = vmatpush2.xpose.msra.mxu0 0.0
      %6604 = vmatprep.subr.mxu0 0.0
      %6605 = vmatpush2.xpose.msra.mxu0 0.0
      %6606 = vmatprep.subr.mxu0 0.0
      %6607 = vmatpush2.xpose.msra.mxu0 0.0
      %6608 = vmatprep.subr.mxu0 0.0
      %6609 = vmatpush2.xpose.msra.mxu0 0.0
      %6610 = vmatprep.subr.mxu0 0.0
      %6611 = vmatpush2.xpose.msra.mxu0 0.0
      %6612 = vmatprep.subr.mxu0 0.0
      %6613 = vmatpush2.xpose.msra.mxu0 0.0
      %6614 = vmatprep.mubr.f32.mxu0 0.0
      %6615 = vmatmul.mubr.f32.gmra.mxu0 %v6546
      %v6616 = vpop.f32.mrf.mxu0
      %v6617 = vadd.f32 0.0, %v6616
      %v6618 = vpop.f32.mrf.mxu0
      %6619 = vdwg.mxu0
      %6620 = vrot.lane.b32.xlu0 %v6465, 96
      %v6621 = vpop.permute.xlu0 %6620
      %v6622 = vsel %vm741, %v6465, 0
      %v6624 = vsel %vm741, %v6621, 0
      %6626 = vmatprep.subr.mxu0 0.0
      %6627 = vmatpush1.xpose.msra.mxu0 0.0
      %6628 = vmatprep.subr.mxu0 0.0
      %6629 = vmatpush1.xpose.msra.mxu0 0.0
      %6630 = vmatprep.subr.mxu0 0.0
      %6631 = vmatpush1.xpose.msra.mxu0 0.0
      %6632 = vmatprep.subr.mxu0 0.0
      %6633 = vmatpush1.xpose.msra.mxu0 0.0
      %6634 = vmatprep.subr.mxu0 0.0
      %6635 = vmatpush1.xpose.msra.mxu0 0.0
      %6636 = vmatprep.subr.mxu0 0.0
      %6637 = vmatpush1.xpose.msra.mxu0 0.0
      %6638 = vmatprep.subr.mxu0 0.0
      %6639 = vmatpush1.xpose.msra.mxu0 0.0
      %6640 = vmatprep.subr.mxu0 0.0
      %6641 = vmatpush1.xpose.msra.mxu0 0.0
      %6642 = vmatprep.subr.mxu0 0.0
      %6643 = vmatpush1.xpose.msra.mxu0 0.0
      %6644 = vmatprep.subr.mxu0 0.0
      %6645 = vmatpush1.xpose.msra.mxu0 0.0
      %6646 = vmatprep.subr.mxu0 0.0
      %6647 = vmatpush1.xpose.msra.mxu0 0.0
      %6648 = vmatprep.subr.mxu0 0.0
      %6649 = vmatpush1.xpose.msra.mxu0 0.0
      %6650 = vmatprep.subr.mxu0 0.0
      %6651 = vmatpush1.xpose.msra.mxu0 0.0
      %6652 = vmatprep.subr.mxu0 0.0
      %6653 = vmatpush1.xpose.msra.mxu0 0.0
      %6654 = vmatprep.subr.mxu0 0.0
      %6655 = vmatpush1.xpose.msra.mxu0 0.0
      %6656 = vmatprep.subr.mxu0 0.0
      %6657 = vmatpush1.xpose.msra.mxu0 %v6624
      %6658 = vmatprep.subr.mxu0 0.0
      %6659 = vmatpush2.xpose.msra.mxu0 0.0
      %6660 = vmatprep.subr.mxu0 0.0
      %6661 = vmatpush2.xpose.msra.mxu0 0.0
      %6662 = vmatprep.subr.mxu0 0.0
      %6663 = vmatpush2.xpose.msra.mxu0 0.0
      %6664 = vmatprep.subr.mxu0 0.0
      %6665 = vmatpush2.xpose.msra.mxu0 0.0
      %6666 = vmatprep.subr.mxu0 0.0
      %6667 = vmatpush2.xpose.msra.mxu0 0.0
      %6668 = vmatprep.subr.mxu0 0.0
      %6669 = vmatpush2.xpose.msra.mxu0 0.0
      %6670 = vmatprep.subr.mxu0 0.0
      %6671 = vmatpush2.xpose.msra.mxu0 0.0
      %6672 = vmatprep.subr.mxu0 0.0
      %6673 = vmatpush2.xpose.msra.mxu0 0.0
      %6674 = vmatprep.subr.mxu0 0.0
      %6675 = vmatpush2.xpose.msra.mxu0 0.0
      %6676 = vmatprep.subr.mxu0 0.0
      %6677 = vmatpush2.xpose.msra.mxu0 0.0
      %6678 = vmatprep.subr.mxu0 0.0
      %6679 = vmatpush2.xpose.msra.mxu0 0.0
      %6680 = vmatprep.subr.mxu0 0.0
      %6681 = vmatpush2.xpose.msra.mxu0 0.0
      %6682 = vmatprep.subr.mxu0 0.0
      %6683 = vmatpush2.xpose.msra.mxu0 0.0
      %6684 = vmatprep.subr.mxu0 0.0
      %6685 = vmatpush2.xpose.msra.mxu0 0.0
      %6686 = vmatprep.subr.mxu0 0.0
      %6687 = vmatpush2.xpose.msra.mxu0 0.0
      %6688 = vmatprep.subr.mxu0 0.0
      %6689 = vmatpush2.xpose.msra.mxu0 0.0
      %6690 = vmatprep.mubr.f32.mxu0 0.0
      %6691 = vmatmul.mubr.f32.gmra.mxu0 %v6622
      %v6692 = vpop.f32.mrf.mxu0
      %v6693 = vadd.f32 0.0, %v6692
      %v6694 = vpop.f32.mrf.mxu0
      %6695 = vdwg.mxu0
      %6696 = vrot.lane.b32.xlu0 %v6467, 96
      %v6697 = vpop.permute.xlu0 %6696
      %v6698 = vsel %vm741, %v6467, 0
      %v6700 = vsel %vm741, %v6697, 0
      %6702 = vmatprep.subr.mxu0 0.0
      %6703 = vmatpush1.xpose.msra.mxu0 0.0
      %6704 = vmatprep.subr.mxu0 0.0
      %6705 = vmatpush1.xpose.msra.mxu0 0.0
      %6706 = vmatprep.subr.mxu0 0.0
      %6707 = vmatpush1.xpose.msra.mxu0 0.0
      %6708 = vmatprep.subr.mxu0 0.0
      %6709 = vmatpush1.xpose.msra.mxu0 0.0
      %6710 = vmatprep.subr.mxu0 0.0
      %6711 = vmatpush1.xpose.msra.mxu0 0.0
      %6712 = vmatprep.subr.mxu0 0.0
      %6713 = vmatpush1.xpose.msra.mxu0 0.0
      %6714 = vmatprep.subr.mxu0 0.0
      %6715 = vmatpush1.xpose.msra.mxu0 0.0
      %6716 = vmatprep.subr.mxu0 0.0
      %6717 = vmatpush1.xpose.msra.mxu0 0.0
      %6718 = vmatprep.subr.mxu0 0.0
      %6719 = vmatpush1.xpose.msra.mxu0 0.0
      %6720 = vmatprep.subr.mxu0 0.0
      %6721 = vmatpush1.xpose.msra.mxu0 0.0
      %6722 = vmatprep.subr.mxu0 0.0
      %6723 = vmatpush1.xpose.msra.mxu0 0.0
      %6724 = vmatprep.subr.mxu0 0.0
      %6725 = vmatpush1.xpose.msra.mxu0 0.0
      %6726 = vmatprep.subr.mxu0 0.0
      %6727 = vmatpush1.xpose.msra.mxu0 0.0
      %6728 = vmatprep.subr.mxu0 0.0
      %6729 = vmatpush1.xpose.msra.mxu0 0.0
      %6730 = vmatprep.subr.mxu0 0.0
      %6731 = vmatpush1.xpose.msra.mxu0 0.0
      %6732 = vmatprep.subr.mxu0 0.0
      %6733 = vmatpush1.xpose.msra.mxu0 %v6700
      %6734 = vmatprep.subr.mxu0 0.0
      %6735 = vmatpush2.xpose.msra.mxu0 0.0
      %6736 = vmatprep.subr.mxu0 0.0
      %6737 = vmatpush2.xpose.msra.mxu0 0.0
      %6738 = vmatprep.subr.mxu0 0.0
      %6739 = vmatpush2.xpose.msra.mxu0 0.0
      %6740 = vmatprep.subr.mxu0 0.0
      %6741 = vmatpush2.xpose.msra.mxu0 0.0
      %6742 = vmatprep.subr.mxu0 0.0
      %6743 = vmatpush2.xpose.msra.mxu0 0.0
      %6744 = vmatprep.subr.mxu0 0.0
      %6745 = vmatpush2.xpose.msra.mxu0 0.0
      %6746 = vmatprep.subr.mxu0 0.0
      %6747 = vmatpush2.xpose.msra.mxu0 0.0
      %6748 = vmatprep.subr.mxu0 0.0
      %6749 = vmatpush2.xpose.msra.mxu0 0.0
      %6750 = vmatprep.subr.mxu0 0.0
      %6751 = vmatpush2.xpose.msra.mxu0 0.0
      %6752 = vmatprep.subr.mxu0 0.0
      %6753 = vmatpush2.xpose.msra.mxu0 0.0
      %6754 = vmatprep.subr.mxu0 0.0
      %6755 = vmatpush2.xpose.msra.mxu0 0.0
      %6756 = vmatprep.subr.mxu0 0.0
      %6757 = vmatpush2.xpose.msra.mxu0 0.0
      %6758 = vmatprep.subr.mxu0 0.0
      %6759 = vmatpush2.xpose.msra.mxu0 0.0
      %6760 = vmatprep.subr.mxu0 0.0
      %6761 = vmatpush2.xpose.msra.mxu0 0.0
      %6762 = vmatprep.subr.mxu0 0.0
      %6763 = vmatpush2.xpose.msra.mxu0 0.0
      %6764 = vmatprep.subr.mxu0 0.0
      %6765 = vmatpush2.xpose.msra.mxu0 0.0
      %6766 = vmatprep.mubr.f32.mxu0 0.0
      %6767 = vmatmul.mubr.f32.gmra.mxu0 %v6698
      %v6768 = vpop.f32.mrf.mxu0
      %v6769 = vadd.f32 0.0, %v6768
      %v6770 = vpop.f32.mrf.mxu0
      %6771 = vdwg.mxu0
      %v6772 = vmul.f32 %v6541, 0.35355338
      %v6773 = vmul.f32 %v6617, 0.35355338
      %v6774 = vmul.f32 %v6693, 0.35355338
      %v6775 = vmul.f32 %v6769, 0.35355338
      %v6776 = vadd.f32 %v6772, %v2023
      %v6777 = vadd.f32 %v6773, %v2023
      %v6778 = vadd.f32 %v6774, %v2023
      %v6779 = vadd.f32 %v6775, %v2023
      %v6780 = vsel %vm741, %v6776, -inf
      %6781 = vmax.xlane.f32.xlu0 %v6780
      %v6782 = vpop.xlane.xlu0 %6781
      %v6783 = vsel %vm741, %v6777, -inf
      %6784 = vmax.xlane.f32.xlu0 %v6783
      %v6785 = vpop.xlane.xlu0 %6784
      %v6786 = vsel %vm741, %v6778, -inf
      %6787 = vmax.xlane.f32.xlu0 %v6786
      %v6788 = vpop.xlane.xlu0 %6787
      %v6789 = vsel %vm741, %v6779, -inf
      %6790 = vmax.xlane.f32.xlu0 %v6789
      %v6791 = vpop.xlane.xlu0 %6790
      %v6792 = vsub.f32 %v6776, %v6782
      %v6793 = vsub.f32 %v6777, %v6785
      %v6794 = vsub.f32 %v6778, %v6788
      %v6795 = vsub.f32 %v6779, %v6791
      %v6796 = vmul.f32 %v6792, 1.442695
      %v6797 = vpow.pop %v6796
      %v6798 = vmul.f32 %v6793, 1.442695
      %v6799 = vpow.pop %v6798
      %v6800 = vmul.f32 %v6794, 1.442695
      %v6801 = vpow.pop %v6800
      %v6802 = vmul.f32 %v6795, 1.442695
      %v6803 = vpow.pop %v6802
      %v6804 = vsel %vm741, %v6797, 0.0
      %6805 = vadd.xlane.f32.xlu0 %v6804
      %v6806 = vpop.xlane.xlu0 %6805
      %v6807 = vsel %vm741, %v6799, 0.0
      %6808 = vadd.xlane.f32.xlu0 %v6807
      %v6809 = vpop.xlane.xlu0 %6808
      %v6810 = vsel %vm741, %v6801, 0.0
      %6811 = vadd.xlane.f32.xlu0 %v6810
      %v6812 = vpop.xlane.xlu0 %6811
      %v6813 = vsel %vm741, %v6803, 0.0
      %6814 = vadd.xlane.f32.xlu0 %v6813
      %v6815 = vpop.xlane.xlu0 %6814
      %v6816 = vrcp.pop %v6806
      %v6817 = vrcp.pop %v6809
      %v6818 = vrcp.pop %v6812
      %v6819 = vrcp.pop %v6815
      %v6820 = vmul.f32 %v6797, %v6816
      %v6821 = vmul.f32 %v6799, %v6817
      %v6822 = vmul.f32 %v6801, %v6818
      %v6823 = vmul.f32 %v6803, %v6819
      %6824 = vrot.lane.b32.xlu0 %v5489, 64
      %v6825 = vpop.permute.xlu0 %6824
      %v6828 = vsel %vm741, %v6820, 0
      %6830 = vmatprep.subr.mxu0 0.0
      %6831 = vmatpush1.msra.mxu0 0.0
      %6832 = vmatprep.subr.mxu0 0.0
      %6833 = vmatpush1.msra.mxu0 0.0
      %6834 = vmatprep.subr.mxu0 0.0
      %6835 = vmatpush1.msra.mxu0 0.0
      %6836 = vmatprep.subr.mxu0 0.0
      %6837 = vmatpush1.msra.mxu0 0.0
      %6838 = vmatprep.subr.mxu0 0.0
      %6839 = vmatpush1.msra.mxu0 0.0
      %6840 = vmatprep.subr.mxu0 0.0
      %6841 = vmatpush1.msra.mxu0 0.0
      %6842 = vmatprep.subr.mxu0 0.0
      %6843 = vmatpush1.msra.mxu0 0.0
      %6844 = vmatprep.subr.mxu0 0.0
      %6845 = vmatpush1.msra.mxu0 0.0
      %6846 = vmatprep.subr.mxu0 0.0
      %6847 = vmatpush1.msra.mxu0 0.0
      %6848 = vmatprep.subr.mxu0 0.0
      %6849 = vmatpush1.msra.mxu0 0.0
      %6850 = vmatprep.subr.mxu0 0.0
      %6851 = vmatpush1.msra.mxu0 0.0
      %6852 = vmatprep.subr.mxu0 0.0
      %6853 = vmatpush1.msra.mxu0 0.0
      %6854 = vmatprep.subr.mxu0 0.0
      %6855 = vmatpush1.msra.mxu0 0.0
      %6856 = vmatprep.subr.mxu0 0.0
      %6857 = vmatpush1.msra.mxu0 0.0
      %6858 = vmatprep.subr.mxu0 0.0
      %6859 = vmatpush1.msra.mxu0 0.0
      %6860 = vmatprep.subr.mxu0 0.0
      %6861 = vmatpush1.msra.mxu0 %v6825
      %6862 = vmatprep.subr.mxu0 0.0
      %6863 = vmatpush2.msra.mxu0 0.0
      %6864 = vmatprep.subr.mxu0 0.0
      %6865 = vmatpush2.msra.mxu0 0.0
      %6866 = vmatprep.subr.mxu0 0.0
      %6867 = vmatpush2.msra.mxu0 0.0
      %6868 = vmatprep.subr.mxu0 0.0
      %6869 = vmatpush2.msra.mxu0 0.0
      %6870 = vmatprep.subr.mxu0 0.0
      %6871 = vmatpush2.msra.mxu0 0.0
      %6872 = vmatprep.subr.mxu0 0.0
      %6873 = vmatpush2.msra.mxu0 0.0
      %6874 = vmatprep.subr.mxu0 0.0
      %6875 = vmatpush2.msra.mxu0 0.0
      %6876 = vmatprep.subr.mxu0 0.0
      %6877 = vmatpush2.msra.mxu0 0.0
      %6878 = vmatprep.subr.mxu0 0.0
      %6879 = vmatpush2.msra.mxu0 0.0
      %6880 = vmatprep.subr.mxu0 0.0
      %6881 = vmatpush2.msra.mxu0 0.0
      %6882 = vmatprep.subr.mxu0 0.0
      %6883 = vmatpush2.msra.mxu0 0.0
      %6884 = vmatprep.subr.mxu0 0.0
      %6885 = vmatpush2.msra.mxu0 0.0
      %6886 = vmatprep.subr.mxu0 0.0
      %6887 = vmatpush2.msra.mxu0 0.0
      %6888 = vmatprep.subr.mxu0 0.0
      %6889 = vmatpush2.msra.mxu0 0.0
      %6890 = vmatprep.subr.mxu0 0.0
      %6891 = vmatpush2.msra.mxu0 0.0
      %6892 = vmatprep.subr.mxu0 0.0
      %6893 = vmatpush2.msra.mxu0 0.0
      %6894 = vmatprep.mubr.f32.mxu0 0.0
      %6895 = vmatmul.mubr.f32.gmra.mxu0 %v6828
      %v6896 = vpop.f32.mrf.mxu0
      %v6897 = vadd.f32 0.0, %v6896
      %v6898 = vpop.f32.mrf.mxu0
      %6899 = vdwg.mxu0
      %6900 = vrot.lane.b32.xlu0 %v6463, 64
      %v6901 = vpop.permute.xlu0 %6900
      %v6904 = vsel %vm741, %v6821, 0
      %6906 = vmatprep.subr.mxu0 0.0
      %6907 = vmatpush1.msra.mxu0 0.0
      %6908 = vmatprep.subr.mxu0 0.0
      %6909 = vmatpush1.msra.mxu0 0.0
      %6910 = vmatprep.subr.mxu0 0.0
      %6911 = vmatpush1.msra.mxu0 0.0
      %6912 = vmatprep.subr.mxu0 0.0
      %6913 = vmatpush1.msra.mxu0 0.0
      %6914 = vmatprep.subr.mxu0 0.0
      %6915 = vmatpush1.msra.mxu0 0.0
      %6916 = vmatprep.subr.mxu0 0.0
      %6917 = vmatpush1.msra.mxu0 0.0
      %6918 = vmatprep.subr.mxu0 0.0
      %6919 = vmatpush1.msra.mxu0 0.0
      %6920 = vmatprep.subr.mxu0 0.0
      %6921 = vmatpush1.msra.mxu0 0.0
      %6922 = vmatprep.subr.mxu0 0.0
      %6923 = vmatpush1.msra.mxu0 0.0
      %6924 = vmatprep.subr.mxu0 0.0
      %6925 = vmatpush1.msra.mxu0 0.0
      %6926 = vmatprep.subr.mxu0 0.0
      %6927 = vmatpush1.msra.mxu0 0.0
      %6928 = vmatprep.subr.mxu0 0.0
      %6929 = vmatpush1.msra.mxu0 0.0
      %6930 = vmatprep.subr.mxu0 0.0
      %6931 = vmatpush1.msra.mxu0 0.0
      %6932 = vmatprep.subr.mxu0 0.0
      %6933 = vmatpush1.msra.mxu0 0.0
      %6934 = vmatprep.subr.mxu0 0.0
      %6935 = vmatpush1.msra.mxu0 0.0
      %6936 = vmatprep.subr.mxu0 0.0
      %6937 = vmatpush1.msra.mxu0 %v6901
      %6938 = vmatprep.subr.mxu0 0.0
      %6939 = vmatpush2.msra.mxu0 0.0
      %6940 = vmatprep.subr.mxu0 0.0
      %6941 = vmatpush2.msra.mxu0 0.0
      %6942 = vmatprep.subr.mxu0 0.0
      %6943 = vmatpush2.msra.mxu0 0.0
      %6944 = vmatprep.subr.mxu0 0.0
      %6945 = vmatpush2.msra.mxu0 0.0
      %6946 = vmatprep.subr.mxu0 0.0
      %6947 = vmatpush2.msra.mxu0 0.0
      %6948 = vmatprep.subr.mxu0 0.0
      %6949 = vmatpush2.msra.mxu0 0.0
      %6950 = vmatprep.subr.mxu0 0.0
      %6951 = vmatpush2.msra.mxu0 0.0
      %6952 = vmatprep.subr.mxu0 0.0
      %6953 = vmatpush2.msra.mxu0 0.0
      %6954 = vmatprep.subr.mxu0 0.0
      %6955 = vmatpush2.msra.mxu0 0.0
      %6956 = vmatprep.subr.mxu0 0.0
      %6957 = vmatpush2.msra.mxu0 0.0
      %6958 = vmatprep.subr.mxu0 0.0
      %6959 = vmatpush2.msra.mxu0 0.0
      %6960 = vmatprep.subr.mxu0 0.0
      %6961 = vmatpush2.msra.mxu0 0.0
      %6962 = vmatprep.subr.mxu0 0.0
      %6963 = vmatpush2.msra.mxu0 0.0
      %6964 = vmatprep.subr.mxu0 0.0
      %6965 = vmatpush2.msra.mxu0 0.0
      %6966 = vmatprep.subr.mxu0 0.0
      %6967 = vmatpush2.msra.mxu0 0.0
      %6968 = vmatprep.subr.mxu0 0.0
      %6969 = vmatpush2.msra.mxu0 0.0
      %6970 = vmatprep.mubr.f32.mxu0 0.0
      %6971 = vmatmul.mubr.f32.gmra.mxu0 %v6904
      %v6972 = vpop.f32.mrf.mxu0
      %v6973 = vadd.f32 0.0, %v6972
      %v6974 = vpop.f32.mrf.mxu0
      %6975 = vdwg.mxu0
      %6976 = vrot.lane.b32.xlu0 %v6465, 64
      %v6977 = vpop.permute.xlu0 %6976
      %v6980 = vsel %vm741, %v6822, 0
      %6982 = vmatprep.subr.mxu0 0.0
      %6983 = vmatpush1.msra.mxu0 0.0
      %6984 = vmatprep.subr.mxu0 0.0
      %6985 = vmatpush1.msra.mxu0 0.0
      %6986 = vmatprep.subr.mxu0 0.0
      %6987 = vmatpush1.msra.mxu0 0.0
      %6988 = vmatprep.subr.mxu0 0.0
      %6989 = vmatpush1.msra.mxu0 0.0
      %6990 = vmatprep.subr.mxu0 0.0
      %6991 = vmatpush1.msra.mxu0 0.0
      %6992 = vmatprep.subr.mxu0 0.0
      %6993 = vmatpush1.msra.mxu0 0.0
      %6994 = vmatprep.subr.mxu0 0.0
      %6995 = vmatpush1.msra.mxu0 0.0
      %6996 = vmatprep.subr.mxu0 0.0
      %6997 = vmatpush1.msra.mxu0 0.0
      %6998 = vmatprep.subr.mxu0 0.0
      %6999 = vmatpush1.msra.mxu0 0.0
      %7000 = vmatprep.subr.mxu0 0.0
      %7001 = vmatpush1.msra.mxu0 0.0
      %7002 = vmatprep.subr.mxu0 0.0
      %7003 = vmatpush1.msra.mxu0 0.0
      %7004 = vmatprep.subr.mxu0 0.0
      %7005 = vmatpush1.msra.mxu0 0.0
      %7006 = vmatprep.subr.mxu0 0.0
      %7007 = vmatpush1.msra.mxu0 0.0
      %7008 = vmatprep.subr.mxu0 0.0
      %7009 = vmatpush1.msra.mxu0 0.0
      %7010 = vmatprep.subr.mxu0 0.0
      %7011 = vmatpush1.msra.mxu0 0.0
      %7012 = vmatprep.subr.mxu0 0.0
      %7013 = vmatpush1.msra.mxu0 %v6977
      %7014 = vmatprep.subr.mxu0 0.0
      %7015 = vmatpush2.msra.mxu0 0.0
      %7016 = vmatprep.subr.mxu0 0.0
      %7017 = vmatpush2.msra.mxu0 0.0
      %7018 = vmatprep.subr.mxu0 0.0
      %7019 = vmatpush2.msra.mxu0 0.0
      %7020 = vmatprep.subr.mxu0 0.0
      %7021 = vmatpush2.msra.mxu0 0.0
      %7022 = vmatprep.subr.mxu0 0.0
      %7023 = vmatpush2.msra.mxu0 0.0
      %7024 = vmatprep.subr.mxu0 0.0
      %7025 = vmatpush2.msra.mxu0 0.0
      %7026 = vmatprep.subr.mxu0 0.0
      %7027 = vmatpush2.msra.mxu0 0.0
      %7028 = vmatprep.subr.mxu0 0.0
      %7029 = vmatpush2.msra.mxu0 0.0
      %7030 = vmatprep.subr.mxu0 0.0
      %7031 = vmatpush2.msra.mxu0 0.0
      %7032 = vmatprep.subr.mxu0 0.0
      %7033 = vmatpush2.msra.mxu0 0.0
      %7034 = vmatprep.subr.mxu0 0.0
      %7035 = vmatpush2.msra.mxu0 0.0
      %7036 = vmatprep.subr.mxu0 0.0
      %7037 = vmatpush2.msra.mxu0 0.0
      %7038 = vmatprep.subr.mxu0 0.0
      %7039 = vmatpush2.msra.mxu0 0.0
      %7040 = vmatprep.subr.mxu0 0.0
      %7041 = vmatpush2.msra.mxu0 0.0
      %7042 = vmatprep.subr.mxu0 0.0
      %7043 = vmatpush2.msra.mxu0 0.0
      %7044 = vmatprep.subr.mxu0 0.0
      %7045 = vmatpush2.msra.mxu0 0.0
      %7046 = vmatprep.mubr.f32.mxu0 0.0
      %7047 = vmatmul.mubr.f32.gmra.mxu0 %v6980
      %v7048 = vpop.f32.mrf.mxu0
      %v7049 = vadd.f32 0.0, %v7048
      %v7050 = vpop.f32.mrf.mxu0
      %7051 = vdwg.mxu0
      %7052 = vrot.lane.b32.xlu0 %v6467, 64
      %v7053 = vpop.permute.xlu0 %7052
      %v7056 = vsel %vm741, %v6823, 0
      %7058 = vmatprep.subr.mxu0 0.0
      %7059 = vmatpush1.msra.mxu0 0.0
      %7060 = vmatprep.subr.mxu0 0.0
      %7061 = vmatpush1.msra.mxu0 0.0
      %7062 = vmatprep.subr.mxu0 0.0
      %7063 = vmatpush1.msra.mxu0 0.0
      %7064 = vmatprep.subr.mxu0 0.0
      %7065 = vmatpush1.msra.mxu0 0.0
      %7066 = vmatprep.subr.mxu0 0.0
      %7067 = vmatpush1.msra.mxu0 0.0
      %7068 = vmatprep.subr.mxu0 0.0
      %7069 = vmatpush1.msra.mxu0 0.0
      %7070 = vmatprep.subr.mxu0 0.0
      %7071 = vmatpush1.msra.mxu0 0.0
      %7072 = vmatprep.subr.mxu0 0.0
      %7073 = vmatpush1.msra.mxu0 0.0
      %7074 = vmatprep.subr.mxu0 0.0
      %7075 = vmatpush1.msra.mxu0 0.0
      %7076 = vmatprep.subr.mxu0 0.0
      %7077 = vmatpush1.msra.mxu0 0.0
      %7078 = vmatprep.subr.mxu0 0.0
      %7079 = vmatpush1.msra.mxu0 0.0
      %7080 = vmatprep.subr.mxu0 0.0
      %7081 = vmatpush1.msra.mxu0 0.0
      %7082 = vmatprep.subr.mxu0 0.0
      %7083 = vmatpush1.msra.mxu0 0.0
      %7084 = vmatprep.subr.mxu0 0.0
      %7085 = vmatpush1.msra.mxu0 0.0
      %7086 = vmatprep.subr.mxu0 0.0
      %7087 = vmatpush1.msra.mxu0 0.0
      %7088 = vmatprep.subr.mxu0 0.0
      %7089 = vmatpush1.msra.mxu0 %v7053
      %7090 = vmatprep.subr.mxu0 0.0
      %7091 = vmatpush2.msra.mxu0 0.0
      %7092 = vmatprep.subr.mxu0 0.0
      %7093 = vmatpush2.msra.mxu0 0.0
      %7094 = vmatprep.subr.mxu0 0.0
      %7095 = vmatpush2.msra.mxu0 0.0
      %7096 = vmatprep.subr.mxu0 0.0
      %7097 = vmatpush2.msra.mxu0 0.0
      %7098 = vmatprep.subr.mxu0 0.0
      %7099 = vmatpush2.msra.mxu0 0.0
      %7100 = vmatprep.subr.mxu0 0.0
      %7101 = vmatpush2.msra.mxu0 0.0
      %7102 = vmatprep.subr.mxu0 0.0
      %7103 = vmatpush2.msra.mxu0 0.0
      %7104 = vmatprep.subr.mxu0 0.0
      %7105 = vmatpush2.msra.mxu0 0.0
      %7106 = vmatprep.subr.mxu0 0.0
      %7107 = vmatpush2.msra.mxu0 0.0
      %7108 = vmatprep.subr.mxu0 0.0
      %7109 = vmatpush2.msra.mxu0 0.0
      %7110 = vmatprep.subr.mxu0 0.0
      %7111 = vmatpush2.msra.mxu0 0.0
      %7112 = vmatprep.subr.mxu0 0.0
      %7113 = vmatpush2.msra.mxu0 0.0
      %7114 = vmatprep.subr.mxu0 0.0
      %7115 = vmatpush2.msra.mxu0 0.0
      %7116 = vmatprep.subr.mxu0 0.0
      %7117 = vmatpush2.msra.mxu0 0.0
      %7118 = vmatprep.subr.mxu0 0.0
      %7119 = vmatpush2.msra.mxu0 0.0
      %7120 = vmatprep.subr.mxu0 0.0
      %7121 = vmatpush2.msra.mxu0 0.0
      %7122 = vmatprep.mubr.f32.mxu0 0.0
      %7123 = vmatmul.mubr.f32.gmra.mxu0 %v7056
      %v7124 = vpop.f32.mrf.mxu0
      %v7125 = vadd.f32 0.0, %v7124
      %v7126 = vpop.f32.mrf.mxu0
      %7127 = vdwg.mxu0
      %v7128 = vld [vmem:[%s6159] sm:$0xff]
      %v7129 = vld [vmem:[%s6161] sm:$0xff]
      %v7131 = vsel %vm741, %v6973, 0
      %7133 = vmatprep.subr.mxu0 0.0
      %7134 = vmatpush1.msra.mxu0 0.0
      %7135 = vmatprep.subr.mxu0 0.0
      %7136 = vmatpush1.msra.mxu0 0.0
      %7137 = vmatprep.subr.mxu0 0.0
      %7138 = vmatpush1.msra.mxu0 0.0
      %7139 = vmatprep.subr.mxu0 0.0
      %7140 = vmatpush1.msra.mxu0 0.0
      %7141 = vmatprep.subr.mxu0 0.0
      %7142 = vmatpush1.msra.mxu0 0.0
      %7143 = vmatprep.subr.mxu0 0.0
      %7144 = vmatpush1.msra.mxu0 0.0
      %7145 = vmatprep.subr.mxu0 0.0
      %7146 = vmatpush1.msra.mxu0 0.0
      %7147 = vmatprep.subr.mxu0 0.0
      %7148 = vmatpush1.msra.mxu0 0.0
      %7149 = vmatprep.subr.mxu0 0.0
      %7150 = vmatpush1.msra.mxu0 0.0
      %7151 = vmatprep.subr.mxu0 0.0
      %7152 = vmatpush1.msra.mxu0 0.0
      %7153 = vmatprep.subr.mxu0 0.0
      %7154 = vmatpush1.msra.mxu0 0.0
      %7155 = vmatprep.subr.mxu0 0.0
      %7156 = vmatpush1.msra.mxu0 0.0
      %7157 = vmatprep.subr.mxu0 0.0
      %7158 = vmatpush1.msra.mxu0 0.0
      %7159 = vmatprep.subr.mxu0 0.0
      %7160 = vmatpush1.msra.mxu0 0.0
      %7161 = vmatprep.subr.mxu0 0.0
      %7162 = vmatpush1.msra.mxu0 0.0
      %7163 = vmatprep.subr.mxu0 0.0
      %7164 = vmatpush1.msra.mxu0 %v7129
      %7165 = vmatprep.subr.mxu0 0.0
      %7166 = vmatpush2.msra.mxu0 0.0
      %7167 = vmatprep.subr.mxu0 0.0
      %7168 = vmatpush2.msra.mxu0 0.0
      %7169 = vmatprep.subr.mxu0 0.0
      %7170 = vmatpush2.msra.mxu0 0.0
      %7171 = vmatprep.subr.mxu0 0.0
      %7172 = vmatpush2.msra.mxu0 0.0
      %7173 = vmatprep.subr.mxu0 0.0
      %7174 = vmatpush2.msra.mxu0 0.0
      %7175 = vmatprep.subr.mxu0 0.0
      %7176 = vmatpush2.msra.mxu0 0.0
      %7177 = vmatprep.subr.mxu0 0.0
      %7178 = vmatpush2.msra.mxu0 0.0
      %7179 = vmatprep.subr.mxu0 0.0
      %7180 = vmatpush2.msra.mxu0 0.0
      %7181 = vmatprep.subr.mxu0 0.0
      %7182 = vmatpush2.msra.mxu0 0.0
      %7183 = vmatprep.subr.mxu0 0.0
      %7184 = vmatpush2.msra.mxu0 0.0
      %7185 = vmatprep.subr.mxu0 0.0
      %7186 = vmatpush2.msra.mxu0 0.0
      %7187 = vmatprep.subr.mxu0 0.0
      %7188 = vmatpush2.msra.mxu0 0.0
      %7189 = vmatprep.subr.mxu0 0.0
      %7190 = vmatpush2.msra.mxu0 0.0
      %7191 = vmatprep.subr.mxu0 0.0
      %7192 = vmatpush2.msra.mxu0 0.0
      %7193 = vmatprep.subr.mxu0 0.0
      %7194 = vmatpush2.msra.mxu0 0.0
      %7195 = vmatprep.subr.mxu0 0.0
      %7196 = vmatpush2.msra.mxu0 0.0
      %7197 = vmatprep.mubr.f32.mxu0 0.0
      %7198 = vmatmul.mubr.f32.gmra.mxu0 %v7131
      %v7199 = vpop.f32.mrf.mxu0
      %v7200 = vadd.f32 0.0, %v7199
      %v7201 = vpop.f32.mrf.mxu0
      %7202 = vdwg.mxu0
      %v7204 = vsel %vm741, %v6897, 0
      %7206 = vmatprep.subr.mxu0 0.0
      %7207 = vmatpush1.msra.mxu0 0.0
      %7208 = vmatprep.subr.mxu0 0.0
      %7209 = vmatpush1.msra.mxu0 0.0
      %7210 = vmatprep.subr.mxu0 0.0
      %7211 = vmatpush1.msra.mxu0 0.0
      %7212 = vmatprep.subr.mxu0 0.0
      %7213 = vmatpush1.msra.mxu0 0.0
      %7214 = vmatprep.subr.mxu0 0.0
      %7215 = vmatpush1.msra.mxu0 0.0
      %7216 = vmatprep.subr.mxu0 0.0
      %7217 = vmatpush1.msra.mxu0 0.0
      %7218 = vmatprep.subr.mxu0 0.0
      %7219 = vmatpush1.msra.mxu0 0.0
      %7220 = vmatprep.subr.mxu0 0.0
      %7221 = vmatpush1.msra.mxu0 0.0
      %7222 = vmatprep.subr.mxu0 0.0
      %7223 = vmatpush1.msra.mxu0 0.0
      %7224 = vmatprep.subr.mxu0 0.0
      %7225 = vmatpush1.msra.mxu0 0.0
      %7226 = vmatprep.subr.mxu0 0.0
      %7227 = vmatpush1.msra.mxu0 0.0
      %7228 = vmatprep.subr.mxu0 0.0
      %7229 = vmatpush1.msra.mxu0 0.0
      %7230 = vmatprep.subr.mxu0 0.0
      %7231 = vmatpush1.msra.mxu0 0.0
      %7232 = vmatprep.subr.mxu0 0.0
      %7233 = vmatpush1.msra.mxu0 0.0
      %7234 = vmatprep.subr.mxu0 0.0
      %7235 = vmatpush1.msra.mxu0 0.0
      %7236 = vmatprep.subr.mxu0 0.0
      %7237 = vmatpush1.msra.mxu0 %v7128
      %7238 = vmatprep.subr.mxu0 0.0
      %7239 = vmatpush2.msra.mxu0 0.0
      %7240 = vmatprep.subr.mxu0 0.0
      %7241 = vmatpush2.msra.mxu0 0.0
      %7242 = vmatprep.subr.mxu0 0.0
      %7243 = vmatpush2.msra.mxu0 0.0
      %7244 = vmatprep.subr.mxu0 0.0
      %7245 = vmatpush2.msra.mxu0 0.0
      %7246 = vmatprep.subr.mxu0 0.0
      %7247 = vmatpush2.msra.mxu0 0.0
      %7248 = vmatprep.subr.mxu0 0.0
      %7249 = vmatpush2.msra.mxu0 0.0
      %7250 = vmatprep.subr.mxu0 0.0
      %7251 = vmatpush2.msra.mxu0 0.0
      %7252 = vmatprep.subr.mxu0 0.0
      %7253 = vmatpush2.msra.mxu0 0.0
      %7254 = vmatprep.subr.mxu0 0.0
      %7255 = vmatpush2.msra.mxu0 0.0
      %7256 = vmatprep.subr.mxu0 0.0
      %7257 = vmatpush2.msra.mxu0 0.0
      %7258 = vmatprep.subr.mxu0 0.0
      %7259 = vmatpush2.msra.mxu0 0.0
      %7260 = vmatprep.subr.mxu0 0.0
      %7261 = vmatpush2.msra.mxu0 0.0
      %7262 = vmatprep.subr.mxu0 0.0
      %7263 = vmatpush2.msra.mxu0 0.0
      %7264 = vmatprep.subr.mxu0 0.0
      %7265 = vmatpush2.msra.mxu0 0.0
      %7266 = vmatprep.subr.mxu0 0.0
      %7267 = vmatpush2.msra.mxu0 0.0
      %7268 = vmatprep.subr.mxu0 0.0
      %7269 = vmatpush2.msra.mxu0 0.0
      %7270 = vmatprep.mubr.f32.mxu0 0.0
      %7271 = vmatmul.mubr.f32.gmra.mxu0 %v7204
      %v7272 = vpop.f32.mrf.mxu0
      %v7273 = vadd.f32 %v7200, %v7272
      %v7274 = vpop.f32.mrf.mxu0
      %7275 = vdwg.mxu0
      %v7276 = vld [vmem:[%s6309] sm:$0xff]
      %v7278 = vsel %vm741, %v7049, 0
      %7280 = vmatprep.subr.mxu0 0.0
      %7281 = vmatpush1.msra.mxu0 0.0
      %7282 = vmatprep.subr.mxu0 0.0
      %7283 = vmatpush1.msra.mxu0 0.0
      %7284 = vmatprep.subr.mxu0 0.0
      %7285 = vmatpush1.msra.mxu0 0.0
      %7286 = vmatprep.subr.mxu0 0.0
      %7287 = vmatpush1.msra.mxu0 0.0
      %7288 = vmatprep.subr.mxu0 0.0
      %7289 = vmatpush1.msra.mxu0 0.0
      %7290 = vmatprep.subr.mxu0 0.0
      %7291 = vmatpush1.msra.mxu0 0.0
      %7292 = vmatprep.subr.mxu0 0.0
      %7293 = vmatpush1.msra.mxu0 0.0
      %7294 = vmatprep.subr.mxu0 0.0
      %7295 = vmatpush1.msra.mxu0 0.0
      %7296 = vmatprep.subr.mxu0 0.0
      %7297 = vmatpush1.msra.mxu0 0.0
      %7298 = vmatprep.subr.mxu0 0.0
      %7299 = vmatpush1.msra.mxu0 0.0
      %7300 = vmatprep.subr.mxu0 0.0
      %7301 = vmatpush1.msra.mxu0 0.0
      %7302 = vmatprep.subr.mxu0 0.0
      %7303 = vmatpush1.msra.mxu0 0.0
      %7304 = vmatprep.subr.mxu0 0.0
      %7305 = vmatpush1.msra.mxu0 0.0
      %7306 = vmatprep.subr.mxu0 0.0
      %7307 = vmatpush1.msra.mxu0 0.0
      %7308 = vmatprep.subr.mxu0 0.0
      %7309 = vmatpush1.msra.mxu0 0.0
      %7310 = vmatprep.subr.mxu0 0.0
      %7311 = vmatpush1.msra.mxu0 %v7276
      %7312 = vmatprep.subr.mxu0 0.0
      %7313 = vmatpush2.msra.mxu0 0.0
      %7314 = vmatprep.subr.mxu0 0.0
      %7315 = vmatpush2.msra.mxu0 0.0
      %7316 = vmatprep.subr.mxu0 0.0
      %7317 = vmatpush2.msra.mxu0 0.0
      %7318 = vmatprep.subr.mxu0 0.0
      %7319 = vmatpush2.msra.mxu0 0.0
      %7320 = vmatprep.subr.mxu0 0.0
      %7321 = vmatpush2.msra.mxu0 0.0
      %7322 = vmatprep.subr.mxu0 0.0
      %7323 = vmatpush2.msra.mxu0 0.0
      %7324 = vmatprep.subr.mxu0 0.0
      %7325 = vmatpush2.msra.mxu0 0.0
      %7326 = vmatprep.subr.mxu0 0.0
      %7327 = vmatpush2.msra.mxu0 0.0
      %7328 = vmatprep.subr.mxu0 0.0
      %7329 = vmatpush2.msra.mxu0 0.0
      %7330 = vmatprep.subr.mxu0 0.0
      %7331 = vmatpush2.msra.mxu0 0.0
      %7332 = vmatprep.subr.mxu0 0.0
      %7333 = vmatpush2.msra.mxu0 0.0
      %7334 = vmatprep.subr.mxu0 0.0
      %7335 = vmatpush2.msra.mxu0 0.0
      %7336 = vmatprep.subr.mxu0 0.0
      %7337 = vmatpush2.msra.mxu0 0.0
      %7338 = vmatprep.subr.mxu0 0.0
      %7339 = vmatpush2.msra.mxu0 0.0
      %7340 = vmatprep.subr.mxu0 0.0
      %7341 = vmatpush2.msra.mxu0 0.0
      %7342 = vmatprep.subr.mxu0 0.0
      %7343 = vmatpush2.msra.mxu0 0.0
      %7344 = vmatprep.mubr.f32.mxu0 0.0
      %7345 = vmatmul.mubr.f32.gmra.mxu0 %v7278
      %v7346 = vpop.f32.mrf.mxu0
      %v7347 = vadd.f32 0.0, %v7346
      %v7348 = vpop.f32.mrf.mxu0
      %7349 = vdwg.mxu0
      %v7350 = vadd.f32 %v7273, %v7347
      %v7351 = vld [vmem:[%s6385] sm:$0xff]
      %v7353 = vsel %vm741, %v7125, 0
      %7355 = vmatprep.subr.mxu0 0.0
      %7356 = vmatpush1.msra.mxu0 0.0
      %7357 = vmatprep.subr.mxu0 0.0
      %7358 = vmatpush1.msra.mxu0 0.0
      %7359 = vmatprep.subr.mxu0 0.0
      %7360 = vmatpush1.msra.mxu0 0.0
      %7361 = vmatprep.subr.mxu0 0.0
      %7362 = vmatpush1.msra.mxu0 0.0
      %7363 = vmatprep.subr.mxu0 0.0
      %7364 = vmatpush1.msra.mxu0 0.0
      %7365 = vmatprep.subr.mxu0 0.0
      %7366 = vmatpush1.msra.mxu0 0.0
      %7367 = vmatprep.subr.mxu0 0.0
      %7368 = vmatpush1.msra.mxu0 0.0
      %7369 = vmatprep.subr.mxu0 0.0
      %7370 = vmatpush1.msra.mxu0 0.0
      %7371 = vmatprep.subr.mxu0 0.0
      %7372 = vmatpush1.msra.mxu0 0.0
      %7373 = vmatprep.subr.mxu0 0.0
      %7374 = vmatpush1.msra.mxu0 0.0
      %7375 = vmatprep.subr.mxu0 0.0
      %7376 = vmatpush1.msra.mxu0 0.0
      %7377 = vmatprep.subr.mxu0 0.0
      %7378 = vmatpush1.msra.mxu0 0.0
      %7379 = vmatprep.subr.mxu0 0.0
      %7380 = vmatpush1.msra.mxu0 0.0
      %7381 = vmatprep.subr.mxu0 0.0
      %7382 = vmatpush1.msra.mxu0 0.0
      %7383 = vmatprep.subr.mxu0 0.0
      %7384 = vmatpush1.msra.mxu0 0.0
      %7385 = vmatprep.subr.mxu0 0.0
      %7386 = vmatpush1.msra.mxu0 %v7351
      %7387 = vmatprep.subr.mxu0 0.0
      %7388 = vmatpush2.msra.mxu0 0.0
      %7389 = vmatprep.subr.mxu0 0.0
      %7390 = vmatpush2.msra.mxu0 0.0
      %7391 = vmatprep.subr.mxu0 0.0
      %7392 = vmatpush2.msra.mxu0 0.0
      %7393 = vmatprep.subr.mxu0 0.0
      %7394 = vmatpush2.msra.mxu0 0.0
      %7395 = vmatprep.subr.mxu0 0.0
      %7396 = vmatpush2.msra.mxu0 0.0
      %7397 = vmatprep.subr.mxu0 0.0
      %7398 = vmatpush2.msra.mxu0 0.0
      %7399 = vmatprep.subr.mxu0 0.0
      %7400 = vmatpush2.msra.mxu0 0.0
      %7401 = vmatprep.subr.mxu0 0.0
      %7402 = vmatpush2.msra.mxu0 0.0
      %7403 = vmatprep.subr.mxu0 0.0
      %7404 = vmatpush2.msra.mxu0 0.0
      %7405 = vmatprep.subr.mxu0 0.0
      %7406 = vmatpush2.msra.mxu0 0.0
      %7407 = vmatprep.subr.mxu0 0.0
      %7408 = vmatpush2.msra.mxu0 0.0
      %7409 = vmatprep.subr.mxu0 0.0
      %7410 = vmatpush2.msra.mxu0 0.0
      %7411 = vmatprep.subr.mxu0 0.0
      %7412 = vmatpush2.msra.mxu0 0.0
      %7413 = vmatprep.subr.mxu0 0.0
      %7414 = vmatpush2.msra.mxu0 0.0
      %7415 = vmatprep.subr.mxu0 0.0
      %7416 = vmatpush2.msra.mxu0 0.0
      %7417 = vmatprep.subr.mxu0 0.0
      %7418 = vmatpush2.msra.mxu0 0.0
      %7419 = vmatprep.mubr.f32.mxu0 0.0
      %7420 = vmatmul.mubr.f32.gmra.mxu0 %v7353
      %v7421 = vpop.f32.mrf.mxu0
      %v7422 = vadd.f32 0.0, %v7421
      %v7423 = vpop.f32.mrf.mxu0
      %7424 = vdwg.mxu0
      %v7425 = vadd.f32 %v7350, %v7422
      %s7426 = scalar_lea.vmem %s7, 2
      %v7427 = vld [vmem:[%s7426] sm:$0x1]
      %v7429 = vlaneseq
      %v7430 = vshrl.u32 %v7429, 7
      %v7431 = vsub.s32 0, %v7430
      %v7432 = vrot.slane %v7427, %v7431
      %v7434 = vadd.f32 %v6460, %v7432
      %v7435 = vadd.f32 %v7425, %v7432
      %v7436 = vadd.f32 %v7434, %v5396
      %v7437 = vadd.f32 %v7435, %v5397
      %s7438 = scalar_lea.vmem %s8, 2
      %v7439 = vld [vmem:[%s7438] sm:$0x1]
      %s7440 = scalar_lea.vmem %s9, 2
      %v7441 = vld [vmem:[%s7440] sm:$0x1]
      %v7442 = vsel %vm596, %v7436, 0.0
      %7443 = vadd.xlane.f32.xlu0 %v7442
      %v7444 = vpop.xlane.xlu0 %7443
      %v7445 = vsel %vm596, %v7437, 0.0
      %7446 = vadd.xlane.f32.xlu0 %v7445
      %v7447 = vpop.xlane.xlu0 %7446
      %v7448 = vmul.f32 %v7444, %v603
      %v7449 = vmul.f32 %v7447, %v603
      %v7450 = vsub.f32 %v7436, %v7448
      %v7451 = vsub.f32 %v7437, %v7449
      %v7452 = vmul.f32 %v7450, %v7450
      %v7453 = vmul.f32 %v7451, %v7451
      %v7454 = vsel %vm596, %v7452, 0.0
      %7455 = vadd.xlane.f32.xlu0 %v7454
      %v7456 = vpop.xlane.xlu0 %7455
      %v7457 = vsel %vm596, %v7453, 0.0
      %7458 = vadd.xlane.f32.xlu0 %v7457
      %v7459 = vpop.xlane.xlu0 %7458
      %v7460 = vmul.f32 %v7456, %v603
      %v7461 = vmul.f32 %v7459, %v603
      %v7462 = vadd.f32 %v7460, 1e-12
      %v7463 = vadd.f32 %v7461, 1e-12
      %v7464 = vrsqrt.pop %v7462
      %v7465 = vrsqrt.pop %v7463
      %v7466 = vmul.f32 %v7450, %v7464
      %v7467 = vmul.f32 %v7451, %v7465
      %v7469 = vlaneseq
      %v7470 = vshrl.u32 %v7469, 7
      %v7471 = vsub.s32 0, %v7470
      %v7472 = vrot.slane %v7439, %v7471
      %v7474 = vmul.f32 %v7466, %v7472
      %v7475 = vmul.f32 %v7467, %v7472
      %v7477 = vlaneseq
      %v7478 = vshrl.u32 %v7477, 7
      %v7479 = vsub.s32 0, %v7478
      %v7480 = vrot.slane %v7441, %v7479
      %v7482 = vadd.f32 %v7474, %v7480
      %v7483 = vadd.f32 %v7475, %v7480
      %s7484 = scalar_lea.vmem %s10, 64
      %v7485 = vld [vmem:[%s7484] sm:$0xff]
      %v7486 = vld [vmem:[%s7484 + $0x8] sm:$0xff]
      %v7487 = vld [vmem:[%s7484 + $0x10] sm:$0xff]
      %v7488 = vld [vmem:[%s7484 + $0x18] sm:$0xff]
      %s7489 = scalar_lea.vmem %s11, 2
      %v7490 = vld [vmem:[%s7489] sm:$0x1]
      %v7492 = vlaneseq
      %v7493 = vshrl.u32 %v7492, 7
      %v7494 = vsub.s32 0, %v7493
      %v7495 = vrot.slane %v7490, %v7494
      %v7498 = vsel %vm596, %v7482, 0
      %v7501 = vsel %vm596, %v7483, 0
      %7503 = vmatprep.subr.mxu0 0.0
      %7504 = vmatpush1.msra.mxu0 0.0
      %7505 = vmatprep.subr.mxu0 0.0
      %7506 = vmatpush1.msra.mxu0 0.0
      %7507 = vmatprep.subr.mxu0 0.0
      %7508 = vmatpush1.msra.mxu0 0.0
      %7509 = vmatprep.subr.mxu0 0.0
      %7510 = vmatpush1.msra.mxu0 0.0
      %7511 = vmatprep.subr.mxu0 0.0
      %7512 = vmatpush1.msra.mxu0 0.0
      %7513 = vmatprep.subr.mxu0 0.0
      %7514 = vmatpush1.msra.mxu0 0.0
      %7515 = vmatprep.subr.mxu0 0.0
      %7516 = vmatpush1.msra.mxu0 0.0
      %7517 = vmatprep.subr.mxu0 0.0
      %7518 = vmatpush1.msra.mxu0 0.0
      %7519 = vmatprep.subr.mxu0 0.0
      %7520 = vmatpush1.msra.mxu0 0.0
      %7521 = vmatprep.subr.mxu0 0.0
      %7522 = vmatpush1.msra.mxu0 0.0
      %7523 = vmatprep.subr.mxu0 0.0
      %7524 = vmatpush1.msra.mxu0 0.0
      %7525 = vmatprep.subr.mxu0 0.0
      %7526 = vmatpush1.msra.mxu0 0.0
      %7527 = vmatprep.subr.mxu0 0.0
      %7528 = vmatpush1.msra.mxu0 %v7488
      %7529 = vmatprep.subr.mxu0 0.0
      %7530 = vmatpush1.msra.mxu0 %v7487
      %7531 = vmatprep.subr.mxu0 0.0
      %7532 = vmatpush1.msra.mxu0 %v7486
      %7533 = vmatprep.subr.mxu0 0.0
      %7534 = vmatpush1.msra.mxu0 %v7485
      %7535 = vmatprep.subr.mxu0 0.0
      %7536 = vmatpush2.msra.mxu0 0.0
      %7537 = vmatprep.subr.mxu0 0.0
      %7538 = vmatpush2.msra.mxu0 0.0
      %7539 = vmatprep.subr.mxu0 0.0
      %7540 = vmatpush2.msra.mxu0 0.0
      %7541 = vmatprep.subr.mxu0 0.0
      %7542 = vmatpush2.msra.mxu0 0.0
      %7543 = vmatprep.subr.mxu0 0.0
      %7544 = vmatpush2.msra.mxu0 0.0
      %7545 = vmatprep.subr.mxu0 0.0
      %7546 = vmatpush2.msra.mxu0 0.0
      %7547 = vmatprep.subr.mxu0 0.0
      %7548 = vmatpush2.msra.mxu0 0.0
      %7549 = vmatprep.subr.mxu0 0.0
      %7550 = vmatpush2.msra.mxu0 0.0
      %7551 = vmatprep.subr.mxu0 0.0
      %7552 = vmatpush2.msra.mxu0 0.0
      %7553 = vmatprep.subr.mxu0 0.0
      %7554 = vmatpush2.msra.mxu0 0.0
      %7555 = vmatprep.subr.mxu0 0.0
      %7556 = vmatpush2.msra.mxu0 0.0
      %7557 = vmatprep.subr.mxu0 0.0
      %7558 = vmatpush2.msra.mxu0 0.0
      %7559 = vmatprep.subr.mxu0 0.0
      %7560 = vmatpush2.msra.mxu0 0.0
      %7561 = vmatprep.subr.mxu0 0.0
      %7562 = vmatpush2.msra.mxu0 0.0
      %7563 = vmatprep.subr.mxu0 0.0
      %7564 = vmatpush2.msra.mxu0 0.0
      %7565 = vmatprep.subr.mxu0 0.0
      %7566 = vmatpush2.msra.mxu0 0.0
      %7567 = vmatprep.mubr.f32.mxu0 0.0
      %7568 = vmatmul.mubr.f32.gmra.mxu0 %v7498
      %v7569 = vpop.f32.mrf.mxu0
      %v7570 = vadd.f32 %v7495, %v7569
      %v7571 = vpop.f32.mrf.mxu0
      %7572 = vmatprep.mubr.f32.mxu0 0.0
      %7573 = vmatmul.mubr.f32.gmra.mxu0 %v7501
      %v7574 = vpop.f32.mrf.mxu0
      %v7575 = vadd.f32 %v7495, %v7574
      %v7576 = vpop.f32.mrf.mxu0
      %7577 = vdwg.mxu0
      %v7578 = vmul.f32 %v7570, 0.5
      %v7579 = vmul.f32 %v7575, 0.5
      %v7580 = vmul.f32 %v7570, 0.70710677
      %v7581 = vmul.f32 %v7575, 0.70710677
      %vm7582 = vcmp.ge.f32.partialorder %v7580, 0.0
      %vm7583 = vcmp.ge.f32.partialorder %v7581, 0.0
      %v7584 = vsel %vm7582, 1.0, -1.0
      %v7585 = vsel %vm7583, 1.0, -1.0
      %v7586 = vand.u32 2147483647, %v7580
      %v7587 = vand.u32 2147483647, %v7581
      %v7588 = vmul.f32 %v7586, 0.3275911
      %v7589 = vmul.f32 %v7587, 0.3275911
      %v7590 = vadd.f32 %v7588, 1.0
      %v7591 = vadd.f32 %v7589, 1.0
      %v7592 = vrcp.pop %v7590
      %v7593 = vmul.f32 1.0, %v7592
      %v7594 = vrcp.pop %v7591
      %v7595 = vmul.f32 1.0, %v7594
      %v7596 = vmul.f32 %v7593, 1.0614054
      %v7597 = vmul.f32 %v7595, 1.0614054
      %v7598 = vadd.f32 %v7596, -1.4531521
      %v7599 = vadd.f32 %v7597, -1.4531521
      %v7600 = vmul.f32 %v7598, %v7593
      %v7601 = vmul.f32 %v7599, %v7595
      %v7602 = vadd.f32 %v7600, 1.4214138
      %v7603 = vadd.f32 %v7601, 1.4214138
      %v7604 = vmul.f32 %v7602, %v7593
      %v7605 = vmul.f32 %v7603, %v7595
      %v7606 = vadd.f32 %v7604, -0.28449672
      %v7607 = vadd.f32 %v7605, -0.28449672
      %v7608 = vmul.f32 %v7606, %v7593
      %v7609 = vmul.f32 %v7607, %v7595
      %v7610 = vadd.f32 %v7608, 0.2548296
      %v7611 = vadd.f32 %v7609, 0.2548296
      %v7612 = vmul.f32 %v7610, %v7593
      %v7613 = vmul.f32 %v7611, %v7595
      %v7614 = vsub.f32 0.0, %v7586
      %v7615 = vsub.f32 0.0, %v7587
      %v7616 = vmul.f32 %v7614, %v7586
      %v7617 = vmul.f32 %v7615, %v7587
      %v7618 = vmul.f32 %v7616, 1.442695
      %v7619 = vpow.pop %v7618
      %v7620 = vmul.f32 %v7617, 1.442695
      %v7621 = vpow.pop %v7620
      %v7622 = vmul.f32 %v7612, %v7619
      %v7623 = vmul.f32 %v7613, %v7621
      %v7624 = vsub.f32 1.0, %v7622
      %v7625 = vsub.f32 1.0, %v7623
      %v7626 = vmul.f32 %v7584, %v7624
      %v7627 = vmul.f32 %v7585, %v7625
      %v7628 = vadd.f32 %v7626, 1.0
      %v7629 = vadd.f32 %v7627, 1.0
      %v7630 = vmul.f32 %v7578, %v7628
      %v7631 = vmul.f32 %v7579, %v7629
      %s7632 = scalar_lea.vmem %s12, 128
      %v7633 = vld [vmem:[%s7632] sm:$0xff]
      %v7634 = vld [vmem:[%s7632 + $0x8] sm:$0xff]
      %v7635 = vld [vmem:[%s7632 + $0x10] sm:$0xff]
      %v7636 = vld [vmem:[%s7632 + $0x18] sm:$0xff]
      %v7637 = vld [vmem:[%s7632 + $0x20] sm:$0xff]
      %v7638 = vld [vmem:[%s7632 + $0x28] sm:$0xff]
      %v7639 = vld [vmem:[%s7632 + $0x30] sm:$0xff]
      %v7640 = vld [vmem:[%s7632 + $0x38] sm:$0xff]
      %s7641 = scalar_lea.vmem %s13, 2
      %v7642 = vld [vmem:[%s7641] sm:$0x1]
      %v7644 = vlaneseq
      %v7645 = vshrl.u32 %v7644, 7
      %v7646 = vsub.s32 0, %v7645
      %v7647 = vrot.slane %v7642, %v7646
      %v7650 = vsel %vm2890, %v7630, 0
      %v7653 = vsel %vm2890, %v7631, 0
      %7655 = vmatprep.subr.mxu0 0.0
      %7656 = vmatpush1.msra.mxu0 0.0
      %7657 = vmatprep.subr.mxu0 0.0
      %7658 = vmatpush1.msra.mxu0 0.0
      %7659 = vmatprep.subr.mxu0 0.0
      %7660 = vmatpush1.msra.mxu0 0.0
      %7661 = vmatprep.subr.mxu0 0.0
      %7662 = vmatpush1.msra.mxu0 0.0
      %7663 = vmatprep.subr.mxu0 0.0
      %7664 = vmatpush1.msra.mxu0 0.0
      %7665 = vmatprep.subr.mxu0 0.0
      %7666 = vmatpush1.msra.mxu0 0.0
      %7667 = vmatprep.subr.mxu0 0.0
      %7668 = vmatpush1.msra.mxu0 0.0
      %7669 = vmatprep.subr.mxu0 0.0
      %7670 = vmatpush1.msra.mxu0 0.0
      %7671 = vmatprep.subr.mxu0 0.0
      %7672 = vmatpush1.msra.mxu0 %v7640
      %7673 = vmatprep.subr.mxu0 0.0
      %7674 = vmatpush1.msra.mxu0 %v7639
      %7675 = vmatprep.subr.mxu0 0.0
      %7676 = vmatpush1.msra.mxu0 %v7638
      %7677 = vmatprep.subr.mxu0 0.0
      %7678 = vmatpush1.msra.mxu0 %v7637
      %7679 = vmatprep.subr.mxu0 0.0
      %7680 = vmatpush1.msra.mxu0 %v7636
      %7681 = vmatprep.subr.mxu0 0.0
      %7682 = vmatpush1.msra.mxu0 %v7635
      %7683 = vmatprep.subr.mxu0 0.0
      %7684 = vmatpush1.msra.mxu0 %v7634
      %7685 = vmatprep.subr.mxu0 0.0
      %7686 = vmatpush1.msra.mxu0 %v7633
      %7687 = vmatprep.subr.mxu0 0.0
      %7688 = vmatpush2.msra.mxu0 0.0
      %7689 = vmatprep.subr.mxu0 0.0
      %7690 = vmatpush2.msra.mxu0 0.0
      %7691 = vmatprep.subr.mxu0 0.0
      %7692 = vmatpush2.msra.mxu0 0.0
      %7693 = vmatprep.subr.mxu0 0.0
      %7694 = vmatpush2.msra.mxu0 0.0
      %7695 = vmatprep.subr.mxu0 0.0
      %7696 = vmatpush2.msra.mxu0 0.0
      %7697 = vmatprep.subr.mxu0 0.0
      %7698 = vmatpush2.msra.mxu0 0.0
      %7699 = vmatprep.subr.mxu0 0.0
      %7700 = vmatpush2.msra.mxu0 0.0
      %7701 = vmatprep.subr.mxu0 0.0
      %7702 = vmatpush2.msra.mxu0 0.0
      %7703 = vmatprep.subr.mxu0 0.0
      %7704 = vmatpush2.msra.mxu0 0.0
      %7705 = vmatprep.subr.mxu0 0.0
      %7706 = vmatpush2.msra.mxu0 0.0
      %7707 = vmatprep.subr.mxu0 0.0
      %7708 = vmatpush2.msra.mxu0 0.0
      %7709 = vmatprep.subr.mxu0 0.0
      %7710 = vmatpush2.msra.mxu0 0.0
      %7711 = vmatprep.subr.mxu0 0.0
      %7712 = vmatpush2.msra.mxu0 0.0
      %7713 = vmatprep.subr.mxu0 0.0
      %7714 = vmatpush2.msra.mxu0 0.0
      %7715 = vmatprep.subr.mxu0 0.0
      %7716 = vmatpush2.msra.mxu0 0.0
      %7717 = vmatprep.subr.mxu0 0.0
      %7718 = vmatpush2.msra.mxu0 0.0
      %7719 = vmatprep.mubr.f32.mxu0 0.0
      %7720 = vmatmul.mubr.f32.gmra.mxu0 %v7650
      %v7721 = vpop.f32.mrf.mxu0
      %v7722 = vadd.f32 %v7647, %v7721
      %v7723 = vpop.f32.mrf.mxu0
      %7724 = vmatprep.mubr.f32.mxu0 0.0
      %7725 = vmatmul.mubr.f32.gmra.mxu0 %v7653
      %v7726 = vpop.f32.mrf.mxu0
      %v7727 = vadd.f32 %v7647, %v7726
      %v7728 = vpop.f32.mrf.mxu0
      %7729 = vdwg.mxu0
      %v7730 = vadd.f32 %v7722, %v7482
      %v7731 = vadd.f32 %v7727, %v7483
      %s7732 = scalar_lea.vmem %s14, 2
      %v7733 = vld [vmem:[%s7732] sm:$0x1]
      %s7734 = scalar_lea.vmem %s15, 2
      %v7735 = vld [vmem:[%s7734] sm:$0x1]
      %v7736 = vsel %vm596, %v7730, 0.0
      %7737 = vadd.xlane.f32.xlu0 %v7736
      %v7738 = vpop.xlane.xlu0 %7737
      %v7739 = vsel %vm596, %v7731, 0.0
      %7740 = vadd.xlane.f32.xlu0 %v7739
      %v7741 = vpop.xlane.xlu0 %7740
      %v7742 = vmul.f32 %v7738, %v603
      %v7743 = vmul.f32 %v7741, %v603
      %v7744 = vsub.f32 %v7730, %v7742
      %v7745 = vsub.f32 %v7731, %v7743
      %v7746 = vmul.f32 %v7744, %v7744
      %v7747 = vmul.f32 %v7745, %v7745
      %v7748 = vsel %vm596, %v7746, 0.0
      %7749 = vadd.xlane.f32.xlu0 %v7748
      %v7750 = vpop.xlane.xlu0 %7749
      %v7751 = vsel %vm596, %v7747, 0.0
      %7752 = vadd.xlane.f32.xlu0 %v7751
      %v7753 = vpop.xlane.xlu0 %7752
      %v7754 = vmul.f32 %v7750, %v603
      %v7755 = vmul.f32 %v7753, %v603
      %v7756 = vadd.f32 %v7754, 1e-12
      %v7757 = vadd.f32 %v7755, 1e-12
      %v7758 = vrsqrt.pop %v7756
      %v7759 = vrsqrt.pop %v7757
      %v7760 = vmul.f32 %v7744, %v7758
      %v7761 = vmul.f32 %v7745, %v7759
      %v7763 = vlaneseq
      %v7764 = vshrl.u32 %v7763, 7
      %v7765 = vsub.s32 0, %v7764
      %v7766 = vrot.slane %v7733, %v7765
      %v7768 = vmul.f32 %v7760, %v7766
      %v7769 = vmul.f32 %v7761, %v7766
      %v7771 = vlaneseq
      %v7772 = vshrl.u32 %v7771, 7
      %v7773 = vsub.s32 0, %v7772
      %v7774 = vrot.slane %v7735, %v7773
      %v7776 = vadd.f32 %v7768, %v7774
      %v7777 = vadd.f32 %v7769, %v7774
      %v7779 = vrot.slane %v7777, 7
      %vm7781 = vcmask 1040384
      %v7782 = vsel %vm7781, %v7776, %v7779
      %v7783 = vld [vmem:[%s16] sm:$0xff]
      %v7784 = vld [vmem:[%s16 + $0x8] sm:$0xff]
      %v7785 = vld [vmem:[%s16 + $0x10] sm:$0xff]
      %v7786 = vld [vmem:[%s16 + $0x18] sm:$0xff]
      %v7787 = vld [vmem:[%s17] sm:$0x1]
      %v7789 = vlaneseq
      %v7790 = vshrl.u32 %v7789, 7
      %v7791 = vsub.s32 0, %v7790
      %v7792 = vrot.slane %v7787, %v7791
      %v7795 = vsel %vm596, %v7782, 0
      %7797 = vmatprep.subr.mxu0 0.0
      %7798 = vmatpush1.msra.mxu0 0.0
      %7799 = vmatprep.subr.mxu0 0.0
      %7800 = vmatpush1.msra.mxu0 0.0
      %7801 = vmatprep.subr.mxu0 0.0
      %7802 = vmatpush1.msra.mxu0 0.0
      %7803 = vmatprep.subr.mxu0 0.0
      %7804 = vmatpush1.msra.mxu0 0.0
      %7805 = vmatprep.subr.mxu0 0.0
      %7806 = vmatpush1.msra.mxu0 0.0
      %7807 = vmatprep.subr.mxu0 0.0
      %7808 = vmatpush1.msra.mxu0 0.0
      %7809 = vmatprep.subr.mxu0 0.0
      %7810 = vmatpush1.msra.mxu0 0.0
      %7811 = vmatprep.subr.mxu0 0.0
      %7812 = vmatpush1.msra.mxu0 0.0
      %7813 = vmatprep.subr.mxu0 0.0
      %7814 = vmatpush1.msra.mxu0 0.0
      %7815 = vmatprep.subr.mxu0 0.0
      %7816 = vmatpush1.msra.mxu0 0.0
      %7817 = vmatprep.subr.mxu0 0.0
      %7818 = vmatpush1.msra.mxu0 0.0
      %7819 = vmatprep.subr.mxu0 0.0
      %7820 = vmatpush1.msra.mxu0 0.0
      %7821 = vmatprep.subr.mxu0 0.0
      %7822 = vmatpush1.msra.mxu0 %v7786
      %7823 = vmatprep.subr.mxu0 0.0
      %7824 = vmatpush1.msra.mxu0 %v7785
      %7825 = vmatprep.subr.mxu0 0.0
      %7826 = vmatpush1.msra.mxu0 %v7784
      %7827 = vmatprep.subr.mxu0 0.0
      %7828 = vmatpush1.msra.mxu0 %v7783
      %7829 = vmatprep.subr.mxu0 0.0
      %7830 = vmatpush2.msra.mxu0 0.0
      %7831 = vmatprep.subr.mxu0 0.0
      %7832 = vmatpush2.msra.mxu0 0.0
      %7833 = vmatprep.subr.mxu0 0.0
      %7834 = vmatpush2.msra.mxu0 0.0
      %7835 = vmatprep.subr.mxu0 0.0
      %7836 = vmatpush2.msra.mxu0 0.0
      %7837 = vmatprep.subr.mxu0 0.0
      %7838 = vmatpush2.msra.mxu0 0.0
      %7839 = vmatprep.subr.mxu0 0.0
      %7840 = vmatpush2.msra.mxu0 0.0
      %7841 = vmatprep.subr.mxu0 0.0
      %7842 = vmatpush2.msra.mxu0 0.0
      %7843 = vmatprep.subr.mxu0 0.0
      %7844 = vmatpush2.msra.mxu0 0.0
      %7845 = vmatprep.subr.mxu0 0.0
      %7846 = vmatpush2.msra.mxu0 0.0
      %7847 = vmatprep.subr.mxu0 0.0
      %7848 = vmatpush2.msra.mxu0 0.0
      %7849 = vmatprep.subr.mxu0 0.0
      %7850 = vmatpush2.msra.mxu0 0.0
      %7851 = vmatprep.subr.mxu0 0.0
      %7852 = vmatpush2.msra.mxu0 0.0
      %7853 = vmatprep.subr.mxu0 0.0
      %7854 = vmatpush2.msra.mxu0 0.0
      %7855 = vmatprep.subr.mxu0 0.0
      %7856 = vmatpush2.msra.mxu0 0.0
      %7857 = vmatprep.subr.mxu0 0.0
      %7858 = vmatpush2.msra.mxu0 0.0
      %7859 = vmatprep.subr.mxu0 0.0
      %7860 = vmatpush2.msra.mxu0 0.0
      %7861 = vmatprep.mubr.f32.mxu0 0.0
      %7862 = vmatmul.mubr.f32.gmra.mxu0 %v7795
      %v7863 = vpop.f32.mrf.mxu0
      %v7864 = vadd.f32 %v7792, %v7863
      %v7865 = vpop.f32.mrf.mxu0
      %7866 = vdwg.mxu0
      %v7867 = vtanh.pop %v7864
      %vm7868 = vcmask 254976
      %7869 = vst.msk [vmem:[%s590] sm:$0x3] %vm7868, %v7867
      %p7870 = scmp.lt.s32.totalorder %s29, 1
      %s7871 = scalar_select %p7870, %s29, 1
      %s7872 = smul.addr %s7871, 2
      %s7873 = scalar_lea.vmem %s18, %s7872
      // Predicated region
      $region93: #{bert_classifier_forward.1} parent=91 // pred_check
        %p7874 = pneg %p435
      $region94: #{bert_classifier_forward.1} parent=91 // pred_check_branch
        %7876 = sbr.rel (%p7874) target = $region96
      $region95: #{bert_classifier_forward.1} parent=91 // pred_region
        _
      $region96: #{bert_classifier_forward.1} parent=91 // pred_fallthru
        _
    $region92: #{bert_classifier_forward.1} parent=5 // pred_fallthru
      _
    %p7877 = scmp.le.s32.totalorder 2, %s24
    // Predicated region
    $region97: #{bert_classifier_forward.1} parent=5 // pred_check
      %p7878 = pneg %p7877
    $region98: #{bert_classifier_forward.1} parent=5 // pred_check_branch
      %7880 = sbr.rel (%p7878) target = $region100
    $region99: #{bert_classifier_forward.1} parent=5 // pred_region
      %s7881 = ssub.s32 %s24, 2
      // Predicated region
      $region101: #{bert_classifier_forward.1} parent=99 // pred_check
        %p7882 = pneg %p441
      $region102: #{bert_classifier_forward.1} parent=99 // pred_check_branch
        %7884 = sbr.rel (%p7882) target = $region104
      $region103: #{bert_classifier_forward.1} parent=99 // pred_region
        %p7885 = scmp.lt.s32.totalorder %s30, 1
        %s7886 = scalar_select %p7885, %s30, 1
        %s7887 = smul.addr %s7886, 2
        %s7888 = scalar_lea.vmem %s18, %s7887
      $region104: #{bert_classifier_forward.1} parent=99 // pred_fallthru
        _
    $region100: #{bert_classifier_forward.1} parent=5 // pred_fallthru
      _
  $region6: #{bert_classifier_forward.1} parent=0 // loop_footer
    %s28 = sadd.s32 1, %s24
  $region7: #{bert_classifier_forward.1} parent=0 // loop_footer_branch
    %23 = sbr.rel target = $region3
  $region8: #{bert_classifier_forward.1} parent=0 // loop_exit
    _

</llo_original>
